<compile_context>
chip_gen: v5e
topology: v5e:2x2
jax: 0.10.0
libtpu: 0.0.40
codegen_flags: <defaults>
</compile_context>

<pallas_src>
import jax
import jax.numpy as jnp
from jax.experimental import pallas as pl
from jax.experimental.pallas import tpu as pltpu


def _num_tensorcores_per_chip():
    """2 TensorCores on v7x, 1 on v5e/v6e; default to 1 if undetectable."""
    try:
        kind = jax.devices()[0].device_kind.lower()
        return 2 if "v7" in kind else 1
    except Exception:  # pragma: no cover
        return 1


_CONV1_BLOCKS = _num_tensorcores_per_chip()


# ----------------------------------------------------------------------------
# Head kernels: conv as (Cout,K)@(K,M) matmul + bias + PReLU, M on lanes
# ----------------------------------------------------------------------------
def _conv_mm_kernel(w_ref, p_ref, b_ref, a_ref, o_ref):
    """o = PReLU(w @ p + b) for one lane-tile of M.

    w:(Cout,K) bf16  p:(K,TM) bf16  b:(Cout,1) f32  a:(1,) f32 in SMEM
    o:(Cout,TM) bf16 -- flattened spatial M on the lane axis (dense stores).
    """
    acc = jnp.dot(w_ref[...], p_ref[...], preferred_element_type=jnp.float32)
    acc = acc + b_ref[...]
    alpha = a_ref[0]
    o_ref[...] = jnp.where(acc >= 0.0, acc, alpha * acc).astype(o_ref.dtype)


def conv_matmul_prelu(w2d, patches, bias, alpha, num_blocks=1):
    """(Cout,K)@(K,M) + bias + PReLU, M split into `num_blocks` lane blocks."""
    cout, k_dim = w2d.shape
    m = patches.shape[1]
    if num_blocks > 1:
        bm = ((m + num_blocks - 1) // num_blocks + 127) // 128 * 128
        bm = min(bm, m)
    else:
        bm = m                               # whole-layer single block
    grid = (pl.cdiv(m, bm),)
    cost = pl.CostEstimate(
        flops=2 * cout * k_dim * m,
        transcendentals=0,
        bytes_accessed=int(w2d.size) * 2 + int(patches.size) * 2
        + int(bias.size) * 4 + cout * m * 2,
    )
    return pl.pallas_call(
        _conv_mm_kernel,
        out_shape=jax.ShapeDtypeStruct((cout, m), jnp.bfloat16),
        grid=grid,
        in_specs=[
            pl.BlockSpec((cout, k_dim), lambda i: (0, 0)),
            pl.BlockSpec((k_dim, bm), lambda i: (0, i)),
            pl.BlockSpec((cout, 1), lambda i: (0, 0)),
            pl.BlockSpec(memory_space=pltpu.MemorySpace.SMEM),
        ],
        out_specs=pl.BlockSpec((cout, bm), lambda i: (0, i)),
        compiler_params=pltpu.CompilerParams(dimension_semantics=("parallel",)),
        cost_estimate=cost,
    )(w2d, patches, bias, alpha)


# ----------------------------------------------------------------------------
# Fused tail: conv3_1 -> conv3_2 -> pool3 -> conv4_1 -> conv4_2 -> ip1/2/3
# ----------------------------------------------------------------------------
def _tail_kernel(x_ref, w31_ref, b31_ref, w32_ref, b32_ref, w41_ref, b41_ref,
                 w42_ref, b42_ref, w1_ref, b1_ref, w2_ref, b2_ref, w3_ref,
                 b3_ref, a_ref, o_ref):
    nb = o_ref.shape[1]                       # batch size (static)
    alpha = a_ref[0]
    f32, bf16 = jnp.float32, jnp.bfloat16

    def prelu(v):
        return jnp.where(v >= 0.0, v, alpha * v)

    def conv3x3(xp, w_ref, b_ref, gw, m):
        """Same-grid 3x3 conv on a flattened (n, h, w) lane axis.

        xp: (Cin, >= m + 2*gw + 2) bf16; w_ref: (9, Cout, Cin) bf16,
        k = di*3+dj major; output (Cout, m) f32 with PReLU applied.  Positions
        whose (h, w) window crosses a row/sample boundary are garbage and are
        never read by later stages.
        """
        acc = None
        for di in range(3):
            for dj in range(3):
                wk = w_ref[di * 3 + dj]                       # (Cout, Cin)
                xk = xp[:, di * gw + dj: di * gw + dj + m]    # (Cin, m)
                d = jnp.dot(wk, xk, preferred_element_type=f32)
                acc = d if acc is None else acc + d
        return prelu(acc + b_ref[...])

    # ---- conv3_1 / conv3_2 on the per-sample 12x12 grid ---------------------
    m1 = nb * 144
    y1 = conv3x3(x_ref[...], w31_ref, b31_ref, 12, m1)        # (24, m1) f32
    y1p = jnp.concatenate([y1, jnp.zeros((24, 32), f32)], axis=1).astype(bf16)
    y2 = conv3x3(y1p, w32_ref, b32_ref, 12, m1)               # (24, m1) f32

    # ---- pool3 (2x2 avg over the valid 8x8) + zero-pad into a 6x6 grid ------
    z6 = jnp.zeros((24, 6), f32)
    z1 = jnp.zeros((24, 1), f32)
    pieces = []
    for n in range(nb):
        base = n * 144
        pieces.append(z6)                                     # top border row
        for ii in range(4):
            r0 = y2[:, base + 24 * ii: base + 24 * ii + 8]
            r1 = y2[:, base + 24 * ii + 12: base + 24 * ii + 20]
            s = r0 + r1                                       # (24, 8)
            row = jnp.concatenate(
                [s[:, 2 * jj:2 * jj + 1] + s[:, 2 * jj + 1:2 * jj + 2]
                 for jj in range(4)], axis=1) * 0.25          # (24, 4)
            pieces += [z1, row, z1]
        pieces.append(z6)                                     # bottom border
    pieces.append(jnp.zeros((24, 24), f32))                   # slack lanes
    c41in = jnp.concatenate(pieces, axis=1).astype(bf16)      # (24, nb*36+24)

    # ---- conv4_1 (pad=1) on the per-sample padded 6x6 grid ------------------
    m2 = nb * 36
    y41 = conv3x3(c41in, w41_ref, b41_ref, 6, m2)             # (40, m2) f32

    # ---- re-embed conv4_1's valid 4x4 into a fresh zero-bordered 6x6 grid ---
    z6b = jnp.zeros((40, 6), f32)
    z1b = jnp.zeros((40, 1), f32)
    pieces = []
    for n in range(nb):
        base = n * 36
        pieces.append(z6b)
        for i in range(4):
            pieces += [z1b, y41[:, base + 6 * i: base + 6 * i + 4], z1b]
        pieces.append(z6b)
    pieces.append(jnp.zeros((40, 24), f32))
    c42in = jnp.concatenate(pieces, axis=1).astype(bf16)      # (40, m2+24)

    # ---- conv4_2 (pad=1) -----------------------------------------------------
    y42 = conv3x3(c42in, w42_ref, b42_ref, 6, m2)             # (80, m2) f32

    # ---- ip1 as 16 per-spatial-position matmul-accumulates ------------------
    # w1_ref is (16, 128, 80) with w1r[p, f, c] = ip1_W[f, c*16 + p], so the
    # (C,H,W) flatten never has to be materialized.
    h1 = None
    for p in range(16):
        i, j = divmod(p, 4)
        cols = jnp.concatenate(
            [y42[:, n * 36 + 6 * i + j: n * 36 + 6 * i + j + 1]
             for n in range(nb)], axis=1).astype(bf16)        # (80, nb)
        d = jnp.dot(w1_ref[p], cols, preferred_element_type=f32)
        h1 = d if h1 is None else h1 + d
    h1 = prelu(h1 + b1_ref[...])                              # (128, nb)
    h2 = prelu(jnp.dot(w2_ref[...], h1.astype(bf16),
                       preferred_element_type=f32) + b2_ref[...])
    h3 = prelu(jnp.dot(w3_ref[...], h2.astype(bf16),
                       preferred_element_type=f32) + b3_ref[...])
    o_ref[...] = h3                                           # (42, nb) f32


def fused_tail(x2, p, alpha):
    """x2: (16, N*144 + 32) bf16 (pool2 output, flattened + slack lanes)."""
    nb = (x2.shape[1] - 32) // 144
    args = (x2,
            *p["conv3_1"], *p["conv3_2"], *p["conv4_1"], *p["conv4_2"],
            *p["ip1"], *p["ip2"], *p["ip3"], alpha)

    def full_spec(a):
        nd = a.ndim
        return pl.BlockSpec(a.shape, lambda i: (0,) * nd)

    in_specs = [full_spec(a) for a in args[:-1]]
    in_specs.append(pl.BlockSpec(memory_space=pltpu.MemorySpace.SMEM))

    flops = 2 * (24 * 144 * nb * 144 + 24 * 216 * nb * 144
                 + 40 * 216 * nb * 36 + 80 * 360 * nb * 36
                 + nb * (1280 * 128 + 128 * 128 + 128 * 42))
    bytes_accessed = sum(int(a.size) * a.dtype.itemsize for a in args) + 42 * nb * 4
    cost = pl.CostEstimate(flops=flops, transcendentals=0,
                           bytes_accessed=bytes_accessed)

    return pl.pallas_call(
        _tail_kernel,
        out_shape=jax.ShapeDtypeStruct((42, nb), jnp.float32),
        grid=(1,),
        in_specs=in_specs,
        out_specs=pl.BlockSpec((42, nb), lambda i: (0, 0)),
        cost_estimate=cost,
    )(*args)


# ----------------------------------------------------------------------------
# XLA-side glue: channels-first im2col and ceil-mode 2x2 average pool
# ----------------------------------------------------------------------------
def _im2col_cf(x, k, stride, pad):
    """x (Cin,N,H,W) -> patches (Cin*k*k, N*Ho*Wo); K ordered (ci, kh, kw)."""
    cin, n, h, w = x.shape
    if pad:
        x = jnp.pad(x, ((0, 0), (0, 0), (pad, pad), (pad, pad)))
    hp, wp = h + 2 * pad, w + 2 * pad
    ho = (hp - k) // stride + 1
    wo = (wp - k) // stride + 1
    cols = []
    for di in range(k):
        for dj in range(k):
            cols.append(x[:, :, di:di + stride * ho:stride, dj:dj + stride * wo:stride])
    p = jnp.stack(cols, axis=1)                      # (Cin, k*k, N, Ho, Wo)
    return p.reshape(cin * k * k, n * ho * wo), (n, ho, wo)


def conv_prelu(x, w2d, bias, alpha, k, stride, padding, num_blocks=1):
    """Conv2d + bias + PReLU on channels-first (Cin,N,H,W) bf16 activations."""
    patches, (n, ho, wo) = _im2col_cf(x, k, stride, padding)
    y = conv_matmul_prelu(w2d, patches, bias, alpha, num_blocks=num_blocks)
    return y.reshape(w2d.shape[0], n, ho, wo)


def avg_pool_2x2_ceil(x):
    """AvgPool2d(2,2,ceil_mode=True) on (C,N,H,W) via two strided adds (XLA)."""
    c, n, h, w = x.shape
    ho, wo = -(-h // 2), -(-w // 2)
    xp = jnp.pad(x, ((0, 0), (0, 0), (0, 2 * ho - h), (0, 2 * wo - w))).astype(jnp.float32)
    s = xp[:, :, 0::2, :] + xp[:, :, 1::2, :]
    s = s[:, :, :, 0::2] + s[:, :, :, 1::2]
    ch = jnp.minimum(2, h - 2 * jnp.arange(ho)).astype(jnp.float32)
    cw = jnp.minimum(2, w - 2 * jnp.arange(wo)).astype(jnp.float32)
    inv = 1.0 / (ch[:, None] * cw[None, :])          # valid-element divisor (ceil_mode)
    return (s * inv[None, None]).astype(x.dtype)


# ----------------------------------------------------------------------------
# Parameters (deterministic PyTorch-like init + one-time inference layout prep)
# ----------------------------------------------------------------------------
def init_params(key):
    def conv_p(k, cout, cin, ks):
        bound = 1.0 / (cin * ks * ks) ** 0.5
        kw, kb = jax.random.split(k)
        return (jax.random.uniform(kw, (cout, cin, ks, ks), jnp.float32, -bound, bound),
                jax.random.uniform(kb, (cout,), jnp.float32, -bound, bound))

    def lin_p(k, fout, fin):
        bound = 1.0 / fin ** 0.5
        kw, kb = jax.random.split(k)
        return (jax.random.uniform(kw, (fout, fin), jnp.float32, -bound, bound),
                jax.random.uniform(kb, (fout,), jnp.float32, -bound, bound))

    ks = jax.random.split(key, 10)
    return {
        "conv1_1": conv_p(ks[0], 8, 3, 5),
        "conv2_1": conv_p(ks[1], 16, 8, 3),
        "conv2_2": conv_p(ks[2], 16, 16, 3),
        "conv3_1": conv_p(ks[3], 24, 16, 3),
        "conv3_2": conv_p(ks[4], 24, 24, 3),
        "conv4_1": conv_p(ks[5], 40, 24, 3),
        "conv4_2": conv_p(ks[6], 80, 40, 3),
        "ip1": lin_p(ks[7], 128, 4 * 4 * 80),
        "ip2": lin_p(ks[8], 128, 128),
        "ip3": lin_p(ks[9], 42, 128),
        "prelu": jnp.array([0.25], jnp.float32),      # nn.PReLU() default, shared
    }


def prepare_params(raw):
    """One-time layout conversion for the Pallas kernels (bf16 weights)."""
    def conv_flat(wb):        # conv1_1 / conv2_x: im2col with (ci, kh, kw) K order
        w, b = wb
        cout = w.shape[0]
        return (w.reshape(cout, -1).astype(jnp.bfloat16),
                b.reshape(cout, 1).astype(jnp.float32))

    def conv_k9(wb):          # tail convs: (9, Cout, Cin), k = di*3 + dj
        w, b = wb
        cout, cin, kh, kw = w.shape
        w9 = jnp.transpose(w, (2, 3, 0, 1)).reshape(kh * kw, cout, cin)
        return (w9.astype(jnp.bfloat16), b.reshape(cout, 1).astype(jnp.float32))

    def lin_col(wb):          # column-vector orientation: y = W @ x + b
        w, b = wb
        return (w.astype(jnp.bfloat16), b.reshape(-1, 1).astype(jnp.float32))

    def ip1_prep(wb):         # (16, 128, 80): w1r[p, f, c] = W[f, c*16 + p]
        w, b = wb
        fout, fin = w.shape
        c = fin // 16
        w1r = jnp.transpose(w.reshape(fout, c, 16), (2, 0, 1))
        return (w1r.astype(jnp.bfloat16), b.reshape(-1, 1).astype(jnp.float32))

    return {
        "conv1_1": conv_flat(raw["conv1_1"]),
        "conv2_1": conv_flat(raw["conv2_1"]),
        "conv2_2": conv_flat(raw["conv2_2"]),
        "conv3_1": conv_k9(raw["conv3_1"]),
        "conv3_2": conv_k9(raw["conv3_2"]),
        "conv4_1": conv_k9(raw["conv4_1"]),
        "conv4_2": conv_k9(raw["conv4_2"]),
        "ip1": ip1_prep(raw["ip1"]),
        "ip2": lin_col(raw["ip2"]),
        "ip3": lin_col(raw["ip3"]),
        "prelu": raw["prelu"].astype(jnp.float32),
    }


# ----------------------------------------------------------------------------
# Forward pass (mirrors Net.forward)
# ----------------------------------------------------------------------------
@jax.jit
def net_forward(params, x_nchw):
    a = params["prelu"]
    # NCHW -> channels-first (C, N, H, W); activations flow as bf16.
    x = jnp.transpose(x_nchw, (1, 0, 2, 3)).astype(jnp.bfloat16)

    x = conv_prelu(x, *params["conv1_1"], a, k=5, stride=2, padding=0,
                   num_blocks=_CONV1_BLOCKS)
    x = avg_pool_2x2_ceil(x)
    x = conv_prelu(x, *params["conv2_1"], a, k=3, stride=1, padding=0)
    x = conv_prelu(x, *params["conv2_2"], a, k=3, stride=1, padding=0)
    x = avg_pool_2x2_ceil(x)                          # (16, N, 12, 12)

    c, n, h, w = x.shape
    assert (c, h, w) == (16, 12, 12), (c, h, w)
    # Flatten spatial to the lane axis (+32 slack lanes for shifted slices).
    x2 = jnp.pad(x.reshape(c, n * h * w), ((0, 0), (0, 32))).astype(jnp.bfloat16)

    out_t = fused_tail(x2, params, a)                 # (42, N)
    return jnp.transpose(out_t)                       # (N, 42)


if __name__ == "__main__":
    key = jax.random.PRNGKey(0)
    kp, kx = jax.random.split(key)
    params = prepare_params(init_params(kp))
    # Input spatial size 112 is required so the flatten sees exactly 4*4*80.
    x = jax.random.normal(kx, (2, 3, 112, 112), jnp.float32)
    out = jax.block_until_ready(net_forward(params, x))
    assert out.shape == (2, 42), out.shape
    assert bool(jnp.all(jnp.isfinite(out)))
    print("KERNEL_OK")
</pallas_src>

<mosaic_0001>
module attributes {stable_mosaic.version = 11 : i64} {
  func.func @_conv_mm_kernel(%arg0: i32, %arg1: memref<8x75xbf16, #tpu.memory_space<vmem>>, %arg2: memref<75x5832xbf16, #tpu.memory_space<vmem>>, %arg3: memref<8x1xf32, #tpu.memory_space<vmem>>, %arg4: memref<1xf32, #tpu.memory_space<smem>>, %arg5: memref<8x5832xbf16, #tpu.memory_space<vmem>>) attributes {dimension_semantics = [#tpu.dimension_semantics<parallel>], iteration_bounds = array<i64: 1>, scalar_prefetch = 0 : i64, scratch_operands = 0 : i64, tpu.core_type = #tpu.core_type<tc>, window_params = [{pipeline_mode = #tpu.pipeline_mode<synchronous>, transform_indices = @transform_0, window_bounds = array<i64: 8, 75>}, {transform_indices = @transform_1, window_bounds = array<i64: 75, 5832>}, {pipeline_mode = #tpu.pipeline_mode<synchronous>, transform_indices = @transform_2, window_bounds = array<i64: 8, 1>}, {transform_indices = @transform_3, window_bounds = array<i64: 1>}, {transform_indices = @transform_4, window_bounds = array<i64: 8, 5832>}]} {
    %c0 = arith.constant 0 : index
    %c0_0 = arith.constant 0 : index
    %0 = vector.load %arg1[%c0, %c0_0] : memref<8x75xbf16, #tpu.memory_space<vmem>>, vector<8x75xbf16>
    %c0_1 = arith.constant 0 : index
    %c0_2 = arith.constant 0 : index
    %1 = vector.load %arg2[%c0_1, %c0_2] : memref<75x5832xbf16, #tpu.memory_space<vmem>>, vector<75x5832xbf16>
    %cst = arith.constant dense<0.000000e+00> : vector<8x5832xf32>
    %2 = tpu.matmul %0, %1, %cst {dimension_numbers = #tpu.dot_dimension_numbers<[1], [0], [0], [1], [0, 0, 1, 1], [], []>} : vector<8x75xbf16>, vector<75x5832xbf16>, vector<8x5832xf32> -> vector<8x5832xf32>
    %c0_3 = arith.constant 0 : index
    %c0_4 = arith.constant 0 : index
    %3 = vector.load %arg3[%c0_3, %c0_4] : memref<8x1xf32, #tpu.memory_space<vmem>>, vector<8x1xf32>
    %4 = vector.broadcast %3 : vector<8x1xf32> to vector<8x5832xf32>
    %5 = arith.addf %2, %4 : vector<8x5832xf32>
    %c0_5 = arith.constant 0 : index
    %6 = memref.load %arg4[%c0_5] : memref<1xf32, #tpu.memory_space<smem>>
    %cst_6 = arith.constant 0.000000e+00 : f32
    %7 = vector.broadcast %cst_6 : f32 to vector<8x5832xf32>
    %8 = arith.cmpf oge, %5, %7 : vector<8x5832xf32>
    %9 = vector.broadcast %6 : f32 to vector<8x5832xf32>
    %10 = arith.mulf %9, %5 : vector<8x5832xf32>
    %11 = arith.select %8, %5, %10 : vector<8x5832xi1>, vector<8x5832xf32>
    %12 = arith.truncf %11 : vector<8x5832xf32> to vector<8x5832xbf16>
    %c0_7 = arith.constant 0 : index
    %c0_8 = arith.constant 0 : index
    %13 = vector.load %arg5[%c0_7, %c0_8] : memref<8x5832xbf16, #tpu.memory_space<vmem>>, vector<8x5832xbf16>
    tpu.vector_store %arg5[%c0_7, %c0_8], %12 {strides = array<i32>} : memref<8x5832xbf16, #tpu.memory_space<vmem>>, vector<8x5832xbf16>,
    return
  }
  func.func @transform_0(%arg0: i32) -> (i32, i32) {
    %c0_i32 = arith.constant 0 : i32
    %c0_i32_0 = arith.constant 0 : i32
    %c0_i32_1 = arith.constant 0 : i32
    return %c0_i32, %c0_i32_0 : i32, i32
  }
  func.func @transform_1(%arg0: i32) -> (i32, i32) {
    %c0_i32 = arith.constant 0 : i32
    %c0_i32_0 = arith.constant 0 : i32
    return %c0_i32, %arg0 : i32, i32
  }
  func.func @transform_2(%arg0: i32) -> (i32, i32) {
    %c0_i32 = arith.constant 0 : i32
    %c0_i32_0 = arith.constant 0 : i32
    %c0_i32_1 = arith.constant 0 : i32
    return %c0_i32, %c0_i32_0 : i32, i32
  }
  func.func @transform_3(%arg0: i32) -> i32 {
    %c0_i32 = arith.constant 0 : i32
    %c0_i32_0 = arith.constant 0 : i32
    return %c0_i32 : i32
  }
  func.func @transform_4(%arg0: i32) -> (i32, i32) {
    %c0_i32 = arith.constant 0 : i32
    %c0_i32_0 = arith.constant 0 : i32
    return %c0_i32, %arg0 : i32, i32
  }
}

module attributes {stable_mosaic.version = 11 : i64} {
  func.func @_conv_mm_kernel(%arg0: i32, %arg1: memref<16x72xbf16, #tpu.memory_space<vmem>>, %arg2: memref<72x1250xbf16, #tpu.memory_space<vmem>>, %arg3: memref<16x1xf32, #tpu.memory_space<vmem>>, %arg4: memref<1xf32, #tpu.memory_space<smem>>, %arg5: memref<16x1250xbf16, #tpu.memory_space<vmem>>) attributes {dimension_semantics = [#tpu.dimension_semantics<parallel>], iteration_bounds = array<i64: 1>, scalar_prefetch = 0 : i64, scratch_operands = 0 : i64, tpu.core_type = #tpu.core_type<tc>, window_params = [{pipeline_mode = #tpu.pipeline_mode<synchronous>, transform_indices = @transform_0, window_bounds = array<i64: 16, 72>}, {transform_indices = @transform_1, window_bounds = array<i64: 72, 1250>}, {pipeline_mode = #tpu.pipeline_mode<synchronous>, transform_indices = @transform_2, window_bounds = array<i64: 16, 1>}, {transform_indices = @transform_3, window_bounds = array<i64: 1>}, {transform_indices = @transform_4, window_bounds = array<i64: 16, 1250>}]} {
    %c0 = arith.constant 0 : index
    %c0_0 = arith.constant 0 : index
    %0 = vector.load %arg1[%c0, %c0_0] : memref<16x72xbf16, #tpu.memory_space<vmem>>, vector<16x72xbf16>
    %c0_1 = arith.constant 0 : index
    %c0_2 = arith.constant 0 : index
    %1 = vector.load %arg2[%c0_1, %c0_2] : memref<72x1250xbf16, #tpu.memory_space<vmem>>, vector<72x1250xbf16>
    %cst = arith.constant dense<0.000000e+00> : vector<16x1250xf32>
    %2 = tpu.matmul %0, %1, %cst {dimension_numbers = #tpu.dot_dimension_numbers<[1], [0], [0], [1], [0, 0, 1, 1], [], []>} : vector<16x72xbf16>, vector<72x1250xbf16>, vector<16x1250xf32> -> vector<16x1250xf32>
    %c0_3 = arith.constant 0 : index
    %c0_4 = arith.constant 0 : index
    %3 = vector.load %arg3[%c0_3, %c0_4] : memref<16x1xf32, #tpu.memory_space<vmem>>, vector<16x1xf32>
    %4 = vector.broadcast %3 : vector<16x1xf32> to vector<16x1250xf32>
    %5 = arith.addf %2, %4 : vector<16x1250xf32>
    %c0_5 = arith.constant 0 : index
    %6 = memref.load %arg4[%c0_5] : memref<1xf32, #tpu.memory_space<smem>>
    %cst_6 = arith.constant 0.000000e+00 : f32
    %7 = vector.broadcast %cst_6 : f32 to vector<16x1250xf32>
    %8 = arith.cmpf oge, %5, %7 : vector<16x1250xf32>
    %9 = vector.broadcast %6 : f32 to vector<16x1250xf32>
    %10 = arith.mulf %9, %5 : vector<16x1250xf32>
    %11 = arith.select %8, %5, %10 : vector<16x1250xi1>, vector<16x1250xf32>
    %12 = arith.truncf %11 : vector<16x1250xf32> to vector<16x1250xbf16>
    %c0_7 = arith.constant 0 : index
    %c0_8 = arith.constant 0 : index
    %13 = vector.load %arg5[%c0_7, %c0_8] : memref<16x1250xbf16, #tpu.memory_space<vmem>>, vector<16x1250xbf16>
    tpu.vector_store %arg5[%c0_7, %c0_8], %12 {strides = array<i32>} : memref<16x1250xbf16, #tpu.memory_space<vmem>>, vector<16x1250xbf16>,
    return
  }
  func.func @transform_0(%arg0: i32) -> (i32, i32) {
    %c0_i32 = arith.constant 0 : i32
    %c0_i32_0 = arith.constant 0 : i32
    %c0_i32_1 = arith.constant 0 : i32
    return %c0_i32, %c0_i32_0 : i32, i32
  }
  func.func @transform_1(%arg0: i32) -> (i32, i32) {
    %c0_i32 = arith.constant 0 : i32
    %c0_i32_0 = arith.constant 0 : i32
    return %c0_i32, %arg0 : i32, i32
  }
  func.func @transform_2(%arg0: i32) -> (i32, i32) {
    %c0_i32 = arith.constant 0 : i32
    %c0_i32_0 = arith.constant 0 : i32
    %c0_i32_1 = arith.constant 0 : i32
    return %c0_i32, %c0_i32_0 : i32, i32
  }
  func.func @transform_3(%arg0: i32) -> i32 {
    %c0_i32 = arith.constant 0 : i32
    %c0_i32_0 = arith.constant 0 : i32
    return %c0_i32 : i32
  }
  func.func @transform_4(%arg0: i32) -> (i32, i32) {
    %c0_i32 = arith.constant 0 : i32
    %c0_i32_0 = arith.constant 0 : i32
    return %c0_i32, %arg0 : i32, i32
  }
}

module attributes {stable_mosaic.version = 11 : i64} {
  func.func @_conv_mm_kernel(%arg0: i32, %arg1: memref<16x144xbf16, #tpu.memory_space<vmem>>, %arg2: memref<144x1058xbf16, #tpu.memory_space<vmem>>, %arg3: memref<16x1xf32, #tpu.memory_space<vmem>>, %arg4: memref<1xf32, #tpu.memory_space<smem>>, %arg5: memref<16x1058xbf16, #tpu.memory_space<vmem>>) attributes {dimension_semantics = [#tpu.dimension_semantics<parallel>], iteration_bounds = array<i64: 1>, scalar_prefetch = 0 : i64, scratch_operands = 0 : i64, tpu.core_type = #tpu.core_type<tc>, window_params = [{pipeline_mode = #tpu.pipeline_mode<synchronous>, transform_indices = @transform_0, window_bounds = array<i64: 16, 144>}, {transform_indices = @transform_1, window_bounds = array<i64: 144, 1058>}, {pipeline_mode = #tpu.pipeline_mode<synchronous>, transform_indices = @transform_2, window_bounds = array<i64: 16, 1>}, {transform_indices = @transform_3, window_bounds = array<i64: 1>}, {transform_indices = @transform_4, window_bounds = array<i64: 16, 1058>}]} {
    %c0 = arith.constant 0 : index
    %c0_0 = arith.constant 0 : index
    %0 = vector.load %arg1[%c0, %c0_0] : memref<16x144xbf16, #tpu.memory_space<vmem>>, vector<16x144xbf16>
    %c0_1 = arith.constant 0 : index
    %c0_2 = arith.constant 0 : index
    %1 = vector.load %arg2[%c0_1, %c0_2] : memref<144x1058xbf16, #tpu.memory_space<vmem>>, vector<144x1058xbf16>
    %cst = arith.constant dense<0.000000e+00> : vector<16x1058xf32>
    %2 = tpu.matmul %0, %1, %cst {dimension_numbers = #tpu.dot_dimension_numbers<[1], [0], [0], [1], [0, 0, 1, 1], [], []>} : vector<16x144xbf16>, vector<144x1058xbf16>, vector<16x1058xf32> -> vector<16x1058xf32>
    %c0_3 = arith.constant 0 : index
    %c0_4 = arith.constant 0 : index
    %3 = vector.load %arg3[%c0_3, %c0_4] : memref<16x1xf32, #tpu.memory_space<vmem>>, vector<16x1xf32>
    %4 = vector.broadcast %3 : vector<16x1xf32> to vector<16x1058xf32>
    %5 = arith.addf %2, %4 : vector<16x1058xf32>
    %c0_5 = arith.constant 0 : index
    %6 = memref.load %arg4[%c0_5] : memref<1xf32, #tpu.memory_space<smem>>
    %cst_6 = arith.constant 0.000000e+00 : f32
    %7 = vector.broadcast %cst_6 : f32 to vector<16x1058xf32>
    %8 = arith.cmpf oge, %5, %7 : vector<16x1058xf32>
    %9 = vector.broadcast %6 : f32 to vector<16x1058xf32>
    %10 = arith.mulf %9, %5 : vector<16x1058xf32>
    %11 = arith.select %8, %5, %10 : vector<16x1058xi1>, vector<16x1058xf32>
    %12 = arith.truncf %11 : vector<16x1058xf32> to vector<16x1058xbf16>
    %c0_7 = arith.constant 0 : index
    %c0_8 = arith.constant 0 : index
    %13 = vector.load %arg5[%c0_7, %c0_8] : memref<16x1058xbf16, #tpu.memory_space<vmem>>, vector<16x1058xbf16>
    tpu.vector_store %arg5[%c0_7, %c0_8], %12 {strides = array<i32>} : memref<16x1058xbf16, #tpu.memory_space<vmem>>, vector<16x1058xbf16>,
    return
  }
  func.func @transform_0(%arg0: i32) -> (i32, i32) {
    %c0_i32 = arith.constant 0 : i32
    %c0_i32_0 = arith.constant 0 : i32
    %c0_i32_1 = arith.constant 0 : i32
    return %c0_i32, %c0_i32_0 : i32, i32
  }
  func.func @transform_1(%arg0: i32) -> (i32, i32) {
    %c0_i32 = arith.constant 0 : i32
    %c0_i32_0 = arith.constant 0 : i32
    return %c0_i32, %arg0 : i32, i32
  }
  func.func @transform_2(%arg0: i32) -> (i32, i32) {
    %c0_i32 = arith.constant 0 : i32
    %c0_i32_0 = arith.constant 0 : i32
    %c0_i32_1 = arith.constant 0 : i32
    return %c0_i32, %c0_i32_0 : i32, i32
  }
  func.func @transform_3(%arg0: i32) -> i32 {
    %c0_i32 = arith.constant 0 : i32
    %c0_i32_0 = arith.constant 0 : i32
    return %c0_i32 : i32
  }
  func.func @transform_4(%arg0: i32) -> (i32, i32) {
    %c0_i32 = arith.constant 0 : i32
    %c0_i32_0 = arith.constant 0 : i32
    return %c0_i32, %arg0 : i32, i32
  }
}

module attributes {stable_mosaic.version = 11 : i64} {
  func.func @_tail_kernel(%arg0: i32, %arg1: memref<16x320xbf16, #tpu.memory_space<vmem>>, %arg2: memref<9x24x16xbf16, #tpu.memory_space<vmem>>, %arg3: memref<24x1xf32, #tpu.memory_space<vmem>>, %arg4: memref<9x24x24xbf16, #tpu.memory_space<vmem>>, %arg5: memref<24x1xf32, #tpu.memory_space<vmem>>, %arg6: memref<9x40x24xbf16, #tpu.memory_space<vmem>>, %arg7: memref<40x1xf32, #tpu.memory_space<vmem>>, %arg8: memref<9x80x40xbf16, #tpu.memory_space<vmem>>, %arg9: memref<80x1xf32, #tpu.memory_space<vmem>>, %arg10: memref<16x128x80xbf16, #tpu.memory_space<vmem>>, %arg11: memref<128x1xf32, #tpu.memory_space<vmem>>, %arg12: memref<128x128xbf16, #tpu.memory_space<vmem>>, %arg13: memref<128x1xf32, #tpu.memory_space<vmem>>, %arg14: memref<42x128xbf16, #tpu.memory_space<vmem>>, %arg15: memref<42x1xf32, #tpu.memory_space<vmem>>, %arg16: memref<1xf32, #tpu.memory_space<smem>>, %arg17: memref<42x2xf32, #tpu.memory_space<vmem>>) attributes {dimension_semantics = [#tpu.dimension_semantics<arbitrary>], iteration_bounds = array<i64: 1>, scalar_prefetch = 0 : i64, scratch_operands = 0 : i64, tpu.core_type = #tpu.core_type<tc>, window_params = [{pipeline_mode = #tpu.pipeline_mode<synchronous>, transform_indices = @transform_0, window_bounds = array<i64: 16, 320>}, {pipeline_mode = #tpu.pipeline_mode<synchronous>, transform_indices = @transform_1, window_bounds = array<i64: 9, 24, 16>}, {pipeline_mode = #tpu.pipeline_mode<synchronous>, transform_indices = @transform_2, window_bounds = array<i64: 24, 1>}, {pipeline_mode = #tpu.pipeline_mode<synchronous>, transform_indices = @transform_3, window_bounds = array<i64: 9, 24, 24>}, {pipeline_mode = #tpu.pipeline_mode<synchronous>, transform_indices = @transform_4, window_bounds = array<i64: 24, 1>}, {pipeline_mode = #tpu.pipeline_mode<synchronous>, transform_indices = @transform_5, window_bounds = array<i64: 9, 40, 24>}, {pipeline_mode = #tpu.pipeline_mode<synchronous>, transform_indices = @transform_6, window_bounds = array<i64: 40, 1>}, {pipeline_mode = #tpu.pipeline_mode<synchronous>, transform_indices = @transform_7, window_bounds = array<i64: 9, 80, 40>}, {pipeline_mode = #tpu.pipeline_mode<synchronous>, transform_indices = @transform_8, window_bounds = array<i64: 80, 1>}, {pipeline_mode = #tpu.pipeline_mode<synchronous>, transform_indices = @transform_9, window_bounds = array<i64: 16, 128, 80>}, {pipeline_mode = #tpu.pipeline_mode<synchronous>, transform_indices = @transform_10, window_bounds = array<i64: 128, 1>}, {pipeline_mode = #tpu.pipeline_mode<synchronous>, transform_indices = @transform_11, window_bounds = array<i64: 128, 128>}, {pipeline_mode = #tpu.pipeline_mode<synchronous>, transform_indices = @transform_12, window_bounds = array<i64: 128, 1>}, {pipeline_mode = #tpu.pipeline_mode<synchronous>, transform_indices = @transform_13, window_bounds = array<i64: 42, 128>}, {pipeline_mode = #tpu.pipeline_mode<synchronous>, transform_indices = @transform_14, window_bounds = array<i64: 42, 1>}, {transform_indices = @transform_15, window_bounds = array<i64: 1>}, {pipeline_mode = #tpu.pipeline_mode<synchronous>, transform_indices = @transform_16, window_bounds = array<i64: 42, 2>}]} {
    %c0 = arith.constant 0 : index
    %0 = memref.load %arg16[%c0] : memref<1xf32, #tpu.memory_space<smem>>
    %c0_0 = arith.constant 0 : index
    %c0_1 = arith.constant 0 : index
    %1 = vector.load %arg1[%c0_0, %c0_1] : memref<16x320xbf16, #tpu.memory_space<vmem>>, vector<16x320xbf16>
    %c0_2 = arith.constant 0 : index
    %c0_3 = arith.constant 0 : index
    %c0_4 = arith.constant 0 : index
    %2 = vector.load %arg2[%c0_2, %c0_3, %c0_4] : memref<9x24x16xbf16, #tpu.memory_space<vmem>>, vector<1x24x16xbf16>
    %3 = vector.shape_cast %2 : vector<1x24x16xbf16> to vector<24x16xbf16>
    %4 = vector.extract_strided_slice %1 {offsets = [0, 0], sizes = [16, 288], strides = [1, 1]} : vector<16x320xbf16> to vector<16x288xbf16>
    %cst = arith.constant dense<0.000000e+00> : vector<24x288xf32>
    %5 = tpu.matmul %3, %4, %cst {dimension_numbers = #tpu.dot_dimension_numbers<[1], [0], [0], [1], [0, 0, 1, 1], [], []>} : vector<24x16xbf16>, vector<16x288xbf16>, vector<24x288xf32> -> vector<24x288xf32>
    %c1 = arith.constant 1 : index
    %c0_5 = arith.constant 0 : index
    %c0_6 = arith.constant 0 : index
    %6 = vector.load %arg2[%c1, %c0_5, %c0_6] : memref<9x24x16xbf16, #tpu.memory_space<vmem>>, vector<1x24x16xbf16>
    %7 = vector.shape_cast %6 : vector<1x24x16xbf16> to vector<24x16xbf16>
    %8 = vector.extract_strided_slice %1 {offsets = [0, 1], sizes = [16, 288], strides = [1, 1]} : vector<16x320xbf16> to vector<16x288xbf16>
    %cst_7 = arith.constant dense<0.000000e+00> : vector<24x288xf32>
    %9 = tpu.matmul %7, %8, %cst_7 {dimension_numbers = #tpu.dot_dimension_numbers<[1], [0], [0], [1], [0, 0, 1, 1], [], []>} : vector<24x16xbf16>, vector<16x288xbf16>, vector<24x288xf32> -> vector<24x288xf32>
    %10 = arith.addf %5, %9 : vector<24x288xf32>
    %c2 = arith.constant 2 : index
    %c0_8 = arith.constant 0 : index
    %c0_9 = arith.constant 0 : index
    %11 = vector.load %arg2[%c2, %c0_8, %c0_9] : memref<9x24x16xbf16, #tpu.memory_space<vmem>>, vector<1x24x16xbf16>
    %12 = vector.shape_cast %11 : vector<1x24x16xbf16> to vector<24x16xbf16>
    %13 = vector.extract_strided_slice %1 {offsets = [0, 2], sizes = [16, 288], strides = [1, 1]} : vector<16x320xbf16> to vector<16x288xbf16>
    %cst_10 = arith.constant dense<0.000000e+00> : vector<24x288xf32>
    %14 = tpu.matmul %12, %13, %cst_10 {dimension_numbers = #tpu.dot_dimension_numbers<[1], [0], [0], [1], [0, 0, 1, 1], [], []>} : vector<24x16xbf16>, vector<16x288xbf16>, vector<24x288xf32> -> vector<24x288xf32>
    %15 = arith.addf %10, %14 : vector<24x288xf32>
    %c3 = arith.constant 3 : index
    %c0_11 = arith.constant 0 : index
    %c0_12 = arith.constant 0 : index
    %16 = vector.load %arg2[%c3, %c0_11, %c0_12] : memref<9x24x16xbf16, #tpu.memory_space<vmem>>, vector<1x24x16xbf16>
    %17 = vector.shape_cast %16 : vector<1x24x16xbf16> to vector<24x16xbf16>
    %18 = vector.extract_strided_slice %1 {offsets = [0, 12], sizes = [16, 288], strides = [1, 1]} : vector<16x320xbf16> to vector<16x288xbf16>
    %cst_13 = arith.constant dense<0.000000e+00> : vector<24x288xf32>
    %19 = tpu.matmul %17, %18, %cst_13 {dimension_numbers = #tpu.dot_dimension_numbers<[1], [0], [0], [1], [0, 0, 1, 1], [], []>} : vector<24x16xbf16>, vector<16x288xbf16>, vector<24x288xf32> -> vector<24x288xf32>
    %20 = arith.addf %15, %19 : vector<24x288xf32>
    %c4 = arith.constant 4 : index
    %c0_14 = arith.constant 0 : index
    %c0_15 = arith.constant 0 : index
    %21 = vector.load %arg2[%c4, %c0_14, %c0_15] : memref<9x24x16xbf16, #tpu.memory_space<vmem>>, vector<1x24x16xbf16>
    %22 = vector.shape_cast %21 : vector<1x24x16xbf16> to vector<24x16xbf16>
    %23 = vector.extract_strided_slice %1 {offsets = [0, 13], sizes = [16, 288], strides = [1, 1]} : vector<16x320xbf16> to vector<16x288xbf16>
    %cst_16 = arith.constant dense<0.000000e+00> : vector<24x288xf32>
    %24 = tpu.matmul %22, %23, %cst_16 {dimension_numbers = #tpu.dot_dimension_numbers<[1], [0], [0], [1], [0, 0, 1, 1], [], []>} : vector<24x16xbf16>, vector<16x288xbf16>, vector<24x288xf32> -> vector<24x288xf32>
    %25 = arith.addf %20, %24 : vector<24x288xf32>
    %c5 = arith.constant 5 : index
    %c0_17 = arith.constant 0 : index
    %c0_18 = arith.constant 0 : index
    %26 = vector.load %arg2[%c5, %c0_17, %c0_18] : memref<9x24x16xbf16, #tpu.memory_space<vmem>>, vector<1x24x16xbf16>
    %27 = vector.shape_cast %26 : vector<1x24x16xbf16> to vector<24x16xbf16>
    %28 = vector.extract_strided_slice %1 {offsets = [0, 14], sizes = [16, 288], strides = [1, 1]} : vector<16x320xbf16> to vector<16x288xbf16>
    %cst_19 = arith.constant dense<0.000000e+00> : vector<24x288xf32>
    %29 = tpu.matmul %27, %28, %cst_19 {dimension_numbers = #tpu.dot_dimension_numbers<[1], [0], [0], [1], [0, 0, 1, 1], [], []>} : vector<24x16xbf16>, vector<16x288xbf16>, vector<24x288xf32> -> vector<24x288xf32>
    %30 = arith.addf %25, %29 : vector<24x288xf32>
    %c6 = arith.constant 6 : index
    %c0_20 = arith.constant 0 : index
    %c0_21 = arith.constant 0 : index
    %31 = vector.load %arg2[%c6, %c0_20, %c0_21] : memref<9x24x16xbf16, #tpu.memory_space<vmem>>, vector<1x24x16xbf16>
    %32 = vector.shape_cast %31 : vector<1x24x16xbf16> to vector<24x16xbf16>
    %33 = vector.extract_strided_slice %1 {offsets = [0, 24], sizes = [16, 288], strides = [1, 1]} : vector<16x320xbf16> to vector<16x288xbf16>
    %cst_22 = arith.constant dense<0.000000e+00> : vector<24x288xf32>
    %34 = tpu.matmul %32, %33, %cst_22 {dimension_numbers = #tpu.dot_dimension_numbers<[1], [0], [0], [1], [0, 0, 1, 1], [], []>} : vector<24x16xbf16>, vector<16x288xbf16>, vector<24x288xf32> -> vector<24x288xf32>
    %35 = arith.addf %30, %34 : vector<24x288xf32>
    %c7 = arith.constant 7 : index
    %c0_23 = arith.constant 0 : index
    %c0_24 = arith.constant 0 : index
    %36 = vector.load %arg2[%c7, %c0_23, %c0_24] : memref<9x24x16xbf16, #tpu.memory_space<vmem>>, vector<1x24x16xbf16>
    %37 = vector.shape_cast %36 : vector<1x24x16xbf16> to vector<24x16xbf16>
    %38 = vector.extract_strided_slice %1 {offsets = [0, 25], sizes = [16, 288], strides = [1, 1]} : vector<16x320xbf16> to vector<16x288xbf16>
    %cst_25 = arith.constant dense<0.000000e+00> : vector<24x288xf32>
    %39 = tpu.matmul %37, %38, %cst_25 {dimension_numbers = #tpu.dot_dimension_numbers<[1], [0], [0], [1], [0, 0, 1, 1], [], []>} : vector<24x16xbf16>, vector<16x288xbf16>, vector<24x288xf32> -> vector<24x288xf32>
    %40 = arith.addf %35, %39 : vector<24x288xf32>
    %c8 = arith.constant 8 : index
    %c0_26 = arith.constant 0 : index
    %c0_27 = arith.constant 0 : index
    %41 = vector.load %arg2[%c8, %c0_26, %c0_27] : memref<9x24x16xbf16, #tpu.memory_space<vmem>>, vector<1x24x16xbf16>
    %42 = vector.shape_cast %41 : vector<1x24x16xbf16> to vector<24x16xbf16>
    %43 = vector.extract_strided_slice %1 {offsets = [0, 26], sizes = [16, 288], strides = [1, 1]} : vector<16x320xbf16> to vector<16x288xbf16>
    %cst_28 = arith.constant dense<0.000000e+00> : vector<24x288xf32>
    %44 = tpu.matmul %42, %43, %cst_28 {dimension_numbers = #tpu.dot_dimension_numbers<[1], [0], [0], [1], [0, 0, 1, 1], [], []>} : vector<24x16xbf16>, vector<16x288xbf16>, vector<24x288xf32> -> vector<24x288xf32>
    %45 = arith.addf %40, %44 : vector<24x288xf32>
    %c0_29 = arith.constant 0 : index
    %c0_30 = arith.constant 0 : index
    %46 = vector.load %arg3[%c0_29, %c0_30] : memref<24x1xf32, #tpu.memory_space<vmem>>, vector<24x1xf32>
    %47 = vector.broadcast %46 : vector<24x1xf32> to vector<24x288xf32>
    %48 = arith.addf %45, %47 : vector<24x288xf32>
    %cst_31 = arith.constant 0.000000e+00 : f32
    %49 = vector.broadcast %cst_31 : f32 to vector<24x288xf32>
    %50 = arith.cmpf oge, %48, %49 : vector<24x288xf32>
    %51 = vector.broadcast %0 : f32 to vector<24x288xf32>
    %52 = arith.mulf %51, %48 : vector<24x288xf32>
    %53 = arith.select %50, %48, %52 : vector<24x288xi1>, vector<24x288xf32>
    %cst_32 = arith.constant 0.000000e+00 : f32
    %54 = vector.broadcast %cst_32 : f32 to vector<24x32xf32>
    %55 = tpu.concatenate %53, %54 in 1 : vector<24x288xf32>, vector<24x32xf32> -> vector<24x320xf32>
    %56 = arith.truncf %55 : vector<24x320xf32> to vector<24x320xbf16>
    %c0_33 = arith.constant 0 : index
    %c0_34 = arith.constant 0 : index
    %c0_35 = arith.constant 0 : index
    %57 = vector.load %arg4[%c0_33, %c0_34, %c0_35] : memref<9x24x24xbf16, #tpu.memory_space<vmem>>, vector<1x24x24xbf16>
    %58 = vector.shape_cast %57 : vector<1x24x24xbf16> to vector<24x24xbf16>
    %59 = vector.extract_strided_slice %56 {offsets = [0, 0], sizes = [24, 288], strides = [1, 1]} : vector<24x320xbf16> to vector<24x288xbf16>
    %cst_36 = arith.constant dense<0.000000e+00> : vector<24x288xf32>
    %60 = tpu.matmul %58, %59, %cst_36 {dimension_numbers = #tpu.dot_dimension_numbers<[1], [0], [0], [1], [0, 0, 1, 1], [], []>} : vector<24x24xbf16>, vector<24x288xbf16>, vector<24x288xf32> -> vector<24x288xf32>
    %c1_37 = arith.constant 1 : index
    %c0_38 = arith.constant 0 : index
    %c0_39 = arith.constant 0 : index
    %61 = vector.load %arg4[%c1_37, %c0_38, %c0_39] : memref<9x24x24xbf16, #tpu.memory_space<vmem>>, vector<1x24x24xbf16>
    %62 = vector.shape_cast %61 : vector<1x24x24xbf16> to vector<24x24xbf16>
    %63 = vector.extract_strided_slice %56 {offsets = [0, 1], sizes = [24, 288], strides = [1, 1]} : vector<24x320xbf16> to vector<24x288xbf16>
    %cst_40 = arith.constant dense<0.000000e+00> : vector<24x288xf32>
    %64 = tpu.matmul %62, %63, %cst_40 {dimension_numbers = #tpu.dot_dimension_numbers<[1], [0], [0], [1], [0, 0, 1, 1], [], []>} : vector<24x24xbf16>, vector<24x288xbf16>, vector<24x288xf32> -> vector<24x288xf32>
    %65 = arith.addf %60, %64 : vector<24x288xf32>
    %c2_41 = arith.constant 2 : index
    %c0_42 = arith.constant 0 : index
    %c0_43 = arith.constant 0 : index
    %66 = vector.load %arg4[%c2_41, %c0_42, %c0_43] : memref<9x24x24xbf16, #tpu.memory_space<vmem>>, vector<1x24x24xbf16>
    %67 = vector.shape_cast %66 : vector<1x24x24xbf16> to vector<24x24xbf16>
    %68 = vector.extract_strided_slice %56 {offsets = [0, 2], sizes = [24, 288], strides = [1, 1]} : vector<24x320xbf16> to vector<24x288xbf16>
    %cst_44 = arith.constant dense<0.000000e+00> : vector<24x288xf32>
    %69 = tpu.matmul %67, %68, %cst_44 {dimension_numbers = #tpu.dot_dimension_numbers<[1], [0], [0], [1], [0, 0, 1, 1], [], []>} : vector<24x24xbf16>, vector<24x288xbf16>, vector<24x288xf32> -> vector<24x288xf32>
    %70 = arith.addf %65, %69 : vector<24x288xf32>
    %c3_45 = arith.constant 3 : index
    %c0_46 = arith.constant 0 : index
    %c0_47 = arith.constant 0 : index
    %71 = vector.load %arg4[%c3_45, %c0_46, %c0_47] : memref<9x24x24xbf16, #tpu.memory_space<vmem>>, vector<1x24x24xbf16>
    %72 = vector.shape_cast %71 : vector<1x24x24xbf16> to vector<24x24xbf16>
    %73 = vector.extract_strided_slice %56 {offsets = [0, 12], sizes = [24, 288], strides = [1, 1]} : vector<24x320xbf16> to vector<24x288xbf16>
    %cst_48 = arith.constant dense<0.000000e+00> : vector<24x288xf32>
    %74 = tpu.matmul %72, %73, %cst_48 {dimension_numbers = #tpu.dot_dimension_numbers<[1], [0], [0], [1], [0, 0, 1, 1], [], []>} : vector<24x24xbf16>, vector<24x288xbf16>, vector<24x288xf32> -> vector<24x288xf32>
    %75 = arith.addf %70, %74 : vector<24x288xf32>
    %c4_49 = arith.constant 4 : index
    %c0_50 = arith.constant 0 : index
    %c0_51 = arith.constant 0 : index
    %76 = vector.load %arg4[%c4_49, %c0_50, %c0_51] : memref<9x24x24xbf16, #tpu.memory_space<vmem>>, vector<1x24x24xbf16>
    %77 = vector.shape_cast %76 : vector<1x24x24xbf16> to vector<24x24xbf16>
    %78 = vector.extract_strided_slice %56 {offsets = [0, 13], sizes = [24, 288], strides = [1, 1]} : vector<24x320xbf16> to vector<24x288xbf16>
    %cst_52 = arith.constant dense<0.000000e+00> : vector<24x288xf32>
    %79 = tpu.matmul %77, %78, %cst_52 {dimension_numbers = #tpu.dot_dimension_numbers<[1], [0], [0], [1], [0, 0, 1, 1], [], []>} : vector<24x24xbf16>, vector<24x288xbf16>, vector<24x288xf32> -> vector<24x288xf32>
    %80 = arith.addf %75, %79 : vector<24x288xf32>
    %c5_53 = arith.constant 5 : index
    %c0_54 = arith.constant 0 : index
    %c0_55 = arith.constant 0 : index
    %81 = vector.load %arg4[%c5_53, %c0_54, %c0_55] : memref<9x24x24xbf16, #tpu.memory_space<vmem>>, vector<1x24x24xbf16>
    %82 = vector.shape_cast %81 : vector<1x24x24xbf16> to vector<24x24xbf16>
    %83 = vector.extract_strided_slice %56 {offsets = [0, 14], sizes = [24, 288], strides = [1, 1]} : vector<24x320xbf16> to vector<24x288xbf16>
    %cst_56 = arith.constant dense<0.000000e+00> : vector<24x288xf32>
    %84 = tpu.matmul %82, %83, %cst_56 {dimension_numbers = #tpu.dot_dimension_numbers<[1], [0], [0], [1], [0, 0, 1, 1], [], []>} : vector<24x24xbf16>, vector<24x288xbf16>, vector<24x288xf32> -> vector<24x288xf32>
    %85 = arith.addf %80, %84 : vector<24x288xf32>
    %c6_57 = arith.constant 6 : index
    %c0_58 = arith.constant 0 : index
    %c0_59 = arith.constant 0 : index
    %86 = vector.load %arg4[%c6_57, %c0_58, %c0_59] : memref<9x24x24xbf16, #tpu.memory_space<vmem>>, vector<1x24x24xbf16>
    %87 = vector.shape_cast %86 : vector<1x24x24xbf16> to vector<24x24xbf16>
    %88 = vector.extract_strided_slice %56 {offsets = [0, 24], sizes = [24, 288], strides = [1, 1]} : vector<24x320xbf16> to vector<24x288xbf16>
    %cst_60 = arith.constant dense<0.000000e+00> : vector<24x288xf32>
    %89 = tpu.matmul %87, %88, %cst_60 {dimension_numbers = #tpu.dot_dimension_numbers<[1], [0], [0], [1], [0, 0, 1, 1], [], []>} : vector<24x24xbf16>, vector<24x288xbf16>, vector<24x288xf32> -> vector<24x288xf32>
    %90 = arith.addf %85, %89 : vector<24x288xf32>
    %c7_61 = arith.constant 7 : index
    %c0_62 = arith.constant 0 : index
    %c0_63 = arith.constant 0 : index
    %91 = vector.load %arg4[%c7_61, %c0_62, %c0_63] : memref<9x24x24xbf16, #tpu.memory_space<vmem>>, vector<1x24x24xbf16>
    %92 = vector.shape_cast %91 : vector<1x24x24xbf16> to vector<24x24xbf16>
    %93 = vector.extract_strided_slice %56 {offsets = [0, 25], sizes = [24, 288], strides = [1, 1]} : vector<24x320xbf16> to vector<24x288xbf16>
    %cst_64 = arith.constant dense<0.000000e+00> : vector<24x288xf32>
    %94 = tpu.matmul %92, %93, %cst_64 {dimension_numbers = #tpu.dot_dimension_numbers<[1], [0], [0], [1], [0, 0, 1, 1], [], []>} : vector<24x24xbf16>, vector<24x288xbf16>, vector<24x288xf32> -> vector<24x288xf32>
    %95 = arith.addf %90, %94 : vector<24x288xf32>
    %c8_65 = arith.constant 8 : index
    %c0_66 = arith.constant 0 : index
    %c0_67 = arith.constant 0 : index
    %96 = vector.load %arg4[%c8_65, %c0_66, %c0_67] : memref<9x24x24xbf16, #tpu.memory_space<vmem>>, vector<1x24x24xbf16>
    %97 = vector.shape_cast %96 : vector<1x24x24xbf16> to vector<24x24xbf16>
    %98 = vector.extract_strided_slice %56 {offsets = [0, 26], sizes = [24, 288], strides = [1, 1]} : vector<24x320xbf16> to vector<24x288xbf16>
    %cst_68 = arith.constant dense<0.000000e+00> : vector<24x288xf32>
    %99 = tpu.matmul %97, %98, %cst_68 {dimension_numbers = #tpu.dot_dimension_numbers<[1], [0], [0], [1], [0, 0, 1, 1], [], []>} : vector<24x24xbf16>, vector<24x288xbf16>, vector<24x288xf32> -> vector<24x288xf32>
    %100 = arith.addf %95, %99 : vector<24x288xf32>
    %c0_69 = arith.constant 0 : index
    %c0_70 = arith.constant 0 : index
    %101 = vector.load %arg5[%c0_69, %c0_70] : memref<24x1xf32, #tpu.memory_space<vmem>>, vector<24x1xf32>
    %102 = vector.broadcast %101 : vector<24x1xf32> to vector<24x288xf32>
    %103 = arith.addf %100, %102 : vector<24x288xf32>
    %cst_71 = arith.constant 0.000000e+00 : f32
    %104 = vector.broadcast %cst_71 : f32 to vector<24x288xf32>
    %105 = arith.cmpf oge, %103, %104 : vector<24x288xf32>
    %106 = vector.broadcast %0 : f32 to vector<24x288xf32>
    %107 = arith.mulf %106, %103 : vector<24x288xf32>
    %108 = arith.select %105, %103, %107 : vector<24x288xi1>, vector<24x288xf32>
    %cst_72 = arith.constant 0.000000e+00 : f32
    %109 = vector.broadcast %cst_72 : f32 to vector<24x6xf32>
    %cst_73 = arith.constant 0.000000e+00 : f32
    %110 = vector.broadcast %cst_73 : f32 to vector<24x1xf32>
    %111 = vector.extract_strided_slice %108 {offsets = [0, 0], sizes = [24, 8], strides = [1, 1]} : vector<24x288xf32> to vector<24x8xf32>
    %112 = vector.extract_strided_slice %108 {offsets = [0, 12], sizes = [24, 8], strides = [1, 1]} : vector<24x288xf32> to vector<24x8xf32>
    %113 = arith.addf %111, %112 : vector<24x8xf32>
    %114 = vector.extract_strided_slice %113 {offsets = [0, 0], sizes = [24, 1], strides = [1, 1]} : vector<24x8xf32> to vector<24x1xf32>
    %115 = vector.extract_strided_slice %113 {offsets = [0, 1], sizes = [24, 1], strides = [1, 1]} : vector<24x8xf32> to vector<24x1xf32>
    %116 = arith.addf %114, %115 : vector<24x1xf32>
    %117 = vector.extract_strided_slice %113 {offsets = [0, 2], sizes = [24, 1], strides = [1, 1]} : vector<24x8xf32> to vector<24x1xf32>
    %118 = vector.extract_strided_slice %113 {offsets = [0, 3], sizes = [24, 1], strides = [1, 1]} : vector<24x8xf32> to vector<24x1xf32>
    %119 = arith.addf %117, %118 : vector<24x1xf32>
    %120 = vector.extract_strided_slice %113 {offsets = [0, 4], sizes = [24, 1], strides = [1, 1]} : vector<24x8xf32> to vector<24x1xf32>
    %121 = vector.extract_strided_slice %113 {offsets = [0, 5], sizes = [24, 1], strides = [1, 1]} : vector<24x8xf32> to vector<24x1xf32>
    %122 = arith.addf %120, %121 : vector<24x1xf32>
    %123 = vector.extract_strided_slice %113 {offsets = [0, 6], sizes = [24, 1], strides = [1, 1]} : vector<24x8xf32> to vector<24x1xf32>
    %124 = vector.extract_strided_slice %113 {offsets = [0, 7], sizes = [24, 1], strides = [1, 1]} : vector<24x8xf32> to vector<24x1xf32>
    %125 = arith.addf %123, %124 : vector<24x1xf32>
    %126 = tpu.concatenate %116, %119, %122, %125 in 1 : vector<24x1xf32>, vector<24x1xf32>, vector<24x1xf32>, vector<24x1xf32> -> vector<24x4xf32>
    %cst_74 = arith.constant 2.500000e-01 : f32
    %127 = vector.broadcast %cst_74 : f32 to vector<24x4xf32>
    %128 = arith.mulf %126, %127 : vector<24x4xf32>
    %129 = vector.extract_strided_slice %108 {offsets = [0, 24], sizes = [24, 8], strides = [1, 1]} : vector<24x288xf32> to vector<24x8xf32>
    %130 = vector.extract_strided_slice %108 {offsets = [0, 36], sizes = [24, 8], strides = [1, 1]} : vector<24x288xf32> to vector<24x8xf32>
    %131 = arith.addf %129, %130 : vector<24x8xf32>
    %132 = vector.extract_strided_slice %131 {offsets = [0, 0], sizes = [24, 1], strides = [1, 1]} : vector<24x8xf32> to vector<24x1xf32>
    %133 = vector.extract_strided_slice %131 {offsets = [0, 1], sizes = [24, 1], strides = [1, 1]} : vector<24x8xf32> to vector<24x1xf32>
    %134 = arith.addf %132, %133 : vector<24x1xf32>
    %135 = vector.extract_strided_slice %131 {offsets = [0, 2], sizes = [24, 1], strides = [1, 1]} : vector<24x8xf32> to vector<24x1xf32>
    %136 = vector.extract_strided_slice %131 {offsets = [0, 3], sizes = [24, 1], strides = [1, 1]} : vector<24x8xf32> to vector<24x1xf32>
    %137 = arith.addf %135, %136 : vector<24x1xf32>
    %138 = vector.extract_strided_slice %131 {offsets = [0, 4], sizes = [24, 1], strides = [1, 1]} : vector<24x8xf32> to vector<24x1xf32>
    %139 = vector.extract_strided_slice %131 {offsets = [0, 5], sizes = [24, 1], strides = [1, 1]} : vector<24x8xf32> to vector<24x1xf32>
    %140 = arith.addf %138, %139 : vector<24x1xf32>
    %141 = vector.extract_strided_slice %131 {offsets = [0, 6], sizes = [24, 1], strides = [1, 1]} : vector<24x8xf32> to vector<24x1xf32>
    %142 = vector.extract_strided_slice %131 {offsets = [0, 7], sizes = [24, 1], strides = [1, 1]} : vector<24x8xf32> to vector<24x1xf32>
    %143 = arith.addf %141, %142 : vector<24x1xf32>
    %144 = tpu.concatenate %134, %137, %140, %143 in 1 : vector<24x1xf32>, vector<24x1xf32>, vector<24x1xf32>, vector<24x1xf32> -> vector<24x4xf32>
    %cst_75 = arith.constant 2.500000e-01 : f32
    %145 = vector.broadcast %cst_75 : f32 to vector<24x4xf32>
    %146 = arith.mulf %144, %145 : vector<24x4xf32>
    %147 = vector.extract_strided_slice %108 {offsets = [0, 48], sizes = [24, 8], strides = [1, 1]} : vector<24x288xf32> to vector<24x8xf32>
    %148 = vector.extract_strided_slice %108 {offsets = [0, 60], sizes = [24, 8], strides = [1, 1]} : vector<24x288xf32> to vector<24x8xf32>
    %149 = arith.addf %147, %148 : vector<24x8xf32>
    %150 = vector.extract_strided_slice %149 {offsets = [0, 0], sizes = [24, 1], strides = [1, 1]} : vector<24x8xf32> to vector<24x1xf32>
    %151 = vector.extract_strided_slice %149 {offsets = [0, 1], sizes = [24, 1], strides = [1, 1]} : vector<24x8xf32> to vector<24x1xf32>
    %152 = arith.addf %150, %151 : vector<24x1xf32>
    %153 = vector.extract_strided_slice %149 {offsets = [0, 2], sizes = [24, 1], strides = [1, 1]} : vector<24x8xf32> to vector<24x1xf32>
    %154 = vector.extract_strided_slice %149 {offsets = [0, 3], sizes = [24, 1], strides = [1, 1]} : vector<24x8xf32> to vector<24x1xf32>
    %155 = arith.addf %153, %154 : vector<24x1xf32>
    %156 = vector.extract_strided_slice %149 {offsets = [0, 4], sizes = [24, 1], strides = [1, 1]} : vector<24x8xf32> to vector<24x1xf32>
    %157 = vector.extract_strided_slice %149 {offsets = [0, 5], sizes = [24, 1], strides = [1, 1]} : vector<24x8xf32> to vector<24x1xf32>
    %158 = arith.addf %156, %157 : vector<24x1xf32>
    %159 = vector.extract_strided_slice %149 {offsets = [0, 6], sizes = [24, 1], strides = [1, 1]} : vector<24x8xf32> to vector<24x1xf32>
    %160 = vector.extract_strided_slice %149 {offsets = [0, 7], sizes = [24, 1], strides = [1, 1]} : vector<24x8xf32> to vector<24x1xf32>
    %161 = arith.addf %159, %160 : vector<24x1xf32>
    %162 = tpu.concatenate %152, %155, %158, %161 in 1 : vector<24x1xf32>, vector<24x1xf32>, vector<24x1xf32>, vector<24x1xf32> -> vector<24x4xf32>
    %cst_76 = arith.constant 2.500000e-01 : f32
    %163 = vector.broadcast %cst_76 : f32 to vector<24x4xf32>
    %164 = arith.mulf %162, %163 : vector<24x4xf32>
    %165 = vector.extract_strided_slice %108 {offsets = [0, 72], sizes = [24, 8], strides = [1, 1]} : vector<24x288xf32> to vector<24x8xf32>
    %166 = vector.extract_strided_slice %108 {offsets = [0, 84], sizes = [24, 8], strides = [1, 1]} : vector<24x288xf32> to vector<24x8xf32>
    %167 = arith.addf %165, %166 : vector<24x8xf32>
    %168 = vector.extract_strided_slice %167 {offsets = [0, 0], sizes = [24, 1], strides = [1, 1]} : vector<24x8xf32> to vector<24x1xf32>
    %169 = vector.extract_strided_slice %167 {offsets = [0, 1], sizes = [24, 1], strides = [1, 1]} : vector<24x8xf32> to vector<24x1xf32>
    %170 = arith.addf %168, %169 : vector<24x1xf32>
    %171 = vector.extract_strided_slice %167 {offsets = [0, 2], sizes = [24, 1], strides = [1, 1]} : vector<24x8xf32> to vector<24x1xf32>
    %172 = vector.extract_strided_slice %167 {offsets = [0, 3], sizes = [24, 1], strides = [1, 1]} : vector<24x8xf32> to vector<24x1xf32>
    %173 = arith.addf %171, %172 : vector<24x1xf32>
    %174 = vector.extract_strided_slice %167 {offsets = [0, 4], sizes = [24, 1], strides = [1, 1]} : vector<24x8xf32> to vector<24x1xf32>
    %175 = vector.extract_strided_slice %167 {offsets = [0, 5], sizes = [24, 1], strides = [1, 1]} : vector<24x8xf32> to vector<24x1xf32>
    %176 = arith.addf %174, %175 : vector<24x1xf32>
    %177 = vector.extract_strided_slice %167 {offsets = [0, 6], sizes = [24, 1], strides = [1, 1]} : vector<24x8xf32> to vector<24x1xf32>
    %178 = vector.extract_strided_slice %167 {offsets = [0, 7], sizes = [24, 1], strides = [1, 1]} : vector<24x8xf32> to vector<24x1xf32>
    %179 = arith.addf %177, %178 : vector<24x1xf32>
    %180 = tpu.concatenate %170, %173, %176, %179 in 1 : vector<24x1xf32>, vector<24x1xf32>, vector<24x1xf32>, vector<24x1xf32> -> vector<24x4xf32>
    %cst_77 = arith.constant 2.500000e-01 : f32
    %181 = vector.broadcast %cst_77 : f32 to vector<24x4xf32>
    %182 = arith.mulf %180, %181 : vector<24x4xf32>
    %183 = vector.extract_strided_slice %108 {offsets = [0, 144], sizes = [24, 8], strides = [1, 1]} : vector<24x288xf32> to vector<24x8xf32>
    %184 = vector.extract_strided_slice %108 {offsets = [0, 156], sizes = [24, 8], strides = [1, 1]} : vector<24x288xf32> to vector<24x8xf32>
    %185 = arith.addf %183, %184 : vector<24x8xf32>
    %186 = vector.extract_strided_slice %185 {offsets = [0, 0], sizes = [24, 1], strides = [1, 1]} : vector<24x8xf32> to vector<24x1xf32>
    %187 = vector.extract_strided_slice %185 {offsets = [0, 1], sizes = [24, 1], strides = [1, 1]} : vector<24x8xf32> to vector<24x1xf32>
    %188 = arith.addf %186, %187 : vector<24x1xf32>
    %189 = vector.extract_strided_slice %185 {offsets = [0, 2], sizes = [24, 1], strides = [1, 1]} : vector<24x8xf32> to vector<24x1xf32>
    %190 = vector.extract_strided_slice %185 {offsets = [0, 3], sizes = [24, 1], strides = [1, 1]} : vector<24x8xf32> to vector<24x1xf32>
    %191 = arith.addf %189, %190 : vector<24x1xf32>
    %192 = vector.extract_strided_slice %185 {offsets = [0, 4], sizes = [24, 1], strides = [1, 1]} : vector<24x8xf32> to vector<24x1xf32>
    %193 = vector.extract_strided_slice %185 {offsets = [0, 5], sizes = [24, 1], strides = [1, 1]} : vector<24x8xf32> to vector<24x1xf32>
    %194 = arith.addf %192, %193 : vector<24x1xf32>
    %195 = vector.extract_strided_slice %185 {offsets = [0, 6], sizes = [24, 1], strides = [1, 1]} : vector<24x8xf32> to vector<24x1xf32>
    %196 = vector.extract_strided_slice %185 {offsets = [0, 7], sizes = [24, 1], strides = [1, 1]} : vector<24x8xf32> to vector<24x1xf32>
    %197 = arith.addf %195, %196 : vector<24x1xf32>
    %198 = tpu.concatenate %188, %191, %194, %197 in 1 : vector<24x1xf32>, vector<24x1xf32>, vector<24x1xf32>, vector<24x1xf32> -> vector<24x4xf32>
    %cst_78 = arith.constant 2.500000e-01 : f32
    %199 = vector.broadcast %cst_78 : f32 to vector<24x4xf32>
    %200 = arith.mulf %198, %199 : vector<24x4xf32>
    %201 = vector.extract_strided_slice %108 {offsets = [0, 168], sizes = [24, 8], strides = [1, 1]} : vector<24x288xf32> to vector<24x8xf32>
    %202 = vector.extract_strided_slice %108 {offsets = [0, 180], sizes = [24, 8], strides = [1, 1]} : vector<24x288xf32> to vector<24x8xf32>
    %203 = arith.addf %201, %202 : vector<24x8xf32>
    %204 = vector.extract_strided_slice %203 {offsets = [0, 0], sizes = [24, 1], strides = [1, 1]} : vector<24x8xf32> to vector<24x1xf32>
    %205 = vector.extract_strided_slice %203 {offsets = [0, 1], sizes = [24, 1], strides = [1, 1]} : vector<24x8xf32> to vector<24x1xf32>
    %206 = arith.addf %204, %205 : vector<24x1xf32>
    %207 = vector.extract_strided_slice %203 {offsets = [0, 2], sizes = [24, 1], strides = [1, 1]} : vector<24x8xf32> to vector<24x1xf32>
    %208 = vector.extract_strided_slice %203 {offsets = [0, 3], sizes = [24, 1], strides = [1, 1]} : vector<24x8xf32> to vector<24x1xf32>
    %209 = arith.addf %207, %208 : vector<24x1xf32>
    %210 = vector.extract_strided_slice %203 {offsets = [0, 4], sizes = [24, 1], strides = [1, 1]} : vector<24x8xf32> to vector<24x1xf32>
    %211 = vector.extract_strided_slice %203 {offsets = [0, 5], sizes = [24, 1], strides = [1, 1]} : vector<24x8xf32> to vector<24x1xf32>
    %212 = arith.addf %210, %211 : vector<24x1xf32>
    %213 = vector.extract_strided_slice %203 {offsets = [0, 6], sizes = [24, 1], strides = [1, 1]} : vector<24x8xf32> to vector<24x1xf32>
    %214 = vector.extract_strided_slice %203 {offsets = [0, 7], sizes = [24, 1], strides = [1, 1]} : vector<24x8xf32> to vector<24x1xf32>
    %215 = arith.addf %213, %214 : vector<24x1xf32>
    %216 = tpu.concatenate %206, %209, %212, %215 in 1 : vector<24x1xf32>, vector<24x1xf32>, vector<24x1xf32>, vector<24x1xf32> -> vector<24x4xf32>
    %cst_79 = arith.constant 2.500000e-01 : f32
    %217 = vector.broadcast %cst_79 : f32 to vector<24x4xf32>
    %218 = arith.mulf %216, %217 : vector<24x4xf32>
    %219 = vector.extract_strided_slice %108 {offsets = [0, 192], sizes = [24, 8], strides = [1, 1]} : vector<24x288xf32> to vector<24x8xf32>
    %220 = vector.extract_strided_slice %108 {offsets = [0, 204], sizes = [24, 8], strides = [1, 1]} : vector<24x288xf32> to vector<24x8xf32>
    %221 = arith.addf %219, %220 : vector<24x8xf32>
    %222 = vector.extract_strided_slice %221 {offsets = [0, 0], sizes = [24, 1], strides = [1, 1]} : vector<24x8xf32> to vector<24x1xf32>
    %223 = vector.extract_strided_slice %221 {offsets = [0, 1], sizes = [24, 1], strides = [1, 1]} : vector<24x8xf32> to vector<24x1xf32>
    %224 = arith.addf %222, %223 : vector<24x1xf32>
    %225 = vector.extract_strided_slice %221 {offsets = [0, 2], sizes = [24, 1], strides = [1, 1]} : vector<24x8xf32> to vector<24x1xf32>
    %226 = vector.extract_strided_slice %221 {offsets = [0, 3], sizes = [24, 1], strides = [1, 1]} : vector<24x8xf32> to vector<24x1xf32>
    %227 = arith.addf %225, %226 : vector<24x1xf32>
    %228 = vector.extract_strided_slice %221 {offsets = [0, 4], sizes = [24, 1], strides = [1, 1]} : vector<24x8xf32> to vector<24x1xf32>
    %229 = vector.extract_strided_slice %221 {offsets = [0, 5], sizes = [24, 1], strides = [1, 1]} : vector<24x8xf32> to vector<24x1xf32>
    %230 = arith.addf %228, %229 : vector<24x1xf32>
    %231 = vector.extract_strided_slice %221 {offsets = [0, 6], sizes = [24, 1], strides = [1, 1]} : vector<24x8xf32> to vector<24x1xf32>
    %232 = vector.extract_strided_slice %221 {offsets = [0, 7], sizes = [24, 1], strides = [1, 1]} : vector<24x8xf32> to vector<24x1xf32>
    %233 = arith.addf %231, %232 : vector<24x1xf32>
    %234 = tpu.concatenate %224, %227, %230, %233 in 1 : vector<24x1xf32>, vector<24x1xf32>, vector<24x1xf32>, vector<24x1xf32> -> vector<24x4xf32>
    %cst_80 = arith.constant 2.500000e-01 : f32
    %235 = vector.broadcast %cst_80 : f32 to vector<24x4xf32>
    %236 = arith.mulf %234, %235 : vector<24x4xf32>
    %237 = vector.extract_strided_slice %108 {offsets = [0, 216], sizes = [24, 8], strides = [1, 1]} : vector<24x288xf32> to vector<24x8xf32>
    %238 = vector.extract_strided_slice %108 {offsets = [0, 228], sizes = [24, 8], strides = [1, 1]} : vector<24x288xf32> to vector<24x8xf32>
    %239 = arith.addf %237, %238 : vector<24x8xf32>
    %240 = vector.extract_strided_slice %239 {offsets = [0, 0], sizes = [24, 1], strides = [1, 1]} : vector<24x8xf32> to vector<24x1xf32>
    %241 = vector.extract_strided_slice %239 {offsets = [0, 1], sizes = [24, 1], strides = [1, 1]} : vector<24x8xf32> to vector<24x1xf32>
    %242 = arith.addf %240, %241 : vector<24x1xf32>
    %243 = vector.extract_strided_slice %239 {offsets = [0, 2], sizes = [24, 1], strides = [1, 1]} : vector<24x8xf32> to vector<24x1xf32>
    %244 = vector.extract_strided_slice %239 {offsets = [0, 3], sizes = [24, 1], strides = [1, 1]} : vector<24x8xf32> to vector<24x1xf32>
    %245 = arith.addf %243, %244 : vector<24x1xf32>
    %246 = vector.extract_strided_slice %239 {offsets = [0, 4], sizes = [24, 1], strides = [1, 1]} : vector<24x8xf32> to vector<24x1xf32>
    %247 = vector.extract_strided_slice %239 {offsets = [0, 5], sizes = [24, 1], strides = [1, 1]} : vector<24x8xf32> to vector<24x1xf32>
    %248 = arith.addf %246, %247 : vector<24x1xf32>
    %249 = vector.extract_strided_slice %239 {offsets = [0, 6], sizes = [24, 1], strides = [1, 1]} : vector<24x8xf32> to vector<24x1xf32>
    %250 = vector.extract_strided_slice %239 {offsets = [0, 7], sizes = [24, 1], strides = [1, 1]} : vector<24x8xf32> to vector<24x1xf32>
    %251 = arith.addf %249, %250 : vector<24x1xf32>
    %252 = tpu.concatenate %242, %245, %248, %251 in 1 : vector<24x1xf32>, vector<24x1xf32>, vector<24x1xf32>, vector<24x1xf32> -> vector<24x4xf32>
    %cst_81 = arith.constant 2.500000e-01 : f32
    %253 = vector.broadcast %cst_81 : f32 to vector<24x4xf32>
    %254 = arith.mulf %252, %253 : vector<24x4xf32>
    %cst_82 = arith.constant 0.000000e+00 : f32
    %255 = vector.broadcast %cst_82 : f32 to vector<24x24xf32>
    %256 = tpu.concatenate %109, %110, %128, %110, %110, %146, %110, %110, %164, %110, %110, %182, %110, %109, %109, %110 in 1 : vector<24x6xf32>, vector<24x1xf32>, vector<24x4xf32>, vector<24x1xf32>, vector<24x1xf32>, vector<24x4xf32>, vector<24x1xf32>, vector<24x1xf32>, vector<24x4xf32>, vector<24x1xf32>, vector<24x1xf32>, vector<24x4xf32>, vector<24x1xf32>, vector<24x6xf32>, vector<24x6xf32>, vector<24x1xf32> -> vector<24x43xf32>
    %257 = tpu.concatenate %200, %110, %110, %218, %110, %110, %236, %110, %110, %254, %110, %109, %255 in 1 : vector<24x4xf32>, vector<24x1xf32>, vector<24x1xf32>, vector<24x4xf32>, vector<24x1xf32>, vector<24x1xf32>, vector<24x4xf32>, vector<24x1xf32>, vector<24x1xf32>, vector<24x4xf32>, vector<24x1xf32>, vector<24x6xf32>, vector<24x24xf32> -> vector<24x53xf32>
    %258 = tpu.concatenate %256, %257 in 1 : vector<24x43xf32>, vector<24x53xf32> -> vector<24x96xf32>
    %259 = arith.truncf %258 : vector<24x96xf32> to vector<24x96xbf16>
    %c0_83 = arith.constant 0 : index
    %c0_84 = arith.constant 0 : index
    %c0_85 = arith.constant 0 : index
    %260 = vector.load %arg6[%c0_83, %c0_84, %c0_85] : memref<9x40x24xbf16, #tpu.memory_space<vmem>>, vector<1x40x24xbf16>
    %261 = vector.shape_cast %260 : vector<1x40x24xbf16> to vector<40x24xbf16>
    %262 = vector.extract_strided_slice %259 {offsets = [0, 0], sizes = [24, 72], strides = [1, 1]} : vector<24x96xbf16> to vector<24x72xbf16>
    %cst_86 = arith.constant dense<0.000000e+00> : vector<40x72xf32>
    %263 = tpu.matmul %261, %262, %cst_86 {dimension_numbers = #tpu.dot_dimension_numbers<[1], [0], [0], [1], [0, 0, 1, 1], [], []>} : vector<40x24xbf16>, vector<24x72xbf16>, vector<40x72xf32> -> vector<40x72xf32>
    %c1_87 = arith.constant 1 : index
    %c0_88 = arith.constant 0 : index
    %c0_89 = arith.constant 0 : index
    %264 = vector.load %arg6[%c1_87, %c0_88, %c0_89] : memref<9x40x24xbf16, #tpu.memory_space<vmem>>, vector<1x40x24xbf16>
    %265 = vector.shape_cast %264 : vector<1x40x24xbf16> to vector<40x24xbf16>
    %266 = vector.extract_strided_slice %259 {offsets = [0, 1], sizes = [24, 72], strides = [1, 1]} : vector<24x96xbf16> to vector<24x72xbf16>
    %cst_90 = arith.constant dense<0.000000e+00> : vector<40x72xf32>
    %267 = tpu.matmul %265, %266, %cst_90 {dimension_numbers = #tpu.dot_dimension_numbers<[1], [0], [0], [1], [0, 0, 1, 1], [], []>} : vector<40x24xbf16>, vector<24x72xbf16>, vector<40x72xf32> -> vector<40x72xf32>
    %268 = arith.addf %263, %267 : vector<40x72xf32>
    %c2_91 = arith.constant 2 : index
    %c0_92 = arith.constant 0 : index
    %c0_93 = arith.constant 0 : index
    %269 = vector.load %arg6[%c2_91, %c0_92, %c0_93] : memref<9x40x24xbf16, #tpu.memory_space<vmem>>, vector<1x40x24xbf16>
    %270 = vector.shape_cast %269 : vector<1x40x24xbf16> to vector<40x24xbf16>
    %271 = vector.extract_strided_slice %259 {offsets = [0, 2], sizes = [24, 72], strides = [1, 1]} : vector<24x96xbf16> to vector<24x72xbf16>
    %cst_94 = arith.constant dense<0.000000e+00> : vector<40x72xf32>
    %272 = tpu.matmul %270, %271, %cst_94 {dimension_numbers = #tpu.dot_dimension_numbers<[1], [0], [0], [1], [0, 0, 1, 1], [], []>} : vector<40x24xbf16>, vector<24x72xbf16>, vector<40x72xf32> -> vector<40x72xf32>
    %273 = arith.addf %268, %272 : vector<40x72xf32>
    %c3_95 = arith.constant 3 : index
    %c0_96 = arith.constant 0 : index
    %c0_97 = arith.constant 0 : index
    %274 = vector.load %arg6[%c3_95, %c0_96, %c0_97] : memref<9x40x24xbf16, #tpu.memory_space<vmem>>, vector<1x40x24xbf16>
    %275 = vector.shape_cast %274 : vector<1x40x24xbf16> to vector<40x24xbf16>
    %276 = vector.extract_strided_slice %259 {offsets = [0, 6], sizes = [24, 72], strides = [1, 1]} : vector<24x96xbf16> to vector<24x72xbf16>
    %cst_98 = arith.constant dense<0.000000e+00> : vector<40x72xf32>
    %277 = tpu.matmul %275, %276, %cst_98 {dimension_numbers = #tpu.dot_dimension_numbers<[1], [0], [0], [1], [0, 0, 1, 1], [], []>} : vector<40x24xbf16>, vector<24x72xbf16>, vector<40x72xf32> -> vector<40x72xf32>
    %278 = arith.addf %273, %277 : vector<40x72xf32>
    %c4_99 = arith.constant 4 : index
    %c0_100 = arith.constant 0 : index
    %c0_101 = arith.constant 0 : index
    %279 = vector.load %arg6[%c4_99, %c0_100, %c0_101] : memref<9x40x24xbf16, #tpu.memory_space<vmem>>, vector<1x40x24xbf16>
    %280 = vector.shape_cast %279 : vector<1x40x24xbf16> to vector<40x24xbf16>
    %281 = vector.extract_strided_slice %259 {offsets = [0, 7], sizes = [24, 72], strides = [1, 1]} : vector<24x96xbf16> to vector<24x72xbf16>
    %cst_102 = arith.constant dense<0.000000e+00> : vector<40x72xf32>
    %282 = tpu.matmul %280, %281, %cst_102 {dimension_numbers = #tpu.dot_dimension_numbers<[1], [0], [0], [1], [0, 0, 1, 1], [], []>} : vector<40x24xbf16>, vector<24x72xbf16>, vector<40x72xf32> -> vector<40x72xf32>
    %283 = arith.addf %278, %282 : vector<40x72xf32>
    %c5_103 = arith.constant 5 : index
    %c0_104 = arith.constant 0 : index
    %c0_105 = arith.constant 0 : index
    %284 = vector.load %arg6[%c5_103, %c0_104, %c0_105] : memref<9x40x24xbf16, #tpu.memory_space<vmem>>, vector<1x40x24xbf16>
    %285 = vector.shape_cast %284 : vector<1x40x24xbf16> to vector<40x24xbf16>
    %286 = vector.extract_strided_slice %259 {offsets = [0, 8], sizes = [24, 72], strides = [1, 1]} : vector<24x96xbf16> to vector<24x72xbf16>
    %cst_106 = arith.constant dense<0.000000e+00> : vector<40x72xf32>
    %287 = tpu.matmul %285, %286, %cst_106 {dimension_numbers = #tpu.dot_dimension_numbers<[1], [0], [0], [1], [0, 0, 1, 1], [], []>} : vector<40x24xbf16>, vector<24x72xbf16>, vector<40x72xf32> -> vector<40x72xf32>
    %288 = arith.addf %283, %287 : vector<40x72xf32>
    %c6_107 = arith.constant 6 : index
    %c0_108 = arith.constant 0 : index
    %c0_109 = arith.constant 0 : index
    %289 = vector.load %arg6[%c6_107, %c0_108, %c0_109] : memref<9x40x24xbf16, #tpu.memory_space<vmem>>, vector<1x40x24xbf16>
    %290 = vector.shape_cast %289 : vector<1x40x24xbf16> to vector<40x24xbf16>
    %291 = vector.extract_strided_slice %259 {offsets = [0, 12], sizes = [24, 72], strides = [1, 1]} : vector<24x96xbf16> to vector<24x72xbf16>
    %cst_110 = arith.constant dense<0.000000e+00> : vector<40x72xf32>
    %292 = tpu.matmul %290, %291, %cst_110 {dimension_numbers = #tpu.dot_dimension_numbers<[1], [0], [0], [1], [0, 0, 1, 1], [], []>} : vector<40x24xbf16>, vector<24x72xbf16>, vector<40x72xf32> -> vector<40x72xf32>
    %293 = arith.addf %288, %292 : vector<40x72xf32>
    %c7_111 = arith.constant 7 : index
    %c0_112 = arith.constant 0 : index
    %c0_113 = arith.constant 0 : index
    %294 = vector.load %arg6[%c7_111, %c0_112, %c0_113] : memref<9x40x24xbf16, #tpu.memory_space<vmem>>, vector<1x40x24xbf16>
    %295 = vector.shape_cast %294 : vector<1x40x24xbf16> to vector<40x24xbf16>
    %296 = vector.extract_strided_slice %259 {offsets = [0, 13], sizes = [24, 72], strides = [1, 1]} : vector<24x96xbf16> to vector<24x72xbf16>
    %cst_114 = arith.constant dense<0.000000e+00> : vector<40x72xf32>
    %297 = tpu.matmul %295, %296, %cst_114 {dimension_numbers = #tpu.dot_dimension_numbers<[1], [0], [0], [1], [0, 0, 1, 1], [], []>} : vector<40x24xbf16>, vector<24x72xbf16>, vector<40x72xf32> -> vector<40x72xf32>
    %298 = arith.addf %293, %297 : vector<40x72xf32>
    %c8_115 = arith.constant 8 : index
    %c0_116 = arith.constant 0 : index
    %c0_117 = arith.constant 0 : index
    %299 = vector.load %arg6[%c8_115, %c0_116, %c0_117] : memref<9x40x24xbf16, #tpu.memory_space<vmem>>, vector<1x40x24xbf16>
    %300 = vector.shape_cast %299 : vector<1x40x24xbf16> to vector<40x24xbf16>
    %301 = vector.extract_strided_slice %259 {offsets = [0, 14], sizes = [24, 72], strides = [1, 1]} : vector<24x96xbf16> to vector<24x72xbf16>
    %cst_118 = arith.constant dense<0.000000e+00> : vector<40x72xf32>
    %302 = tpu.matmul %300, %301, %cst_118 {dimension_numbers = #tpu.dot_dimension_numbers<[1], [0], [0], [1], [0, 0, 1, 1], [], []>} : vector<40x24xbf16>, vector<24x72xbf16>, vector<40x72xf32> -> vector<40x72xf32>
    %303 = arith.addf %298, %302 : vector<40x72xf32>
    %c0_119 = arith.constant 0 : index
    %c0_120 = arith.constant 0 : index
    %304 = vector.load %arg7[%c0_119, %c0_120] : memref<40x1xf32, #tpu.memory_space<vmem>>, vector<40x1xf32>
    %305 = vector.broadcast %304 : vector<40x1xf32> to vector<40x72xf32>
    %306 = arith.addf %303, %305 : vector<40x72xf32>
    %cst_121 = arith.constant 0.000000e+00 : f32
    %307 = vector.broadcast %cst_121 : f32 to vector<40x72xf32>
    %308 = arith.cmpf oge, %306, %307 : vector<40x72xf32>
    %309 = vector.broadcast %0 : f32 to vector<40x72xf32>
    %310 = arith.mulf %309, %306 : vector<40x72xf32>
    %311 = arith.select %308, %306, %310 : vector<40x72xi1>, vector<40x72xf32>
    %cst_122 = arith.constant 0.000000e+00 : f32
    %312 = vector.broadcast %cst_122 : f32 to vector<40x6xf32>
    %cst_123 = arith.constant 0.000000e+00 : f32
    %313 = vector.broadcast %cst_123 : f32 to vector<40x1xf32>
    %314 = vector.extract_strided_slice %311 {offsets = [0, 0], sizes = [40, 4], strides = [1, 1]} : vector<40x72xf32> to vector<40x4xf32>
    %315 = vector.extract_strided_slice %311 {offsets = [0, 6], sizes = [40, 4], strides = [1, 1]} : vector<40x72xf32> to vector<40x4xf32>
    %316 = vector.extract_strided_slice %311 {offsets = [0, 12], sizes = [40, 4], strides = [1, 1]} : vector<40x72xf32> to vector<40x4xf32>
    %317 = vector.extract_strided_slice %311 {offsets = [0, 18], sizes = [40, 4], strides = [1, 1]} : vector<40x72xf32> to vector<40x4xf32>
    %318 = vector.extract_strided_slice %311 {offsets = [0, 36], sizes = [40, 4], strides = [1, 1]} : vector<40x72xf32> to vector<40x4xf32>
    %319 = vector.extract_strided_slice %311 {offsets = [0, 42], sizes = [40, 4], strides = [1, 1]} : vector<40x72xf32> to vector<40x4xf32>
    %320 = vector.extract_strided_slice %311 {offsets = [0, 48], sizes = [40, 4], strides = [1, 1]} : vector<40x72xf32> to vector<40x4xf32>
    %321 = vector.extract_strided_slice %311 {offsets = [0, 54], sizes = [40, 4], strides = [1, 1]} : vector<40x72xf32> to vector<40x4xf32>
    %cst_124 = arith.constant 0.000000e+00 : f32
    %322 = vector.broadcast %cst_124 : f32 to vector<40x24xf32>
    %323 = tpu.concatenate %312, %313, %314, %313, %313, %315, %313, %313, %316, %313, %313, %317, %313, %312, %312, %313 in 1 : vector<40x6xf32>, vector<40x1xf32>, vector<40x4xf32>, vector<40x1xf32>, vector<40x1xf32>, vector<40x4xf32>, vector<40x1xf32>, vector<40x1xf32>, vector<40x4xf32>, vector<40x1xf32>, vector<40x1xf32>, vector<40x4xf32>, vector<40x1xf32>, vector<40x6xf32>, vector<40x6xf32>, vector<40x1xf32> -> vector<40x43xf32>
    %324 = tpu.concatenate %318, %313, %313, %319, %313, %313, %320, %313, %313, %321, %313, %312, %322 in 1 : vector<40x4xf32>, vector<40x1xf32>, vector<40x1xf32>, vector<40x4xf32>, vector<40x1xf32>, vector<40x1xf32>, vector<40x4xf32>, vector<40x1xf32>, vector<40x1xf32>, vector<40x4xf32>, vector<40x1xf32>, vector<40x6xf32>, vector<40x24xf32> -> vector<40x53xf32>
    %325 = tpu.concatenate %323, %324 in 1 : vector<40x43xf32>, vector<40x53xf32> -> vector<40x96xf32>
    %326 = arith.truncf %325 : vector<40x96xf32> to vector<40x96xbf16>
    %c0_125 = arith.constant 0 : index
    %c0_126 = arith.constant 0 : index
    %c0_127 = arith.constant 0 : index
    %327 = vector.load %arg8[%c0_125, %c0_126, %c0_127] : memref<9x80x40xbf16, #tpu.memory_space<vmem>>, vector<1x80x40xbf16>
    %328 = vector.shape_cast %327 : vector<1x80x40xbf16> to vector<80x40xbf16>
    %329 = vector.extract_strided_slice %326 {offsets = [0, 0], sizes = [40, 72], strides = [1, 1]} : vector<40x96xbf16> to vector<40x72xbf16>
    %cst_128 = arith.constant dense<0.000000e+00> : vector<80x72xf32>
    %330 = tpu.matmul %328, %329, %cst_128 {dimension_numbers = #tpu.dot_dimension_numbers<[1], [0], [0], [1], [0, 0, 1, 1], [], []>} : vector<80x40xbf16>, vector<40x72xbf16>, vector<80x72xf32> -> vector<80x72xf32>
    %c1_129 = arith.constant 1 : index
    %c0_130 = arith.constant 0 : index
    %c0_131 = arith.constant 0 : index
    %331 = vector.load %arg8[%c1_129, %c0_130, %c0_131] : memref<9x80x40xbf16, #tpu.memory_space<vmem>>, vector<1x80x40xbf16>
    %332 = vector.shape_cast %331 : vector<1x80x40xbf16> to vector<80x40xbf16>
    %333 = vector.extract_strided_slice %326 {offsets = [0, 1], sizes = [40, 72], strides = [1, 1]} : vector<40x96xbf16> to vector<40x72xbf16>
    %cst_132 = arith.constant dense<0.000000e+00> : vector<80x72xf32>
    %334 = tpu.matmul %332, %333, %cst_132 {dimension_numbers = #tpu.dot_dimension_numbers<[1], [0], [0], [1], [0, 0, 1, 1], [], []>} : vector<80x40xbf16>, vector<40x72xbf16>, vector<80x72xf32> -> vector<80x72xf32>
    %335 = arith.addf %330, %334 : vector<80x72xf32>
    %c2_133 = arith.constant 2 : index
    %c0_134 = arith.constant 0 : index
    %c0_135 = arith.constant 0 : index
    %336 = vector.load %arg8[%c2_133, %c0_134, %c0_135] : memref<9x80x40xbf16, #tpu.memory_space<vmem>>, vector<1x80x40xbf16>
    %337 = vector.shape_cast %336 : vector<1x80x40xbf16> to vector<80x40xbf16>
    %338 = vector.extract_strided_slice %326 {offsets = [0, 2], sizes = [40, 72], strides = [1, 1]} : vector<40x96xbf16> to vector<40x72xbf16>
    %cst_136 = arith.constant dense<0.000000e+00> : vector<80x72xf32>
    %339 = tpu.matmul %337, %338, %cst_136 {dimension_numbers = #tpu.dot_dimension_numbers<[1], [0], [0], [1], [0, 0, 1, 1], [], []>} : vector<80x40xbf16>, vector<40x72xbf16>, vector<80x72xf32> -> vector<80x72xf32>
    %340 = arith.addf %335, %339 : vector<80x72xf32>
    %c3_137 = arith.constant 3 : index
    %c0_138 = arith.constant 0 : index
    %c0_139 = arith.constant 0 : index
    %341 = vector.load %arg8[%c3_137, %c0_138, %c0_139] : memref<9x80x40xbf16, #tpu.memory_space<vmem>>, vector<1x80x40xbf16>
    %342 = vector.shape_cast %341 : vector<1x80x40xbf16> to vector<80x40xbf16>
    %343 = vector.extract_strided_slice %326 {offsets = [0, 6], sizes = [40, 72], strides = [1, 1]} : vector<40x96xbf16> to vector<40x72xbf16>
    %cst_140 = arith.constant dense<0.000000e+00> : vector<80x72xf32>
    %344 = tpu.matmul %342, %343, %cst_140 {dimension_numbers = #tpu.dot_dimension_numbers<[1], [0], [0], [1], [0, 0, 1, 1], [], []>} : vector<80x40xbf16>, vector<40x72xbf16>, vector<80x72xf32> -> vector<80x72xf32>
    %345 = arith.addf %340, %344 : vector<80x72xf32>
    %c4_141 = arith.constant 4 : index
    %c0_142 = arith.constant 0 : index
    %c0_143 = arith.constant 0 : index
    %346 = vector.load %arg8[%c4_141, %c0_142, %c0_143] : memref<9x80x40xbf16, #tpu.memory_space<vmem>>, vector<1x80x40xbf16>
    %347 = vector.shape_cast %346 : vector<1x80x40xbf16> to vector<80x40xbf16>
    %348 = vector.extract_strided_slice %326 {offsets = [0, 7], sizes = [40, 72], strides = [1, 1]} : vector<40x96xbf16> to vector<40x72xbf16>
    %cst_144 = arith.constant dense<0.000000e+00> : vector<80x72xf32>
    %349 = tpu.matmul %347, %348, %cst_144 {dimension_numbers = #tpu.dot_dimension_numbers<[1], [0], [0], [1], [0, 0, 1, 1], [], []>} : vector<80x40xbf16>, vector<40x72xbf16>, vector<80x72xf32> -> vector<80x72xf32>
    %350 = arith.addf %345, %349 : vector<80x72xf32>
    %c5_145 = arith.constant 5 : index
    %c0_146 = arith.constant 0 : index
    %c0_147 = arith.constant 0 : index
    %351 = vector.load %arg8[%c5_145, %c0_146, %c0_147] : memref<9x80x40xbf16, #tpu.memory_space<vmem>>, vector<1x80x40xbf16>
    %352 = vector.shape_cast %351 : vector<1x80x40xbf16> to vector<80x40xbf16>
    %353 = vector.extract_strided_slice %326 {offsets = [0, 8], sizes = [40, 72], strides = [1, 1]} : vector<40x96xbf16> to vector<40x72xbf16>
    %cst_148 = arith.constant dense<0.000000e+00> : vector<80x72xf32>
    %354 = tpu.matmul %352, %353, %cst_148 {dimension_numbers = #tpu.dot_dimension_numbers<[1], [0], [0], [1], [0, 0, 1, 1], [], []>} : vector<80x40xbf16>, vector<40x72xbf16>, vector<80x72xf32> -> vector<80x72xf32>
    %355 = arith.addf %350, %354 : vector<80x72xf32>
    %c6_149 = arith.constant 6 : index
    %c0_150 = arith.constant 0 : index
    %c0_151 = arith.constant 0 : index
    %356 = vector.load %arg8[%c6_149, %c0_150, %c0_151] : memref<9x80x40xbf16, #tpu.memory_space<vmem>>, vector<1x80x40xbf16>
    %357 = vector.shape_cast %356 : vector<1x80x40xbf16> to vector<80x40xbf16>
    %358 = vector.extract_strided_slice %326 {offsets = [0, 12], sizes = [40, 72], strides = [1, 1]} : vector<40x96xbf16> to vector<40x72xbf16>
    %cst_152 = arith.constant dense<0.000000e+00> : vector<80x72xf32>
    %359 = tpu.matmul %357, %358, %cst_152 {dimension_numbers = #tpu.dot_dimension_numbers<[1], [0], [0], [1], [0, 0, 1, 1], [], []>} : vector<80x40xbf16>, vector<40x72xbf16>, vector<80x72xf32> -> vector<80x72xf32>
    %360 = arith.addf %355, %359 : vector<80x72xf32>
    %c7_153 = arith.constant 7 : index
    %c0_154 = arith.constant 0 : index
    %c0_155 = arith.constant 0 : index
    %361 = vector.load %arg8[%c7_153, %c0_154, %c0_155] : memref<9x80x40xbf16, #tpu.memory_space<vmem>>, vector<1x80x40xbf16>
    %362 = vector.shape_cast %361 : vector<1x80x40xbf16> to vector<80x40xbf16>
    %363 = vector.extract_strided_slice %326 {offsets = [0, 13], sizes = [40, 72], strides = [1, 1]} : vector<40x96xbf16> to vector<40x72xbf16>
    %cst_156 = arith.constant dense<0.000000e+00> : vector<80x72xf32>
    %364 = tpu.matmul %362, %363, %cst_156 {dimension_numbers = #tpu.dot_dimension_numbers<[1], [0], [0], [1], [0, 0, 1, 1], [], []>} : vector<80x40xbf16>, vector<40x72xbf16>, vector<80x72xf32> -> vector<80x72xf32>
    %365 = arith.addf %360, %364 : vector<80x72xf32>
    %c8_157 = arith.constant 8 : index
    %c0_158 = arith.constant 0 : index
    %c0_159 = arith.constant 0 : index
    %366 = vector.load %arg8[%c8_157, %c0_158, %c0_159] : memref<9x80x40xbf16, #tpu.memory_space<vmem>>, vector<1x80x40xbf16>
    %367 = vector.shape_cast %366 : vector<1x80x40xbf16> to vector<80x40xbf16>
    %368 = vector.extract_strided_slice %326 {offsets = [0, 14], sizes = [40, 72], strides = [1, 1]} : vector<40x96xbf16> to vector<40x72xbf16>
    %cst_160 = arith.constant dense<0.000000e+00> : vector<80x72xf32>
    %369 = tpu.matmul %367, %368, %cst_160 {dimension_numbers = #tpu.dot_dimension_numbers<[1], [0], [0], [1], [0, 0, 1, 1], [], []>} : vector<80x40xbf16>, vector<40x72xbf16>, vector<80x72xf32> -> vector<80x72xf32>
    %370 = arith.addf %365, %369 : vector<80x72xf32>
    %c0_161 = arith.constant 0 : index
    %c0_162 = arith.constant 0 : index
    %371 = vector.load %arg9[%c0_161, %c0_162] : memref<80x1xf32, #tpu.memory_space<vmem>>, vector<80x1xf32>
    %372 = vector.broadcast %371 : vector<80x1xf32> to vector<80x72xf32>
    %373 = arith.addf %370, %372 : vector<80x72xf32>
    %cst_163 = arith.constant 0.000000e+00 : f32
    %374 = vector.broadcast %cst_163 : f32 to vector<80x72xf32>
    %375 = arith.cmpf oge, %373, %374 : vector<80x72xf32>
    %376 = vector.broadcast %0 : f32 to vector<80x72xf32>
    %377 = arith.mulf %376, %373 : vector<80x72xf32>
    %378 = arith.select %375, %373, %377 : vector<80x72xi1>, vector<80x72xf32>
    %379 = vector.extract_strided_slice %378 {offsets = [0, 0], sizes = [80, 1], strides = [1, 1]} : vector<80x72xf32> to vector<80x1xf32>
    %380 = vector.extract_strided_slice %378 {offsets = [0, 36], sizes = [80, 1], strides = [1, 1]} : vector<80x72xf32> to vector<80x1xf32>
    %381 = tpu.concatenate %379, %380 in 1 : vector<80x1xf32>, vector<80x1xf32> -> vector<80x2xf32>
    %382 = arith.truncf %381 : vector<80x2xf32> to vector<80x2xbf16>
    %c0_164 = arith.constant 0 : index
    %c0_165 = arith.constant 0 : index
    %c0_166 = arith.constant 0 : index
    %383 = vector.load %arg10[%c0_164, %c0_165, %c0_166] : memref<16x128x80xbf16, #tpu.memory_space<vmem>>, vector<1x128x80xbf16>
    %384 = vector.shape_cast %383 : vector<1x128x80xbf16> to vector<128x80xbf16>
    %cst_167 = arith.constant dense<0.000000e+00> : vector<128x2xf32>
    %385 = tpu.matmul %384, %382, %cst_167 {dimension_numbers = #tpu.dot_dimension_numbers<[1], [0], [0], [1], [0, 0, 1, 1], [], []>} : vector<128x80xbf16>, vector<80x2xbf16>, vector<128x2xf32> -> vector<128x2xf32>
    %386 = vector.extract_strided_slice %378 {offsets = [0, 1], sizes = [80, 1], strides = [1, 1]} : vector<80x72xf32> to vector<80x1xf32>
    %387 = vector.extract_strided_slice %378 {offsets = [0, 37], sizes = [80, 1], strides = [1, 1]} : vector<80x72xf32> to vector<80x1xf32>
    %388 = tpu.concatenate %386, %387 in 1 : vector<80x1xf32>, vector<80x1xf32> -> vector<80x2xf32>
    %389 = arith.truncf %388 : vector<80x2xf32> to vector<80x2xbf16>
    %c1_168 = arith.constant 1 : index
    %c0_169 = arith.constant 0 : index
    %c0_170 = arith.constant 0 : index
    %390 = vector.load %arg10[%c1_168, %c0_169, %c0_170] : memref<16x128x80xbf16, #tpu.memory_space<vmem>>, vector<1x128x80xbf16>
    %391 = vector.shape_cast %390 : vector<1x128x80xbf16> to vector<128x80xbf16>
    %cst_171 = arith.constant dense<0.000000e+00> : vector<128x2xf32>
    %392 = tpu.matmul %391, %389, %cst_171 {dimension_numbers = #tpu.dot_dimension_numbers<[1], [0], [0], [1], [0, 0, 1, 1], [], []>} : vector<128x80xbf16>, vector<80x2xbf16>, vector<128x2xf32> -> vector<128x2xf32>
    %393 = arith.addf %385, %392 : vector<128x2xf32>
    %394 = vector.extract_strided_slice %378 {offsets = [0, 2], sizes = [80, 1], strides = [1, 1]} : vector<80x72xf32> to vector<80x1xf32>
    %395 = vector.extract_strided_slice %378 {offsets = [0, 38], sizes = [80, 1], strides = [1, 1]} : vector<80x72xf32> to vector<80x1xf32>
    %396 = tpu.concatenate %394, %395 in 1 : vector<80x1xf32>, vector<80x1xf32> -> vector<80x2xf32>
    %397 = arith.truncf %396 : vector<80x2xf32> to vector<80x2xbf16>
    %c2_172 = arith.constant 2 : index
    %c0_173 = arith.constant 0 : index
    %c0_174 = arith.constant 0 : index
    %398 = vector.load %arg10[%c2_172, %c0_173, %c0_174] : memref<16x128x80xbf16, #tpu.memory_space<vmem>>, vector<1x128x80xbf16>
    %399 = vector.shape_cast %398 : vector<1x128x80xbf16> to vector<128x80xbf16>
    %cst_175 = arith.constant dense<0.000000e+00> : vector<128x2xf32>
    %400 = tpu.matmul %399, %397, %cst_175 {dimension_numbers = #tpu.dot_dimension_numbers<[1], [0], [0], [1], [0, 0, 1, 1], [], []>} : vector<128x80xbf16>, vector<80x2xbf16>, vector<128x2xf32> -> vector<128x2xf32>
    %401 = arith.addf %393, %400 : vector<128x2xf32>
    %402 = vector.extract_strided_slice %378 {offsets = [0, 3], sizes = [80, 1], strides = [1, 1]} : vector<80x72xf32> to vector<80x1xf32>
    %403 = vector.extract_strided_slice %378 {offsets = [0, 39], sizes = [80, 1], strides = [1, 1]} : vector<80x72xf32> to vector<80x1xf32>
    %404 = tpu.concatenate %402, %403 in 1 : vector<80x1xf32>, vector<80x1xf32> -> vector<80x2xf32>
    %405 = arith.truncf %404 : vector<80x2xf32> to vector<80x2xbf16>
    %c3_176 = arith.constant 3 : index
    %c0_177 = arith.constant 0 : index
    %c0_178 = arith.constant 0 : index
    %406 = vector.load %arg10[%c3_176, %c0_177, %c0_178] : memref<16x128x80xbf16, #tpu.memory_space<vmem>>, vector<1x128x80xbf16>
    %407 = vector.shape_cast %406 : vector<1x128x80xbf16> to vector<128x80xbf16>
    %cst_179 = arith.constant dense<0.000000e+00> : vector<128x2xf32>
    %408 = tpu.matmul %407, %405, %cst_179 {dimension_numbers = #tpu.dot_dimension_numbers<[1], [0], [0], [1], [0, 0, 1, 1], [], []>} : vector<128x80xbf16>, vector<80x2xbf16>, vector<128x2xf32> -> vector<128x2xf32>
    %409 = arith.addf %401, %408 : vector<128x2xf32>
    %410 = vector.extract_strided_slice %378 {offsets = [0, 6], sizes = [80, 1], strides = [1, 1]} : vector<80x72xf32> to vector<80x1xf32>
    %411 = vector.extract_strided_slice %378 {offsets = [0, 42], sizes = [80, 1], strides = [1, 1]} : vector<80x72xf32> to vector<80x1xf32>
    %412 = tpu.concatenate %410, %411 in 1 : vector<80x1xf32>, vector<80x1xf32> -> vector<80x2xf32>
    %413 = arith.truncf %412 : vector<80x2xf32> to vector<80x2xbf16>
    %c4_180 = arith.constant 4 : index
    %c0_181 = arith.constant 0 : index
    %c0_182 = arith.constant 0 : index
    %414 = vector.load %arg10[%c4_180, %c0_181, %c0_182] : memref<16x128x80xbf16, #tpu.memory_space<vmem>>, vector<1x128x80xbf16>
    %415 = vector.shape_cast %414 : vector<1x128x80xbf16> to vector<128x80xbf16>
    %cst_183 = arith.constant dense<0.000000e+00> : vector<128x2xf32>
    %416 = tpu.matmul %415, %413, %cst_183 {dimension_numbers = #tpu.dot_dimension_numbers<[1], [0], [0], [1], [0, 0, 1, 1], [], []>} : vector<128x80xbf16>, vector<80x2xbf16>, vector<128x2xf32> -> vector<128x2xf32>
    %417 = arith.addf %409, %416 : vector<128x2xf32>
    %418 = vector.extract_strided_slice %378 {offsets = [0, 7], sizes = [80, 1], strides = [1, 1]} : vector<80x72xf32> to vector<80x1xf32>
    %419 = vector.extract_strided_slice %378 {offsets = [0, 43], sizes = [80, 1], strides = [1, 1]} : vector<80x72xf32> to vector<80x1xf32>
    %420 = tpu.concatenate %418, %419 in 1 : vector<80x1xf32>, vector<80x1xf32> -> vector<80x2xf32>
    %421 = arith.truncf %420 : vector<80x2xf32> to vector<80x2xbf16>
    %c5_184 = arith.constant 5 : index
    %c0_185 = arith.constant 0 : index
    %c0_186 = arith.constant 0 : index
    %422 = vector.load %arg10[%c5_184, %c0_185, %c0_186] : memref<16x128x80xbf16, #tpu.memory_space<vmem>>, vector<1x128x80xbf16>
    %423 = vector.shape_cast %422 : vector<1x128x80xbf16> to vector<128x80xbf16>
    %cst_187 = arith.constant dense<0.000000e+00> : vector<128x2xf32>
    %424 = tpu.matmul %423, %421, %cst_187 {dimension_numbers = #tpu.dot_dimension_numbers<[1], [0], [0], [1], [0, 0, 1, 1], [], []>} : vector<128x80xbf16>, vector<80x2xbf16>, vector<128x2xf32> -> vector<128x2xf32>
    %425 = arith.addf %417, %424 : vector<128x2xf32>
    %426 = vector.extract_strided_slice %378 {offsets = [0, 8], sizes = [80, 1], strides = [1, 1]} : vector<80x72xf32> to vector<80x1xf32>
    %427 = vector.extract_strided_slice %378 {offsets = [0, 44], sizes = [80, 1], strides = [1, 1]} : vector<80x72xf32> to vector<80x1xf32>
    %428 = tpu.concatenate %426, %427 in 1 : vector<80x1xf32>, vector<80x1xf32> -> vector<80x2xf32>
    %429 = arith.truncf %428 : vector<80x2xf32> to vector<80x2xbf16>
    %c6_188 = arith.constant 6 : index
    %c0_189 = arith.constant 0 : index
    %c0_190 = arith.constant 0 : index
    %430 = vector.load %arg10[%c6_188, %c0_189, %c0_190] : memref<16x128x80xbf16, #tpu.memory_space<vmem>>, vector<1x128x80xbf16>
    %431 = vector.shape_cast %430 : vector<1x128x80xbf16> to vector<128x80xbf16>
    %cst_191 = arith.constant dense<0.000000e+00> : vector<128x2xf32>
    %432 = tpu.matmul %431, %429, %cst_191 {dimension_numbers = #tpu.dot_dimension_numbers<[1], [0], [0], [1], [0, 0, 1, 1], [], []>} : vector<128x80xbf16>, vector<80x2xbf16>, vector<128x2xf32> -> vector<128x2xf32>
    %433 = arith.addf %425, %432 : vector<128x2xf32>
    %434 = vector.extract_strided_slice %378 {offsets = [0, 9], sizes = [80, 1], strides = [1, 1]} : vector<80x72xf32> to vector<80x1xf32>
    %435 = vector.extract_strided_slice %378 {offsets = [0, 45], sizes = [80, 1], strides = [1, 1]} : vector<80x72xf32> to vector<80x1xf32>
    %436 = tpu.concatenate %434, %435 in 1 : vector<80x1xf32>, vector<80x1xf32> -> vector<80x2xf32>
    %437 = arith.truncf %436 : vector<80x2xf32> to vector<80x2xbf16>
    %c7_192 = arith.constant 7 : index
    %c0_193 = arith.constant 0 : index
    %c0_194 = arith.constant 0 : index
    %438 = vector.load %arg10[%c7_192, %c0_193, %c0_194] : memref<16x128x80xbf16, #tpu.memory_space<vmem>>, vector<1x128x80xbf16>
    %439 = vector.shape_cast %438 : vector<1x128x80xbf16> to vector<128x80xbf16>
    %cst_195 = arith.constant dense<0.000000e+00> : vector<128x2xf32>
    %440 = tpu.matmul %439, %437, %cst_195 {dimension_numbers = #tpu.dot_dimension_numbers<[1], [0], [0], [1], [0, 0, 1, 1], [], []>} : vector<128x80xbf16>, vector<80x2xbf16>, vector<128x2xf32> -> vector<128x2xf32>
    %441 = arith.addf %433, %440 : vector<128x2xf32>
    %442 = vector.extract_strided_slice %378 {offsets = [0, 12], sizes = [80, 1], strides = [1, 1]} : vector<80x72xf32> to vector<80x1xf32>
    %443 = vector.extract_strided_slice %378 {offsets = [0, 48], sizes = [80, 1], strides = [1, 1]} : vector<80x72xf32> to vector<80x1xf32>
    %444 = tpu.concatenate %442, %443 in 1 : vector<80x1xf32>, vector<80x1xf32> -> vector<80x2xf32>
    %445 = arith.truncf %444 : vector<80x2xf32> to vector<80x2xbf16>
    %c8_196 = arith.constant 8 : index
    %c0_197 = arith.constant 0 : index
    %c0_198 = arith.constant 0 : index
    %446 = vector.load %arg10[%c8_196, %c0_197, %c0_198] : memref<16x128x80xbf16, #tpu.memory_space<vmem>>, vector<1x128x80xbf16>
    %447 = vector.shape_cast %446 : vector<1x128x80xbf16> to vector<128x80xbf16>
    %cst_199 = arith.constant dense<0.000000e+00> : vector<128x2xf32>
    %448 = tpu.matmul %447, %445, %cst_199 {dimension_numbers = #tpu.dot_dimension_numbers<[1], [0], [0], [1], [0, 0, 1, 1], [], []>} : vector<128x80xbf16>, vector<80x2xbf16>, vector<128x2xf32> -> vector<128x2xf32>
    %449 = arith.addf %441, %448 : vector<128x2xf32>
    %450 = vector.extract_strided_slice %378 {offsets = [0, 13], sizes = [80, 1], strides = [1, 1]} : vector<80x72xf32> to vector<80x1xf32>
    %451 = vector.extract_strided_slice %378 {offsets = [0, 49], sizes = [80, 1], strides = [1, 1]} : vector<80x72xf32> to vector<80x1xf32>
    %452 = tpu.concatenate %450, %451 in 1 : vector<80x1xf32>, vector<80x1xf32> -> vector<80x2xf32>
    %453 = arith.truncf %452 : vector<80x2xf32> to vector<80x2xbf16>
    %c9 = arith.constant 9 : index
    %c0_200 = arith.constant 0 : index
    %c0_201 = arith.constant 0 : index
    %454 = vector.load %arg10[%c9, %c0_200, %c0_201] : memref<16x128x80xbf16, #tpu.memory_space<vmem>>, vector<1x128x80xbf16>
    %455 = vector.shape_cast %454 : vector<1x128x80xbf16> to vector<128x80xbf16>
    %cst_202 = arith.constant dense<0.000000e+00> : vector<128x2xf32>
    %456 = tpu.matmul %455, %453, %cst_202 {dimension_numbers = #tpu.dot_dimension_numbers<[1], [0], [0], [1], [0, 0, 1, 1], [], []>} : vector<128x80xbf16>, vector<80x2xbf16>, vector<128x2xf32> -> vector<128x2xf32>
    %457 = arith.addf %449, %456 : vector<128x2xf32>
    %458 = vector.extract_strided_slice %378 {offsets = [0, 14], sizes = [80, 1], strides = [1, 1]} : vector<80x72xf32> to vector<80x1xf32>
    %459 = vector.extract_strided_slice %378 {offsets = [0, 50], sizes = [80, 1], strides = [1, 1]} : vector<80x72xf32> to vector<80x1xf32>
    %460 = tpu.concatenate %458, %459 in 1 : vector<80x1xf32>, vector<80x1xf32> -> vector<80x2xf32>
    %461 = arith.truncf %460 : vector<80x2xf32> to vector<80x2xbf16>
    %c10 = arith.constant 10 : index
    %c0_203 = arith.constant 0 : index
    %c0_204 = arith.constant 0 : index
    %462 = vector.load %arg10[%c10, %c0_203, %c0_204] : memref<16x128x80xbf16, #tpu.memory_space<vmem>>, vector<1x128x80xbf16>
    %463 = vector.shape_cast %462 : vector<1x128x80xbf16> to vector<128x80xbf16>
    %cst_205 = arith.constant dense<0.000000e+00> : vector<128x2xf32>
    %464 = tpu.matmul %463, %461, %cst_205 {dimension_numbers = #tpu.dot_dimension_numbers<[1], [0], [0], [1], [0, 0, 1, 1], [], []>} : vector<128x80xbf16>, vector<80x2xbf16>, vector<128x2xf32> -> vector<128x2xf32>
    %465 = arith.addf %457, %464 : vector<128x2xf32>
    %466 = vector.extract_strided_slice %378 {offsets = [0, 15], sizes = [80, 1], strides = [1, 1]} : vector<80x72xf32> to vector<80x1xf32>
    %467 = vector.extract_strided_slice %378 {offsets = [0, 51], sizes = [80, 1], strides = [1, 1]} : vector<80x72xf32> to vector<80x1xf32>
    %468 = tpu.concatenate %466, %467 in 1 : vector<80x1xf32>, vector<80x1xf32> -> vector<80x2xf32>
    %469 = arith.truncf %468 : vector<80x2xf32> to vector<80x2xbf16>
    %c11 = arith.constant 11 : index
    %c0_206 = arith.constant 0 : index
    %c0_207 = arith.constant 0 : index
    %470 = vector.load %arg10[%c11, %c0_206, %c0_207] : memref<16x128x80xbf16, #tpu.memory_space<vmem>>, vector<1x128x80xbf16>
    %471 = vector.shape_cast %470 : vector<1x128x80xbf16> to vector<128x80xbf16>
    %cst_208 = arith.constant dense<0.000000e+00> : vector<128x2xf32>
    %472 = tpu.matmul %471, %469, %cst_208 {dimension_numbers = #tpu.dot_dimension_numbers<[1], [0], [0], [1], [0, 0, 1, 1], [], []>} : vector<128x80xbf16>, vector<80x2xbf16>, vector<128x2xf32> -> vector<128x2xf32>
    %473 = arith.addf %465, %472 : vector<128x2xf32>
    %474 = vector.extract_strided_slice %378 {offsets = [0, 18], sizes = [80, 1], strides = [1, 1]} : vector<80x72xf32> to vector<80x1xf32>
    %475 = vector.extract_strided_slice %378 {offsets = [0, 54], sizes = [80, 1], strides = [1, 1]} : vector<80x72xf32> to vector<80x1xf32>
    %476 = tpu.concatenate %474, %475 in 1 : vector<80x1xf32>, vector<80x1xf32> -> vector<80x2xf32>
    %477 = arith.truncf %476 : vector<80x2xf32> to vector<80x2xbf16>
    %c12 = arith.constant 12 : index
    %c0_209 = arith.constant 0 : index
    %c0_210 = arith.constant 0 : index
    %478 = vector.load %arg10[%c12, %c0_209, %c0_210] : memref<16x128x80xbf16, #tpu.memory_space<vmem>>, vector<1x128x80xbf16>
    %479 = vector.shape_cast %478 : vector<1x128x80xbf16> to vector<128x80xbf16>
    %cst_211 = arith.constant dense<0.000000e+00> : vector<128x2xf32>
    %480 = tpu.matmul %479, %477, %cst_211 {dimension_numbers = #tpu.dot_dimension_numbers<[1], [0], [0], [1], [0, 0, 1, 1], [], []>} : vector<128x80xbf16>, vector<80x2xbf16>, vector<128x2xf32> -> vector<128x2xf32>
    %481 = arith.addf %473, %480 : vector<128x2xf32>
    %482 = vector.extract_strided_slice %378 {offsets = [0, 19], sizes = [80, 1], strides = [1, 1]} : vector<80x72xf32> to vector<80x1xf32>
    %483 = vector.extract_strided_slice %378 {offsets = [0, 55], sizes = [80, 1], strides = [1, 1]} : vector<80x72xf32> to vector<80x1xf32>
    %484 = tpu.concatenate %482, %483 in 1 : vector<80x1xf32>, vector<80x1xf32> -> vector<80x2xf32>
    %485 = arith.truncf %484 : vector<80x2xf32> to vector<80x2xbf16>
    %c13 = arith.constant 13 : index
    %c0_212 = arith.constant 0 : index
    %c0_213 = arith.constant 0 : index
    %486 = vector.load %arg10[%c13, %c0_212, %c0_213] : memref<16x128x80xbf16, #tpu.memory_space<vmem>>, vector<1x128x80xbf16>
    %487 = vector.shape_cast %486 : vector<1x128x80xbf16> to vector<128x80xbf16>
    %cst_214 = arith.constant dense<0.000000e+00> : vector<128x2xf32>
    %488 = tpu.matmul %487, %485, %cst_214 {dimension_numbers = #tpu.dot_dimension_numbers<[1], [0], [0], [1], [0, 0, 1, 1], [], []>} : vector<128x80xbf16>, vector<80x2xbf16>, vector<128x2xf32> -> vector<128x2xf32>
    %489 = arith.addf %481, %488 : vector<128x2xf32>
    %490 = vector.extract_strided_slice %378 {offsets = [0, 20], sizes = [80, 1], strides = [1, 1]} : vector<80x72xf32> to vector<80x1xf32>
    %491 = vector.extract_strided_slice %378 {offsets = [0, 56], sizes = [80, 1], strides = [1, 1]} : vector<80x72xf32> to vector<80x1xf32>
    %492 = tpu.concatenate %490, %491 in 1 : vector<80x1xf32>, vector<80x1xf32> -> vector<80x2xf32>
    %493 = arith.truncf %492 : vector<80x2xf32> to vector<80x2xbf16>
    %c14 = arith.constant 14 : index
    %c0_215 = arith.constant 0 : index
    %c0_216 = arith.constant 0 : index
    %494 = vector.load %arg10[%c14, %c0_215, %c0_216] : memref<16x128x80xbf16, #tpu.memory_space<vmem>>, vector<1x128x80xbf16>
    %495 = vector.shape_cast %494 : vector<1x128x80xbf16> to vector<128x80xbf16>
    %cst_217 = arith.constant dense<0.000000e+00> : vector<128x2xf32>
    %496 = tpu.matmul %495, %493, %cst_217 {dimension_numbers = #tpu.dot_dimension_numbers<[1], [0], [0], [1], [0, 0, 1, 1], [], []>} : vector<128x80xbf16>, vector<80x2xbf16>, vector<128x2xf32> -> vector<128x2xf32>
    %497 = arith.addf %489, %496 : vector<128x2xf32>
    %498 = vector.extract_strided_slice %378 {offsets = [0, 21], sizes = [80, 1], strides = [1, 1]} : vector<80x72xf32> to vector<80x1xf32>
    %499 = vector.extract_strided_slice %378 {offsets = [0, 57], sizes = [80, 1], strides = [1, 1]} : vector<80x72xf32> to vector<80x1xf32>
    %500 = tpu.concatenate %498, %499 in 1 : vector<80x1xf32>, vector<80x1xf32> -> vector<80x2xf32>
    %501 = arith.truncf %500 : vector<80x2xf32> to vector<80x2xbf16>
    %c15 = arith.constant 15 : index
    %c0_218 = arith.constant 0 : index
    %c0_219 = arith.constant 0 : index
    %502 = vector.load %arg10[%c15, %c0_218, %c0_219] : memref<16x128x80xbf16, #tpu.memory_space<vmem>>, vector<1x128x80xbf16>
    %503 = vector.shape_cast %502 : vector<1x128x80xbf16> to vector<128x80xbf16>
    %cst_220 = arith.constant dense<0.000000e+00> : vector<128x2xf32>
    %504 = tpu.matmul %503, %501, %cst_220 {dimension_numbers = #tpu.dot_dimension_numbers<[1], [0], [0], [1], [0, 0, 1, 1], [], []>} : vector<128x80xbf16>, vector<80x2xbf16>, vector<128x2xf32> -> vector<128x2xf32>
    %505 = arith.addf %497, %504 : vector<128x2xf32>
    %c0_221 = arith.constant 0 : index
    %c0_222 = arith.constant 0 : index
    %506 = vector.load %arg11[%c0_221, %c0_222] : memref<128x1xf32, #tpu.memory_space<vmem>>, vector<128x1xf32>
    %507 = vector.broadcast %506 : vector<128x1xf32> to vector<128x2xf32>
    %508 = arith.addf %505, %507 : vector<128x2xf32>
    %cst_223 = arith.constant 0.000000e+00 : f32
    %509 = vector.broadcast %cst_223 : f32 to vector<128x2xf32>
    %510 = arith.cmpf oge, %508, %509 : vector<128x2xf32>
    %511 = vector.broadcast %0 : f32 to vector<128x2xf32>
    %512 = arith.mulf %511, %508 : vector<128x2xf32>
    %513 = arith.select %510, %508, %512 : vector<128x2xi1>, vector<128x2xf32>
    %c0_224 = arith.constant 0 : index
    %c0_225 = arith.constant 0 : index
    %514 = vector.load %arg12[%c0_224, %c0_225] : memref<128x128xbf16, #tpu.memory_space<vmem>>, vector<128x128xbf16>
    %515 = arith.truncf %513 : vector<128x2xf32> to vector<128x2xbf16>
    %cst_226 = arith.constant dense<0.000000e+00> : vector<128x2xf32>
    %516 = tpu.matmul %514, %515, %cst_226 {dimension_numbers = #tpu.dot_dimension_numbers<[1], [0], [0], [1], [0, 0, 1, 1], [], []>} : vector<128x128xbf16>, vector<128x2xbf16>, vector<128x2xf32> -> vector<128x2xf32>
    %c0_227 = arith.constant 0 : index
    %c0_228 = arith.constant 0 : index
    %517 = vector.load %arg13[%c0_227, %c0_228] : memref<128x1xf32, #tpu.memory_space<vmem>>, vector<128x1xf32>
    %518 = vector.broadcast %517 : vector<128x1xf32> to vector<128x2xf32>
    %519 = arith.addf %516, %518 : vector<128x2xf32>
    %cst_229 = arith.constant 0.000000e+00 : f32
    %520 = vector.broadcast %cst_229 : f32 to vector<128x2xf32>
    %521 = arith.cmpf oge, %519, %520 : vector<128x2xf32>
    %522 = vector.broadcast %0 : f32 to vector<128x2xf32>
    %523 = arith.mulf %522, %519 : vector<128x2xf32>
    %524 = arith.select %521, %519, %523 : vector<128x2xi1>, vector<128x2xf32>
    %c0_230 = arith.constant 0 : index
    %c0_231 = arith.constant 0 : index
    %525 = vector.load %arg14[%c0_230, %c0_231] : memref<42x128xbf16, #tpu.memory_space<vmem>>, vector<42x128xbf16>
    %526 = arith.truncf %524 : vector<128x2xf32> to vector<128x2xbf16>
    %cst_232 = arith.constant dense<0.000000e+00> : vector<42x2xf32>
    %527 = tpu.matmul %525, %526, %cst_232 {dimension_numbers = #tpu.dot_dimension_numbers<[1], [0], [0], [1], [0, 0, 1, 1], [], []>} : vector<42x128xbf16>, vector<128x2xbf16>, vector<42x2xf32> -> vector<42x2xf32>
    %c0_233 = arith.constant 0 : index
    %c0_234 = arith.constant 0 : index
    %528 = vector.load %arg15[%c0_233, %c0_234] : memref<42x1xf32, #tpu.memory_space<vmem>>, vector<42x1xf32>
    %529 = vector.broadcast %528 : vector<42x1xf32> to vector<42x2xf32>
    %530 = arith.addf %527, %529 : vector<42x2xf32>
    %cst_235 = arith.constant 0.000000e+00 : f32
    %531 = vector.broadcast %cst_235 : f32 to vector<42x2xf32>
    %532 = arith.cmpf oge, %530, %531 : vector<42x2xf32>
    %533 = vector.broadcast %0 : f32 to vector<42x2xf32>
    %534 = arith.mulf %533, %530 : vector<42x2xf32>
    %535 = arith.select %532, %530, %534 : vector<42x2xi1>, vector<42x2xf32>
    %c0_236 = arith.constant 0 : index
    %c0_237 = arith.constant 0 : index
    %536 = vector.load %arg17[%c0_236, %c0_237] : memref<42x2xf32, #tpu.memory_space<vmem>>, vector<42x2xf32>
    tpu.vector_store %arg17[%c0_236, %c0_237], %535 {strides = array<i32>} : memref<42x2xf32, #tpu.memory_space<vmem>>, vector<42x2xf32>,
    return
  }
  func.func @transform_0(%arg0: i32) -> (i32, i32) {
    %c0_i32 = arith.constant 0 : i32
    %c0_i32_0 = arith.constant 0 : i32
    %c0_i32_1 = arith.constant 0 : i32
    return %c0_i32, %c0_i32_0 : i32, i32
  }
  func.func @transform_1(%arg0: i32) -> (i32, i32, i32) {
    %c0_i32 = arith.constant 0 : i32
    %c0_i32_0 = arith.constant 0 : i32
    %c0_i32_1 = arith.constant 0 : i32
    %c0_i32_2 = arith.constant 0 : i32
    return %c0_i32, %c0_i32_0, %c0_i32_1 : i32, i32, i32
  }
  func.func @transform_2(%arg0: i32) -> (i32, i32) {
    %c0_i32 = arith.constant 0 : i32
    %c0_i32_0 = arith.constant 0 : i32
    %c0_i32_1 = arith.constant 0 : i32
    return %c0_i32, %c0_i32_0 : i32, i32
  }
  func.func @transform_3(%arg0: i32) -> (i32, i32, i32) {
    %c0_i32 = arith.constant 0 : i32
    %c0_i32_0 = arith.constant 0 : i32
    %c0_i32_1 = arith.constant 0 : i32
    %c0_i32_2 = arith.constant 0 : i32
    return %c0_i32, %c0_i32_0, %c0_i32_1 : i32, i32, i32
  }
  func.func @transform_4(%arg0: i32) -> (i32, i32) {
    %c0_i32 = arith.constant 0 : i32
    %c0_i32_0 = arith.constant 0 : i32
    %c0_i32_1 = arith.constant 0 : i32
    return %c0_i32, %c0_i32_0 : i32, i32
  }
  func.func @transform_5(%arg0: i32) -> (i32, i32, i32) {
    %c0_i32 = arith.constant 0 : i32
    %c0_i32_0 = arith.constant 0 : i32
    %c0_i32_1 = arith.constant 0 : i32
    %c0_i32_2 = arith.constant 0 : i32
    return %c0_i32, %c0_i32_0, %c0_i32_1 : i32, i32, i32
  }
  func.func @transform_6(%arg0: i32) -> (i32, i32) {
    %c0_i32 = arith.constant 0 : i32
    %c0_i32_0 = arith.constant 0 : i32
    %c0_i32_1 = arith.constant 0 : i32
    return %c0_i32, %c0_i32_0 : i32, i32
  }
  func.func @transform_7(%arg0: i32) -> (i32, i32, i32) {
    %c0_i32 = arith.constant 0 : i32
    %c0_i32_0 = arith.constant 0 : i32
    %c0_i32_1 = arith.constant 0 : i32
    %c0_i32_2 = arith.constant 0 : i32
    return %c0_i32, %c0_i32_0, %c0_i32_1 : i32, i32, i32
  }
  func.func @transform_8(%arg0: i32) -> (i32, i32) {
    %c0_i32 = arith.constant 0 : i32
    %c0_i32_0 = arith.constant 0 : i32
    %c0_i32_1 = arith.constant 0 : i32
    return %c0_i32, %c0_i32_0 : i32, i32
  }
  func.func @transform_9(%arg0: i32) -> (i32, i32, i32) {
    %c0_i32 = arith.constant 0 : i32
    %c0_i32_0 = arith.constant 0 : i32
    %c0_i32_1 = arith.constant 0 : i32
    %c0_i32_2 = arith.constant 0 : i32
    return %c0_i32, %c0_i32_0, %c0_i32_1 : i32, i32, i32
  }
  func.func @transform_10(%arg0: i32) -> (i32, i32) {
    %c0_i32 = arith.constant 0 : i32
    %c0_i32_0 = arith.constant 0 : i32
    %c0_i32_1 = arith.constant 0 : i32
    return %c0_i32, %c0_i32_0 : i32, i32
  }
  func.func @transform_11(%arg0: i32) -> (i32, i32) {
    %c0_i32 = arith.constant 0 : i32
    %c0_i32_0 = arith.constant 0 : i32
    %c0_i32_1 = arith.constant 0 : i32
    return %c0_i32, %c0_i32_0 : i32, i32
  }
  func.func @transform_12(%arg0: i32) -> (i32, i32) {
    %c0_i32 = arith.constant 0 : i32
    %c0_i32_0 = arith.constant 0 : i32
    %c0_i32_1 = arith.constant 0 : i32
    return %c0_i32, %c0_i32_0 : i32, i32
  }
  func.func @transform_13(%arg0: i32) -> (i32, i32) {
    %c0_i32 = arith.constant 0 : i32
    %c0_i32_0 = arith.constant 0 : i32
    %c0_i32_1 = arith.constant 0 : i32
    return %c0_i32, %c0_i32_0 : i32, i32
  }
  func.func @transform_14(%arg0: i32) -> (i32, i32) {
    %c0_i32 = arith.constant 0 : i32
    %c0_i32_0 = arith.constant 0 : i32
    %c0_i32_1 = arith.constant 0 : i32
    return %c0_i32, %c0_i32_0 : i32, i32
  }
  func.func @transform_15(%arg0: i32) -> i32 {
    %c0_i32 = arith.constant 0 : i32
    %c0_i32_0 = arith.constant 0 : i32
    return %c0_i32 : i32
  }
  func.func @transform_16(%arg0: i32) -> (i32, i32) {
    %c0_i32 = arith.constant 0 : i32
    %c0_i32_0 = arith.constant 0 : i32
    %c0_i32_1 = arith.constant 0 : i32
    return %c0_i32, %c0_i32_0 : i32, i32
  }
}

</mosaic_0001>

<llo_original>
// kernel: net_forward.4
$region0: #{net_forward.4}
  #allocation0 [shape = 'u32[]', space=smem, size = 0x4, offset = 0x4, fixed_abs, tag = 'smem constant byte address 0x4 - core index']
  #allocation1 [shape = 'u32[72,128]{1,0:T(1,128)}', space=vmem, size = 0x9000, scoped, tag = 'internal scratch']
  #allocation2 [shape = 'f32[1]{0:T(128)S(6)}', space=smem, size = 0x200, scoped, tag = 'scoped memory for net_forward.4']
  %s0 = inlined_call_operand.vmem [shape: bf16[8,75], index: 0, kind: input, shape index: {}]
  %s1 = inlined_call_operand.vmem [shape: bf16[75,5832], index: 1, kind: input, shape index: {}]
  %s2 = inlined_call_operand.vmem [shape: f32[8,1], index: 2, kind: input, shape index: {}]
  %s3 = inlined_call_operand.<no memory space> [shape: f32[1], index: 3, kind: input, shape index: {}]
  %s4 = inlined_call_operand.vmem [shape: bf16[8,5832], index: 4, kind: output, shape index: {}]
  %s5 = sld [smem:[#allocation0]]
  $region26: #{net_forward.4} parent=0
    _
  %s7 = ssub.s32 1, %s5
  %s8 = scalar_select 0, %s7, %s5
  %9 = sst [smem:[#allocation2]] %s3
  // Predicated region
  $region2: #{net_forward.4} parent=0 // pred_check
    _
  $region3: #{net_forward.4} parent=0 // pred_check_branch
    %11 = sbr.rel (0) target = $region5
  $region4: #{net_forward.4} parent=0 // pred_region
    _
  $region5: #{net_forward.4} parent=0 // pred_fallthru
    _
  // Predicated region
  $region6: #{net_forward.4} parent=0 // pred_check
    _
  $region7: #{net_forward.4} parent=0 // pred_check_branch
    %13 = sbr.rel (0) target = $region9
  $region8: #{net_forward.4} parent=0 // pred_region
    _
  $region9: #{net_forward.4} parent=0 // pred_fallthru
    _
  // Predicated region
  $region10: #{net_forward.4} parent=0 // pred_check
    _
  $region11: #{net_forward.4} parent=0 // pred_check_branch
    %15 = sbr.rel (0) target = $region13
  $region12: #{net_forward.4} parent=0 // pred_region
    _
  $region13: #{net_forward.4} parent=0 // pred_fallthru
    _
  // Predicated region
  $region14: #{net_forward.4} parent=0 // pred_check
    _
  $region15: #{net_forward.4} parent=0 // pred_check_branch
    %17 = sbr.rel (0) target = $region17
  $region16: #{net_forward.4} parent=0 // pred_region
    _
  $region17: #{net_forward.4} parent=0 // pred_fallthru
    _
  %v19 = vld [vmem:[%s0] sm:$0xf]
  %v20 = vld [vmem:[%s1] sm:$0xff]
  %v21 = vld [vmem:[%s1 + $0x8] sm:$0xff]
  %v22 = vld [vmem:[%s1 + $0x10] sm:$0xff]
  %v23 = vld [vmem:[%s1 + $0x18] sm:$0xff]
  %v24 = vld [vmem:[%s1 + $0x20] sm:$0xff]
  %v25 = vld [vmem:[%s1 + $0x28] sm:$0xff]
  %v26 = vld [vmem:[%s1 + $0x30] sm:$0xff]
  %v27 = vld [vmem:[%s1 + $0x38] sm:$0xff]
  %v28 = vld [vmem:[%s1 + $0x40] sm:$0xff]
  %v29 = vld [vmem:[%s1 + $0x48] sm:$0xff]
  %v30 = vld [vmem:[%s1 + $0x50] sm:$0xff]
  %v31 = vld [vmem:[%s1 + $0x58] sm:$0xff]
  %v32 = vld [vmem:[%s1 + $0x60] sm:$0xff]
  %v33 = vld [vmem:[%s1 + $0x68] sm:$0xff]
  %v34 = vld [vmem:[%s1 + $0x70] sm:$0xff]
  %v35 = vld [vmem:[%s1 + $0x78] sm:$0xff]
  %v36 = vld [vmem:[%s1 + $0x80] sm:$0xff]
  %v37 = vld [vmem:[%s1 + $0x88] sm:$0xff]
  %v38 = vld [vmem:[%s1 + $0x90] sm:$0xff]
  %v39 = vld [vmem:[%s1 + $0x98] sm:$0xff]
  %v40 = vld [vmem:[%s1 + $0xa0] sm:$0xff]
  %v41 = vld [vmem:[%s1 + $0xa8] sm:$0xff]
  %v42 = vld [vmem:[%s1 + $0xb0] sm:$0xff]
  %v43 = vld [vmem:[%s1 + $0xb8] sm:$0xff]
  %v44 = vld [vmem:[%s1 + $0xc0] sm:$0xff]
  %v45 = vld [vmem:[%s1 + $0xc8] sm:$0xff]
  %v46 = vld [vmem:[%s1 + $0xd0] sm:$0xff]
  %v47 = vld [vmem:[%s1 + $0xd8] sm:$0xff]
  %v48 = vld [vmem:[%s1 + $0xe0] sm:$0xff]
  %v49 = vld [vmem:[%s1 + $0xe8] sm:$0xff]
  %v50 = vld [vmem:[%s1 + $0xf0] sm:$0xff]
  %v51 = vld [vmem:[%s1 + $0xf8] sm:$0xff]
  %v52 = vld [vmem:[%s1 + $0x100] sm:$0xff]
  %v53 = vld [vmem:[%s1 + $0x108] sm:$0xff]
  %v54 = vld [vmem:[%s1 + $0x110] sm:$0xff]
  %v55 = vld [vmem:[%s1 + $0x118] sm:$0xff]
  %v56 = vld [vmem:[%s1 + $0x120] sm:$0xff]
  %v57 = vld [vmem:[%s1 + $0x128] sm:$0xff]
  %v58 = vld [vmem:[%s1 + $0x130] sm:$0xff]
  %v59 = vld [vmem:[%s1 + $0x138] sm:$0xff]
  %v60 = vld [vmem:[%s1 + $0x140] sm:$0xff]
  %v61 = vld [vmem:[%s1 + $0x148] sm:$0xff]
  %v62 = vld [vmem:[%s1 + $0x150] sm:$0xff]
  %v63 = vld [vmem:[%s1 + $0x158] sm:$0xff]
  %v64 = vld [vmem:[%s1 + $0x160] sm:$0xff]
  %v65 = vld [vmem:[%s1 + $0x168] sm:$0xff]
  %v66 = vld [vmem:[%s1 + $0x170] sm:$0xff]
  %v67 = vld [vmem:[%s1 + $0x178] sm:$0xff]
  %v68 = vld [vmem:[%s1 + $0x180] sm:$0xff]
  %v69 = vld [vmem:[%s1 + $0x188] sm:$0xff]
  %v70 = vld [vmem:[%s1 + $0x190] sm:$0xff]
  %v71 = vld [vmem:[%s1 + $0x198] sm:$0xff]
  %v72 = vld [vmem:[%s1 + $0x1a0] sm:$0xff]
  %v73 = vld [vmem:[%s1 + $0x1a8] sm:$0xff]
  %v74 = vld [vmem:[%s1 + $0x1b0] sm:$0xff]
  %v75 = vld [vmem:[%s1 + $0x1b8] sm:$0xff]
  %v76 = vld [vmem:[%s1 + $0x1c0] sm:$0xff]
  %v77 = vld [vmem:[%s1 + $0x1c8] sm:$0xff]
  %v78 = vld [vmem:[%s1 + $0x1d0] sm:$0xff]
  %v79 = vld [vmem:[%s1 + $0x1d8] sm:$0xff]
  %v80 = vld [vmem:[%s1 + $0x1e0] sm:$0xff]
  %v81 = vld [vmem:[%s1 + $0x1e8] sm:$0xff]
  %v82 = vld [vmem:[%s1 + $0x1f0] sm:$0xff]
  %v83 = vld [vmem:[%s1 + $0x1f8] sm:$0xff]
  %v84 = vld [vmem:[%s1 + $0x200] sm:$0xff]
  %v85 = vld [vmem:[%s1 + $0x208] sm:$0xff]
  %v86 = vld [vmem:[%s1 + $0x210] sm:$0xff]
  %v87 = vld [vmem:[%s1 + $0x218] sm:$0xff]
  %v88 = vld [vmem:[%s1 + $0x220] sm:$0xff]
  %v89 = vld [vmem:[%s1 + $0x228] sm:$0xff]
  %v90 = vld [vmem:[%s1 + $0x230] sm:$0xff]
  %v91 = vld [vmem:[%s1 + $0x238] sm:$0xff]
  %v92 = vld [vmem:[%s1 + $0x240] sm:$0xff]
  %v93 = vld [vmem:[%s1 + $0x248] sm:$0xff]
  %v94 = vld [vmem:[%s1 + $0x250] sm:$0xff]
  %v95 = vld [vmem:[%s1 + $0x258] sm:$0xff]
  %v96 = vld [vmem:[%s1 + $0x260] sm:$0xff]
  %v97 = vld [vmem:[%s1 + $0x268] sm:$0xff]
  %v98 = vld [vmem:[%s1 + $0x270] sm:$0xff]
  %v99 = vld [vmem:[%s1 + $0x278] sm:$0xff]
  %v100 = vld [vmem:[%s1 + $0x280] sm:$0xff]
  %v101 = vld [vmem:[%s1 + $0x288] sm:$0xff]
  %v102 = vld [vmem:[%s1 + $0x290] sm:$0xff]
  %v103 = vld [vmem:[%s1 + $0x298] sm:$0xff]
  %v104 = vld [vmem:[%s1 + $0x2a0] sm:$0xff]
  %v105 = vld [vmem:[%s1 + $0x2a8] sm:$0xff]
  %v106 = vld [vmem:[%s1 + $0x2b0] sm:$0xff]
  %v107 = vld [vmem:[%s1 + $0x2b8] sm:$0xff]
  %v108 = vld [vmem:[%s1 + $0x2c0] sm:$0xff]
  %v109 = vld [vmem:[%s1 + $0x2c8] sm:$0xff]
  %v110 = vld [vmem:[%s1 + $0x2d0] sm:$0xff]
  %v111 = vld [vmem:[%s1 + $0x2d8] sm:$0xff]
  %v112 = vld [vmem:[%s1 + $0x2e0] sm:$0xff]
  %v113 = vld [vmem:[%s1 + $0x2e8] sm:$0xff]
  %v114 = vld [vmem:[%s1 + $0x2f0] sm:$0xff]
  %v115 = vld [vmem:[%s1 + $0x2f8] sm:$0xff]
  %v116 = vld [vmem:[%s1 + $0x300] sm:$0xff]
  %v117 = vld [vmem:[%s1 + $0x308] sm:$0xff]
  %v118 = vld [vmem:[%s1 + $0x310] sm:$0xff]
  %v119 = vld [vmem:[%s1 + $0x318] sm:$0xff]
  %v120 = vld [vmem:[%s1 + $0x320] sm:$0xff]
  %v121 = vld [vmem:[%s1 + $0x328] sm:$0xff]
  %v122 = vld [vmem:[%s1 + $0x330] sm:$0xff]
  %v123 = vld [vmem:[%s1 + $0x338] sm:$0xff]
  %v124 = vld [vmem:[%s1 + $0x340] sm:$0xff]
  %v125 = vld [vmem:[%s1 + $0x348] sm:$0xff]
  %v126 = vld [vmem:[%s1 + $0x350] sm:$0xff]
  %v127 = vld [vmem:[%s1 + $0x358] sm:$0xff]
  %v128 = vld [vmem:[%s1 + $0x360] sm:$0xff]
  %v129 = vld [vmem:[%s1 + $0x368] sm:$0xff]
  %v130 = vld [vmem:[%s1 + $0x370] sm:$0xff]
  %v131 = vld [vmem:[%s1 + $0x378] sm:$0xff]
  %v132 = vld [vmem:[%s1 + $0x380] sm:$0xff]
  %v133 = vld [vmem:[%s1 + $0x388] sm:$0xff]
  %v134 = vld [vmem:[%s1 + $0x390] sm:$0xff]
  %v135 = vld [vmem:[%s1 + $0x398] sm:$0xff]
  %v136 = vld [vmem:[%s1 + $0x3a0] sm:$0xff]
  %v137 = vld [vmem:[%s1 + $0x3a8] sm:$0xff]
  %v138 = vld [vmem:[%s1 + $0x3b0] sm:$0xff]
  %v139 = vld [vmem:[%s1 + $0x3b8] sm:$0xff]
  %v140 = vld [vmem:[%s1 + $0x3c0] sm:$0xff]
  %v141 = vld [vmem:[%s1 + $0x3c8] sm:$0xff]
  %v142 = vld [vmem:[%s1 + $0x3d0] sm:$0xff]
  %v143 = vld [vmem:[%s1 + $0x3d8] sm:$0xff]
  %v144 = vld [vmem:[%s1 + $0x3e0] sm:$0xff]
  %v145 = vld [vmem:[%s1 + $0x3e8] sm:$0xff]
  %v146 = vld [vmem:[%s1 + $0x3f0] sm:$0xff]
  %v147 = vld [vmem:[%s1 + $0x3f8] sm:$0xff]
  %v148 = vld [vmem:[%s1 + $0x400] sm:$0xff]
  %v149 = vld [vmem:[%s1 + $0x408] sm:$0xff]
  %v150 = vld [vmem:[%s1 + $0x410] sm:$0xff]
  %v151 = vld [vmem:[%s1 + $0x418] sm:$0xff]
  %v152 = vld [vmem:[%s1 + $0x420] sm:$0xff]
  %v153 = vld [vmem:[%s1 + $0x428] sm:$0xff]
  %v154 = vld [vmem:[%s1 + $0x430] sm:$0xff]
  %v155 = vld [vmem:[%s1 + $0x438] sm:$0xff]
  %v156 = vld [vmem:[%s1 + $0x440] sm:$0xff]
  %v157 = vld [vmem:[%s1 + $0x448] sm:$0xff]
  %v158 = vld [vmem:[%s1 + $0x450] sm:$0xff]
  %v159 = vld [vmem:[%s1 + $0x458] sm:$0xff]
  %v160 = vld [vmem:[%s1 + $0x460] sm:$0xff]
  %v161 = vld [vmem:[%s1 + $0x468] sm:$0xff]
  %v162 = vld [vmem:[%s1 + $0x470] sm:$0xff]
  %v163 = vld [vmem:[%s1 + $0x478] sm:$0xff]
  %v164 = vld [vmem:[%s1 + $0x480] sm:$0xff]
  %v165 = vld [vmem:[%s1 + $0x488] sm:$0xff]
  %v166 = vld [vmem:[%s1 + $0x490] sm:$0xff]
  %v167 = vld [vmem:[%s1 + $0x498] sm:$0xff]
  %v168 = vld [vmem:[%s1 + $0x4a0] sm:$0xff]
  %v169 = vld [vmem:[%s1 + $0x4a8] sm:$0xff]
  %v170 = vld [vmem:[%s1 + $0x4b0] sm:$0xff]
  %v171 = vld [vmem:[%s1 + $0x4b8] sm:$0xff]
  %v172 = vld [vmem:[%s1 + $0x4c0] sm:$0xff]
  %v173 = vld [vmem:[%s1 + $0x4c8] sm:$0xff]
  %v174 = vld [vmem:[%s1 + $0x4d0] sm:$0xff]
  %v175 = vld [vmem:[%s1 + $0x4d8] sm:$0xff]
  %v176 = vld [vmem:[%s1 + $0x4e0] sm:$0xff]
  %v177 = vld [vmem:[%s1 + $0x4e8] sm:$0xff]
  %v178 = vld [vmem:[%s1 + $0x4f0] sm:$0xff]
  %v179 = vld [vmem:[%s1 + $0x4f8] sm:$0xff]
  %v180 = vld [vmem:[%s1 + $0x500] sm:$0xff]
  %v181 = vld [vmem:[%s1 + $0x508] sm:$0xff]
  %v182 = vld [vmem:[%s1 + $0x510] sm:$0xff]
  %v183 = vld [vmem:[%s1 + $0x518] sm:$0xff]
  %v184 = vld [vmem:[%s1 + $0x520] sm:$0xff]
  %v185 = vld [vmem:[%s1 + $0x528] sm:$0xff]
  %v186 = vld [vmem:[%s1 + $0x530] sm:$0xff]
  %v187 = vld [vmem:[%s1 + $0x538] sm:$0xff]
  %v188 = vld [vmem:[%s1 + $0x540] sm:$0xff]
  %v189 = vld [vmem:[%s1 + $0x548] sm:$0xff]
  %v190 = vld [vmem:[%s1 + $0x550] sm:$0xff]
  %v191 = vld [vmem:[%s1 + $0x558] sm:$0xff]
  %v192 = vld [vmem:[%s1 + $0x560] sm:$0xff]
  %v193 = vld [vmem:[%s1 + $0x568] sm:$0xff]
  %v194 = vld [vmem:[%s1 + $0x570] sm:$0xff]
  %v195 = vld [vmem:[%s1 + $0x578] sm:$0xff]
  %v196 = vld [vmem:[%s1 + $0x580] sm:$0xff]
  %v197 = vld [vmem:[%s1 + $0x588] sm:$0xff]
  %v198 = vld [vmem:[%s1 + $0x590] sm:$0xff]
  %v199 = vld [vmem:[%s1 + $0x598] sm:$0xff]
  %v200 = vld [vmem:[%s1 + $0x5a0] sm:$0xff]
  %v201 = vld [vmem:[%s1 + $0x5a8] sm:$0xff]
  %v202 = vld [vmem:[%s1 + $0x5b0] sm:$0xff]
  %v203 = vld [vmem:[%s1 + $0x5b8] sm:$0xff]
  %v204 = vld [vmem:[%s1 + $0x5c0] sm:$0xff]
  %v205 = vld [vmem:[%s1 + $0x5c8] sm:$0xff]
  %v206 = vld [vmem:[%s1 + $0x5d0] sm:$0xff]
  %v207 = vld [vmem:[%s1 + $0x5d8] sm:$0xff]
  %v208 = vld [vmem:[%s1 + $0x5e0] sm:$0xff]
  %v209 = vld [vmem:[%s1 + $0x5e8] sm:$0xff]
  %v210 = vld [vmem:[%s1 + $0x5f0] sm:$0xff]
  %v211 = vld [vmem:[%s1 + $0x5f8] sm:$0xff]
  %v212 = vld [vmem:[%s1 + $0x600] sm:$0xff]
  %v213 = vld [vmem:[%s1 + $0x608] sm:$0xff]
  %v214 = vld [vmem:[%s1 + $0x610] sm:$0xff]
  %v215 = vld [vmem:[%s1 + $0x618] sm:$0xff]
  %v216 = vld [vmem:[%s1 + $0x620] sm:$0xff]
  %v217 = vld [vmem:[%s1 + $0x628] sm:$0xff]
  %v218 = vld [vmem:[%s1 + $0x630] sm:$0xff]
  %v219 = vld [vmem:[%s1 + $0x638] sm:$0xff]
  %v220 = vld [vmem:[%s1 + $0x640] sm:$0xff]
  %v221 = vld [vmem:[%s1 + $0x648] sm:$0xff]
  %v222 = vld [vmem:[%s1 + $0x650] sm:$0xff]
  %v223 = vld [vmem:[%s1 + $0x658] sm:$0xff]
  %v224 = vld [vmem:[%s1 + $0x660] sm:$0xff]
  %v225 = vld [vmem:[%s1 + $0x668] sm:$0xff]
  %v226 = vld [vmem:[%s1 + $0x670] sm:$0xff]
  %v227 = vld [vmem:[%s1 + $0x678] sm:$0x33]
  %v228 = vld [vmem:[%s1 + $0x680] sm:$0x33]
  %v229 = vld [vmem:[%s1 + $0x688] sm:$0x33]
  %v230 = vld [vmem:[%s1 + $0x690] sm:$0x33]
  %v231 = vld [vmem:[%s1 + $0x698] sm:$0x33]
  %v232 = vld [vmem:[%s1 + $0x6a0] sm:$0x33]
  %v233 = vld [vmem:[%s1 + $0x6a8] sm:$0x33]
  %v234 = vld [vmem:[%s1 + $0x6b0] sm:$0x33]
  %v235 = vld [vmem:[%s1 + $0x6b8] sm:$0x33]
  %v236 = vld [vmem:[%s1 + $0x6c0] sm:$0x33]
  %v237 = vld [vmem:[%s1 + $0x6c8] sm:$0x33]
  %v238 = vld [vmem:[%s1 + $0x6d0] sm:$0x33]
  %v239 = vld [vmem:[%s1 + $0x6d8] sm:$0x33]
  %v240 = vld [vmem:[%s1 + $0x6e0] sm:$0x33]
  %v241 = vld [vmem:[%s1 + $0x6e8] sm:$0x33]
  %v242 = vld [vmem:[%s1 + $0x6f0] sm:$0x33]
  %v243 = vld [vmem:[%s1 + $0x6f8] sm:$0x33]
  %v244 = vld [vmem:[%s1 + $0x700] sm:$0x33]
  %v245 = vld [vmem:[%s1 + $0x708] sm:$0x33]
  %v246 = vld [vmem:[%s1 + $0x710] sm:$0x33]
  %v247 = vld [vmem:[%s1 + $0x718] sm:$0x33]
  %v248 = vld [vmem:[%s1 + $0x720] sm:$0x33]
  %v249 = vld [vmem:[%s1 + $0x728] sm:$0x33]
  %v250 = vld [vmem:[%s2] sm:$0xff]
  %252 = vset.pattern.permute.xlu0 0
  %253 = vperm.xlu0 %252, %v250
  %v254 = vpop.permute.xlu0 %253
  %v486 = vunpack.c.l.b16 %v20
  %v487 = vunpack.c.h.b16 %v20
  %v488 = vunpack.c.l.b16 %v21
  %v489 = vunpack.c.h.b16 %v21
  %v490 = vunpack.c.l.b16 %v22
  %v491 = vunpack.c.h.b16 %v22
  %v492 = vunpack.c.l.b16 %v23
  %v493 = vunpack.c.h.b16 %v23
  %v494 = vunpack.c.l.b16 %v24
  %v495 = vunpack.c.h.b16 %v24
  %v496 = vunpack.c.l.b16 %v25
  %v497 = vunpack.c.h.b16 %v25
  %v498 = vunpack.c.l.b16 %v26
  %v499 = vunpack.c.h.b16 %v26
  %v500 = vunpack.c.l.b16 %v27
  %v501 = vunpack.c.h.b16 %v27
  %v502 = vunpack.c.l.b16 %v28
  %v503 = vunpack.c.h.b16 %v28
  %v504 = vunpack.c.l.b16 %v29
  %v505 = vunpack.c.h.b16 %v29
  %v506 = vunpack.c.l.b16 %v30
  %v507 = vunpack.c.h.b16 %v30
  %v508 = vunpack.c.l.b16 %v31
  %v509 = vunpack.c.h.b16 %v31
  %v510 = vunpack.c.l.b16 %v32
  %v511 = vunpack.c.h.b16 %v32
  %v512 = vunpack.c.l.b16 %v33
  %v513 = vunpack.c.h.b16 %v33
  %v514 = vunpack.c.l.b16 %v34
  %v515 = vunpack.c.h.b16 %v34
  %v516 = vunpack.c.l.b16 %v35
  %v517 = vunpack.c.h.b16 %v35
  %v518 = vunpack.c.l.b16 %v36
  %v519 = vunpack.c.h.b16 %v36
  %v520 = vunpack.c.l.b16 %v37
  %v521 = vunpack.c.h.b16 %v37
  %v522 = vunpack.c.l.b16 %v38
  %v523 = vunpack.c.h.b16 %v38
  %v524 = vunpack.c.l.b16 %v39
  %v525 = vunpack.c.h.b16 %v39
  %v526 = vunpack.c.l.b16 %v40
  %v527 = vunpack.c.h.b16 %v40
  %v528 = vunpack.c.l.b16 %v41
  %v529 = vunpack.c.h.b16 %v41
  %v530 = vunpack.c.l.b16 %v42
  %v531 = vunpack.c.h.b16 %v42
  %v532 = vunpack.c.l.b16 %v43
  %v533 = vunpack.c.h.b16 %v43
  %v534 = vunpack.c.l.b16 %v44
  %v535 = vunpack.c.h.b16 %v44
  %v536 = vunpack.c.l.b16 %v45
  %v537 = vunpack.c.h.b16 %v45
  %v538 = vunpack.c.l.b16 %v46
  %v539 = vunpack.c.h.b16 %v46
  %v540 = vunpack.c.l.b16 %v47
  %v541 = vunpack.c.h.b16 %v47
  %v542 = vunpack.c.l.b16 %v48
  %v543 = vunpack.c.h.b16 %v48
  %v544 = vunpack.c.l.b16 %v49
  %v545 = vunpack.c.h.b16 %v49
  %v546 = vunpack.c.l.b16 %v50
  %v547 = vunpack.c.h.b16 %v50
  %v548 = vunpack.c.l.b16 %v51
  %v549 = vunpack.c.h.b16 %v51
  %v550 = vunpack.c.l.b16 %v52
  %v551 = vunpack.c.h.b16 %v52
  %v552 = vunpack.c.l.b16 %v53
  %v553 = vunpack.c.h.b16 %v53
  %v554 = vunpack.c.l.b16 %v54
  %v555 = vunpack.c.h.b16 %v54
  %v556 = vunpack.c.l.b16 %v55
  %v557 = vunpack.c.h.b16 %v55
  %v558 = vunpack.c.l.b16 %v56
  %v559 = vunpack.c.h.b16 %v56
  %v560 = vunpack.c.l.b16 %v57
  %v561 = vunpack.c.h.b16 %v57
  %v562 = vunpack.c.l.b16 %v58
  %v563 = vunpack.c.h.b16 %v58
  %v564 = vunpack.c.l.b16 %v59
  %v565 = vunpack.c.h.b16 %v59
  %v566 = vunpack.c.l.b16 %v60
  %v567 = vunpack.c.h.b16 %v60
  %v568 = vunpack.c.l.b16 %v61
  %v569 = vunpack.c.h.b16 %v61
  %v570 = vunpack.c.l.b16 %v62
  %v571 = vunpack.c.h.b16 %v62
  %v572 = vunpack.c.l.b16 %v63
  %v573 = vunpack.c.h.b16 %v63
  %v574 = vunpack.c.l.b16 %v64
  %v575 = vunpack.c.h.b16 %v64
  %v576 = vunpack.c.l.b16 %v65
  %v577 = vunpack.c.h.b16 %v65
  %v578 = vunpack.c.l.b16 %v66
  %v579 = vunpack.c.h.b16 %v66
  %v580 = vunpack.c.l.b16 %v67
  %v581 = vunpack.c.h.b16 %v67
  %v582 = vunpack.c.l.b16 %v68
  %v583 = vunpack.c.h.b16 %v68
  %v584 = vunpack.c.l.b16 %v69
  %v585 = vunpack.c.h.b16 %v69
  %v586 = vunpack.c.l.b16 %v70
  %v587 = vunpack.c.h.b16 %v70
  %v588 = vunpack.c.l.b16 %v71
  %v589 = vunpack.c.h.b16 %v71
  %v590 = vunpack.c.l.b16 %v72
  %v591 = vunpack.c.h.b16 %v72
  %v592 = vunpack.c.l.b16 %v73
  %v593 = vunpack.c.h.b16 %v73
  %v594 = vunpack.c.l.b16 %v74
  %v595 = vunpack.c.h.b16 %v74
  %v596 = vunpack.c.l.b16 %v75
  %v597 = vunpack.c.h.b16 %v75
  %v598 = vunpack.c.l.b16 %v76
  %v599 = vunpack.c.h.b16 %v76
  %v600 = vunpack.c.l.b16 %v77
  %v601 = vunpack.c.h.b16 %v77
  %v602 = vunpack.c.l.b16 %v78
  %v603 = vunpack.c.h.b16 %v78
  %v604 = vunpack.c.l.b16 %v79
  %v605 = vunpack.c.h.b16 %v79
  %v606 = vunpack.c.l.b16 %v80
  %v607 = vunpack.c.h.b16 %v80
  %v608 = vunpack.c.l.b16 %v81
  %v609 = vunpack.c.h.b16 %v81
  %v610 = vunpack.c.l.b16 %v82
  %v611 = vunpack.c.h.b16 %v82
  %v612 = vunpack.c.l.b16 %v83
  %v613 = vunpack.c.h.b16 %v83
  %v614 = vunpack.c.l.b16 %v84
  %v615 = vunpack.c.h.b16 %v84
  %v616 = vunpack.c.l.b16 %v85
  %v617 = vunpack.c.h.b16 %v85
  %v618 = vunpack.c.l.b16 %v86
  %v619 = vunpack.c.h.b16 %v86
  %v620 = vunpack.c.l.b16 %v87
  %v621 = vunpack.c.h.b16 %v87
  %v622 = vunpack.c.l.b16 %v88
  %v623 = vunpack.c.h.b16 %v88
  %v624 = vunpack.c.l.b16 %v89
  %v625 = vunpack.c.h.b16 %v89
  %v626 = vunpack.c.l.b16 %v90
  %v627 = vunpack.c.h.b16 %v90
  %v628 = vunpack.c.l.b16 %v91
  %v629 = vunpack.c.h.b16 %v91
  %v630 = vunpack.c.l.b16 %v92
  %v631 = vunpack.c.h.b16 %v92
  %v632 = vunpack.c.l.b16 %v93
  %v633 = vunpack.c.h.b16 %v93
  %v634 = vunpack.c.l.b16 %v94
  %v635 = vunpack.c.h.b16 %v94
  %v636 = vunpack.c.l.b16 %v95
  %v637 = vunpack.c.h.b16 %v95
  %v638 = vunpack.c.l.b16 %v96
  %v639 = vunpack.c.h.b16 %v96
  %v640 = vunpack.c.l.b16 %v97
  %v641 = vunpack.c.h.b16 %v97
  %v642 = vunpack.c.l.b16 %v98
  %v643 = vunpack.c.h.b16 %v98
  %v644 = vunpack.c.l.b16 %v99
  %v645 = vunpack.c.h.b16 %v99
  %v646 = vunpack.c.l.b16 %v100
  %v647 = vunpack.c.h.b16 %v100
  %v648 = vunpack.c.l.b16 %v101
  %v649 = vunpack.c.h.b16 %v101
  %v650 = vunpack.c.l.b16 %v102
  %v651 = vunpack.c.h.b16 %v102
  %v652 = vunpack.c.l.b16 %v103
  %v653 = vunpack.c.h.b16 %v103
  %v654 = vunpack.c.l.b16 %v104
  %v655 = vunpack.c.h.b16 %v104
  %v656 = vunpack.c.l.b16 %v105
  %v657 = vunpack.c.h.b16 %v105
  %v658 = vunpack.c.l.b16 %v106
  %v659 = vunpack.c.h.b16 %v106
  %v660 = vunpack.c.l.b16 %v107
  %v661 = vunpack.c.h.b16 %v107
  %v662 = vunpack.c.l.b16 %v108
  %v663 = vunpack.c.h.b16 %v108
  %v664 = vunpack.c.l.b16 %v109
  %v665 = vunpack.c.h.b16 %v109
  %v666 = vunpack.c.l.b16 %v110
  %v667 = vunpack.c.h.b16 %v110
  %v668 = vunpack.c.l.b16 %v111
  %v669 = vunpack.c.h.b16 %v111
  %v670 = vunpack.c.l.b16 %v112
  %v671 = vunpack.c.h.b16 %v112
  %v672 = vunpack.c.l.b16 %v113
  %v673 = vunpack.c.h.b16 %v113
  %v674 = vunpack.c.l.b16 %v114
  %v675 = vunpack.c.h.b16 %v114
  %v676 = vunpack.c.l.b16 %v115
  %v677 = vunpack.c.h.b16 %v115
  %v678 = vunpack.c.l.b16 %v116
  %v679 = vunpack.c.h.b16 %v116
  %v680 = vunpack.c.l.b16 %v117
  %v681 = vunpack.c.h.b16 %v117
  %v682 = vunpack.c.l.b16 %v118
  %v683 = vunpack.c.h.b16 %v118
  %v684 = vunpack.c.l.b16 %v119
  %v685 = vunpack.c.h.b16 %v119
  %v686 = vunpack.c.l.b16 %v120
  %v687 = vunpack.c.h.b16 %v120
  %v688 = vunpack.c.l.b16 %v121
  %v689 = vunpack.c.h.b16 %v121
  %v690 = vunpack.c.l.b16 %v122
  %v691 = vunpack.c.h.b16 %v122
  %v692 = vunpack.c.l.b16 %v123
  %v693 = vunpack.c.h.b16 %v123
  %v694 = vunpack.c.l.b16 %v124
  %v695 = vunpack.c.h.b16 %v124
  %v696 = vunpack.c.l.b16 %v125
  %v697 = vunpack.c.h.b16 %v125
  %v698 = vunpack.c.l.b16 %v126
  %v699 = vunpack.c.h.b16 %v126
  %v700 = vunpack.c.l.b16 %v127
  %v701 = vunpack.c.h.b16 %v127
  %v702 = vunpack.c.l.b16 %v128
  %v703 = vunpack.c.h.b16 %v128
  %v704 = vunpack.c.l.b16 %v129
  %v705 = vunpack.c.h.b16 %v129
  %v706 = vunpack.c.l.b16 %v130
  %v707 = vunpack.c.h.b16 %v130
  %v708 = vunpack.c.l.b16 %v131
  %v709 = vunpack.c.h.b16 %v131
  %v710 = vunpack.c.l.b16 %v132
  %v711 = vunpack.c.h.b16 %v132
  %v712 = vunpack.c.l.b16 %v133
  %v713 = vunpack.c.h.b16 %v133
  %v714 = vunpack.c.l.b16 %v134
  %v715 = vunpack.c.h.b16 %v134
  %v716 = vunpack.c.l.b16 %v135
  %v717 = vunpack.c.h.b16 %v135
  %v718 = vunpack.c.l.b16 %v136
  %v719 = vunpack.c.h.b16 %v136
  %v720 = vunpack.c.l.b16 %v137
  %v721 = vunpack.c.h.b16 %v137
  %v722 = vunpack.c.l.b16 %v138
  %v723 = vunpack.c.h.b16 %v138
  %v724 = vunpack.c.l.b16 %v139
  %v725 = vunpack.c.h.b16 %v139
  %v726 = vunpack.c.l.b16 %v140
  %v727 = vunpack.c.h.b16 %v140
  %v728 = vunpack.c.l.b16 %v141
  %v729 = vunpack.c.h.b16 %v141
  %v730 = vunpack.c.l.b16 %v142
  %v731 = vunpack.c.h.b16 %v142
  %v732 = vunpack.c.l.b16 %v143
  %v733 = vunpack.c.h.b16 %v143
  %v734 = vunpack.c.l.b16 %v144
  %v735 = vunpack.c.h.b16 %v144
  %v736 = vunpack.c.l.b16 %v145
  %v737 = vunpack.c.h.b16 %v145
  %v738 = vunpack.c.l.b16 %v146
  %v739 = vunpack.c.h.b16 %v146
  %v740 = vunpack.c.l.b16 %v147
  %v741 = vunpack.c.h.b16 %v147
  %v742 = vunpack.c.l.b16 %v148
  %v743 = vunpack.c.h.b16 %v148
  %v744 = vunpack.c.l.b16 %v149
  %v745 = vunpack.c.h.b16 %v149
  %v746 = vunpack.c.l.b16 %v150
  %v747 = vunpack.c.h.b16 %v150
  %v748 = vunpack.c.l.b16 %v151
  %v749 = vunpack.c.h.b16 %v151
  %v750 = vunpack.c.l.b16 %v152
  %v751 = vunpack.c.h.b16 %v152
  %v752 = vunpack.c.l.b16 %v153
  %v753 = vunpack.c.h.b16 %v153
  %v754 = vunpack.c.l.b16 %v154
  %v755 = vunpack.c.h.b16 %v154
  %v756 = vunpack.c.l.b16 %v155
  %v757 = vunpack.c.h.b16 %v155
  %v758 = vunpack.c.l.b16 %v156
  %v759 = vunpack.c.h.b16 %v156
  %v760 = vunpack.c.l.b16 %v157
  %v761 = vunpack.c.h.b16 %v157
  %v762 = vunpack.c.l.b16 %v158
  %v763 = vunpack.c.h.b16 %v158
  %v764 = vunpack.c.l.b16 %v159
  %v765 = vunpack.c.h.b16 %v159
  %v766 = vunpack.c.l.b16 %v160
  %v767 = vunpack.c.h.b16 %v160
  %v768 = vunpack.c.l.b16 %v161
  %v769 = vunpack.c.h.b16 %v161
  %v770 = vunpack.c.l.b16 %v162
  %v771 = vunpack.c.h.b16 %v162
  %v772 = vunpack.c.l.b16 %v163
  %v773 = vunpack.c.h.b16 %v163
  %v774 = vunpack.c.l.b16 %v164
  %v775 = vunpack.c.h.b16 %v164
  %v776 = vunpack.c.l.b16 %v165
  %v777 = vunpack.c.h.b16 %v165
  %v778 = vunpack.c.l.b16 %v166
  %v779 = vunpack.c.h.b16 %v166
  %v780 = vunpack.c.l.b16 %v167
  %v781 = vunpack.c.h.b16 %v167
  %v782 = vunpack.c.l.b16 %v168
  %v783 = vunpack.c.h.b16 %v168
  %v784 = vunpack.c.l.b16 %v169
  %v785 = vunpack.c.h.b16 %v169
  %v786 = vunpack.c.l.b16 %v170
  %v787 = vunpack.c.h.b16 %v170
  %v788 = vunpack.c.l.b16 %v171
  %v789 = vunpack.c.h.b16 %v171
  %v790 = vunpack.c.l.b16 %v172
  %v791 = vunpack.c.h.b16 %v172
  %v792 = vunpack.c.l.b16 %v173
  %v793 = vunpack.c.h.b16 %v173
  %v794 = vunpack.c.l.b16 %v174
  %v795 = vunpack.c.h.b16 %v174
  %v796 = vunpack.c.l.b16 %v175
  %v797 = vunpack.c.h.b16 %v175
  %v798 = vunpack.c.l.b16 %v176
  %v799 = vunpack.c.h.b16 %v176
  %v800 = vunpack.c.l.b16 %v177
  %v801 = vunpack.c.h.b16 %v177
  %v802 = vunpack.c.l.b16 %v178
  %v803 = vunpack.c.h.b16 %v178
  %v804 = vunpack.c.l.b16 %v179
  %v805 = vunpack.c.h.b16 %v179
  %v806 = vunpack.c.l.b16 %v180
  %v807 = vunpack.c.h.b16 %v180
  %v808 = vunpack.c.l.b16 %v181
  %v809 = vunpack.c.h.b16 %v181
  %v810 = vunpack.c.l.b16 %v182
  %v811 = vunpack.c.h.b16 %v182
  %v812 = vunpack.c.l.b16 %v183
  %v813 = vunpack.c.h.b16 %v183
  %v814 = vunpack.c.l.b16 %v184
  %v815 = vunpack.c.h.b16 %v184
  %v816 = vunpack.c.l.b16 %v185
  %v817 = vunpack.c.h.b16 %v185
  %v818 = vunpack.c.l.b16 %v186
  %v819 = vunpack.c.h.b16 %v186
  %v820 = vunpack.c.l.b16 %v187
  %v821 = vunpack.c.h.b16 %v187
  %v822 = vunpack.c.l.b16 %v188
  %v823 = vunpack.c.h.b16 %v188
  %v824 = vunpack.c.l.b16 %v189
  %v825 = vunpack.c.h.b16 %v189
  %v826 = vunpack.c.l.b16 %v190
  %v827 = vunpack.c.h.b16 %v190
  %v828 = vunpack.c.l.b16 %v191
  %v829 = vunpack.c.h.b16 %v191
  %v830 = vunpack.c.l.b16 %v192
  %v831 = vunpack.c.h.b16 %v192
  %v832 = vunpack.c.l.b16 %v193
  %v833 = vunpack.c.h.b16 %v193
  %v834 = vunpack.c.l.b16 %v194
  %v835 = vunpack.c.h.b16 %v194
  %v836 = vunpack.c.l.b16 %v195
  %v837 = vunpack.c.h.b16 %v195
  %v838 = vunpack.c.l.b16 %v196
  %v839 = vunpack.c.h.b16 %v196
  %v840 = vunpack.c.l.b16 %v197
  %v841 = vunpack.c.h.b16 %v197
  %v842 = vunpack.c.l.b16 %v198
  %v843 = vunpack.c.h.b16 %v198
  %v844 = vunpack.c.l.b16 %v199
  %v845 = vunpack.c.h.b16 %v199
  %v846 = vunpack.c.l.b16 %v200
  %v847 = vunpack.c.h.b16 %v200
  %v848 = vunpack.c.l.b16 %v201
  %v849 = vunpack.c.h.b16 %v201
  %v850 = vunpack.c.l.b16 %v202
  %v851 = vunpack.c.h.b16 %v202
  %v852 = vunpack.c.l.b16 %v203
  %v853 = vunpack.c.h.b16 %v203
  %v854 = vunpack.c.l.b16 %v204
  %v855 = vunpack.c.h.b16 %v204
  %v856 = vunpack.c.l.b16 %v205
  %v857 = vunpack.c.h.b16 %v205
  %v858 = vunpack.c.l.b16 %v206
  %v859 = vunpack.c.h.b16 %v206
  %v860 = vunpack.c.l.b16 %v207
  %v861 = vunpack.c.h.b16 %v207
  %v862 = vunpack.c.l.b16 %v208
  %v863 = vunpack.c.h.b16 %v208
  %v864 = vunpack.c.l.b16 %v209
  %v865 = vunpack.c.h.b16 %v209
  %v866 = vunpack.c.l.b16 %v210
  %v867 = vunpack.c.h.b16 %v210
  %v868 = vunpack.c.l.b16 %v211
  %v869 = vunpack.c.h.b16 %v211
  %v870 = vunpack.c.l.b16 %v212
  %v871 = vunpack.c.h.b16 %v212
  %v872 = vunpack.c.l.b16 %v213
  %v873 = vunpack.c.h.b16 %v213
  %v874 = vunpack.c.l.b16 %v214
  %v875 = vunpack.c.h.b16 %v214
  %v876 = vunpack.c.l.b16 %v215
  %v877 = vunpack.c.h.b16 %v215
  %v878 = vunpack.c.l.b16 %v216
  %v879 = vunpack.c.h.b16 %v216
  %v880 = vunpack.c.l.b16 %v217
  %v881 = vunpack.c.h.b16 %v217
  %v882 = vunpack.c.l.b16 %v218
  %v883 = vunpack.c.h.b16 %v218
  %v884 = vunpack.c.l.b16 %v219
  %v885 = vunpack.c.h.b16 %v219
  %v886 = vunpack.c.l.b16 %v220
  %v887 = vunpack.c.h.b16 %v220
  %v888 = vunpack.c.l.b16 %v221
  %v889 = vunpack.c.h.b16 %v221
  %v890 = vunpack.c.l.b16 %v222
  %v891 = vunpack.c.h.b16 %v222
  %v892 = vunpack.c.l.b16 %v223
  %v893 = vunpack.c.h.b16 %v223
  %v894 = vunpack.c.l.b16 %v224
  %v895 = vunpack.c.h.b16 %v224
  %v896 = vunpack.c.l.b16 %v225
  %v897 = vunpack.c.h.b16 %v225
  %v898 = vunpack.c.l.b16 %v226
  %v899 = vunpack.c.h.b16 %v226
  %v900 = vunpack.c.l.b16 %v227
  %v901 = vunpack.c.h.b16 %v227
  %v902 = vunpack.c.l.b16 %v228
  %v903 = vunpack.c.h.b16 %v228
  %v904 = vunpack.c.l.b16 %v229
  %v905 = vunpack.c.h.b16 %v229
  %v906 = vunpack.c.l.b16 %v230
  %v907 = vunpack.c.h.b16 %v230
  %v908 = vunpack.c.l.b16 %v231
  %v909 = vunpack.c.h.b16 %v231
  %v910 = vunpack.c.l.b16 %v232
  %v911 = vunpack.c.h.b16 %v232
  %v912 = vunpack.c.l.b16 %v233
  %v913 = vunpack.c.h.b16 %v233
  %v914 = vunpack.c.l.b16 %v234
  %v915 = vunpack.c.h.b16 %v234
  %v916 = vunpack.c.l.b16 %v235
  %v917 = vunpack.c.h.b16 %v235
  %v918 = vunpack.c.l.b16 %v236
  %v919 = vunpack.c.h.b16 %v236
  %v920 = vunpack.c.l.b16 %v237
  %v921 = vunpack.c.h.b16 %v237
  %v922 = vunpack.c.l.b16 %v238
  %v923 = vunpack.c.h.b16 %v238
  %v924 = vunpack.c.l.b16 %v239
  %v925 = vunpack.c.h.b16 %v239
  %v926 = vunpack.c.l.b16 %v240
  %v927 = vunpack.c.h.b16 %v240
  %v928 = vunpack.c.l.b16 %v241
  %v929 = vunpack.c.h.b16 %v241
  %v930 = vunpack.c.l.b16 %v242
  %v931 = vunpack.c.h.b16 %v242
  %v932 = vunpack.c.l.b16 %v243
  %v933 = vunpack.c.h.b16 %v243
  %v934 = vunpack.c.l.b16 %v244
  %v935 = vunpack.c.h.b16 %v244
  %v936 = vunpack.c.l.b16 %v245
  %v937 = vunpack.c.h.b16 %v245
  %v938 = vunpack.c.l.b16 %v246
  %v939 = vunpack.c.h.b16 %v246
  %v940 = vunpack.c.l.b16 %v247
  %v941 = vunpack.c.h.b16 %v247
  %v942 = vunpack.c.l.b16 %v248
  %v943 = vunpack.c.h.b16 %v248
  %v944 = vunpack.c.l.b16 %v249
  %v945 = vunpack.c.h.b16 %v249
  %v946 = vpack.c.b16 %v532, %v486
  %v947 = vpack.c.b16 %v533, %v487
  %v948 = vpack.c.b16 %v534, %v488
  %v949 = vpack.c.b16 %v535, %v489
  %v950 = vpack.c.b16 %v536, %v490
  %v951 = vpack.c.b16 %v537, %v491
  %v952 = vpack.c.b16 %v538, %v492
  %v953 = vpack.c.b16 %v539, %v493
  %v954 = vpack.c.b16 %v540, %v494
  %v955 = vpack.c.b16 %v541, %v495
  %v956 = vpack.c.b16 %v542, %v496
  %v957 = vpack.c.b16 %v543, %v497
  %v958 = vpack.c.b16 %v544, %v498
  %v959 = vpack.c.b16 %v545, %v499
  %v960 = vpack.c.b16 %v546, %v500
  %v961 = vpack.c.b16 %v547, %v501
  %v962 = vpack.c.b16 %v548, %v502
  %v963 = vpack.c.b16 %v549, %v503
  %v964 = vpack.c.b16 %v550, %v504
  %v965 = vpack.c.b16 %v551, %v505
  %v966 = vpack.c.b16 %v552, %v506
  %v967 = vpack.c.b16 %v553, %v507
  %v968 = vpack.c.b16 %v554, %v508
  %v969 = vpack.c.b16 %v555, %v509
  %v970 = vpack.c.b16 %v556, %v510
  %v971 = vpack.c.b16 %v557, %v511
  %v972 = vpack.c.b16 %v558, %v512
  %v973 = vpack.c.b16 %v559, %v513
  %v974 = vpack.c.b16 %v560, %v514
  %v975 = vpack.c.b16 %v561, %v515
  %v976 = vpack.c.b16 %v562, %v516
  %v977 = vpack.c.b16 %v563, %v517
  %v978 = vpack.c.b16 %v564, %v518
  %v979 = vpack.c.b16 %v565, %v519
  %v980 = vpack.c.b16 %v566, %v520
  %v981 = vpack.c.b16 %v567, %v521
  %v982 = vpack.c.b16 %v568, %v522
  %v983 = vpack.c.b16 %v569, %v523
  %v984 = vpack.c.b16 %v570, %v524
  %v985 = vpack.c.b16 %v571, %v525
  %v986 = vpack.c.b16 %v572, %v526
  %v987 = vpack.c.b16 %v573, %v527
  %v988 = vpack.c.b16 %v574, %v528
  %v989 = vpack.c.b16 %v575, %v529
  %v990 = vpack.c.b16 %v576, %v530
  %v991 = vpack.c.b16 %v577, %v531
  %v992 = vpack.c.b16 %v624, %v578
  %v993 = vpack.c.b16 %v625, %v579
  %v994 = vpack.c.b16 %v626, %v580
  %v995 = vpack.c.b16 %v627, %v581
  %v996 = vpack.c.b16 %v628, %v582
  %v997 = vpack.c.b16 %v629, %v583
  %v998 = vpack.c.b16 %v630, %v584
  %v999 = vpack.c.b16 %v631, %v585
  %v1000 = vpack.c.b16 %v632, %v586
  %v1001 = vpack.c.b16 %v633, %v587
  %v1002 = vpack.c.b16 %v634, %v588
  %v1003 = vpack.c.b16 %v635, %v589
  %v1004 = vpack.c.b16 %v636, %v590
  %v1005 = vpack.c.b16 %v637, %v591
  %v1006 = vpack.c.b16 %v638, %v592
  %v1007 = vpack.c.b16 %v639, %v593
  %v1008 = vpack.c.b16 %v640, %v594
  %v1009 = vpack.c.b16 %v641, %v595
  %v1010 = vpack.c.b16 %v642, %v596
  %v1011 = vpack.c.b16 %v643, %v597
  %v1012 = vpack.c.b16 %v644, %v598
  %v1013 = vpack.c.b16 %v645, %v599
  %v1014 = vpack.c.b16 %v646, %v600
  %v1015 = vpack.c.b16 %v647, %v601
  %v1016 = vpack.c.b16 %v648, %v602
  %v1017 = vpack.c.b16 %v649, %v603
  %v1018 = vpack.c.b16 %v650, %v604
  %v1019 = vpack.c.b16 %v651, %v605
  %v1020 = vpack.c.b16 %v652, %v606
  %v1021 = vpack.c.b16 %v653, %v607
  %v1022 = vpack.c.b16 %v654, %v608
  %v1023 = vpack.c.b16 %v655, %v609
  %v1024 = vpack.c.b16 %v656, %v610
  %v1025 = vpack.c.b16 %v657, %v611
  %v1026 = vpack.c.b16 %v658, %v612
  %v1027 = vpack.c.b16 %v659, %v613
  %v1028 = vpack.c.b16 %v660, %v614
  %v1029 = vpack.c.b16 %v661, %v615
  %v1030 = vpack.c.b16 %v662, %v616
  %v1031 = vpack.c.b16 %v663, %v617
  %v1032 = vpack.c.b16 %v664, %v618
  %v1033 = vpack.c.b16 %v665, %v619
  %v1034 = vpack.c.b16 %v666, %v620
  %v1035 = vpack.c.b16 %v667, %v621
  %v1036 = vpack.c.b16 %v668, %v622
  %v1037 = vpack.c.b16 %v669, %v623
  %v1038 = vpack.c.b16 %v716, %v670
  %v1039 = vpack.c.b16 %v717, %v671
  %v1040 = vpack.c.b16 %v718, %v672
  %v1041 = vpack.c.b16 %v719, %v673
  %v1042 = vpack.c.b16 %v720, %v674
  %v1043 = vpack.c.b16 %v721, %v675
  %v1044 = vpack.c.b16 %v722, %v676
  %v1045 = vpack.c.b16 %v723, %v677
  %v1046 = vpack.c.b16 %v724, %v678
  %v1047 = vpack.c.b16 %v725, %v679
  %v1048 = vpack.c.b16 %v726, %v680
  %v1049 = vpack.c.b16 %v727, %v681
  %v1050 = vpack.c.b16 %v728, %v682
  %v1051 = vpack.c.b16 %v729, %v683
  %v1052 = vpack.c.b16 %v730, %v684
  %v1053 = vpack.c.b16 %v731, %v685
  %v1054 = vpack.c.b16 %v732, %v686
  %v1055 = vpack.c.b16 %v733, %v687
  %v1056 = vpack.c.b16 %v734, %v688
  %v1057 = vpack.c.b16 %v735, %v689
  %v1058 = vpack.c.b16 %v736, %v690
  %v1059 = vpack.c.b16 %v737, %v691
  %v1060 = vpack.c.b16 %v738, %v692
  %v1061 = vpack.c.b16 %v739, %v693
  %v1062 = vpack.c.b16 %v740, %v694
  %v1063 = vpack.c.b16 %v741, %v695
  %v1064 = vpack.c.b16 %v742, %v696
  %v1065 = vpack.c.b16 %v743, %v697
  %v1066 = vpack.c.b16 %v744, %v698
  %v1067 = vpack.c.b16 %v745, %v699
  %v1068 = vpack.c.b16 %v746, %v700
  %v1069 = vpack.c.b16 %v747, %v701
  %v1070 = vpack.c.b16 %v748, %v702
  %v1071 = vpack.c.b16 %v749, %v703
  %v1072 = vpack.c.b16 %v750, %v704
  %v1073 = vpack.c.b16 %v751, %v705
  %v1074 = vpack.c.b16 %v752, %v706
  %v1075 = vpack.c.b16 %v753, %v707
  %v1076 = vpack.c.b16 %v754, %v708
  %v1077 = vpack.c.b16 %v755, %v709
  %v1078 = vpack.c.b16 %v756, %v710
  %v1079 = vpack.c.b16 %v757, %v711
  %v1080 = vpack.c.b16 %v758, %v712
  %v1081 = vpack.c.b16 %v759, %v713
  %v1082 = vpack.c.b16 %v760, %v714
  %v1083 = vpack.c.b16 %v761, %v715
  %v1084 = vpack.c.b16 %v808, %v762
  %v1085 = vpack.c.b16 %v809, %v763
  %v1086 = vpack.c.b16 %v810, %v764
  %v1087 = vpack.c.b16 %v811, %v765
  %v1088 = vpack.c.b16 %v812, %v766
  %v1089 = vpack.c.b16 %v813, %v767
  %v1090 = vpack.c.b16 %v814, %v768
  %v1091 = vpack.c.b16 %v815, %v769
  %v1092 = vpack.c.b16 %v816, %v770
  %v1093 = vpack.c.b16 %v817, %v771
  %v1094 = vpack.c.b16 %v818, %v772
  %v1095 = vpack.c.b16 %v819, %v773
  %v1096 = vpack.c.b16 %v820, %v774
  %v1097 = vpack.c.b16 %v821, %v775
  %v1098 = vpack.c.b16 %v822, %v776
  %v1099 = vpack.c.b16 %v823, %v777
  %v1100 = vpack.c.b16 %v824, %v778
  %v1101 = vpack.c.b16 %v825, %v779
  %v1102 = vpack.c.b16 %v826, %v780
  %v1103 = vpack.c.b16 %v827, %v781
  %v1104 = vpack.c.b16 %v828, %v782
  %v1105 = vpack.c.b16 %v829, %v783
  %v1106 = vpack.c.b16 %v830, %v784
  %v1107 = vpack.c.b16 %v831, %v785
  %v1108 = vpack.c.b16 %v832, %v786
  %v1109 = vpack.c.b16 %v833, %v787
  %v1110 = vpack.c.b16 %v834, %v788
  %v1111 = vpack.c.b16 %v835, %v789
  %v1112 = vpack.c.b16 %v836, %v790
  %v1113 = vpack.c.b16 %v837, %v791
  %v1114 = vpack.c.b16 %v838, %v792
  %v1115 = vpack.c.b16 %v839, %v793
  %v1116 = vpack.c.b16 %v840, %v794
  %v1117 = vpack.c.b16 %v841, %v795
  %v1118 = vpack.c.b16 %v842, %v796
  %v1119 = vpack.c.b16 %v843, %v797
  %v1120 = vpack.c.b16 %v844, %v798
  %v1121 = vpack.c.b16 %v845, %v799
  %v1122 = vpack.c.b16 %v846, %v800
  %v1123 = vpack.c.b16 %v847, %v801
  %v1124 = vpack.c.b16 %v848, %v802
  %v1125 = vpack.c.b16 %v849, %v803
  %v1126 = vpack.c.b16 %v850, %v804
  %v1127 = vpack.c.b16 %v851, %v805
  %v1128 = vpack.c.b16 %v852, %v806
  %v1129 = vpack.c.b16 %v853, %v807
  %v1130 = vpack.c.b16 %v900, %v854
  %v1131 = vpack.c.b16 %v901, %v855
  %v1132 = vpack.c.b16 %v902, %v856
  %v1133 = vpack.c.b16 %v903, %v857
  %v1134 = vpack.c.b16 %v904, %v858
  %v1135 = vpack.c.b16 %v905, %v859
  %v1136 = vpack.c.b16 %v906, %v860
  %v1137 = vpack.c.b16 %v907, %v861
  %v1138 = vpack.c.b16 %v908, %v862
  %v1139 = vpack.c.b16 %v909, %v863
  %v1140 = vpack.c.b16 %v910, %v864
  %v1141 = vpack.c.b16 %v911, %v865
  %v1142 = vpack.c.b16 %v912, %v866
  %v1143 = vpack.c.b16 %v913, %v867
  %v1144 = vpack.c.b16 %v914, %v868
  %v1145 = vpack.c.b16 %v915, %v869
  %v1146 = vpack.c.b16 %v916, %v870
  %v1147 = vpack.c.b16 %v917, %v871
  %v1148 = vpack.c.b16 %v918, %v872
  %v1149 = vpack.c.b16 %v919, %v873
  %v1150 = vpack.c.b16 %v920, %v874
  %v1151 = vpack.c.b16 %v921, %v875
  %v1152 = vpack.c.b16 %v922, %v876
  %v1153 = vpack.c.b16 %v923, %v877
  %v1154 = vpack.c.b16 %v924, %v878
  %v1155 = vpack.c.b16 %v925, %v879
  %v1156 = vpack.c.b16 %v926, %v880
  %v1157 = vpack.c.b16 %v927, %v881
  %v1158 = vpack.c.b16 %v928, %v882
  %v1159 = vpack.c.b16 %v929, %v883
  %v1160 = vpack.c.b16 %v930, %v884
  %v1161 = vpack.c.b16 %v931, %v885
  %v1162 = vpack.c.b16 %v932, %v886
  %v1163 = vpack.c.b16 %v933, %v887
  %v1164 = vpack.c.b16 %v934, %v888
  %v1165 = vpack.c.b16 %v935, %v889
  %v1166 = vpack.c.b16 %v936, %v890
  %v1167 = vpack.c.b16 %v937, %v891
  %v1168 = vpack.c.b16 %v938, %v892
  %v1169 = vpack.c.b16 %v939, %v893
  %v1170 = vpack.c.b16 %v940, %v894
  %v1171 = vpack.c.b16 %v941, %v895
  %v1172 = vpack.c.b16 %v942, %v896
  %v1173 = vpack.c.b16 %v943, %v897
  %v1174 = vpack.c.b16 %v944, %v898
  %v1175 = vpack.c.b16 %v945, %v899
  %vm1360 = vcmask 613376
  %v1362 = vsel %vm1360, %v19, 0
  %vm1364 = vcmask 1044480
  %vm1365 = vcmask 1045504
  %v1366 = vsel %vm1364, 4294967295, 65535
  %v1367 = vsel %vm1365, %v1366, 0
  %v1369 = vand.u32 %v1130, %v1367
  %v1372 = vand.u32 %v1131, %v1367
  %v1375 = vand.u32 %v1132, %v1367
  %v1378 = vand.u32 %v1133, %v1367
  %v1381 = vand.u32 %v1134, %v1367
  %v1384 = vand.u32 %v1135, %v1367
  %v1387 = vand.u32 %v1136, %v1367
  %v1390 = vand.u32 %v1137, %v1367
  %v1393 = vand.u32 %v1138, %v1367
  %v1396 = vand.u32 %v1139, %v1367
  %v1399 = vand.u32 %v1140, %v1367
  %v1402 = vand.u32 %v1141, %v1367
  %v1405 = vand.u32 %v1142, %v1367
  %v1408 = vand.u32 %v1143, %v1367
  %v1411 = vand.u32 %v1144, %v1367
  %v1414 = vand.u32 %v1145, %v1367
  %v1417 = vand.u32 %v1146, %v1367
  %v1420 = vand.u32 %v1147, %v1367
  %v1423 = vand.u32 %v1148, %v1367
  %v1426 = vand.u32 %v1149, %v1367
  %v1429 = vand.u32 %v1150, %v1367
  %v1432 = vand.u32 %v1151, %v1367
  %v1435 = vand.u32 %v1152, %v1367
  %v1438 = vand.u32 %v1153, %v1367
  %v1441 = vand.u32 %v1154, %v1367
  %v1444 = vand.u32 %v1155, %v1367
  %v1447 = vand.u32 %v1156, %v1367
  %v1450 = vand.u32 %v1157, %v1367
  %v1453 = vand.u32 %v1158, %v1367
  %v1456 = vand.u32 %v1159, %v1367
  %v1459 = vand.u32 %v1160, %v1367
  %v1462 = vand.u32 %v1161, %v1367
  %v1465 = vand.u32 %v1162, %v1367
  %v1468 = vand.u32 %v1163, %v1367
  %v1471 = vand.u32 %v1164, %v1367
  %v1474 = vand.u32 %v1165, %v1367
  %v1477 = vand.u32 %v1166, %v1367
  %v1480 = vand.u32 %v1167, %v1367
  %v1483 = vand.u32 %v1168, %v1367
  %v1486 = vand.u32 %v1169, %v1367
  %v1489 = vand.u32 %v1170, %v1367
  %v1492 = vand.u32 %v1171, %v1367
  %v1495 = vand.u32 %v1172, %v1367
  %v1498 = vand.u32 %v1173, %v1367
  %v1501 = vand.u32 %v1174, %v1367
  %v1504 = vand.u32 %v1175, %v1367
  %1506 = vmatpush.bf16.msra.mxu0 0
  %1507 = vmatpush.bf16.msra.mxu0 0
  %1508 = vmatpush.bf16.msra.mxu0 0
  %1509 = vmatpush.bf16.msra.mxu0 %v1369
  %1510 = vmatpush.bf16.msra.mxu0 %v1084
  %1511 = vmatpush.bf16.msra.mxu0 %v1038
  %1512 = vmatpush.bf16.msra.mxu0 %v992
  %1513 = vmatpush.bf16.msra.mxu0 %v946
  %1514 = vmatmul.bf16.gmra.mxu0 %v1362
  %v1515 = vpop.f32.mrf.mxu0
  %v1516 = vadd.f32 %v254, %v1515
  %v1517 = vpop.f32.mrf.mxu0
  %1518 = vdwg.mxu0
  %1519 = vmatpush.bf16.msra.mxu0 0
  %1520 = vmatpush.bf16.msra.mxu0 0
  %1521 = vmatpush.bf16.msra.mxu0 0
  %1522 = vmatpush.bf16.msra.mxu0 %v1372
  %1523 = vmatpush.bf16.msra.mxu0 %v1085
  %1524 = vmatpush.bf16.msra.mxu0 %v1039
  %1525 = vmatpush.bf16.msra.mxu0 %v993
  %1526 = vmatpush.bf16.msra.mxu0 %v947
  %1527 = vmatmul.bf16.gmra.mxu0 %v1362
  %v1528 = vpop.f32.mrf.mxu0
  %v1529 = vadd.f32 %v254, %v1528
  %v1530 = vpop.f32.mrf.mxu0
  %1531 = vdwg.mxu0
  %1532 = vmatpush.bf16.msra.mxu0 0
  %1533 = vmatpush.bf16.msra.mxu0 0
  %1534 = vmatpush.bf16.msra.mxu0 0
  %1535 = vmatpush.bf16.msra.mxu0 %v1375
  %1536 = vmatpush.bf16.msra.mxu0 %v1086
  %1537 = vmatpush.bf16.msra.mxu0 %v1040
  %1538 = vmatpush.bf16.msra.mxu0 %v994
  %1539 = vmatpush.bf16.msra.mxu0 %v948
  %1540 = vmatmul.bf16.gmra.mxu0 %v1362
  %v1541 = vpop.f32.mrf.mxu0
  %v1542 = vadd.f32 %v254, %v1541
  %v1543 = vpop.f32.mrf.mxu0
  %1544 = vdwg.mxu0
  %1545 = vmatpush.bf16.msra.mxu0 0
  %1546 = vmatpush.bf16.msra.mxu0 0
  %1547 = vmatpush.bf16.msra.mxu0 0
  %1548 = vmatpush.bf16.msra.mxu0 %v1378
  %1549 = vmatpush.bf16.msra.mxu0 %v1087
  %1550 = vmatpush.bf16.msra.mxu0 %v1041
  %1551 = vmatpush.bf16.msra.mxu0 %v995
  %1552 = vmatpush.bf16.msra.mxu0 %v949
  %1553 = vmatmul.bf16.gmra.mxu0 %v1362
  %v1554 = vpop.f32.mrf.mxu0
  %v1555 = vadd.f32 %v254, %v1554
  %v1556 = vpop.f32.mrf.mxu0
  %1557 = vdwg.mxu0
  %1558 = vmatpush.bf16.msra.mxu0 0
  %1559 = vmatpush.bf16.msra.mxu0 0
  %1560 = vmatpush.bf16.msra.mxu0 0
  %1561 = vmatpush.bf16.msra.mxu0 %v1381
  %1562 = vmatpush.bf16.msra.mxu0 %v1088
  %1563 = vmatpush.bf16.msra.mxu0 %v1042
  %1564 = vmatpush.bf16.msra.mxu0 %v996
  %1565 = vmatpush.bf16.msra.mxu0 %v950
  %1566 = vmatmul.bf16.gmra.mxu0 %v1362
  %v1567 = vpop.f32.mrf.mxu0
  %v1568 = vadd.f32 %v254, %v1567
  %v1569 = vpop.f32.mrf.mxu0
  %1570 = vdwg.mxu0
  %1571 = vmatpush.bf16.msra.mxu0 0
  %1572 = vmatpush.bf16.msra.mxu0 0
  %1573 = vmatpush.bf16.msra.mxu0 0
  %1574 = vmatpush.bf16.msra.mxu0 %v1384
  %1575 = vmatpush.bf16.msra.mxu0 %v1089
  %1576 = vmatpush.bf16.msra.mxu0 %v1043
  %1577 = vmatpush.bf16.msra.mxu0 %v997
  %1578 = vmatpush.bf16.msra.mxu0 %v951
  %1579 = vmatmul.bf16.gmra.mxu0 %v1362
  %v1580 = vpop.f32.mrf.mxu0
  %v1581 = vadd.f32 %v254, %v1580
  %v1582 = vpop.f32.mrf.mxu0
  %1583 = vdwg.mxu0
  %1584 = vmatpush.bf16.msra.mxu0 0
  %1585 = vmatpush.bf16.msra.mxu0 0
  %1586 = vmatpush.bf16.msra.mxu0 0
  %1587 = vmatpush.bf16.msra.mxu0 %v1387
  %1588 = vmatpush.bf16.msra.mxu0 %v1090
  %1589 = vmatpush.bf16.msra.mxu0 %v1044
  %1590 = vmatpush.bf16.msra.mxu0 %v998
  %1591 = vmatpush.bf16.msra.mxu0 %v952
  %1592 = vmatmul.bf16.gmra.mxu0 %v1362
  %v1593 = vpop.f32.mrf.mxu0
  %v1594 = vadd.f32 %v254, %v1593
  %v1595 = vpop.f32.mrf.mxu0
  %1596 = vdwg.mxu0
  %1597 = vmatpush.bf16.msra.mxu0 0
  %1598 = vmatpush.bf16.msra.mxu0 0
  %1599 = vmatpush.bf16.msra.mxu0 0
  %1600 = vmatpush.bf16.msra.mxu0 %v1390
  %1601 = vmatpush.bf16.msra.mxu0 %v1091
  %1602 = vmatpush.bf16.msra.mxu0 %v1045
  %1603 = vmatpush.bf16.msra.mxu0 %v999
  %1604 = vmatpush.bf16.msra.mxu0 %v953
  %1605 = vmatmul.bf16.gmra.mxu0 %v1362
  %v1606 = vpop.f32.mrf.mxu0
  %v1607 = vadd.f32 %v254, %v1606
  %v1608 = vpop.f32.mrf.mxu0
  %1609 = vdwg.mxu0
  %1610 = vmatpush.bf16.msra.mxu0 0
  %1611 = vmatpush.bf16.msra.mxu0 0
  %1612 = vmatpush.bf16.msra.mxu0 0
  %1613 = vmatpush.bf16.msra.mxu0 %v1393
  %1614 = vmatpush.bf16.msra.mxu0 %v1092
  %1615 = vmatpush.bf16.msra.mxu0 %v1046
  %1616 = vmatpush.bf16.msra.mxu0 %v1000
  %1617 = vmatpush.bf16.msra.mxu0 %v954
  %1618 = vmatmul.bf16.gmra.mxu0 %v1362
  %v1619 = vpop.f32.mrf.mxu0
  %v1620 = vadd.f32 %v254, %v1619
  %v1621 = vpop.f32.mrf.mxu0
  %1622 = vdwg.mxu0
  %1623 = vmatpush.bf16.msra.mxu0 0
  %1624 = vmatpush.bf16.msra.mxu0 0
  %1625 = vmatpush.bf16.msra.mxu0 0
  %1626 = vmatpush.bf16.msra.mxu0 %v1396
  %1627 = vmatpush.bf16.msra.mxu0 %v1093
  %1628 = vmatpush.bf16.msra.mxu0 %v1047
  %1629 = vmatpush.bf16.msra.mxu0 %v1001
  %1630 = vmatpush.bf16.msra.mxu0 %v955
  %1631 = vmatmul.bf16.gmra.mxu0 %v1362
  %v1632 = vpop.f32.mrf.mxu0
  %v1633 = vadd.f32 %v254, %v1632
  %v1634 = vpop.f32.mrf.mxu0
  %1635 = vdwg.mxu0
  %1636 = vmatpush.bf16.msra.mxu0 0
  %1637 = vmatpush.bf16.msra.mxu0 0
  %1638 = vmatpush.bf16.msra.mxu0 0
  %1639 = vmatpush.bf16.msra.mxu0 %v1399
  %1640 = vmatpush.bf16.msra.mxu0 %v1094
  %1641 = vmatpush.bf16.msra.mxu0 %v1048
  %1642 = vmatpush.bf16.msra.mxu0 %v1002
  %1643 = vmatpush.bf16.msra.mxu0 %v956
  %1644 = vmatmul.bf16.gmra.mxu0 %v1362
  %v1645 = vpop.f32.mrf.mxu0
  %v1646 = vadd.f32 %v254, %v1645
  %v1647 = vpop.f32.mrf.mxu0
  %1648 = vdwg.mxu0
  %1649 = vmatpush.bf16.msra.mxu0 0
  %1650 = vmatpush.bf16.msra.mxu0 0
  %1651 = vmatpush.bf16.msra.mxu0 0
  %1652 = vmatpush.bf16.msra.mxu0 %v1402
  %1653 = vmatpush.bf16.msra.mxu0 %v1095
  %1654 = vmatpush.bf16.msra.mxu0 %v1049
  %1655 = vmatpush.bf16.msra.mxu0 %v1003
  %1656 = vmatpush.bf16.msra.mxu0 %v957
  %1657 = vmatmul.bf16.gmra.mxu0 %v1362
  %v1658 = vpop.f32.mrf.mxu0
  %v1659 = vadd.f32 %v254, %v1658
  %v1660 = vpop.f32.mrf.mxu0
  %1661 = vdwg.mxu0
  %1662 = vmatpush.bf16.msra.mxu0 0
  %1663 = vmatpush.bf16.msra.mxu0 0
  %1664 = vmatpush.bf16.msra.mxu0 0
  %1665 = vmatpush.bf16.msra.mxu0 %v1405
  %1666 = vmatpush.bf16.msra.mxu0 %v1096
  %1667 = vmatpush.bf16.msra.mxu0 %v1050
  %1668 = vmatpush.bf16.msra.mxu0 %v1004
  %1669 = vmatpush.bf16.msra.mxu0 %v958
  %1670 = vmatmul.bf16.gmra.mxu0 %v1362
  %v1671 = vpop.f32.mrf.mxu0
  %v1672 = vadd.f32 %v254, %v1671
  %v1673 = vpop.f32.mrf.mxu0
  %1674 = vdwg.mxu0
  %1675 = vmatpush.bf16.msra.mxu0 0
  %1676 = vmatpush.bf16.msra.mxu0 0
  %1677 = vmatpush.bf16.msra.mxu0 0
  %1678 = vmatpush.bf16.msra.mxu0 %v1408
  %1679 = vmatpush.bf16.msra.mxu0 %v1097
  %1680 = vmatpush.bf16.msra.mxu0 %v1051
  %1681 = vmatpush.bf16.msra.mxu0 %v1005
  %1682 = vmatpush.bf16.msra.mxu0 %v959
  %1683 = vmatmul.bf16.gmra.mxu0 %v1362
  %v1684 = vpop.f32.mrf.mxu0
  %v1685 = vadd.f32 %v254, %v1684
  %v1686 = vpop.f32.mrf.mxu0
  %1687 = vdwg.mxu0
  %1688 = vmatpush.bf16.msra.mxu0 0
  %1689 = vmatpush.bf16.msra.mxu0 0
  %1690 = vmatpush.bf16.msra.mxu0 0
  %1691 = vmatpush.bf16.msra.mxu0 %v1411
  %1692 = vmatpush.bf16.msra.mxu0 %v1098
  %1693 = vmatpush.bf16.msra.mxu0 %v1052
  %1694 = vmatpush.bf16.msra.mxu0 %v1006
  %1695 = vmatpush.bf16.msra.mxu0 %v960
  %1696 = vmatmul.bf16.gmra.mxu0 %v1362
  %v1697 = vpop.f32.mrf.mxu0
  %v1698 = vadd.f32 %v254, %v1697
  %v1699 = vpop.f32.mrf.mxu0
  %1700 = vdwg.mxu0
  %1701 = vmatpush.bf16.msra.mxu0 0
  %1702 = vmatpush.bf16.msra.mxu0 0
  %1703 = vmatpush.bf16.msra.mxu0 0
  %1704 = vmatpush.bf16.msra.mxu0 %v1414
  %1705 = vmatpush.bf16.msra.mxu0 %v1099
  %1706 = vmatpush.bf16.msra.mxu0 %v1053
  %1707 = vmatpush.bf16.msra.mxu0 %v1007
  %1708 = vmatpush.bf16.msra.mxu0 %v961
  %1709 = vmatmul.bf16.gmra.mxu0 %v1362
  %v1710 = vpop.f32.mrf.mxu0
  %v1711 = vadd.f32 %v254, %v1710
  %v1712 = vpop.f32.mrf.mxu0
  %1713 = vdwg.mxu0
  %1714 = vmatpush.bf16.msra.mxu0 0
  %1715 = vmatpush.bf16.msra.mxu0 0
  %1716 = vmatpush.bf16.msra.mxu0 0
  %1717 = vmatpush.bf16.msra.mxu0 %v1417
  %1718 = vmatpush.bf16.msra.mxu0 %v1100
  %1719 = vmatpush.bf16.msra.mxu0 %v1054
  %1720 = vmatpush.bf16.msra.mxu0 %v1008
  %1721 = vmatpush.bf16.msra.mxu0 %v962
  %1722 = vmatmul.bf16.gmra.mxu0 %v1362
  %v1723 = vpop.f32.mrf.mxu0
  %v1724 = vadd.f32 %v254, %v1723
  %v1725 = vpop.f32.mrf.mxu0
  %1726 = vdwg.mxu0
  %1727 = vmatpush.bf16.msra.mxu0 0
  %1728 = vmatpush.bf16.msra.mxu0 0
  %1729 = vmatpush.bf16.msra.mxu0 0
  %1730 = vmatpush.bf16.msra.mxu0 %v1420
  %1731 = vmatpush.bf16.msra.mxu0 %v1101
  %1732 = vmatpush.bf16.msra.mxu0 %v1055
  %1733 = vmatpush.bf16.msra.mxu0 %v1009
  %1734 = vmatpush.bf16.msra.mxu0 %v963
  %1735 = vmatmul.bf16.gmra.mxu0 %v1362
  %v1736 = vpop.f32.mrf.mxu0
  %v1737 = vadd.f32 %v254, %v1736
  %v1738 = vpop.f32.mrf.mxu0
  %1739 = vdwg.mxu0
  %1740 = vmatpush.bf16.msra.mxu0 0
  %1741 = vmatpush.bf16.msra.mxu0 0
  %1742 = vmatpush.bf16.msra.mxu0 0
  %1743 = vmatpush.bf16.msra.mxu0 %v1423
  %1744 = vmatpush.bf16.msra.mxu0 %v1102
  %1745 = vmatpush.bf16.msra.mxu0 %v1056
  %1746 = vmatpush.bf16.msra.mxu0 %v1010
  %1747 = vmatpush.bf16.msra.mxu0 %v964
  %1748 = vmatmul.bf16.gmra.mxu0 %v1362
  %v1749 = vpop.f32.mrf.mxu0
  %v1750 = vadd.f32 %v254, %v1749
  %v1751 = vpop.f32.mrf.mxu0
  %1752 = vdwg.mxu0
  %1753 = vmatpush.bf16.msra.mxu0 0
  %1754 = vmatpush.bf16.msra.mxu0 0
  %1755 = vmatpush.bf16.msra.mxu0 0
  %1756 = vmatpush.bf16.msra.mxu0 %v1426
  %1757 = vmatpush.bf16.msra.mxu0 %v1103
  %1758 = vmatpush.bf16.msra.mxu0 %v1057
  %1759 = vmatpush.bf16.msra.mxu0 %v1011
  %1760 = vmatpush.bf16.msra.mxu0 %v965
  %1761 = vmatmul.bf16.gmra.mxu0 %v1362
  %v1762 = vpop.f32.mrf.mxu0
  %v1763 = vadd.f32 %v254, %v1762
  %v1764 = vpop.f32.mrf.mxu0
  %1765 = vdwg.mxu0
  %1766 = vmatpush.bf16.msra.mxu0 0
  %1767 = vmatpush.bf16.msra.mxu0 0
  %1768 = vmatpush.bf16.msra.mxu0 0
  %1769 = vmatpush.bf16.msra.mxu0 %v1429
  %1770 = vmatpush.bf16.msra.mxu0 %v1104
  %1771 = vmatpush.bf16.msra.mxu0 %v1058
  %1772 = vmatpush.bf16.msra.mxu0 %v1012
  %1773 = vmatpush.bf16.msra.mxu0 %v966
  %1774 = vmatmul.bf16.gmra.mxu0 %v1362
  %v1775 = vpop.f32.mrf.mxu0
  %v1776 = vadd.f32 %v254, %v1775
  %v1777 = vpop.f32.mrf.mxu0
  %1778 = vdwg.mxu0
  %1779 = vmatpush.bf16.msra.mxu0 0
  %1780 = vmatpush.bf16.msra.mxu0 0
  %1781 = vmatpush.bf16.msra.mxu0 0
  %1782 = vmatpush.bf16.msra.mxu0 %v1432
  %1783 = vmatpush.bf16.msra.mxu0 %v1105
  %1784 = vmatpush.bf16.msra.mxu0 %v1059
  %1785 = vmatpush.bf16.msra.mxu0 %v1013
  %1786 = vmatpush.bf16.msra.mxu0 %v967
  %1787 = vmatmul.bf16.gmra.mxu0 %v1362
  %v1788 = vpop.f32.mrf.mxu0
  %v1789 = vadd.f32 %v254, %v1788
  %v1790 = vpop.f32.mrf.mxu0
  %1791 = vdwg.mxu0
  %1792 = vmatpush.bf16.msra.mxu0 0
  %1793 = vmatpush.bf16.msra.mxu0 0
  %1794 = vmatpush.bf16.msra.mxu0 0
  %1795 = vmatpush.bf16.msra.mxu0 %v1435
  %1796 = vmatpush.bf16.msra.mxu0 %v1106
  %1797 = vmatpush.bf16.msra.mxu0 %v1060
  %1798 = vmatpush.bf16.msra.mxu0 %v1014
  %1799 = vmatpush.bf16.msra.mxu0 %v968
  %1800 = vmatmul.bf16.gmra.mxu0 %v1362
  %v1801 = vpop.f32.mrf.mxu0
  %v1802 = vadd.f32 %v254, %v1801
  %v1803 = vpop.f32.mrf.mxu0
  %1804 = vdwg.mxu0
  %1805 = vmatpush.bf16.msra.mxu0 0
  %1806 = vmatpush.bf16.msra.mxu0 0
  %1807 = vmatpush.bf16.msra.mxu0 0
  %1808 = vmatpush.bf16.msra.mxu0 %v1438
  %1809 = vmatpush.bf16.msra.mxu0 %v1107
  %1810 = vmatpush.bf16.msra.mxu0 %v1061
  %1811 = vmatpush.bf16.msra.mxu0 %v1015
  %1812 = vmatpush.bf16.msra.mxu0 %v969
  %1813 = vmatmul.bf16.gmra.mxu0 %v1362
  %v1814 = vpop.f32.mrf.mxu0
  %v1815 = vadd.f32 %v254, %v1814
  %v1816 = vpop.f32.mrf.mxu0
  %1817 = vdwg.mxu0
  %1818 = vmatpush.bf16.msra.mxu0 0
  %1819 = vmatpush.bf16.msra.mxu0 0
  %1820 = vmatpush.bf16.msra.mxu0 0
  %1821 = vmatpush.bf16.msra.mxu0 %v1441
  %1822 = vmatpush.bf16.msra.mxu0 %v1108
  %1823 = vmatpush.bf16.msra.mxu0 %v1062
  %1824 = vmatpush.bf16.msra.mxu0 %v1016
  %1825 = vmatpush.bf16.msra.mxu0 %v970
  %1826 = vmatmul.bf16.gmra.mxu0 %v1362
  %v1827 = vpop.f32.mrf.mxu0
  %v1828 = vadd.f32 %v254, %v1827
  %v1829 = vpop.f32.mrf.mxu0
  %1830 = vdwg.mxu0
  %1831 = vmatpush.bf16.msra.mxu0 0
  %1832 = vmatpush.bf16.msra.mxu0 0
  %1833 = vmatpush.bf16.msra.mxu0 0
  %1834 = vmatpush.bf16.msra.mxu0 %v1444
  %1835 = vmatpush.bf16.msra.mxu0 %v1109
  %1836 = vmatpush.bf16.msra.mxu0 %v1063
  %1837 = vmatpush.bf16.msra.mxu0 %v1017
  %1838 = vmatpush.bf16.msra.mxu0 %v971
  %1839 = vmatmul.bf16.gmra.mxu0 %v1362
  %v1840 = vpop.f32.mrf.mxu0
  %v1841 = vadd.f32 %v254, %v1840
  %v1842 = vpop.f32.mrf.mxu0
  %1843 = vdwg.mxu0
  %1844 = vmatpush.bf16.msra.mxu0 0
  %1845 = vmatpush.bf16.msra.mxu0 0
  %1846 = vmatpush.bf16.msra.mxu0 0
  %1847 = vmatpush.bf16.msra.mxu0 %v1447
  %1848 = vmatpush.bf16.msra.mxu0 %v1110
  %1849 = vmatpush.bf16.msra.mxu0 %v1064
  %1850 = vmatpush.bf16.msra.mxu0 %v1018
  %1851 = vmatpush.bf16.msra.mxu0 %v972
  %1852 = vmatmul.bf16.gmra.mxu0 %v1362
  %v1853 = vpop.f32.mrf.mxu0
  %v1854 = vadd.f32 %v254, %v1853
  %v1855 = vpop.f32.mrf.mxu0
  %1856 = vdwg.mxu0
  %1857 = vmatpush.bf16.msra.mxu0 0
  %1858 = vmatpush.bf16.msra.mxu0 0
  %1859 = vmatpush.bf16.msra.mxu0 0
  %1860 = vmatpush.bf16.msra.mxu0 %v1450
  %1861 = vmatpush.bf16.msra.mxu0 %v1111
  %1862 = vmatpush.bf16.msra.mxu0 %v1065
  %1863 = vmatpush.bf16.msra.mxu0 %v1019
  %1864 = vmatpush.bf16.msra.mxu0 %v973
  %1865 = vmatmul.bf16.gmra.mxu0 %v1362
  %v1866 = vpop.f32.mrf.mxu0
  %v1867 = vadd.f32 %v254, %v1866
  %v1868 = vpop.f32.mrf.mxu0
  %1869 = vdwg.mxu0
  %1870 = vmatpush.bf16.msra.mxu0 0
  %1871 = vmatpush.bf16.msra.mxu0 0
  %1872 = vmatpush.bf16.msra.mxu0 0
  %1873 = vmatpush.bf16.msra.mxu0 %v1453
  %1874 = vmatpush.bf16.msra.mxu0 %v1112
  %1875 = vmatpush.bf16.msra.mxu0 %v1066
  %1876 = vmatpush.bf16.msra.mxu0 %v1020
  %1877 = vmatpush.bf16.msra.mxu0 %v974
  %1878 = vmatmul.bf16.gmra.mxu0 %v1362
  %v1879 = vpop.f32.mrf.mxu0
  %v1880 = vadd.f32 %v254, %v1879
  %v1881 = vpop.f32.mrf.mxu0
  %1882 = vdwg.mxu0
  %1883 = vmatpush.bf16.msra.mxu0 0
  %1884 = vmatpush.bf16.msra.mxu0 0
  %1885 = vmatpush.bf16.msra.mxu0 0
  %1886 = vmatpush.bf16.msra.mxu0 %v1456
  %1887 = vmatpush.bf16.msra.mxu0 %v1113
  %1888 = vmatpush.bf16.msra.mxu0 %v1067
  %1889 = vmatpush.bf16.msra.mxu0 %v1021
  %1890 = vmatpush.bf16.msra.mxu0 %v975
  %1891 = vmatmul.bf16.gmra.mxu0 %v1362
  %v1892 = vpop.f32.mrf.mxu0
  %v1893 = vadd.f32 %v254, %v1892
  %v1894 = vpop.f32.mrf.mxu0
  %1895 = vdwg.mxu0
  %1896 = vmatpush.bf16.msra.mxu0 0
  %1897 = vmatpush.bf16.msra.mxu0 0
  %1898 = vmatpush.bf16.msra.mxu0 0
  %1899 = vmatpush.bf16.msra.mxu0 %v1459
  %1900 = vmatpush.bf16.msra.mxu0 %v1114
  %1901 = vmatpush.bf16.msra.mxu0 %v1068
  %1902 = vmatpush.bf16.msra.mxu0 %v1022
  %1903 = vmatpush.bf16.msra.mxu0 %v976
  %1904 = vmatmul.bf16.gmra.mxu0 %v1362
  %v1905 = vpop.f32.mrf.mxu0
  %v1906 = vadd.f32 %v254, %v1905
  %v1907 = vpop.f32.mrf.mxu0
  %1908 = vdwg.mxu0
  %1909 = vmatpush.bf16.msra.mxu0 0
  %1910 = vmatpush.bf16.msra.mxu0 0
  %1911 = vmatpush.bf16.msra.mxu0 0
  %1912 = vmatpush.bf16.msra.mxu0 %v1462
  %1913 = vmatpush.bf16.msra.mxu0 %v1115
  %1914 = vmatpush.bf16.msra.mxu0 %v1069
  %1915 = vmatpush.bf16.msra.mxu0 %v1023
  %1916 = vmatpush.bf16.msra.mxu0 %v977
  %1917 = vmatmul.bf16.gmra.mxu0 %v1362
  %v1918 = vpop.f32.mrf.mxu0
  %v1919 = vadd.f32 %v254, %v1918
  %v1920 = vpop.f32.mrf.mxu0
  %1921 = vdwg.mxu0
  %1922 = vmatpush.bf16.msra.mxu0 0
  %1923 = vmatpush.bf16.msra.mxu0 0
  %1924 = vmatpush.bf16.msra.mxu0 0
  %1925 = vmatpush.bf16.msra.mxu0 %v1465
  %1926 = vmatpush.bf16.msra.mxu0 %v1116
  %1927 = vmatpush.bf16.msra.mxu0 %v1070
  %1928 = vmatpush.bf16.msra.mxu0 %v1024
  %1929 = vmatpush.bf16.msra.mxu0 %v978
  %1930 = vmatmul.bf16.gmra.mxu0 %v1362
  %v1931 = vpop.f32.mrf.mxu0
  %v1932 = vadd.f32 %v254, %v1931
  %v1933 = vpop.f32.mrf.mxu0
  %1934 = vdwg.mxu0
  %1935 = vmatpush.bf16.msra.mxu0 0
  %1936 = vmatpush.bf16.msra.mxu0 0
  %1937 = vmatpush.bf16.msra.mxu0 0
  %1938 = vmatpush.bf16.msra.mxu0 %v1468
  %1939 = vmatpush.bf16.msra.mxu0 %v1117
  %1940 = vmatpush.bf16.msra.mxu0 %v1071
  %1941 = vmatpush.bf16.msra.mxu0 %v1025
  %1942 = vmatpush.bf16.msra.mxu0 %v979
  %1943 = vmatmul.bf16.gmra.mxu0 %v1362
  %v1944 = vpop.f32.mrf.mxu0
  %v1945 = vadd.f32 %v254, %v1944
  %v1946 = vpop.f32.mrf.mxu0
  %1947 = vdwg.mxu0
  %1948 = vmatpush.bf16.msra.mxu0 0
  %1949 = vmatpush.bf16.msra.mxu0 0
  %1950 = vmatpush.bf16.msra.mxu0 0
  %1951 = vmatpush.bf16.msra.mxu0 %v1471
  %1952 = vmatpush.bf16.msra.mxu0 %v1118
  %1953 = vmatpush.bf16.msra.mxu0 %v1072
  %1954 = vmatpush.bf16.msra.mxu0 %v1026
  %1955 = vmatpush.bf16.msra.mxu0 %v980
  %1956 = vmatmul.bf16.gmra.mxu0 %v1362
  %v1957 = vpop.f32.mrf.mxu0
  %v1958 = vadd.f32 %v254, %v1957
  %v1959 = vpop.f32.mrf.mxu0
  %1960 = vdwg.mxu0
  %1961 = vmatpush.bf16.msra.mxu0 0
  %1962 = vmatpush.bf16.msra.mxu0 0
  %1963 = vmatpush.bf16.msra.mxu0 0
  %1964 = vmatpush.bf16.msra.mxu0 %v1474
  %1965 = vmatpush.bf16.msra.mxu0 %v1119
  %1966 = vmatpush.bf16.msra.mxu0 %v1073
  %1967 = vmatpush.bf16.msra.mxu0 %v1027
  %1968 = vmatpush.bf16.msra.mxu0 %v981
  %1969 = vmatmul.bf16.gmra.mxu0 %v1362
  %v1970 = vpop.f32.mrf.mxu0
  %v1971 = vadd.f32 %v254, %v1970
  %v1972 = vpop.f32.mrf.mxu0
  %1973 = vdwg.mxu0
  %1974 = vmatpush.bf16.msra.mxu0 0
  %1975 = vmatpush.bf16.msra.mxu0 0
  %1976 = vmatpush.bf16.msra.mxu0 0
  %1977 = vmatpush.bf16.msra.mxu0 %v1477
  %1978 = vmatpush.bf16.msra.mxu0 %v1120
  %1979 = vmatpush.bf16.msra.mxu0 %v1074
  %1980 = vmatpush.bf16.msra.mxu0 %v1028
  %1981 = vmatpush.bf16.msra.mxu0 %v982
  %1982 = vmatmul.bf16.gmra.mxu0 %v1362
  %v1983 = vpop.f32.mrf.mxu0
  %v1984 = vadd.f32 %v254, %v1983
  %v1985 = vpop.f32.mrf.mxu0
  %1986 = vdwg.mxu0
  %1987 = vmatpush.bf16.msra.mxu0 0
  %1988 = vmatpush.bf16.msra.mxu0 0
  %1989 = vmatpush.bf16.msra.mxu0 0
  %1990 = vmatpush.bf16.msra.mxu0 %v1480
  %1991 = vmatpush.bf16.msra.mxu0 %v1121
  %1992 = vmatpush.bf16.msra.mxu0 %v1075
  %1993 = vmatpush.bf16.msra.mxu0 %v1029
  %1994 = vmatpush.bf16.msra.mxu0 %v983
  %1995 = vmatmul.bf16.gmra.mxu0 %v1362
  %v1996 = vpop.f32.mrf.mxu0
  %v1997 = vadd.f32 %v254, %v1996
  %v1998 = vpop.f32.mrf.mxu0
  %1999 = vdwg.mxu0
  %2000 = vmatpush.bf16.msra.mxu0 0
  %2001 = vmatpush.bf16.msra.mxu0 0
  %2002 = vmatpush.bf16.msra.mxu0 0
  %2003 = vmatpush.bf16.msra.mxu0 %v1483
  %2004 = vmatpush.bf16.msra.mxu0 %v1122
  %2005 = vmatpush.bf16.msra.mxu0 %v1076
  %2006 = vmatpush.bf16.msra.mxu0 %v1030
  %2007 = vmatpush.bf16.msra.mxu0 %v984
  %2008 = vmatmul.bf16.gmra.mxu0 %v1362
  %v2009 = vpop.f32.mrf.mxu0
  %v2010 = vadd.f32 %v254, %v2009
  %v2011 = vpop.f32.mrf.mxu0
  %2012 = vdwg.mxu0
  %2013 = vmatpush.bf16.msra.mxu0 0
  %2014 = vmatpush.bf16.msra.mxu0 0
  %2015 = vmatpush.bf16.msra.mxu0 0
  %2016 = vmatpush.bf16.msra.mxu0 %v1486
  %2017 = vmatpush.bf16.msra.mxu0 %v1123
  %2018 = vmatpush.bf16.msra.mxu0 %v1077
  %2019 = vmatpush.bf16.msra.mxu0 %v1031
  %2020 = vmatpush.bf16.msra.mxu0 %v985
  %2021 = vmatmul.bf16.gmra.mxu0 %v1362
  %v2022 = vpop.f32.mrf.mxu0
  %v2023 = vadd.f32 %v254, %v2022
  %v2024 = vpop.f32.mrf.mxu0
  %2025 = vdwg.mxu0
  %2026 = vmatpush.bf16.msra.mxu0 0
  %2027 = vmatpush.bf16.msra.mxu0 0
  %2028 = vmatpush.bf16.msra.mxu0 0
  %2029 = vmatpush.bf16.msra.mxu0 %v1489
  %2030 = vmatpush.bf16.msra.mxu0 %v1124
  %2031 = vmatpush.bf16.msra.mxu0 %v1078
  %2032 = vmatpush.bf16.msra.mxu0 %v1032
  %2033 = vmatpush.bf16.msra.mxu0 %v986
  %2034 = vmatmul.bf16.gmra.mxu0 %v1362
  %v2035 = vpop.f32.mrf.mxu0
  %v2036 = vadd.f32 %v254, %v2035
  %v2037 = vpop.f32.mrf.mxu0
  %2038 = vdwg.mxu0
  %2039 = vmatpush.bf16.msra.mxu0 0
  %2040 = vmatpush.bf16.msra.mxu0 0
  %2041 = vmatpush.bf16.msra.mxu0 0
  %2042 = vmatpush.bf16.msra.mxu0 %v1492
  %2043 = vmatpush.bf16.msra.mxu0 %v1125
  %2044 = vmatpush.bf16.msra.mxu0 %v1079
  %2045 = vmatpush.bf16.msra.mxu0 %v1033
  %2046 = vmatpush.bf16.msra.mxu0 %v987
  %2047 = vmatmul.bf16.gmra.mxu0 %v1362
  %v2048 = vpop.f32.mrf.mxu0
  %v2049 = vadd.f32 %v254, %v2048
  %v2050 = vpop.f32.mrf.mxu0
  %2051 = vdwg.mxu0
  %2052 = vmatpush.bf16.msra.mxu0 0
  %2053 = vmatpush.bf16.msra.mxu0 0
  %2054 = vmatpush.bf16.msra.mxu0 0
  %2055 = vmatpush.bf16.msra.mxu0 %v1495
  %2056 = vmatpush.bf16.msra.mxu0 %v1126
  %2057 = vmatpush.bf16.msra.mxu0 %v1080
  %2058 = vmatpush.bf16.msra.mxu0 %v1034
  %2059 = vmatpush.bf16.msra.mxu0 %v988
  %2060 = vmatmul.bf16.gmra.mxu0 %v1362
  %v2061 = vpop.f32.mrf.mxu0
  %v2062 = vadd.f32 %v254, %v2061
  %v2063 = vpop.f32.mrf.mxu0
  %2064 = vdwg.mxu0
  %2065 = vmatpush.bf16.msra.mxu0 0
  %2066 = vmatpush.bf16.msra.mxu0 0
  %2067 = vmatpush.bf16.msra.mxu0 0
  %2068 = vmatpush.bf16.msra.mxu0 %v1498
  %2069 = vmatpush.bf16.msra.mxu0 %v1127
  %2070 = vmatpush.bf16.msra.mxu0 %v1081
  %2071 = vmatpush.bf16.msra.mxu0 %v1035
  %2072 = vmatpush.bf16.msra.mxu0 %v989
  %2073 = vmatmul.bf16.gmra.mxu0 %v1362
  %v2074 = vpop.f32.mrf.mxu0
  %v2075 = vadd.f32 %v254, %v2074
  %v2076 = vpop.f32.mrf.mxu0
  %2077 = vdwg.mxu0
  %2078 = vmatpush.bf16.msra.mxu0 0
  %2079 = vmatpush.bf16.msra.mxu0 0
  %2080 = vmatpush.bf16.msra.mxu0 0
  %2081 = vmatpush.bf16.msra.mxu0 %v1501
  %2082 = vmatpush.bf16.msra.mxu0 %v1128
  %2083 = vmatpush.bf16.msra.mxu0 %v1082
  %2084 = vmatpush.bf16.msra.mxu0 %v1036
  %2085 = vmatpush.bf16.msra.mxu0 %v990
  %2086 = vmatmul.bf16.gmra.mxu0 %v1362
  %v2087 = vpop.f32.mrf.mxu0
  %v2088 = vadd.f32 %v254, %v2087
  %v2089 = vpop.f32.mrf.mxu0
  %2090 = vdwg.mxu0
  %2091 = vmatpush.bf16.msra.mxu0 0
  %2092 = vmatpush.bf16.msra.mxu0 0
  %2093 = vmatpush.bf16.msra.mxu0 0
  %2094 = vmatpush.bf16.msra.mxu0 %v1504
  %2095 = vmatpush.bf16.msra.mxu0 %v1129
  %2096 = vmatpush.bf16.msra.mxu0 %v1083
  %2097 = vmatpush.bf16.msra.mxu0 %v1037
  %2098 = vmatpush.bf16.msra.mxu0 %v991
  %2099 = vmatmul.bf16.gmra.mxu0 %v1362
  %v2100 = vpop.f32.mrf.mxu0
  %v2101 = vadd.f32 %v254, %v2100
  %v2102 = vpop.f32.mrf.mxu0
  %2103 = vdwg.mxu0
  %s2104 = sld [smem:[#allocation2]]
  %vm2105 = vcmp.ge.f32.partialorder %v1516, 0.0
  %vm2106 = vcmp.ge.f32.partialorder %v1529, 0.0
  %vm2107 = vcmp.ge.f32.partialorder %v1542, 0.0
  %vm2108 = vcmp.ge.f32.partialorder %v1555, 0.0
  %vm2109 = vcmp.ge.f32.partialorder %v1568, 0.0
  %vm2110 = vcmp.ge.f32.partialorder %v1581, 0.0
  %vm2111 = vcmp.ge.f32.partialorder %v1594, 0.0
  %vm2112 = vcmp.ge.f32.partialorder %v1607, 0.0
  %vm2113 = vcmp.ge.f32.partialorder %v1620, 0.0
  %vm2114 = vcmp.ge.f32.partialorder %v1633, 0.0
  %vm2115 = vcmp.ge.f32.partialorder %v1646, 0.0
  %vm2116 = vcmp.ge.f32.partialorder %v1659, 0.0
  %vm2117 = vcmp.ge.f32.partialorder %v1672, 0.0
  %vm2118 = vcmp.ge.f32.partialorder %v1685, 0.0
  %vm2119 = vcmp.ge.f32.partialorder %v1698, 0.0
  %vm2120 = vcmp.ge.f32.partialorder %v1711, 0.0
  %vm2121 = vcmp.ge.f32.partialorder %v1724, 0.0
  %vm2122 = vcmp.ge.f32.partialorder %v1737, 0.0
  %vm2123 = vcmp.ge.f32.partialorder %v1750, 0.0
  %vm2124 = vcmp.ge.f32.partialorder %v1763, 0.0
  %vm2125 = vcmp.ge.f32.partialorder %v1776, 0.0
  %vm2126 = vcmp.ge.f32.partialorder %v1789, 0.0
  %vm2127 = vcmp.ge.f32.partialorder %v1802, 0.0
  %vm2128 = vcmp.ge.f32.partialorder %v1815, 0.0
  %vm2129 = vcmp.ge.f32.partialorder %v1828, 0.0
  %vm2130 = vcmp.ge.f32.partialorder %v1841, 0.0
  %vm2131 = vcmp.ge.f32.partialorder %v1854, 0.0
  %vm2132 = vcmp.ge.f32.partialorder %v1867, 0.0
  %vm2133 = vcmp.ge.f32.partialorder %v1880, 0.0
  %vm2134 = vcmp.ge.f32.partialorder %v1893, 0.0
  %vm2135 = vcmp.ge.f32.partialorder %v1906, 0.0
  %vm2136 = vcmp.ge.f32.partialorder %v1919, 0.0
  %vm2137 = vcmp.ge.f32.partialorder %v1932, 0.0
  %vm2138 = vcmp.ge.f32.partialorder %v1945, 0.0
  %vm2139 = vcmp.ge.f32.partialorder %v1958, 0.0
  %vm2140 = vcmp.ge.f32.partialorder %v1971, 0.0
  %vm2141 = vcmp.ge.f32.partialorder %v1984, 0.0
  %vm2142 = vcmp.ge.f32.partialorder %v1997, 0.0
  %vm2143 = vcmp.ge.f32.partialorder %v2010, 0.0
  %vm2144 = vcmp.ge.f32.partialorder %v2023, 0.0
  %vm2145 = vcmp.ge.f32.partialorder %v2036, 0.0
  %vm2146 = vcmp.ge.f32.partialorder %v2049, 0.0
  %vm2147 = vcmp.ge.f32.partialorder %v2062, 0.0
  %vm2148 = vcmp.ge.f32.partialorder %v2075, 0.0
  %vm2149 = vcmp.ge.f32.partialorder %v2088, 0.0
  %vm2150 = vcmp.ge.f32.partialorder %v2101, 0.0
  %v2151 = vstv %s2104
  %v2152 = vmul.f32 %v2151, %v1516
  %v2153 = vmul.f32 %v2151, %v1529
  %v2154 = vmul.f32 %v2151, %v1542
  %v2155 = vmul.f32 %v2151, %v1555
  %v2156 = vmul.f32 %v2151, %v1568
  %v2157 = vmul.f32 %v2151, %v1581
  %v2158 = vmul.f32 %v2151, %v1594
  %v2159 = vmul.f32 %v2151, %v1607
  %v2160 = vmul.f32 %v2151, %v1620
  %v2161 = vmul.f32 %v2151, %v1633
  %v2162 = vmul.f32 %v2151, %v1646
  %v2163 = vmul.f32 %v2151, %v1659
  %v2164 = vmul.f32 %v2151, %v1672
  %v2165 = vmul.f32 %v2151, %v1685
  %v2166 = vmul.f32 %v2151, %v1698
  %v2167 = vmul.f32 %v2151, %v1711
  %v2168 = vmul.f32 %v2151, %v1724
  %v2169 = vmul.f32 %v2151, %v1737
  %v2170 = vmul.f32 %v2151, %v1750
  %v2171 = vmul.f32 %v2151, %v1763
  %v2172 = vmul.f32 %v2151, %v1776
  %v2173 = vmul.f32 %v2151, %v1789
  %v2174 = vmul.f32 %v2151, %v1802
  %v2175 = vmul.f32 %v2151, %v1815
  %v2176 = vmul.f32 %v2151, %v1828
  %v2177 = vmul.f32 %v2151, %v1841
  %v2178 = vmul.f32 %v2151, %v1854
  %v2179 = vmul.f32 %v2151, %v1867
  %v2180 = vmul.f32 %v2151, %v1880
  %v2181 = vmul.f32 %v2151, %v1893
  %v2182 = vmul.f32 %v2151, %v1906
  %v2183 = vmul.f32 %v2151, %v1919
  %v2184 = vmul.f32 %v2151, %v1932
  %v2185 = vmul.f32 %v2151, %v1945
  %v2186 = vmul.f32 %v2151, %v1958
  %v2187 = vmul.f32 %v2151, %v1971
  %v2188 = vmul.f32 %v2151, %v1984
  %v2189 = vmul.f32 %v2151, %v1997
  %v2190 = vmul.f32 %v2151, %v2010
  %v2191 = vmul.f32 %v2151, %v2023
  %v2192 = vmul.f32 %v2151, %v2036
  %v2193 = vmul.f32 %v2151, %v2049
  %v2194 = vmul.f32 %v2151, %v2062
  %v2195 = vmul.f32 %v2151, %v2075
  %v2196 = vmul.f32 %v2151, %v2088
  %v2197 = vmul.f32 %v2151, %v2101
  %v2198 = vsel %vm2105, %v1516, %v2152
  %v2199 = vsel %vm2106, %v1529, %v2153
  %v2200 = vsel %vm2107, %v1542, %v2154
  %v2201 = vsel %vm2108, %v1555, %v2155
  %v2202 = vsel %vm2109, %v1568, %v2156
  %v2203 = vsel %vm2110, %v1581, %v2157
  %v2204 = vsel %vm2111, %v1594, %v2158
  %v2205 = vsel %vm2112, %v1607, %v2159
  %v2206 = vsel %vm2113, %v1620, %v2160
  %v2207 = vsel %vm2114, %v1633, %v2161
  %v2208 = vsel %vm2115, %v1646, %v2162
  %v2209 = vsel %vm2116, %v1659, %v2163
  %v2210 = vsel %vm2117, %v1672, %v2164
  %v2211 = vsel %vm2118, %v1685, %v2165
  %v2212 = vsel %vm2119, %v1698, %v2166
  %v2213 = vsel %vm2120, %v1711, %v2167
  %v2214 = vsel %vm2121, %v1724, %v2168
  %v2215 = vsel %vm2122, %v1737, %v2169
  %v2216 = vsel %vm2123, %v1750, %v2170
  %v2217 = vsel %vm2124, %v1763, %v2171
  %v2218 = vsel %vm2125, %v1776, %v2172
  %v2219 = vsel %vm2126, %v1789, %v2173
  %v2220 = vsel %vm2127, %v1802, %v2174
  %v2221 = vsel %vm2128, %v1815, %v2175
  %v2222 = vsel %vm2129, %v1828, %v2176
  %v2223 = vsel %vm2130, %v1841, %v2177
  %v2224 = vsel %vm2131, %v1854, %v2178
  %v2225 = vsel %vm2132, %v1867, %v2179
  %v2226 = vsel %vm2133, %v1880, %v2180
  %v2227 = vsel %vm2134, %v1893, %v2181
  %v2228 = vsel %vm2135, %v1906, %v2182
  %v2229 = vsel %vm2136, %v1919, %v2183
  %v2230 = vsel %vm2137, %v1932, %v2184
  %v2231 = vsel %vm2138, %v1945, %v2185
  %v2232 = vsel %vm2139, %v1958, %v2186
  %v2233 = vsel %vm2140, %v1971, %v2187
  %v2234 = vsel %vm2141, %v1984, %v2188
  %v2235 = vsel %vm2142, %v1997, %v2189
  %v2236 = vsel %vm2143, %v2010, %v2190
  %v2237 = vsel %vm2144, %v2023, %v2191
  %v2238 = vsel %vm2145, %v2036, %v2192
  %v2239 = vsel %vm2146, %v2049, %v2193
  %v2240 = vsel %vm2147, %v2062, %v2194
  %v2241 = vsel %vm2148, %v2075, %v2195
  %v2242 = vsel %vm2149, %v2088, %v2196
  %v2243 = vsel %vm2150, %v2101, %v2197
  %v2244 = vpack.c.bf16 %v2199, %v2198
  %v2245 = vpack.c.bf16 %v2201, %v2200
  %v2246 = vpack.c.bf16 %v2203, %v2202
  %v2247 = vpack.c.bf16 %v2205, %v2204
  %v2248 = vpack.c.bf16 %v2207, %v2206
  %v2249 = vpack.c.bf16 %v2209, %v2208
  %v2250 = vpack.c.bf16 %v2211, %v2210
  %v2251 = vpack.c.bf16 %v2213, %v2212
  %v2252 = vpack.c.bf16 %v2215, %v2214
  %v2253 = vpack.c.bf16 %v2217, %v2216
  %v2254 = vpack.c.bf16 %v2219, %v2218
  %v2255 = vpack.c.bf16 %v2221, %v2220
  %v2256 = vpack.c.bf16 %v2223, %v2222
  %v2257 = vpack.c.bf16 %v2225, %v2224
  %v2258 = vpack.c.bf16 %v2227, %v2226
  %v2259 = vpack.c.bf16 %v2229, %v2228
  %v2260 = vpack.c.bf16 %v2231, %v2230
  %v2261 = vpack.c.bf16 %v2233, %v2232
  %v2262 = vpack.c.bf16 %v2235, %v2234
  %v2263 = vpack.c.bf16 %v2237, %v2236
  %v2264 = vpack.c.bf16 %v2239, %v2238
  %v2265 = vpack.c.bf16 %v2241, %v2240
  %v2266 = vpack.c.bf16 %v2243, %v2242
  %2267 = vst [vmem:[%s4] sm:$0xff] %v2244
  %2268 = vst [vmem:[%s4 + $0x8] sm:$0xff] %v2245
  %2269 = vst [vmem:[%s4 + $0x10] sm:$0xff] %v2246
  %2270 = vst [vmem:[%s4 + $0x18] sm:$0xff] %v2247
  %2271 = vst [vmem:[%s4 + $0x20] sm:$0xff] %v2248
  %2272 = vst [vmem:[%s4 + $0x28] sm:$0xff] %v2249
  %2273 = vst [vmem:[%s4 + $0x30] sm:$0xff] %v2250
  %2274 = vst [vmem:[%s4 + $0x38] sm:$0xff] %v2251
  %2275 = vst [vmem:[%s4 + $0x40] sm:$0xff] %v2252
  %2276 = vst [vmem:[%s4 + $0x48] sm:$0xff] %v2253
  %2277 = vst [vmem:[%s4 + $0x50] sm:$0xff] %v2254
  %2278 = vst [vmem:[%s4 + $0x58] sm:$0xff] %v2255
  %2279 = vst [vmem:[%s4 + $0x60] sm:$0xff] %v2256
  %2280 = vst [vmem:[%s4 + $0x68] sm:$0xff] %v2257
  %2281 = vst [vmem:[%s4 + $0x70] sm:$0xff] %v2258
  %2282 = vst [vmem:[%s4 + $0x78] sm:$0xff] %v2259
  %2283 = vst [vmem:[%s4 + $0x80] sm:$0xff] %v2260
  %2284 = vst [vmem:[%s4 + $0x88] sm:$0xff] %v2261
  %2285 = vst [vmem:[%s4 + $0x90] sm:$0xff] %v2262
  %2286 = vst [vmem:[%s4 + $0x98] sm:$0xff] %v2263
  %2287 = vst [vmem:[%s4 + $0xa0] sm:$0xff] %v2264
  %2288 = vst [vmem:[%s4 + $0xa8] sm:$0xff] %v2265
  %vm2289 = vcmask 1043456
  %vm2290 = vcmask 588804
  %vm2291 = vmor %vm2290, %vm2289
  %2292 = vst.msk [vmem:[%s4 + $0xb0] sm:$0xff] %vm2291, %v2266
  // Predicated region
  $region18: #{net_forward.4} parent=0 // pred_check
    _
  $region19: #{net_forward.4} parent=0 // pred_check_branch
    %2294 = sbr.rel (0) target = $region21
  $region20: #{net_forward.4} parent=0 // pred_region
    _
  $region21: #{net_forward.4} parent=0 // pred_fallthru
    _
  // Predicated region
  $region22: #{net_forward.4} parent=0 // pred_check
    _
  $region23: #{net_forward.4} parent=0 // pred_check_branch
    %2296 = sbr.rel (0) target = $region25
  $region24: #{net_forward.4} parent=0 // pred_region
    _
  $region25: #{net_forward.4} parent=0 // pred_fallthru
    _

// kernel: net_forward.5
$region0: #{net_forward.5}
  #allocation0 [shape = 'u32[]', space=smem, size = 0x4, offset = 0x4, fixed_abs, tag = 'smem constant byte address 0x4 - core index']
  #allocation1 [shape = 'u32[72,128]{1,0:T(1,128)}', space=vmem, size = 0x9000, scoped, tag = 'internal scratch']
  #allocation2 [shape = 'f32[1]{0:T(128)S(6)}', space=smem, size = 0x200, scoped, tag = 'scoped memory for net_forward.5']
  %s0 = inlined_call_operand.vmem [shape: bf16[16,72], index: 0, kind: input, shape index: {}]
  %s1 = inlined_call_operand.vmem [shape: bf16[72,1250], index: 1, kind: input, shape index: {}]
  %s2 = inlined_call_operand.vmem [shape: f32[16,1], index: 2, kind: input, shape index: {}]
  %s3 = inlined_call_operand.<no memory space> [shape: f32[1], index: 3, kind: input, shape index: {}]
  %s4 = inlined_call_operand.vmem [shape: bf16[16,1250], index: 4, kind: output, shape index: {}]
  %s5 = sld [smem:[#allocation0]]
  $region26: #{net_forward.5} parent=0
    _
  %s7 = ssub.s32 1, %s5
  %s8 = scalar_select 0, %s7, %s5
  %9 = sst [smem:[#allocation2]] %s3
  // Predicated region
  $region2: #{net_forward.5} parent=0 // pred_check
    _
  $region3: #{net_forward.5} parent=0 // pred_check_branch
    %11 = sbr.rel (0) target = $region5
  $region4: #{net_forward.5} parent=0 // pred_region
    _
  $region5: #{net_forward.5} parent=0 // pred_fallthru
    _
  // Predicated region
  $region6: #{net_forward.5} parent=0 // pred_check
    _
  $region7: #{net_forward.5} parent=0 // pred_check_branch
    %13 = sbr.rel (0) target = $region9
  $region8: #{net_forward.5} parent=0 // pred_region
    _
  $region9: #{net_forward.5} parent=0 // pred_fallthru
    _
  // Predicated region
  $region10: #{net_forward.5} parent=0 // pred_check
    _
  $region11: #{net_forward.5} parent=0 // pred_check_branch
    %15 = sbr.rel (0) target = $region13
  $region12: #{net_forward.5} parent=0 // pred_region
    _
  $region13: #{net_forward.5} parent=0 // pred_fallthru
    _
  // Predicated region
  $region14: #{net_forward.5} parent=0 // pred_check
    _
  $region15: #{net_forward.5} parent=0 // pred_check_branch
    %17 = sbr.rel (0) target = $region17
  $region16: #{net_forward.5} parent=0 // pred_region
    _
  $region17: #{net_forward.5} parent=0 // pred_fallthru
    _
  %v19 = vld [vmem:[%s0] sm:$0xf]
  %v20 = vld [vmem:[%s0 + $0x4] sm:$0xf]
  %v21 = vld [vmem:[%s1] sm:$0xff]
  %v22 = vld [vmem:[%s1 + $0x8] sm:$0xff]
  %v23 = vld [vmem:[%s1 + $0x10] sm:$0xff]
  %v24 = vld [vmem:[%s1 + $0x18] sm:$0xff]
  %v25 = vld [vmem:[%s1 + $0x20] sm:$0xff]
  %v26 = vld [vmem:[%s1 + $0x28] sm:$0xff]
  %v27 = vld [vmem:[%s1 + $0x30] sm:$0xff]
  %v28 = vld [vmem:[%s1 + $0x38] sm:$0xff]
  %v29 = vld [vmem:[%s1 + $0x40] sm:$0xff]
  %v30 = vld [vmem:[%s1 + $0x48] sm:$0xff]
  %v31 = vld [vmem:[%s1 + $0x50] sm:$0xff]
  %v32 = vld [vmem:[%s1 + $0x58] sm:$0xff]
  %v33 = vld [vmem:[%s1 + $0x60] sm:$0xff]
  %v34 = vld [vmem:[%s1 + $0x68] sm:$0xff]
  %v35 = vld [vmem:[%s1 + $0x70] sm:$0xff]
  %v36 = vld [vmem:[%s1 + $0x78] sm:$0xff]
  %v37 = vld [vmem:[%s1 + $0x80] sm:$0xff]
  %v38 = vld [vmem:[%s1 + $0x88] sm:$0xff]
  %v39 = vld [vmem:[%s1 + $0x90] sm:$0xff]
  %v40 = vld [vmem:[%s1 + $0x98] sm:$0xff]
  %v41 = vld [vmem:[%s1 + $0xa0] sm:$0xff]
  %v42 = vld [vmem:[%s1 + $0xa8] sm:$0xff]
  %v43 = vld [vmem:[%s1 + $0xb0] sm:$0xff]
  %v44 = vld [vmem:[%s1 + $0xb8] sm:$0xff]
  %v45 = vld [vmem:[%s1 + $0xc0] sm:$0xff]
  %v46 = vld [vmem:[%s1 + $0xc8] sm:$0xff]
  %v47 = vld [vmem:[%s1 + $0xd0] sm:$0xff]
  %v48 = vld [vmem:[%s1 + $0xd8] sm:$0xff]
  %v49 = vld [vmem:[%s1 + $0xe0] sm:$0xff]
  %v50 = vld [vmem:[%s1 + $0xe8] sm:$0xff]
  %v51 = vld [vmem:[%s1 + $0xf0] sm:$0xff]
  %v52 = vld [vmem:[%s1 + $0xf8] sm:$0xff]
  %v53 = vld [vmem:[%s1 + $0x100] sm:$0xff]
  %v54 = vld [vmem:[%s1 + $0x108] sm:$0xff]
  %v55 = vld [vmem:[%s1 + $0x110] sm:$0xff]
  %v56 = vld [vmem:[%s1 + $0x118] sm:$0xff]
  %v57 = vld [vmem:[%s1 + $0x120] sm:$0xff]
  %v58 = vld [vmem:[%s1 + $0x128] sm:$0xff]
  %v59 = vld [vmem:[%s1 + $0x130] sm:$0xff]
  %v60 = vld [vmem:[%s1 + $0x138] sm:$0xff]
  %v61 = vld [vmem:[%s1 + $0x140] sm:$0xff]
  %v62 = vld [vmem:[%s1 + $0x148] sm:$0xff]
  %v63 = vld [vmem:[%s1 + $0x150] sm:$0xff]
  %v64 = vld [vmem:[%s1 + $0x158] sm:$0xff]
  %v65 = vld [vmem:[%s1 + $0x160] sm:$0xff]
  %v66 = vld [vmem:[%s2] sm:$0xff]
  %v67 = vld [vmem:[%s2 + $0x8] sm:$0xff]
  %69 = vset.pattern.permute.xlu0 0
  %70 = vperm.xlu0 %69, %v66
  %v71 = vpop.permute.xlu0 %70
  %74 = vset.pattern.permute.xlu0 0
  %75 = vperm.xlu0 %74, %v67
  %v76 = vpop.permute.xlu0 %75
  %v80 = vunpack.c.l.b16 %v19
  %v81 = vunpack.c.l.b16 %v20
  %v82 = vpack.c.b16 %v81, %v80
  %v128 = vunpack.c.l.b16 %v21
  %v129 = vunpack.c.h.b16 %v21
  %v130 = vunpack.c.l.b16 %v22
  %v131 = vunpack.c.h.b16 %v22
  %v132 = vunpack.c.l.b16 %v23
  %v133 = vunpack.c.h.b16 %v23
  %v134 = vunpack.c.l.b16 %v24
  %v135 = vunpack.c.h.b16 %v24
  %v136 = vunpack.c.l.b16 %v25
  %v137 = vunpack.c.h.b16 %v25
  %v138 = vunpack.c.l.b16 %v26
  %v139 = vunpack.c.h.b16 %v26
  %v140 = vunpack.c.l.b16 %v27
  %v141 = vunpack.c.h.b16 %v27
  %v142 = vunpack.c.l.b16 %v28
  %v143 = vunpack.c.h.b16 %v28
  %v144 = vunpack.c.l.b16 %v29
  %v145 = vunpack.c.h.b16 %v29
  %v146 = vunpack.c.l.b16 %v30
  %v147 = vunpack.c.h.b16 %v30
  %v148 = vunpack.c.l.b16 %v31
  %v149 = vunpack.c.h.b16 %v31
  %v150 = vunpack.c.l.b16 %v32
  %v151 = vunpack.c.h.b16 %v32
  %v152 = vunpack.c.l.b16 %v33
  %v153 = vunpack.c.h.b16 %v33
  %v154 = vunpack.c.l.b16 %v34
  %v155 = vunpack.c.h.b16 %v34
  %v156 = vunpack.c.l.b16 %v35
  %v157 = vunpack.c.h.b16 %v35
  %v158 = vunpack.c.l.b16 %v36
  %v159 = vunpack.c.h.b16 %v36
  %v160 = vunpack.c.l.b16 %v37
  %v161 = vunpack.c.h.b16 %v37
  %v162 = vunpack.c.l.b16 %v38
  %v163 = vunpack.c.h.b16 %v38
  %v164 = vunpack.c.l.b16 %v39
  %v165 = vunpack.c.h.b16 %v39
  %v166 = vunpack.c.l.b16 %v40
  %v167 = vunpack.c.h.b16 %v40
  %v168 = vunpack.c.l.b16 %v41
  %v169 = vunpack.c.h.b16 %v41
  %v170 = vunpack.c.l.b16 %v42
  %v171 = vunpack.c.h.b16 %v42
  %v172 = vunpack.c.l.b16 %v43
  %v173 = vunpack.c.h.b16 %v43
  %v174 = vunpack.c.l.b16 %v44
  %v175 = vunpack.c.h.b16 %v44
  %v176 = vunpack.c.l.b16 %v45
  %v177 = vunpack.c.h.b16 %v45
  %v178 = vunpack.c.l.b16 %v46
  %v179 = vunpack.c.h.b16 %v46
  %v180 = vunpack.c.l.b16 %v47
  %v181 = vunpack.c.h.b16 %v47
  %v182 = vunpack.c.l.b16 %v48
  %v183 = vunpack.c.h.b16 %v48
  %v184 = vunpack.c.l.b16 %v49
  %v185 = vunpack.c.h.b16 %v49
  %v186 = vunpack.c.l.b16 %v50
  %v187 = vunpack.c.h.b16 %v50
  %v188 = vunpack.c.l.b16 %v51
  %v189 = vunpack.c.h.b16 %v51
  %v190 = vunpack.c.l.b16 %v52
  %v191 = vunpack.c.h.b16 %v52
  %v192 = vunpack.c.l.b16 %v53
  %v193 = vunpack.c.h.b16 %v53
  %v194 = vunpack.c.l.b16 %v54
  %v195 = vunpack.c.h.b16 %v54
  %v196 = vunpack.c.l.b16 %v55
  %v197 = vunpack.c.h.b16 %v55
  %v198 = vunpack.c.l.b16 %v56
  %v199 = vunpack.c.h.b16 %v56
  %v200 = vunpack.c.l.b16 %v57
  %v201 = vunpack.c.h.b16 %v57
  %v202 = vunpack.c.l.b16 %v58
  %v203 = vunpack.c.h.b16 %v58
  %v204 = vunpack.c.l.b16 %v59
  %v205 = vunpack.c.h.b16 %v59
  %v206 = vunpack.c.l.b16 %v60
  %v207 = vunpack.c.h.b16 %v60
  %v208 = vunpack.c.l.b16 %v61
  %v209 = vunpack.c.h.b16 %v61
  %v210 = vunpack.c.l.b16 %v62
  %v211 = vunpack.c.h.b16 %v62
  %v212 = vunpack.c.l.b16 %v63
  %v213 = vunpack.c.h.b16 %v63
  %v214 = vunpack.c.l.b16 %v64
  %v215 = vunpack.c.h.b16 %v64
  %v216 = vunpack.c.l.b16 %v65
  %v217 = vunpack.c.h.b16 %v65
  %v218 = vpack.c.b16 %v138, %v128
  %v219 = vpack.c.b16 %v139, %v129
  %v220 = vpack.c.b16 %v140, %v130
  %v221 = vpack.c.b16 %v141, %v131
  %v222 = vpack.c.b16 %v142, %v132
  %v223 = vpack.c.b16 %v143, %v133
  %v224 = vpack.c.b16 %v144, %v134
  %v225 = vpack.c.b16 %v145, %v135
  %v226 = vpack.c.b16 %v146, %v136
  %v227 = vpack.c.b16 %v147, %v137
  %v228 = vpack.c.b16 %v158, %v148
  %v229 = vpack.c.b16 %v159, %v149
  %v230 = vpack.c.b16 %v160, %v150
  %v231 = vpack.c.b16 %v161, %v151
  %v232 = vpack.c.b16 %v162, %v152
  %v233 = vpack.c.b16 %v163, %v153
  %v234 = vpack.c.b16 %v164, %v154
  %v235 = vpack.c.b16 %v165, %v155
  %v236 = vpack.c.b16 %v166, %v156
  %v237 = vpack.c.b16 %v167, %v157
  %v238 = vpack.c.b16 %v178, %v168
  %v239 = vpack.c.b16 %v179, %v169
  %v240 = vpack.c.b16 %v180, %v170
  %v241 = vpack.c.b16 %v181, %v171
  %v242 = vpack.c.b16 %v182, %v172
  %v243 = vpack.c.b16 %v183, %v173
  %v244 = vpack.c.b16 %v184, %v174
  %v245 = vpack.c.b16 %v185, %v175
  %v246 = vpack.c.b16 %v186, %v176
  %v247 = vpack.c.b16 %v187, %v177
  %v248 = vpack.c.b16 %v198, %v188
  %v249 = vpack.c.b16 %v199, %v189
  %v250 = vpack.c.b16 %v200, %v190
  %v251 = vpack.c.b16 %v201, %v191
  %v252 = vpack.c.b16 %v202, %v192
  %v253 = vpack.c.b16 %v203, %v193
  %v254 = vpack.c.b16 %v204, %v194
  %v255 = vpack.c.b16 %v205, %v195
  %v256 = vpack.c.b16 %v206, %v196
  %v257 = vpack.c.b16 %v207, %v197
  %v258 = vpack.c.b16 %v208, %v208
  %v259 = vpack.c.b16 %v209, %v209
  %v260 = vpack.c.b16 %v210, %v210
  %v261 = vpack.c.b16 %v211, %v211
  %v262 = vpack.c.b16 %v212, %v212
  %v263 = vpack.c.b16 %v213, %v213
  %v264 = vpack.c.b16 %v214, %v214
  %v265 = vpack.c.b16 %v215, %v215
  %v266 = vpack.c.b16 %v216, %v216
  %v267 = vpack.c.b16 %v217, %v217
  %vm308 = vcmask 588800
  %v310 = vsel %vm308, %v82, 0
  %vm312 = vcmask 1043456
  %v314 = vsel %vm312, %v258, 0
  %v317 = vsel %vm312, %v259, 0
  %v320 = vsel %vm312, %v260, 0
  %v323 = vsel %vm312, %v261, 0
  %v326 = vsel %vm312, %v262, 0
  %v329 = vsel %vm312, %v263, 0
  %v332 = vsel %vm312, %v264, 0
  %v335 = vsel %vm312, %v265, 0
  %v338 = vsel %vm312, %v266, 0
  %v341 = vsel %vm312, %v267, 0
  %343 = vmatpush.bf16.msra.mxu0 0
  %344 = vmatpush.bf16.msra.mxu0 0
  %345 = vmatpush.bf16.msra.mxu0 0
  %346 = vmatpush.bf16.msra.mxu0 %v314
  %347 = vmatpush.bf16.msra.mxu0 %v248
  %348 = vmatpush.bf16.msra.mxu0 %v238
  %349 = vmatpush.bf16.msra.mxu0 %v228
  %350 = vmatpush.bf16.msra.mxu0 %v218
  %351 = vmatmul.bf16.gmra.mxu0 %v310
  %v352 = vpop.f32.mrf.mxu0
  %v353 = vadd.f32 %v71, %v352
  %v354 = vpop.f32.mrf.mxu0
  %v355 = vadd.f32 %v76, %v354
  %356 = vdwg.mxu0
  %357 = vmatpush.bf16.msra.mxu0 0
  %358 = vmatpush.bf16.msra.mxu0 0
  %359 = vmatpush.bf16.msra.mxu0 0
  %360 = vmatpush.bf16.msra.mxu0 %v317
  %361 = vmatpush.bf16.msra.mxu0 %v249
  %362 = vmatpush.bf16.msra.mxu0 %v239
  %363 = vmatpush.bf16.msra.mxu0 %v229
  %364 = vmatpush.bf16.msra.mxu0 %v219
  %365 = vmatmul.bf16.gmra.mxu0 %v310
  %v366 = vpop.f32.mrf.mxu0
  %v367 = vadd.f32 %v71, %v366
  %v368 = vpop.f32.mrf.mxu0
  %v369 = vadd.f32 %v76, %v368
  %370 = vdwg.mxu0
  %371 = vmatpush.bf16.msra.mxu0 0
  %372 = vmatpush.bf16.msra.mxu0 0
  %373 = vmatpush.bf16.msra.mxu0 0
  %374 = vmatpush.bf16.msra.mxu0 %v320
  %375 = vmatpush.bf16.msra.mxu0 %v250
  %376 = vmatpush.bf16.msra.mxu0 %v240
  %377 = vmatpush.bf16.msra.mxu0 %v230
  %378 = vmatpush.bf16.msra.mxu0 %v220
  %379 = vmatmul.bf16.gmra.mxu0 %v310
  %v380 = vpop.f32.mrf.mxu0
  %v381 = vadd.f32 %v71, %v380
  %v382 = vpop.f32.mrf.mxu0
  %v383 = vadd.f32 %v76, %v382
  %384 = vdwg.mxu0
  %385 = vmatpush.bf16.msra.mxu0 0
  %386 = vmatpush.bf16.msra.mxu0 0
  %387 = vmatpush.bf16.msra.mxu0 0
  %388 = vmatpush.bf16.msra.mxu0 %v323
  %389 = vmatpush.bf16.msra.mxu0 %v251
  %390 = vmatpush.bf16.msra.mxu0 %v241
  %391 = vmatpush.bf16.msra.mxu0 %v231
  %392 = vmatpush.bf16.msra.mxu0 %v221
  %393 = vmatmul.bf16.gmra.mxu0 %v310
  %v394 = vpop.f32.mrf.mxu0
  %v395 = vadd.f32 %v71, %v394
  %v396 = vpop.f32.mrf.mxu0
  %v397 = vadd.f32 %v76, %v396
  %398 = vdwg.mxu0
  %399 = vmatpush.bf16.msra.mxu0 0
  %400 = vmatpush.bf16.msra.mxu0 0
  %401 = vmatpush.bf16.msra.mxu0 0
  %402 = vmatpush.bf16.msra.mxu0 %v326
  %403 = vmatpush.bf16.msra.mxu0 %v252
  %404 = vmatpush.bf16.msra.mxu0 %v242
  %405 = vmatpush.bf16.msra.mxu0 %v232
  %406 = vmatpush.bf16.msra.mxu0 %v222
  %407 = vmatmul.bf16.gmra.mxu0 %v310
  %v408 = vpop.f32.mrf.mxu0
  %v409 = vadd.f32 %v71, %v408
  %v410 = vpop.f32.mrf.mxu0
  %v411 = vadd.f32 %v76, %v410
  %412 = vdwg.mxu0
  %413 = vmatpush.bf16.msra.mxu0 0
  %414 = vmatpush.bf16.msra.mxu0 0
  %415 = vmatpush.bf16.msra.mxu0 0
  %416 = vmatpush.bf16.msra.mxu0 %v329
  %417 = vmatpush.bf16.msra.mxu0 %v253
  %418 = vmatpush.bf16.msra.mxu0 %v243
  %419 = vmatpush.bf16.msra.mxu0 %v233
  %420 = vmatpush.bf16.msra.mxu0 %v223
  %421 = vmatmul.bf16.gmra.mxu0 %v310
  %v422 = vpop.f32.mrf.mxu0
  %v423 = vadd.f32 %v71, %v422
  %v424 = vpop.f32.mrf.mxu0
  %v425 = vadd.f32 %v76, %v424
  %426 = vdwg.mxu0
  %427 = vmatpush.bf16.msra.mxu0 0
  %428 = vmatpush.bf16.msra.mxu0 0
  %429 = vmatpush.bf16.msra.mxu0 0
  %430 = vmatpush.bf16.msra.mxu0 %v332
  %431 = vmatpush.bf16.msra.mxu0 %v254
  %432 = vmatpush.bf16.msra.mxu0 %v244
  %433 = vmatpush.bf16.msra.mxu0 %v234
  %434 = vmatpush.bf16.msra.mxu0 %v224
  %435 = vmatmul.bf16.gmra.mxu0 %v310
  %v436 = vpop.f32.mrf.mxu0
  %v437 = vadd.f32 %v71, %v436
  %v438 = vpop.f32.mrf.mxu0
  %v439 = vadd.f32 %v76, %v438
  %440 = vdwg.mxu0
  %441 = vmatpush.bf16.msra.mxu0 0
  %442 = vmatpush.bf16.msra.mxu0 0
  %443 = vmatpush.bf16.msra.mxu0 0
  %444 = vmatpush.bf16.msra.mxu0 %v335
  %445 = vmatpush.bf16.msra.mxu0 %v255
  %446 = vmatpush.bf16.msra.mxu0 %v245
  %447 = vmatpush.bf16.msra.mxu0 %v235
  %448 = vmatpush.bf16.msra.mxu0 %v225
  %449 = vmatmul.bf16.gmra.mxu0 %v310
  %v450 = vpop.f32.mrf.mxu0
  %v451 = vadd.f32 %v71, %v450
  %v452 = vpop.f32.mrf.mxu0
  %v453 = vadd.f32 %v76, %v452
  %454 = vdwg.mxu0
  %455 = vmatpush.bf16.msra.mxu0 0
  %456 = vmatpush.bf16.msra.mxu0 0
  %457 = vmatpush.bf16.msra.mxu0 0
  %458 = vmatpush.bf16.msra.mxu0 %v338
  %459 = vmatpush.bf16.msra.mxu0 %v256
  %460 = vmatpush.bf16.msra.mxu0 %v246
  %461 = vmatpush.bf16.msra.mxu0 %v236
  %462 = vmatpush.bf16.msra.mxu0 %v226
  %463 = vmatmul.bf16.gmra.mxu0 %v310
  %v464 = vpop.f32.mrf.mxu0
  %v465 = vadd.f32 %v71, %v464
  %v466 = vpop.f32.mrf.mxu0
  %v467 = vadd.f32 %v76, %v466
  %468 = vdwg.mxu0
  %469 = vmatpush.bf16.msra.mxu0 0
  %470 = vmatpush.bf16.msra.mxu0 0
  %471 = vmatpush.bf16.msra.mxu0 0
  %472 = vmatpush.bf16.msra.mxu0 %v341
  %473 = vmatpush.bf16.msra.mxu0 %v257
  %474 = vmatpush.bf16.msra.mxu0 %v247
  %475 = vmatpush.bf16.msra.mxu0 %v237
  %476 = vmatpush.bf16.msra.mxu0 %v227
  %477 = vmatmul.bf16.gmra.mxu0 %v310
  %v478 = vpop.f32.mrf.mxu0
  %v479 = vadd.f32 %v71, %v478
  %v480 = vpop.f32.mrf.mxu0
  %v481 = vadd.f32 %v76, %v480
  %482 = vdwg.mxu0
  %s483 = sld [smem:[#allocation2]]
  %vm484 = vcmp.ge.f32.partialorder %v353, 0.0
  %vm485 = vcmp.ge.f32.partialorder %v367, 0.0
  %vm486 = vcmp.ge.f32.partialorder %v381, 0.0
  %vm487 = vcmp.ge.f32.partialorder %v395, 0.0
  %vm488 = vcmp.ge.f32.partialorder %v409, 0.0
  %vm489 = vcmp.ge.f32.partialorder %v423, 0.0
  %vm490 = vcmp.ge.f32.partialorder %v437, 0.0
  %vm491 = vcmp.ge.f32.partialorder %v451, 0.0
  %vm492 = vcmp.ge.f32.partialorder %v465, 0.0
  %vm493 = vcmp.ge.f32.partialorder %v479, 0.0
  %vm494 = vcmp.ge.f32.partialorder %v355, 0.0
  %vm495 = vcmp.ge.f32.partialorder %v369, 0.0
  %vm496 = vcmp.ge.f32.partialorder %v383, 0.0
  %vm497 = vcmp.ge.f32.partialorder %v397, 0.0
  %vm498 = vcmp.ge.f32.partialorder %v411, 0.0
  %vm499 = vcmp.ge.f32.partialorder %v425, 0.0
  %vm500 = vcmp.ge.f32.partialorder %v439, 0.0
  %vm501 = vcmp.ge.f32.partialorder %v453, 0.0
  %vm502 = vcmp.ge.f32.partialorder %v467, 0.0
  %vm503 = vcmp.ge.f32.partialorder %v481, 0.0
  %v504 = vstv %s483
  %v505 = vmul.f32 %v504, %v353
  %v506 = vmul.f32 %v504, %v367
  %v507 = vmul.f32 %v504, %v381
  %v508 = vmul.f32 %v504, %v395
  %v509 = vmul.f32 %v504, %v409
  %v510 = vmul.f32 %v504, %v423
  %v511 = vmul.f32 %v504, %v437
  %v512 = vmul.f32 %v504, %v451
  %v513 = vmul.f32 %v504, %v465
  %v514 = vmul.f32 %v504, %v479
  %v515 = vmul.f32 %v504, %v355
  %v516 = vmul.f32 %v504, %v369
  %v517 = vmul.f32 %v504, %v383
  %v518 = vmul.f32 %v504, %v397
  %v519 = vmul.f32 %v504, %v411
  %v520 = vmul.f32 %v504, %v425
  %v521 = vmul.f32 %v504, %v439
  %v522 = vmul.f32 %v504, %v453
  %v523 = vmul.f32 %v504, %v467
  %v524 = vmul.f32 %v504, %v481
  %v525 = vsel %vm484, %v353, %v505
  %v526 = vsel %vm485, %v367, %v506
  %v527 = vsel %vm486, %v381, %v507
  %v528 = vsel %vm487, %v395, %v508
  %v529 = vsel %vm488, %v409, %v509
  %v530 = vsel %vm489, %v423, %v510
  %v531 = vsel %vm490, %v437, %v511
  %v532 = vsel %vm491, %v451, %v512
  %v533 = vsel %vm492, %v465, %v513
  %v534 = vsel %vm493, %v479, %v514
  %v535 = vsel %vm494, %v355, %v515
  %v536 = vsel %vm495, %v369, %v516
  %v537 = vsel %vm496, %v383, %v517
  %v538 = vsel %vm497, %v397, %v518
  %v539 = vsel %vm498, %v411, %v519
  %v540 = vsel %vm499, %v425, %v520
  %v541 = vsel %vm500, %v439, %v521
  %v542 = vsel %vm501, %v453, %v522
  %v543 = vsel %vm502, %v467, %v523
  %v544 = vsel %vm503, %v481, %v524
  %v545 = vpack.c.bf16 %v526, %v525
  %v546 = vpack.c.bf16 %v528, %v527
  %v547 = vpack.c.bf16 %v530, %v529
  %v548 = vpack.c.bf16 %v532, %v531
  %v549 = vpack.c.bf16 %v534, %v533
  %v550 = vpack.c.bf16 %v536, %v535
  %v551 = vpack.c.bf16 %v538, %v537
  %v552 = vpack.c.bf16 %v540, %v539
  %v553 = vpack.c.bf16 %v542, %v541
  %v554 = vpack.c.bf16 %v544, %v543
  %555 = vst [vmem:[%s4] sm:$0xff] %v545
  %556 = vst [vmem:[%s4 + $0x8] sm:$0xff] %v546
  %557 = vst [vmem:[%s4 + $0x10] sm:$0xff] %v547
  %558 = vst [vmem:[%s4 + $0x18] sm:$0xff] %v548
  %vm559 = vcmask 801796
  %vm560 = vmor %vm559, %vm312
  %561 = vst.msk [vmem:[%s4 + $0x20] sm:$0xff] %vm560, %v549
  %562 = vst [vmem:[%s4 + $0x28] sm:$0xff] %v550
  %563 = vst [vmem:[%s4 + $0x30] sm:$0xff] %v551
  %564 = vst [vmem:[%s4 + $0x38] sm:$0xff] %v552
  %565 = vst [vmem:[%s4 + $0x40] sm:$0xff] %v553
  %566 = vst.msk [vmem:[%s4 + $0x48] sm:$0xff] %vm560, %v554
  // Predicated region
  $region18: #{net_forward.5} parent=0 // pred_check
    _
  $region19: #{net_forward.5} parent=0 // pred_check_branch
    %568 = sbr.rel (0) target = $region21
  $region20: #{net_forward.5} parent=0 // pred_region
    _
  $region21: #{net_forward.5} parent=0 // pred_fallthru
    _
  // Predicated region
  $region22: #{net_forward.5} parent=0 // pred_check
    _
  $region23: #{net_forward.5} parent=0 // pred_check_branch
    %570 = sbr.rel (0) target = $region25
  $region24: #{net_forward.5} parent=0 // pred_region
    _
  $region25: #{net_forward.5} parent=0 // pred_fallthru
    _

// kernel: net_forward.6
$region0: #{net_forward.6}
  #allocation0 [shape = 'u32[]', space=smem, size = 0x4, offset = 0x4, fixed_abs, tag = 'smem constant byte address 0x4 - core index']
  #allocation1 [shape = 'u32[72,128]{1,0:T(1,128)}', space=vmem, size = 0x9000, scoped, tag = 'internal scratch']
  #allocation2 [shape = 'f32[1]{0:T(128)S(6)}', space=smem, size = 0x200, scoped, tag = 'scoped memory for net_forward.6']
  %s0 = inlined_call_operand.vmem [shape: bf16[16,144], index: 0, kind: input, shape index: {}]
  %s1 = inlined_call_operand.vmem [shape: bf16[144,1058], index: 1, kind: input, shape index: {}]
  %s2 = inlined_call_operand.vmem [shape: f32[16,1], index: 2, kind: input, shape index: {}]
  %s3 = inlined_call_operand.<no memory space> [shape: f32[1], index: 3, kind: input, shape index: {}]
  %s4 = inlined_call_operand.vmem [shape: bf16[16,1058], index: 4, kind: output, shape index: {}]
  %s5 = sld [smem:[#allocation0]]
  $region26: #{net_forward.6} parent=0
    _
  %s7 = ssub.s32 1, %s5
  %s8 = scalar_select 0, %s7, %s5
  %9 = sst [smem:[#allocation2]] %s3
  // Predicated region
  $region2: #{net_forward.6} parent=0 // pred_check
    _
  $region3: #{net_forward.6} parent=0 // pred_check_branch
    %11 = sbr.rel (0) target = $region5
  $region4: #{net_forward.6} parent=0 // pred_region
    _
  $region5: #{net_forward.6} parent=0 // pred_fallthru
    _
  // Predicated region
  $region6: #{net_forward.6} parent=0 // pred_check
    _
  $region7: #{net_forward.6} parent=0 // pred_check_branch
    %13 = sbr.rel (0) target = $region9
  $region8: #{net_forward.6} parent=0 // pred_region
    _
  $region9: #{net_forward.6} parent=0 // pred_fallthru
    _
  // Predicated region
  $region10: #{net_forward.6} parent=0 // pred_check
    _
  $region11: #{net_forward.6} parent=0 // pred_check_branch
    %15 = sbr.rel (0) target = $region13
  $region12: #{net_forward.6} parent=0 // pred_region
    _
  $region13: #{net_forward.6} parent=0 // pred_fallthru
    _
  // Predicated region
  $region14: #{net_forward.6} parent=0 // pred_check
    _
  $region15: #{net_forward.6} parent=0 // pred_check_branch
    %17 = sbr.rel (0) target = $region17
  $region16: #{net_forward.6} parent=0 // pred_region
    _
  $region17: #{net_forward.6} parent=0 // pred_fallthru
    _
  %v19 = vld [vmem:[%s0] sm:$0xff]
  %v20 = vld [vmem:[%s0 + $0x8] sm:$0xff]
  %v21 = vld [vmem:[%s1] sm:$0xff]
  %v22 = vld [vmem:[%s1 + $0x8] sm:$0xff]
  %v23 = vld [vmem:[%s1 + $0x10] sm:$0xff]
  %v24 = vld [vmem:[%s1 + $0x18] sm:$0xff]
  %v25 = vld [vmem:[%s1 + $0x20] sm:$0xf]
  %v26 = vld [vmem:[%s1 + $0x24] sm:$0xff]
  %v27 = vld [vmem:[%s1 + $0x2c] sm:$0xff]
  %v28 = vld [vmem:[%s1 + $0x34] sm:$0xff]
  %v29 = vld [vmem:[%s1 + $0x3c] sm:$0xff]
  %v30 = vld [vmem:[%s1 + $0x44] sm:$0xf]
  %v31 = vld [vmem:[%s1 + $0x48] sm:$0xff]
  %v32 = vld [vmem:[%s1 + $0x50] sm:$0xff]
  %v33 = vld [vmem:[%s1 + $0x58] sm:$0xff]
  %v34 = vld [vmem:[%s1 + $0x60] sm:$0xff]
  %v35 = vld [vmem:[%s1 + $0x68] sm:$0xf]
  %v36 = vld [vmem:[%s1 + $0x6c] sm:$0xff]
  %v37 = vld [vmem:[%s1 + $0x74] sm:$0xff]
  %v38 = vld [vmem:[%s1 + $0x7c] sm:$0xff]
  %v39 = vld [vmem:[%s1 + $0x84] sm:$0xff]
  %v40 = vld [vmem:[%s1 + $0x8c] sm:$0xf]
  %v41 = vld [vmem:[%s1 + $0x90] sm:$0xff]
  %v42 = vld [vmem:[%s1 + $0x98] sm:$0xff]
  %v43 = vld [vmem:[%s1 + $0xa0] sm:$0xff]
  %v44 = vld [vmem:[%s1 + $0xa8] sm:$0xff]
  %v45 = vld [vmem:[%s1 + $0xb0] sm:$0xf]
  %v46 = vld [vmem:[%s1 + $0xb4] sm:$0xff]
  %v47 = vld [vmem:[%s1 + $0xbc] sm:$0xff]
  %v48 = vld [vmem:[%s1 + $0xc4] sm:$0xff]
  %v49 = vld [vmem:[%s1 + $0xcc] sm:$0xff]
  %v50 = vld [vmem:[%s1 + $0xd4] sm:$0xf]
  %v51 = vld [vmem:[%s1 + $0xd8] sm:$0xff]
  %v52 = vld [vmem:[%s1 + $0xe0] sm:$0xff]
  %v53 = vld [vmem:[%s1 + $0xe8] sm:$0xff]
  %v54 = vld [vmem:[%s1 + $0xf0] sm:$0xff]
  %v55 = vld [vmem:[%s1 + $0xf8] sm:$0xf]
  %v56 = vld [vmem:[%s1 + $0xfc] sm:$0xff]
  %v57 = vld [vmem:[%s1 + $0x104] sm:$0xff]
  %v58 = vld [vmem:[%s1 + $0x10c] sm:$0xff]
  %v59 = vld [vmem:[%s1 + $0x114] sm:$0xff]
  %v60 = vld [vmem:[%s1 + $0x11c] sm:$0xf]
  %v61 = vld [vmem:[%s1 + $0x120] sm:$0xff]
  %v62 = vld [vmem:[%s1 + $0x128] sm:$0xff]
  %v63 = vld [vmem:[%s1 + $0x130] sm:$0xff]
  %v64 = vld [vmem:[%s1 + $0x138] sm:$0xff]
  %v65 = vld [vmem:[%s1 + $0x140] sm:$0xf]
  %v66 = vld [vmem:[%s1 + $0x144] sm:$0xff]
  %v67 = vld [vmem:[%s1 + $0x14c] sm:$0xff]
  %v68 = vld [vmem:[%s1 + $0x154] sm:$0xff]
  %v69 = vld [vmem:[%s1 + $0x15c] sm:$0xff]
  %v70 = vld [vmem:[%s1 + $0x164] sm:$0xf]
  %v71 = vld [vmem:[%s1 + $0x168] sm:$0xff]
  %v72 = vld [vmem:[%s1 + $0x170] sm:$0xff]
  %v73 = vld [vmem:[%s1 + $0x178] sm:$0xff]
  %v74 = vld [vmem:[%s1 + $0x180] sm:$0xff]
  %v75 = vld [vmem:[%s1 + $0x188] sm:$0xf]
  %v76 = vld [vmem:[%s1 + $0x18c] sm:$0xff]
  %v77 = vld [vmem:[%s1 + $0x194] sm:$0xff]
  %v78 = vld [vmem:[%s1 + $0x19c] sm:$0xff]
  %v79 = vld [vmem:[%s1 + $0x1a4] sm:$0xff]
  %v80 = vld [vmem:[%s1 + $0x1ac] sm:$0xf]
  %v81 = vld [vmem:[%s1 + $0x1b0] sm:$0xff]
  %v82 = vld [vmem:[%s1 + $0x1b8] sm:$0xff]
  %v83 = vld [vmem:[%s1 + $0x1c0] sm:$0xff]
  %v84 = vld [vmem:[%s1 + $0x1c8] sm:$0xff]
  %v85 = vld [vmem:[%s1 + $0x1d0] sm:$0xf]
  %v86 = vld [vmem:[%s1 + $0x1d4] sm:$0xff]
  %v87 = vld [vmem:[%s1 + $0x1dc] sm:$0xff]
  %v88 = vld [vmem:[%s1 + $0x1e4] sm:$0xff]
  %v89 = vld [vmem:[%s1 + $0x1ec] sm:$0xff]
  %v90 = vld [vmem:[%s1 + $0x1f4] sm:$0xf]
  %v91 = vld [vmem:[%s1 + $0x1f8] sm:$0xff]
  %v92 = vld [vmem:[%s1 + $0x200] sm:$0xff]
  %v93 = vld [vmem:[%s1 + $0x208] sm:$0xff]
  %v94 = vld [vmem:[%s1 + $0x210] sm:$0xff]
  %v95 = vld [vmem:[%s1 + $0x218] sm:$0xf]
  %v96 = vld [vmem:[%s1 + $0x21c] sm:$0xff]
  %v97 = vld [vmem:[%s1 + $0x224] sm:$0xff]
  %v98 = vld [vmem:[%s1 + $0x22c] sm:$0xff]
  %v99 = vld [vmem:[%s1 + $0x234] sm:$0xff]
  %v100 = vld [vmem:[%s1 + $0x23c] sm:$0xf]
  %v101 = vld [vmem:[%s1 + $0x240] sm:$0xff]
  %v102 = vld [vmem:[%s1 + $0x248] sm:$0xff]
  %v103 = vld [vmem:[%s1 + $0x250] sm:$0xff]
  %v104 = vld [vmem:[%s1 + $0x258] sm:$0xff]
  %v105 = vld [vmem:[%s1 + $0x260] sm:$0xf]
  %v106 = vld [vmem:[%s1 + $0x264] sm:$0xff]
  %v107 = vld [vmem:[%s1 + $0x26c] sm:$0xff]
  %v108 = vld [vmem:[%s1 + $0x274] sm:$0xff]
  %v109 = vld [vmem:[%s1 + $0x27c] sm:$0xff]
  %v110 = vld [vmem:[%s1 + $0x284] sm:$0xf]
  %v111 = vld [vmem:[%s2] sm:$0xff]
  %v112 = vld [vmem:[%s2 + $0x8] sm:$0xff]
  %114 = vset.pattern.permute.xlu0 0
  %115 = vperm.xlu0 %114, %v111
  %v116 = vpop.permute.xlu0 %115
  %119 = vset.pattern.permute.xlu0 0
  %120 = vperm.xlu0 %119, %v112
  %v121 = vpop.permute.xlu0 %120
  %v125 = vunpack.c.l.b16 %v19
  %v126 = vunpack.c.h.b16 %v19
  %v127 = vunpack.c.l.b16 %v20
  %v128 = vunpack.c.h.b16 %v20
  %v129 = vpack.c.b16 %v127, %v125
  %v130 = vpack.c.b16 %v128, %v126
  %v222 = vunpack.c.l.b16 %v21
  %v223 = vunpack.c.h.b16 %v21
  %v224 = vunpack.c.l.b16 %v22
  %v225 = vunpack.c.h.b16 %v22
  %v226 = vunpack.c.l.b16 %v23
  %v227 = vunpack.c.h.b16 %v23
  %v228 = vunpack.c.l.b16 %v24
  %v229 = vunpack.c.h.b16 %v24
  %v230 = vunpack.c.l.b16 %v25
  %v231 = vunpack.c.l.b16 %v26
  %v232 = vunpack.c.h.b16 %v26
  %v233 = vunpack.c.l.b16 %v27
  %v234 = vunpack.c.h.b16 %v27
  %v235 = vunpack.c.l.b16 %v28
  %v236 = vunpack.c.h.b16 %v28
  %v237 = vunpack.c.l.b16 %v29
  %v238 = vunpack.c.h.b16 %v29
  %v239 = vunpack.c.l.b16 %v30
  %v240 = vunpack.c.l.b16 %v31
  %v241 = vunpack.c.h.b16 %v31
  %v242 = vunpack.c.l.b16 %v32
  %v243 = vunpack.c.h.b16 %v32
  %v244 = vunpack.c.l.b16 %v33
  %v245 = vunpack.c.h.b16 %v33
  %v246 = vunpack.c.l.b16 %v34
  %v247 = vunpack.c.h.b16 %v34
  %v248 = vunpack.c.l.b16 %v35
  %v249 = vunpack.c.l.b16 %v36
  %v250 = vunpack.c.h.b16 %v36
  %v251 = vunpack.c.l.b16 %v37
  %v252 = vunpack.c.h.b16 %v37
  %v253 = vunpack.c.l.b16 %v38
  %v254 = vunpack.c.h.b16 %v38
  %v255 = vunpack.c.l.b16 %v39
  %v256 = vunpack.c.h.b16 %v39
  %v257 = vunpack.c.l.b16 %v40
  %v258 = vunpack.c.l.b16 %v41
  %v259 = vunpack.c.h.b16 %v41
  %v260 = vunpack.c.l.b16 %v42
  %v261 = vunpack.c.h.b16 %v42
  %v262 = vunpack.c.l.b16 %v43
  %v263 = vunpack.c.h.b16 %v43
  %v264 = vunpack.c.l.b16 %v44
  %v265 = vunpack.c.h.b16 %v44
  %v266 = vunpack.c.l.b16 %v45
  %v267 = vunpack.c.l.b16 %v46
  %v268 = vunpack.c.h.b16 %v46
  %v269 = vunpack.c.l.b16 %v47
  %v270 = vunpack.c.h.b16 %v47
  %v271 = vunpack.c.l.b16 %v48
  %v272 = vunpack.c.h.b16 %v48
  %v273 = vunpack.c.l.b16 %v49
  %v274 = vunpack.c.h.b16 %v49
  %v275 = vunpack.c.l.b16 %v50
  %v276 = vunpack.c.l.b16 %v51
  %v277 = vunpack.c.h.b16 %v51
  %v278 = vunpack.c.l.b16 %v52
  %v279 = vunpack.c.h.b16 %v52
  %v280 = vunpack.c.l.b16 %v53
  %v281 = vunpack.c.h.b16 %v53
  %v282 = vunpack.c.l.b16 %v54
  %v283 = vunpack.c.h.b16 %v54
  %v284 = vunpack.c.l.b16 %v55
  %v285 = vunpack.c.l.b16 %v56
  %v286 = vunpack.c.h.b16 %v56
  %v287 = vunpack.c.l.b16 %v57
  %v288 = vunpack.c.h.b16 %v57
  %v289 = vunpack.c.l.b16 %v58
  %v290 = vunpack.c.h.b16 %v58
  %v291 = vunpack.c.l.b16 %v59
  %v292 = vunpack.c.h.b16 %v59
  %v293 = vunpack.c.l.b16 %v60
  %v294 = vunpack.c.l.b16 %v61
  %v295 = vunpack.c.h.b16 %v61
  %v296 = vunpack.c.l.b16 %v62
  %v297 = vunpack.c.h.b16 %v62
  %v298 = vunpack.c.l.b16 %v63
  %v299 = vunpack.c.h.b16 %v63
  %v300 = vunpack.c.l.b16 %v64
  %v301 = vunpack.c.h.b16 %v64
  %v302 = vunpack.c.l.b16 %v65
  %v303 = vunpack.c.l.b16 %v66
  %v304 = vunpack.c.h.b16 %v66
  %v305 = vunpack.c.l.b16 %v67
  %v306 = vunpack.c.h.b16 %v67
  %v307 = vunpack.c.l.b16 %v68
  %v308 = vunpack.c.h.b16 %v68
  %v309 = vunpack.c.l.b16 %v69
  %v310 = vunpack.c.h.b16 %v69
  %v311 = vunpack.c.l.b16 %v70
  %v312 = vunpack.c.l.b16 %v71
  %v313 = vunpack.c.h.b16 %v71
  %v314 = vunpack.c.l.b16 %v72
  %v315 = vunpack.c.h.b16 %v72
  %v316 = vunpack.c.l.b16 %v73
  %v317 = vunpack.c.h.b16 %v73
  %v318 = vunpack.c.l.b16 %v74
  %v319 = vunpack.c.h.b16 %v74
  %v320 = vunpack.c.l.b16 %v75
  %v321 = vunpack.c.l.b16 %v76
  %v322 = vunpack.c.h.b16 %v76
  %v323 = vunpack.c.l.b16 %v77
  %v324 = vunpack.c.h.b16 %v77
  %v325 = vunpack.c.l.b16 %v78
  %v326 = vunpack.c.h.b16 %v78
  %v327 = vunpack.c.l.b16 %v79
  %v328 = vunpack.c.h.b16 %v79
  %v329 = vunpack.c.l.b16 %v80
  %v330 = vunpack.c.l.b16 %v81
  %v331 = vunpack.c.h.b16 %v81
  %v332 = vunpack.c.l.b16 %v82
  %v333 = vunpack.c.h.b16 %v82
  %v334 = vunpack.c.l.b16 %v83
  %v335 = vunpack.c.h.b16 %v83
  %v336 = vunpack.c.l.b16 %v84
  %v337 = vunpack.c.h.b16 %v84
  %v338 = vunpack.c.l.b16 %v85
  %v339 = vunpack.c.l.b16 %v86
  %v340 = vunpack.c.h.b16 %v86
  %v341 = vunpack.c.l.b16 %v87
  %v342 = vunpack.c.h.b16 %v87
  %v343 = vunpack.c.l.b16 %v88
  %v344 = vunpack.c.h.b16 %v88
  %v345 = vunpack.c.l.b16 %v89
  %v346 = vunpack.c.h.b16 %v89
  %v347 = vunpack.c.l.b16 %v90
  %v348 = vunpack.c.l.b16 %v91
  %v349 = vunpack.c.h.b16 %v91
  %v350 = vunpack.c.l.b16 %v92
  %v351 = vunpack.c.h.b16 %v92
  %v352 = vunpack.c.l.b16 %v93
  %v353 = vunpack.c.h.b16 %v93
  %v354 = vunpack.c.l.b16 %v94
  %v355 = vunpack.c.h.b16 %v94
  %v356 = vunpack.c.l.b16 %v95
  %v357 = vunpack.c.l.b16 %v96
  %v358 = vunpack.c.h.b16 %v96
  %v359 = vunpack.c.l.b16 %v97
  %v360 = vunpack.c.h.b16 %v97
  %v361 = vunpack.c.l.b16 %v98
  %v362 = vunpack.c.h.b16 %v98
  %v363 = vunpack.c.l.b16 %v99
  %v364 = vunpack.c.h.b16 %v99
  %v365 = vunpack.c.l.b16 %v100
  %v366 = vunpack.c.l.b16 %v101
  %v367 = vunpack.c.h.b16 %v101
  %v368 = vunpack.c.l.b16 %v102
  %v369 = vunpack.c.h.b16 %v102
  %v370 = vunpack.c.l.b16 %v103
  %v371 = vunpack.c.h.b16 %v103
  %v372 = vunpack.c.l.b16 %v104
  %v373 = vunpack.c.h.b16 %v104
  %v374 = vunpack.c.l.b16 %v105
  %v375 = vunpack.c.l.b16 %v106
  %v376 = vunpack.c.h.b16 %v106
  %v377 = vunpack.c.l.b16 %v107
  %v378 = vunpack.c.h.b16 %v107
  %v379 = vunpack.c.l.b16 %v108
  %v380 = vunpack.c.h.b16 %v108
  %v381 = vunpack.c.l.b16 %v109
  %v382 = vunpack.c.h.b16 %v109
  %v383 = vunpack.c.l.b16 %v110
  %v384 = vpack.c.b16 %v231, %v222
  %v385 = vpack.c.b16 %v232, %v223
  %v386 = vpack.c.b16 %v233, %v224
  %v387 = vpack.c.b16 %v234, %v225
  %v388 = vpack.c.b16 %v235, %v226
  %v389 = vpack.c.b16 %v236, %v227
  %v390 = vpack.c.b16 %v237, %v228
  %v391 = vpack.c.b16 %v238, %v229
  %v392 = vpack.c.b16 %v239, %v230
  %v393 = vpack.c.b16 %v249, %v240
  %v394 = vpack.c.b16 %v250, %v241
  %v395 = vpack.c.b16 %v251, %v242
  %v396 = vpack.c.b16 %v252, %v243
  %v397 = vpack.c.b16 %v253, %v244
  %v398 = vpack.c.b16 %v254, %v245
  %v399 = vpack.c.b16 %v255, %v246
  %v400 = vpack.c.b16 %v256, %v247
  %v401 = vpack.c.b16 %v257, %v248
  %v402 = vpack.c.b16 %v267, %v258
  %v403 = vpack.c.b16 %v268, %v259
  %v404 = vpack.c.b16 %v269, %v260
  %v405 = vpack.c.b16 %v270, %v261
  %v406 = vpack.c.b16 %v271, %v262
  %v407 = vpack.c.b16 %v272, %v263
  %v408 = vpack.c.b16 %v273, %v264
  %v409 = vpack.c.b16 %v274, %v265
  %v410 = vpack.c.b16 %v275, %v266
  %v411 = vpack.c.b16 %v285, %v276
  %v412 = vpack.c.b16 %v286, %v277
  %v413 = vpack.c.b16 %v287, %v278
  %v414 = vpack.c.b16 %v288, %v279
  %v415 = vpack.c.b16 %v289, %v280
  %v416 = vpack.c.b16 %v290, %v281
  %v417 = vpack.c.b16 %v291, %v282
  %v418 = vpack.c.b16 %v292, %v283
  %v419 = vpack.c.b16 %v293, %v284
  %v420 = vpack.c.b16 %v303, %v294
  %v421 = vpack.c.b16 %v304, %v295
  %v422 = vpack.c.b16 %v305, %v296
  %v423 = vpack.c.b16 %v306, %v297
  %v424 = vpack.c.b16 %v307, %v298
  %v425 = vpack.c.b16 %v308, %v299
  %v426 = vpack.c.b16 %v309, %v300
  %v427 = vpack.c.b16 %v310, %v301
  %v428 = vpack.c.b16 %v311, %v302
  %v429 = vpack.c.b16 %v321, %v312
  %v430 = vpack.c.b16 %v322, %v313
  %v431 = vpack.c.b16 %v323, %v314
  %v432 = vpack.c.b16 %v324, %v315
  %v433 = vpack.c.b16 %v325, %v316
  %v434 = vpack.c.b16 %v326, %v317
  %v435 = vpack.c.b16 %v327, %v318
  %v436 = vpack.c.b16 %v328, %v319
  %v437 = vpack.c.b16 %v329, %v320
  %v438 = vpack.c.b16 %v339, %v330
  %v439 = vpack.c.b16 %v340, %v331
  %v440 = vpack.c.b16 %v341, %v332
  %v441 = vpack.c.b16 %v342, %v333
  %v442 = vpack.c.b16 %v343, %v334
  %v443 = vpack.c.b16 %v344, %v335
  %v444 = vpack.c.b16 %v345, %v336
  %v445 = vpack.c.b16 %v346, %v337
  %v446 = vpack.c.b16 %v347, %v338
  %v447 = vpack.c.b16 %v357, %v348
  %v448 = vpack.c.b16 %v358, %v349
  %v449 = vpack.c.b16 %v359, %v350
  %v450 = vpack.c.b16 %v360, %v351
  %v451 = vpack.c.b16 %v361, %v352
  %v452 = vpack.c.b16 %v362, %v353
  %v453 = vpack.c.b16 %v363, %v354
  %v454 = vpack.c.b16 %v364, %v355
  %v455 = vpack.c.b16 %v365, %v356
  %v456 = vpack.c.b16 %v375, %v366
  %v457 = vpack.c.b16 %v376, %v367
  %v458 = vpack.c.b16 %v377, %v368
  %v459 = vpack.c.b16 %v378, %v369
  %v460 = vpack.c.b16 %v379, %v370
  %v461 = vpack.c.b16 %v380, %v371
  %v462 = vpack.c.b16 %v381, %v372
  %v463 = vpack.c.b16 %v382, %v373
  %v464 = vpack.c.b16 %v383, %v374
  %vm546 = vcmask 130048
  %v548 = vsel %vm546, %v130, 0
  %550 = vmatpush.bf16.msra.mxu0 %v447
  %551 = vmatpush.bf16.msra.mxu0 %v438
  %552 = vmatpush.bf16.msra.mxu0 %v429
  %553 = vmatpush.bf16.msra.mxu0 %v420
  %554 = vmatpush.bf16.msra.mxu0 %v411
  %555 = vmatpush.bf16.msra.mxu0 %v402
  %556 = vmatpush.bf16.msra.mxu0 %v393
  %557 = vmatpush.bf16.msra.mxu0 %v384
  %558 = vmatmul.bf16.gmra.mxu0 %v129
  %v559 = vpop.f32.mrf.mxu0
  %v560 = vadd.f32 %v116, %v559
  %v561 = vpop.f32.mrf.mxu0
  %v562 = vadd.f32 %v121, %v561
  %563 = vdwg.mxu0
  %564 = vmatpush.bf16.msra.mxu0 0
  %565 = vmatpush.bf16.msra.mxu0 0
  %566 = vmatpush.bf16.msra.mxu0 0
  %567 = vmatpush.bf16.msra.mxu0 0
  %568 = vmatpush.bf16.msra.mxu0 0
  %569 = vmatpush.bf16.msra.mxu0 0
  %570 = vmatpush.bf16.msra.mxu0 0
  %571 = vmatpush.bf16.msra.mxu0 %v456
  %572 = vmatmul.bf16.gmra.mxu0 %v548
  %v573 = vpop.f32.mrf.mxu0
  %v574 = vadd.f32 %v560, %v573
  %v575 = vpop.f32.mrf.mxu0
  %v576 = vadd.f32 %v562, %v575
  %577 = vdwg.mxu0
  %578 = vmatpush.bf16.msra.mxu0 %v448
  %579 = vmatpush.bf16.msra.mxu0 %v439
  %580 = vmatpush.bf16.msra.mxu0 %v430
  %581 = vmatpush.bf16.msra.mxu0 %v421
  %582 = vmatpush.bf16.msra.mxu0 %v412
  %583 = vmatpush.bf16.msra.mxu0 %v403
  %584 = vmatpush.bf16.msra.mxu0 %v394
  %585 = vmatpush.bf16.msra.mxu0 %v385
  %586 = vmatmul.bf16.gmra.mxu0 %v129
  %v587 = vpop.f32.mrf.mxu0
  %v588 = vadd.f32 %v116, %v587
  %v589 = vpop.f32.mrf.mxu0
  %v590 = vadd.f32 %v121, %v589
  %591 = vdwg.mxu0
  %592 = vmatpush.bf16.msra.mxu0 0
  %593 = vmatpush.bf16.msra.mxu0 0
  %594 = vmatpush.bf16.msra.mxu0 0
  %595 = vmatpush.bf16.msra.mxu0 0
  %596 = vmatpush.bf16.msra.mxu0 0
  %597 = vmatpush.bf16.msra.mxu0 0
  %598 = vmatpush.bf16.msra.mxu0 0
  %599 = vmatpush.bf16.msra.mxu0 %v457
  %600 = vmatmul.bf16.gmra.mxu0 %v548
  %v601 = vpop.f32.mrf.mxu0
  %v602 = vadd.f32 %v588, %v601
  %v603 = vpop.f32.mrf.mxu0
  %v604 = vadd.f32 %v590, %v603
  %605 = vdwg.mxu0
  %606 = vmatpush.bf16.msra.mxu0 %v449
  %607 = vmatpush.bf16.msra.mxu0 %v440
  %608 = vmatpush.bf16.msra.mxu0 %v431
  %609 = vmatpush.bf16.msra.mxu0 %v422
  %610 = vmatpush.bf16.msra.mxu0 %v413
  %611 = vmatpush.bf16.msra.mxu0 %v404
  %612 = vmatpush.bf16.msra.mxu0 %v395
  %613 = vmatpush.bf16.msra.mxu0 %v386
  %614 = vmatmul.bf16.gmra.mxu0 %v129
  %v615 = vpop.f32.mrf.mxu0
  %v616 = vadd.f32 %v116, %v615
  %v617 = vpop.f32.mrf.mxu0
  %v618 = vadd.f32 %v121, %v617
  %619 = vdwg.mxu0
  %620 = vmatpush.bf16.msra.mxu0 0
  %621 = vmatpush.bf16.msra.mxu0 0
  %622 = vmatpush.bf16.msra.mxu0 0
  %623 = vmatpush.bf16.msra.mxu0 0
  %624 = vmatpush.bf16.msra.mxu0 0
  %625 = vmatpush.bf16.msra.mxu0 0
  %626 = vmatpush.bf16.msra.mxu0 0
  %627 = vmatpush.bf16.msra.mxu0 %v458
  %628 = vmatmul.bf16.gmra.mxu0 %v548
  %v629 = vpop.f32.mrf.mxu0
  %v630 = vadd.f32 %v616, %v629
  %v631 = vpop.f32.mrf.mxu0
  %v632 = vadd.f32 %v618, %v631
  %633 = vdwg.mxu0
  %634 = vmatpush.bf16.msra.mxu0 %v450
  %635 = vmatpush.bf16.msra.mxu0 %v441
  %636 = vmatpush.bf16.msra.mxu0 %v432
  %637 = vmatpush.bf16.msra.mxu0 %v423
  %638 = vmatpush.bf16.msra.mxu0 %v414
  %639 = vmatpush.bf16.msra.mxu0 %v405
  %640 = vmatpush.bf16.msra.mxu0 %v396
  %641 = vmatpush.bf16.msra.mxu0 %v387
  %642 = vmatmul.bf16.gmra.mxu0 %v129
  %v643 = vpop.f32.mrf.mxu0
  %v644 = vadd.f32 %v116, %v643
  %v645 = vpop.f32.mrf.mxu0
  %v646 = vadd.f32 %v121, %v645
  %647 = vdwg.mxu0
  %648 = vmatpush.bf16.msra.mxu0 0
  %649 = vmatpush.bf16.msra.mxu0 0
  %650 = vmatpush.bf16.msra.mxu0 0
  %651 = vmatpush.bf16.msra.mxu0 0
  %652 = vmatpush.bf16.msra.mxu0 0
  %653 = vmatpush.bf16.msra.mxu0 0
  %654 = vmatpush.bf16.msra.mxu0 0
  %655 = vmatpush.bf16.msra.mxu0 %v459
  %656 = vmatmul.bf16.gmra.mxu0 %v548
  %v657 = vpop.f32.mrf.mxu0
  %v658 = vadd.f32 %v644, %v657
  %v659 = vpop.f32.mrf.mxu0
  %v660 = vadd.f32 %v646, %v659
  %661 = vdwg.mxu0
  %662 = vmatpush.bf16.msra.mxu0 %v451
  %663 = vmatpush.bf16.msra.mxu0 %v442
  %664 = vmatpush.bf16.msra.mxu0 %v433
  %665 = vmatpush.bf16.msra.mxu0 %v424
  %666 = vmatpush.bf16.msra.mxu0 %v415
  %667 = vmatpush.bf16.msra.mxu0 %v406
  %668 = vmatpush.bf16.msra.mxu0 %v397
  %669 = vmatpush.bf16.msra.mxu0 %v388
  %670 = vmatmul.bf16.gmra.mxu0 %v129
  %v671 = vpop.f32.mrf.mxu0
  %v672 = vadd.f32 %v116, %v671
  %v673 = vpop.f32.mrf.mxu0
  %v674 = vadd.f32 %v121, %v673
  %675 = vdwg.mxu0
  %676 = vmatpush.bf16.msra.mxu0 0
  %677 = vmatpush.bf16.msra.mxu0 0
  %678 = vmatpush.bf16.msra.mxu0 0
  %679 = vmatpush.bf16.msra.mxu0 0
  %680 = vmatpush.bf16.msra.mxu0 0
  %681 = vmatpush.bf16.msra.mxu0 0
  %682 = vmatpush.bf16.msra.mxu0 0
  %683 = vmatpush.bf16.msra.mxu0 %v460
  %684 = vmatmul.bf16.gmra.mxu0 %v548
  %v685 = vpop.f32.mrf.mxu0
  %v686 = vadd.f32 %v672, %v685
  %v687 = vpop.f32.mrf.mxu0
  %v688 = vadd.f32 %v674, %v687
  %689 = vdwg.mxu0
  %690 = vmatpush.bf16.msra.mxu0 %v452
  %691 = vmatpush.bf16.msra.mxu0 %v443
  %692 = vmatpush.bf16.msra.mxu0 %v434
  %693 = vmatpush.bf16.msra.mxu0 %v425
  %694 = vmatpush.bf16.msra.mxu0 %v416
  %695 = vmatpush.bf16.msra.mxu0 %v407
  %696 = vmatpush.bf16.msra.mxu0 %v398
  %697 = vmatpush.bf16.msra.mxu0 %v389
  %698 = vmatmul.bf16.gmra.mxu0 %v129
  %v699 = vpop.f32.mrf.mxu0
  %v700 = vadd.f32 %v116, %v699
  %v701 = vpop.f32.mrf.mxu0
  %v702 = vadd.f32 %v121, %v701
  %703 = vdwg.mxu0
  %704 = vmatpush.bf16.msra.mxu0 0
  %705 = vmatpush.bf16.msra.mxu0 0
  %706 = vmatpush.bf16.msra.mxu0 0
  %707 = vmatpush.bf16.msra.mxu0 0
  %708 = vmatpush.bf16.msra.mxu0 0
  %709 = vmatpush.bf16.msra.mxu0 0
  %710 = vmatpush.bf16.msra.mxu0 0
  %711 = vmatpush.bf16.msra.mxu0 %v461
  %712 = vmatmul.bf16.gmra.mxu0 %v548
  %v713 = vpop.f32.mrf.mxu0
  %v714 = vadd.f32 %v700, %v713
  %v715 = vpop.f32.mrf.mxu0
  %v716 = vadd.f32 %v702, %v715
  %717 = vdwg.mxu0
  %718 = vmatpush.bf16.msra.mxu0 %v453
  %719 = vmatpush.bf16.msra.mxu0 %v444
  %720 = vmatpush.bf16.msra.mxu0 %v435
  %721 = vmatpush.bf16.msra.mxu0 %v426
  %722 = vmatpush.bf16.msra.mxu0 %v417
  %723 = vmatpush.bf16.msra.mxu0 %v408
  %724 = vmatpush.bf16.msra.mxu0 %v399
  %725 = vmatpush.bf16.msra.mxu0 %v390
  %726 = vmatmul.bf16.gmra.mxu0 %v129
  %v727 = vpop.f32.mrf.mxu0
  %v728 = vadd.f32 %v116, %v727
  %v729 = vpop.f32.mrf.mxu0
  %v730 = vadd.f32 %v121, %v729
  %731 = vdwg.mxu0
  %732 = vmatpush.bf16.msra.mxu0 0
  %733 = vmatpush.bf16.msra.mxu0 0
  %734 = vmatpush.bf16.msra.mxu0 0
  %735 = vmatpush.bf16.msra.mxu0 0
  %736 = vmatpush.bf16.msra.mxu0 0
  %737 = vmatpush.bf16.msra.mxu0 0
  %738 = vmatpush.bf16.msra.mxu0 0
  %739 = vmatpush.bf16.msra.mxu0 %v462
  %740 = vmatmul.bf16.gmra.mxu0 %v548
  %v741 = vpop.f32.mrf.mxu0
  %v742 = vadd.f32 %v728, %v741
  %v743 = vpop.f32.mrf.mxu0
  %v744 = vadd.f32 %v730, %v743
  %745 = vdwg.mxu0
  %746 = vmatpush.bf16.msra.mxu0 %v454
  %747 = vmatpush.bf16.msra.mxu0 %v445
  %748 = vmatpush.bf16.msra.mxu0 %v436
  %749 = vmatpush.bf16.msra.mxu0 %v427
  %750 = vmatpush.bf16.msra.mxu0 %v418
  %751 = vmatpush.bf16.msra.mxu0 %v409
  %752 = vmatpush.bf16.msra.mxu0 %v400
  %753 = vmatpush.bf16.msra.mxu0 %v391
  %754 = vmatmul.bf16.gmra.mxu0 %v129
  %v755 = vpop.f32.mrf.mxu0
  %v756 = vadd.f32 %v116, %v755
  %v757 = vpop.f32.mrf.mxu0
  %v758 = vadd.f32 %v121, %v757
  %759 = vdwg.mxu0
  %760 = vmatpush.bf16.msra.mxu0 0
  %761 = vmatpush.bf16.msra.mxu0 0
  %762 = vmatpush.bf16.msra.mxu0 0
  %763 = vmatpush.bf16.msra.mxu0 0
  %764 = vmatpush.bf16.msra.mxu0 0
  %765 = vmatpush.bf16.msra.mxu0 0
  %766 = vmatpush.bf16.msra.mxu0 0
  %767 = vmatpush.bf16.msra.mxu0 %v463
  %768 = vmatmul.bf16.gmra.mxu0 %v548
  %v769 = vpop.f32.mrf.mxu0
  %v770 = vadd.f32 %v756, %v769
  %v771 = vpop.f32.mrf.mxu0
  %v772 = vadd.f32 %v758, %v771
  %773 = vdwg.mxu0
  %774 = vmatpush.bf16.msra.mxu0 %v455
  %775 = vmatpush.bf16.msra.mxu0 %v446
  %776 = vmatpush.bf16.msra.mxu0 %v437
  %777 = vmatpush.bf16.msra.mxu0 %v428
  %778 = vmatpush.bf16.msra.mxu0 %v419
  %779 = vmatpush.bf16.msra.mxu0 %v410
  %780 = vmatpush.bf16.msra.mxu0 %v401
  %781 = vmatpush.bf16.msra.mxu0 %v392
  %782 = vmatmul.bf16.gmra.mxu0 %v129
  %v783 = vpop.f32.mrf.mxu0
  %v784 = vadd.f32 %v116, %v783
  %v785 = vpop.f32.mrf.mxu0
  %v786 = vadd.f32 %v121, %v785
  %787 = vdwg.mxu0
  %788 = vmatpush.bf16.msra.mxu0 0
  %789 = vmatpush.bf16.msra.mxu0 0
  %790 = vmatpush.bf16.msra.mxu0 0
  %791 = vmatpush.bf16.msra.mxu0 0
  %792 = vmatpush.bf16.msra.mxu0 0
  %793 = vmatpush.bf16.msra.mxu0 0
  %794 = vmatpush.bf16.msra.mxu0 0
  %795 = vmatpush.bf16.msra.mxu0 %v464
  %796 = vmatmul.bf16.gmra.mxu0 %v548
  %v797 = vpop.f32.mrf.mxu0
  %v798 = vadd.f32 %v784, %v797
  %v799 = vpop.f32.mrf.mxu0
  %v800 = vadd.f32 %v786, %v799
  %801 = vdwg.mxu0
  %s802 = sld [smem:[#allocation2]]
  %vm803 = vcmp.ge.f32.partialorder %v574, 0.0
  %vm804 = vcmp.ge.f32.partialorder %v602, 0.0
  %vm805 = vcmp.ge.f32.partialorder %v630, 0.0
  %vm806 = vcmp.ge.f32.partialorder %v658, 0.0
  %vm807 = vcmp.ge.f32.partialorder %v686, 0.0
  %vm808 = vcmp.ge.f32.partialorder %v714, 0.0
  %vm809 = vcmp.ge.f32.partialorder %v742, 0.0
  %vm810 = vcmp.ge.f32.partialorder %v770, 0.0
  %vm811 = vcmp.ge.f32.partialorder %v798, 0.0
  %vm812 = vcmp.ge.f32.partialorder %v576, 0.0
  %vm813 = vcmp.ge.f32.partialorder %v604, 0.0
  %vm814 = vcmp.ge.f32.partialorder %v632, 0.0
  %vm815 = vcmp.ge.f32.partialorder %v660, 0.0
  %vm816 = vcmp.ge.f32.partialorder %v688, 0.0
  %vm817 = vcmp.ge.f32.partialorder %v716, 0.0
  %vm818 = vcmp.ge.f32.partialorder %v744, 0.0
  %vm819 = vcmp.ge.f32.partialorder %v772, 0.0
  %vm820 = vcmp.ge.f32.partialorder %v800, 0.0
  %v821 = vstv %s802
  %v822 = vmul.f32 %v821, %v574
  %v823 = vmul.f32 %v821, %v602
  %v824 = vmul.f32 %v821, %v630
  %v825 = vmul.f32 %v821, %v658
  %v826 = vmul.f32 %v821, %v686
  %v827 = vmul.f32 %v821, %v714
  %v828 = vmul.f32 %v821, %v742
  %v829 = vmul.f32 %v821, %v770
  %v830 = vmul.f32 %v821, %v798
  %v831 = vmul.f32 %v821, %v576
  %v832 = vmul.f32 %v821, %v604
  %v833 = vmul.f32 %v821, %v632
  %v834 = vmul.f32 %v821, %v660
  %v835 = vmul.f32 %v821, %v688
  %v836 = vmul.f32 %v821, %v716
  %v837 = vmul.f32 %v821, %v744
  %v838 = vmul.f32 %v821, %v772
  %v839 = vmul.f32 %v821, %v800
  %v840 = vsel %vm803, %v574, %v822
  %v841 = vsel %vm804, %v602, %v823
  %v842 = vsel %vm805, %v630, %v824
  %v843 = vsel %vm806, %v658, %v825
  %v844 = vsel %vm807, %v686, %v826
  %v845 = vsel %vm808, %v714, %v827
  %v846 = vsel %vm809, %v742, %v828
  %v847 = vsel %vm810, %v770, %v829
  %v848 = vsel %vm811, %v798, %v830
  %v849 = vsel %vm812, %v576, %v831
  %v850 = vsel %vm813, %v604, %v832
  %v851 = vsel %vm814, %v632, %v833
  %v852 = vsel %vm815, %v660, %v834
  %v853 = vsel %vm816, %v688, %v835
  %v854 = vsel %vm817, %v716, %v836
  %v855 = vsel %vm818, %v744, %v837
  %v856 = vsel %vm819, %v772, %v838
  %v857 = vsel %vm820, %v800, %v839
  %v858 = vpack.c.bf16 %v841, %v840
  %v859 = vpack.c.bf16 %v843, %v842
  %v860 = vpack.c.bf16 %v845, %v844
  %v861 = vpack.c.bf16 %v847, %v846
  %v862 = vpack.c.bf16 %v848, %v848
  %v863 = vpack.c.bf16 %v850, %v849
  %v864 = vpack.c.bf16 %v852, %v851
  %v865 = vpack.c.bf16 %v854, %v853
  %v866 = vpack.c.bf16 %v856, %v855
  %v867 = vpack.c.bf16 %v857, %v857
  %868 = vst [vmem:[%s4] sm:$0xff] %v858
  %869 = vst [vmem:[%s4 + $0x8] sm:$0xff] %v859
  %870 = vst [vmem:[%s4 + $0x10] sm:$0xff] %v860
  %871 = vst [vmem:[%s4 + $0x18] sm:$0xff] %v861
  %vm872 = vcmask 273408
  %873 = vst.msk [vmem:[%s4 + $0x20] sm:$0xf] %vm872, %v862
  %874 = vst [vmem:[%s4 + $0x24] sm:$0xff] %v863
  %875 = vst [vmem:[%s4 + $0x2c] sm:$0xff] %v864
  %876 = vst [vmem:[%s4 + $0x34] sm:$0xff] %v865
  %877 = vst [vmem:[%s4 + $0x3c] sm:$0xff] %v866
  %878 = vst.msk [vmem:[%s4 + $0x44] sm:$0xf] %vm872, %v867
  // Predicated region
  $region18: #{net_forward.6} parent=0 // pred_check
    _
  $region19: #{net_forward.6} parent=0 // pred_check_branch
    %880 = sbr.rel (0) target = $region21
  $region20: #{net_forward.6} parent=0 // pred_region
    _
  $region21: #{net_forward.6} parent=0 // pred_fallthru
    _
  // Predicated region
  $region22: #{net_forward.6} parent=0 // pred_check
    _
  $region23: #{net_forward.6} parent=0 // pred_check_branch
    %882 = sbr.rel (0) target = $region25
  $region24: #{net_forward.6} parent=0 // pred_region
    _
  $region25: #{net_forward.6} parent=0 // pred_fallthru
    _

// kernel: net_forward.7
$region0: #{net_forward.7}
  #allocation0 [shape = 'u32[]', space=smem, size = 0x4, offset = 0x4, fixed_abs, tag = 'smem constant byte address 0x4 - core index']
  #allocation1 [shape = 'u32[72,128]{1,0:T(1,128)}', space=vmem, size = 0x9000, scoped, tag = 'internal scratch']
  #allocation2 [shape = 'f32[1]{0:T(128)S(6)}', space=smem, size = 0x200, scoped, tag = 'scoped memory for net_forward.7']
  %s0 = inlined_call_operand.vmem [shape: bf16[16,320], index: 0, kind: input, shape index: {}]
  %s1 = inlined_call_operand.vmem [shape: bf16[9,24,16], index: 1, kind: input, shape index: {}]
  %s2 = inlined_call_operand.vmem [shape: f32[24,1], index: 2, kind: input, shape index: {}]
  %s3 = inlined_call_operand.vmem [shape: bf16[9,24,24], index: 3, kind: input, shape index: {}]
  %s4 = inlined_call_operand.vmem [shape: f32[24,1], index: 4, kind: input, shape index: {}]
  %s5 = inlined_call_operand.vmem [shape: bf16[9,40,24], index: 5, kind: input, shape index: {}]
  %s6 = inlined_call_operand.vmem [shape: f32[40,1], index: 6, kind: input, shape index: {}]
  %s7 = inlined_call_operand.vmem [shape: bf16[9,80,40], index: 7, kind: input, shape index: {}]
  %s8 = inlined_call_operand.vmem [shape: f32[80,1], index: 8, kind: input, shape index: {}]
  %s9 = inlined_call_operand.vmem [shape: bf16[16,128,80], index: 9, kind: input, shape index: {}]
  %s10 = inlined_call_operand.vmem [shape: f32[128,1], index: 10, kind: input, shape index: {}]
  %s11 = inlined_call_operand.vmem [shape: bf16[128,128], index: 11, kind: input, shape index: {}]
  %s12 = inlined_call_operand.vmem [shape: f32[128,1], index: 12, kind: input, shape index: {}]
  %s13 = inlined_call_operand.vmem [shape: bf16[42,128], index: 13, kind: input, shape index: {}]
  %s14 = inlined_call_operand.vmem [shape: f32[42,1], index: 14, kind: input, shape index: {}]
  %s15 = inlined_call_operand.<no memory space> [shape: f32[1], index: 15, kind: input, shape index: {}]
  %s16 = inlined_call_operand.vmem [shape: f32[42,2], index: 16, kind: output, shape index: {}]
  %s17 = sld [smem:[#allocation0]]
  $region74: #{net_forward.7} parent=0
    _
  %s19 = ssub.s32 1, %s17
  %s20 = scalar_select 0, %s19, %s17
  %21 = sst [smem:[#allocation2]] %s15
  // Predicated region
  $region2: #{net_forward.7} parent=0 // pred_check
    _
  $region3: #{net_forward.7} parent=0 // pred_check_branch
    %23 = sbr.rel (0) target = $region5
  $region4: #{net_forward.7} parent=0 // pred_region
    _
  $region5: #{net_forward.7} parent=0 // pred_fallthru
    _
  // Predicated region
  $region6: #{net_forward.7} parent=0 // pred_check
    _
  $region7: #{net_forward.7} parent=0 // pred_check_branch
    %25 = sbr.rel (0) target = $region9
  $region8: #{net_forward.7} parent=0 // pred_region
    _
  $region9: #{net_forward.7} parent=0 // pred_fallthru
    _
  // Predicated region
  $region10: #{net_forward.7} parent=0 // pred_check
    _
  $region11: #{net_forward.7} parent=0 // pred_check_branch
    %27 = sbr.rel (0) target = $region13
  $region12: #{net_forward.7} parent=0 // pred_region
    _
  $region13: #{net_forward.7} parent=0 // pred_fallthru
    _
  // Predicated region
  $region14: #{net_forward.7} parent=0 // pred_check
    _
  $region15: #{net_forward.7} parent=0 // pred_check_branch
    %29 = sbr.rel (0) target = $region17
  $region16: #{net_forward.7} parent=0 // pred_region
    _
  $region17: #{net_forward.7} parent=0 // pred_fallthru
    _
  // Predicated region
  $region18: #{net_forward.7} parent=0 // pred_check
    _
  $region19: #{net_forward.7} parent=0 // pred_check_branch
    %31 = sbr.rel (0) target = $region21
  $region20: #{net_forward.7} parent=0 // pred_region
    _
  $region21: #{net_forward.7} parent=0 // pred_fallthru
    _
  // Predicated region
  $region22: #{net_forward.7} parent=0 // pred_check
    _
  $region23: #{net_forward.7} parent=0 // pred_check_branch
    %33 = sbr.rel (0) target = $region25
  $region24: #{net_forward.7} parent=0 // pred_region
    _
  $region25: #{net_forward.7} parent=0 // pred_fallthru
    _
  // Predicated region
  $region26: #{net_forward.7} parent=0 // pred_check
    _
  $region27: #{net_forward.7} parent=0 // pred_check_branch
    %35 = sbr.rel (0) target = $region29
  $region28: #{net_forward.7} parent=0 // pred_region
    _
  $region29: #{net_forward.7} parent=0 // pred_fallthru
    _
  // Predicated region
  $region30: #{net_forward.7} parent=0 // pred_check
    _
  $region31: #{net_forward.7} parent=0 // pred_check_branch
    %37 = sbr.rel (0) target = $region33
  $region32: #{net_forward.7} parent=0 // pred_region
    _
  $region33: #{net_forward.7} parent=0 // pred_fallthru
    _
  // Predicated region
  $region34: #{net_forward.7} parent=0 // pred_check
    _
  $region35: #{net_forward.7} parent=0 // pred_check_branch
    %39 = sbr.rel (0) target = $region37
  $region36: #{net_forward.7} parent=0 // pred_region
    _
  $region37: #{net_forward.7} parent=0 // pred_fallthru
    _
  // Predicated region
  $region38: #{net_forward.7} parent=0 // pred_check
    _
  $region39: #{net_forward.7} parent=0 // pred_check_branch
    %41 = sbr.rel (0) target = $region41
  $region40: #{net_forward.7} parent=0 // pred_region
    _
  $region41: #{net_forward.7} parent=0 // pred_fallthru
    _
  // Predicated region
  $region42: #{net_forward.7} parent=0 // pred_check
    _
  $region43: #{net_forward.7} parent=0 // pred_check_branch
    %43 = sbr.rel (0) target = $region45
  $region44: #{net_forward.7} parent=0 // pred_region
    _
  $region45: #{net_forward.7} parent=0 // pred_fallthru
    _
  // Predicated region
  $region46: #{net_forward.7} parent=0 // pred_check
    _
  $region47: #{net_forward.7} parent=0 // pred_check_branch
    %45 = sbr.rel (0) target = $region49
  $region48: #{net_forward.7} parent=0 // pred_region
    _
  $region49: #{net_forward.7} parent=0 // pred_fallthru
    _
  // Predicated region
  $region50: #{net_forward.7} parent=0 // pred_check
    _
  $region51: #{net_forward.7} parent=0 // pred_check_branch
    %47 = sbr.rel (0) target = $region53
  $region52: #{net_forward.7} parent=0 // pred_region
    _
  $region53: #{net_forward.7} parent=0 // pred_fallthru
    _
  // Predicated region
  $region54: #{net_forward.7} parent=0 // pred_check
    _
  $region55: #{net_forward.7} parent=0 // pred_check_branch
    %49 = sbr.rel (0) target = $region57
  $region56: #{net_forward.7} parent=0 // pred_region
    _
  $region57: #{net_forward.7} parent=0 // pred_fallthru
    _
  // Predicated region
  $region58: #{net_forward.7} parent=0 // pred_check
    _
  $region59: #{net_forward.7} parent=0 // pred_check_branch
    %51 = sbr.rel (0) target = $region61
  $region60: #{net_forward.7} parent=0 // pred_region
    _
  $region61: #{net_forward.7} parent=0 // pred_fallthru
    _
  // Predicated region
  $region62: #{net_forward.7} parent=0 // pred_check
    _
  $region63: #{net_forward.7} parent=0 // pred_check_branch
    %53 = sbr.rel (0) target = $region65
  $region64: #{net_forward.7} parent=0 // pred_region
    _
  $region65: #{net_forward.7} parent=0 // pred_fallthru
    _
  %s55 = sld [smem:[#allocation2]]
  %v56 = vld [vmem:[%s0] sm:$0xff]
  %v57 = vld [vmem:[%s0 + $0x8] sm:$0xf]
  %v58 = vld [vmem:[%s0 + $0xc] sm:$0xff]
  %v59 = vld [vmem:[%s0 + $0x14] sm:$0xf]
  %v60 = vld [vmem:[%s1] sm:$0xf]
  %v61 = vld [vmem:[%s1 + $0x4] sm:$0xf]
  %v62 = vld [vmem:[%s1 + $0x8] sm:$0xf]
  %s63 = scalar_lea.vmem %s1, 12
  %v64 = vld [vmem:[%s63] sm:$0xf]
  %v65 = vld [vmem:[%s63 + $0x4] sm:$0xf]
  %v66 = vld [vmem:[%s63 + $0x8] sm:$0xf]
  %v70 = vunpack.c.l.b16 %v64
  %v71 = vunpack.c.l.b16 %v65
  %v72 = vunpack.c.l.b16 %v66
  %v73 = vpack.c.b16 %v71, %v70
  %v74 = vpack.c.b16 %v72, %v72
  %v79 = vunpack.c.l.b16 %v56
  %v80 = vunpack.c.h.b16 %v56
  %v81 = vunpack.c.l.b16 %v57
  %v82 = vunpack.c.l.b16 %v58
  %v83 = vunpack.c.h.b16 %v58
  %v84 = vunpack.c.l.b16 %v59
  %v85 = vpack.c.b16 %v82, %v79
  %v86 = vpack.c.b16 %v83, %v80
  %v87 = vpack.c.b16 %v84, %v81
  %88 = vrot.lane.b32.xlu0 %v85, 127
  %v89 = vpop.permute.xlu0 %88
  %90 = vrot.lane.b32.xlu0 %v86, 127
  %v91 = vpop.permute.xlu0 %90
  %92 = vrot.lane.b32.xlu0 %v87, 127
  %v93 = vpop.permute.xlu0 %92
  %vm94 = vcmask 1039360
  %v95 = vsel %vm94, %v89, %v91
  %v96 = vsel %vm94, %v91, %v93
  %vm100 = vcmask 130048
  %v102 = vsel %vm100, %v73, 0
  %v105 = vsel %vm100, %v74, 0
  %107 = vmatpush.bf16.msra.mxu0 0
  %108 = vmatpush.bf16.msra.mxu0 0
  %109 = vmatpush.bf16.msra.mxu0 0
  %110 = vmatpush.bf16.msra.mxu0 0
  %111 = vmatpush.bf16.msra.mxu0 0
  %112 = vmatpush.bf16.msra.mxu0 0
  %113 = vmatpush.bf16.msra.mxu0 0
  %114 = vmatpush.bf16.msra.mxu0 %v95
  %115 = vmatmul.bf16.gmra.mxu0 %v102
  %v116 = vpop.f32.mrf.mxu0
  %v117 = vadd.f32 0.0, %v116
  %v118 = vpop.f32.mrf.mxu0
  %v119 = vadd.f32 0.0, %v118
  %120 = vmatmul.bf16.gmra.mxu0 %v105
  %v121 = vpop.f32.mrf.mxu0
  %v122 = vadd.f32 0.0, %v121
  %v123 = vpop.f32.mrf.mxu0
  %124 = vdwg.mxu0
  %125 = vmatpush.bf16.msra.mxu0 0
  %126 = vmatpush.bf16.msra.mxu0 0
  %127 = vmatpush.bf16.msra.mxu0 0
  %128 = vmatpush.bf16.msra.mxu0 0
  %129 = vmatpush.bf16.msra.mxu0 0
  %130 = vmatpush.bf16.msra.mxu0 0
  %131 = vmatpush.bf16.msra.mxu0 0
  %132 = vmatpush.bf16.msra.mxu0 %v96
  %133 = vmatmul.bf16.gmra.mxu0 %v102
  %v134 = vpop.f32.mrf.mxu0
  %v135 = vadd.f32 0.0, %v134
  %v136 = vpop.f32.mrf.mxu0
  %v137 = vadd.f32 0.0, %v136
  %138 = vmatmul.bf16.gmra.mxu0 %v105
  %v139 = vpop.f32.mrf.mxu0
  %v140 = vadd.f32 0.0, %v139
  %v141 = vpop.f32.mrf.mxu0
  %142 = vdwg.mxu0
  %143 = vmatpush.bf16.msra.mxu0 0
  %144 = vmatpush.bf16.msra.mxu0 0
  %145 = vmatpush.bf16.msra.mxu0 0
  %146 = vmatpush.bf16.msra.mxu0 0
  %147 = vmatpush.bf16.msra.mxu0 0
  %148 = vmatpush.bf16.msra.mxu0 0
  %149 = vmatpush.bf16.msra.mxu0 0
  %150 = vmatpush.bf16.msra.mxu0 %v93
  %151 = vmatmul.bf16.gmra.mxu0 %v102
  %v152 = vpop.f32.mrf.mxu0
  %v153 = vadd.f32 0.0, %v152
  %v154 = vpop.f32.mrf.mxu0
  %v155 = vadd.f32 0.0, %v154
  %156 = vmatmul.bf16.gmra.mxu0 %v105
  %v157 = vpop.f32.mrf.mxu0
  %v158 = vadd.f32 0.0, %v157
  %v159 = vpop.f32.mrf.mxu0
  %160 = vdwg.mxu0
  %v164 = vunpack.c.l.b16 %v60
  %v165 = vunpack.c.l.b16 %v61
  %v166 = vunpack.c.l.b16 %v62
  %v167 = vpack.c.b16 %v165, %v164
  %v168 = vpack.c.b16 %v166, %v166
  %v173 = vsel %vm100, %v167, 0
  %v176 = vsel %vm100, %v168, 0
  %178 = vmatpush.bf16.msra.mxu0 0
  %179 = vmatpush.bf16.msra.mxu0 0
  %180 = vmatpush.bf16.msra.mxu0 0
  %181 = vmatpush.bf16.msra.mxu0 0
  %182 = vmatpush.bf16.msra.mxu0 0
  %183 = vmatpush.bf16.msra.mxu0 0
  %184 = vmatpush.bf16.msra.mxu0 0
  %185 = vmatpush.bf16.msra.mxu0 %v85
  %186 = vmatmul.bf16.gmra.mxu0 %v173
  %v187 = vpop.f32.mrf.mxu0
  %v188 = vadd.f32 %v117, %v187
  %v189 = vpop.f32.mrf.mxu0
  %v190 = vadd.f32 %v119, %v189
  %191 = vmatmul.bf16.gmra.mxu0 %v176
  %v192 = vpop.f32.mrf.mxu0
  %v193 = vadd.f32 %v122, %v192
  %v194 = vpop.f32.mrf.mxu0
  %195 = vdwg.mxu0
  %196 = vmatpush.bf16.msra.mxu0 0
  %197 = vmatpush.bf16.msra.mxu0 0
  %198 = vmatpush.bf16.msra.mxu0 0
  %199 = vmatpush.bf16.msra.mxu0 0
  %200 = vmatpush.bf16.msra.mxu0 0
  %201 = vmatpush.bf16.msra.mxu0 0
  %202 = vmatpush.bf16.msra.mxu0 0
  %203 = vmatpush.bf16.msra.mxu0 %v86
  %204 = vmatmul.bf16.gmra.mxu0 %v173
  %v205 = vpop.f32.mrf.mxu0
  %v206 = vadd.f32 %v135, %v205
  %v207 = vpop.f32.mrf.mxu0
  %v208 = vadd.f32 %v137, %v207
  %209 = vmatmul.bf16.gmra.mxu0 %v176
  %v210 = vpop.f32.mrf.mxu0
  %v211 = vadd.f32 %v140, %v210
  %v212 = vpop.f32.mrf.mxu0
  %213 = vdwg.mxu0
  %214 = vmatpush.bf16.msra.mxu0 0
  %215 = vmatpush.bf16.msra.mxu0 0
  %216 = vmatpush.bf16.msra.mxu0 0
  %217 = vmatpush.bf16.msra.mxu0 0
  %218 = vmatpush.bf16.msra.mxu0 0
  %219 = vmatpush.bf16.msra.mxu0 0
  %220 = vmatpush.bf16.msra.mxu0 0
  %221 = vmatpush.bf16.msra.mxu0 %v87
  %222 = vmatmul.bf16.gmra.mxu0 %v173
  %v223 = vpop.f32.mrf.mxu0
  %v224 = vadd.f32 %v153, %v223
  %v225 = vpop.f32.mrf.mxu0
  %v226 = vadd.f32 %v155, %v225
  %227 = vmatmul.bf16.gmra.mxu0 %v176
  %v228 = vpop.f32.mrf.mxu0
  %v229 = vadd.f32 %v158, %v228
  %v230 = vpop.f32.mrf.mxu0
  %231 = vdwg.mxu0
  %s232 = scalar_lea.vmem %s1, 24
  %v233 = vld [vmem:[%s232] sm:$0xf]
  %v234 = vld [vmem:[%s232 + $0x4] sm:$0xf]
  %v235 = vld [vmem:[%s232 + $0x8] sm:$0xf]
  %v239 = vunpack.c.l.b16 %v233
  %v240 = vunpack.c.l.b16 %v234
  %v241 = vunpack.c.l.b16 %v235
  %v242 = vpack.c.b16 %v240, %v239
  %v243 = vpack.c.b16 %v241, %v241
  %244 = vrot.lane.b32.xlu0 %v85, 126
  %v245 = vpop.permute.xlu0 %244
  %246 = vrot.lane.b32.xlu0 %v86, 126
  %v247 = vpop.permute.xlu0 %246
  %248 = vrot.lane.b32.xlu0 %v87, 126
  %v249 = vpop.permute.xlu0 %248
  %vm250 = vcmask 1031168
  %v251 = vsel %vm250, %v245, %v247
  %v252 = vsel %vm250, %v247, %v249
  %v257 = vsel %vm100, %v242, 0
  %v260 = vsel %vm100, %v243, 0
  %262 = vmatpush.bf16.msra.mxu0 0
  %263 = vmatpush.bf16.msra.mxu0 0
  %264 = vmatpush.bf16.msra.mxu0 0
  %265 = vmatpush.bf16.msra.mxu0 0
  %266 = vmatpush.bf16.msra.mxu0 0
  %267 = vmatpush.bf16.msra.mxu0 0
  %268 = vmatpush.bf16.msra.mxu0 0
  %269 = vmatpush.bf16.msra.mxu0 %v251
  %270 = vmatmul.bf16.gmra.mxu0 %v257
  %v271 = vpop.f32.mrf.mxu0
  %v272 = vadd.f32 0.0, %v271
  %v273 = vpop.f32.mrf.mxu0
  %v274 = vadd.f32 0.0, %v273
  %275 = vmatmul.bf16.gmra.mxu0 %v260
  %v276 = vpop.f32.mrf.mxu0
  %v277 = vadd.f32 0.0, %v276
  %v278 = vpop.f32.mrf.mxu0
  %279 = vdwg.mxu0
  %280 = vmatpush.bf16.msra.mxu0 0
  %281 = vmatpush.bf16.msra.mxu0 0
  %282 = vmatpush.bf16.msra.mxu0 0
  %283 = vmatpush.bf16.msra.mxu0 0
  %284 = vmatpush.bf16.msra.mxu0 0
  %285 = vmatpush.bf16.msra.mxu0 0
  %286 = vmatpush.bf16.msra.mxu0 0
  %287 = vmatpush.bf16.msra.mxu0 %v252
  %288 = vmatmul.bf16.gmra.mxu0 %v257
  %v289 = vpop.f32.mrf.mxu0
  %v290 = vadd.f32 0.0, %v289
  %v291 = vpop.f32.mrf.mxu0
  %v292 = vadd.f32 0.0, %v291
  %293 = vmatmul.bf16.gmra.mxu0 %v260
  %v294 = vpop.f32.mrf.mxu0
  %v295 = vadd.f32 0.0, %v294
  %v296 = vpop.f32.mrf.mxu0
  %297 = vdwg.mxu0
  %298 = vmatpush.bf16.msra.mxu0 0
  %299 = vmatpush.bf16.msra.mxu0 0
  %300 = vmatpush.bf16.msra.mxu0 0
  %301 = vmatpush.bf16.msra.mxu0 0
  %302 = vmatpush.bf16.msra.mxu0 0
  %303 = vmatpush.bf16.msra.mxu0 0
  %304 = vmatpush.bf16.msra.mxu0 0
  %305 = vmatpush.bf16.msra.mxu0 %v249
  %306 = vmatmul.bf16.gmra.mxu0 %v257
  %v307 = vpop.f32.mrf.mxu0
  %v308 = vadd.f32 0.0, %v307
  %v309 = vpop.f32.mrf.mxu0
  %v310 = vadd.f32 0.0, %v309
  %311 = vmatmul.bf16.gmra.mxu0 %v260
  %v312 = vpop.f32.mrf.mxu0
  %v313 = vadd.f32 0.0, %v312
  %v314 = vpop.f32.mrf.mxu0
  %315 = vdwg.mxu0
  %v316 = vadd.f32 %v188, %v272
  %v317 = vadd.f32 %v206, %v290
  %v318 = vadd.f32 %v224, %v308
  %v319 = vadd.f32 %v190, %v274
  %v320 = vadd.f32 %v208, %v292
  %v321 = vadd.f32 %v226, %v310
  %v322 = vadd.f32 %v193, %v277
  %v323 = vadd.f32 %v211, %v295
  %v324 = vadd.f32 %v229, %v313
  %s325 = scalar_lea.vmem %s1, 36
  %v326 = vld [vmem:[%s325] sm:$0xf]
  %v327 = vld [vmem:[%s325 + $0x4] sm:$0xf]
  %v328 = vld [vmem:[%s325 + $0x8] sm:$0xf]
  %v332 = vunpack.c.l.b16 %v326
  %v333 = vunpack.c.l.b16 %v327
  %v334 = vunpack.c.l.b16 %v328
  %v335 = vpack.c.b16 %v333, %v332
  %v336 = vpack.c.b16 %v334, %v334
  %337 = vrot.lane.b32.xlu0 %v85, 116
  %v338 = vpop.permute.xlu0 %337
  %339 = vrot.lane.b32.xlu0 %v86, 116
  %v340 = vpop.permute.xlu0 %339
  %341 = vrot.lane.b32.xlu0 %v87, 116
  %v342 = vpop.permute.xlu0 %341
  %vm343 = vcmask 949248
  %v344 = vsel %vm343, %v338, %v340
  %v345 = vsel %vm343, %v340, %v342
  %v350 = vsel %vm100, %v335, 0
  %v353 = vsel %vm100, %v336, 0
  %355 = vmatpush.bf16.msra.mxu0 0
  %356 = vmatpush.bf16.msra.mxu0 0
  %357 = vmatpush.bf16.msra.mxu0 0
  %358 = vmatpush.bf16.msra.mxu0 0
  %359 = vmatpush.bf16.msra.mxu0 0
  %360 = vmatpush.bf16.msra.mxu0 0
  %361 = vmatpush.bf16.msra.mxu0 0
  %362 = vmatpush.bf16.msra.mxu0 %v344
  %363 = vmatmul.bf16.gmra.mxu0 %v350
  %v364 = vpop.f32.mrf.mxu0
  %v365 = vadd.f32 0.0, %v364
  %v366 = vpop.f32.mrf.mxu0
  %v367 = vadd.f32 0.0, %v366
  %368 = vmatmul.bf16.gmra.mxu0 %v353
  %v369 = vpop.f32.mrf.mxu0
  %v370 = vadd.f32 0.0, %v369
  %v371 = vpop.f32.mrf.mxu0
  %372 = vdwg.mxu0
  %373 = vmatpush.bf16.msra.mxu0 0
  %374 = vmatpush.bf16.msra.mxu0 0
  %375 = vmatpush.bf16.msra.mxu0 0
  %376 = vmatpush.bf16.msra.mxu0 0
  %377 = vmatpush.bf16.msra.mxu0 0
  %378 = vmatpush.bf16.msra.mxu0 0
  %379 = vmatpush.bf16.msra.mxu0 0
  %380 = vmatpush.bf16.msra.mxu0 %v345
  %381 = vmatmul.bf16.gmra.mxu0 %v350
  %v382 = vpop.f32.mrf.mxu0
  %v383 = vadd.f32 0.0, %v382
  %v384 = vpop.f32.mrf.mxu0
  %v385 = vadd.f32 0.0, %v384
  %386 = vmatmul.bf16.gmra.mxu0 %v353
  %v387 = vpop.f32.mrf.mxu0
  %v388 = vadd.f32 0.0, %v387
  %v389 = vpop.f32.mrf.mxu0
  %390 = vdwg.mxu0
  %391 = vmatpush.bf16.msra.mxu0 0
  %392 = vmatpush.bf16.msra.mxu0 0
  %393 = vmatpush.bf16.msra.mxu0 0
  %394 = vmatpush.bf16.msra.mxu0 0
  %395 = vmatpush.bf16.msra.mxu0 0
  %396 = vmatpush.bf16.msra.mxu0 0
  %397 = vmatpush.bf16.msra.mxu0 0
  %398 = vmatpush.bf16.msra.mxu0 %v342
  %399 = vmatmul.bf16.gmra.mxu0 %v350
  %v400 = vpop.f32.mrf.mxu0
  %v401 = vadd.f32 0.0, %v400
  %v402 = vpop.f32.mrf.mxu0
  %v403 = vadd.f32 0.0, %v402
  %404 = vmatmul.bf16.gmra.mxu0 %v353
  %v405 = vpop.f32.mrf.mxu0
  %v406 = vadd.f32 0.0, %v405
  %v407 = vpop.f32.mrf.mxu0
  %408 = vdwg.mxu0
  %v409 = vadd.f32 %v316, %v365
  %v410 = vadd.f32 %v317, %v383
  %v411 = vadd.f32 %v318, %v401
  %v412 = vadd.f32 %v319, %v367
  %v413 = vadd.f32 %v320, %v385
  %v414 = vadd.f32 %v321, %v403
  %v415 = vadd.f32 %v322, %v370
  %v416 = vadd.f32 %v323, %v388
  %v417 = vadd.f32 %v324, %v406
  %s418 = scalar_lea.vmem %s1, 48
  %v419 = vld [vmem:[%s418] sm:$0xf]
  %v420 = vld [vmem:[%s418 + $0x4] sm:$0xf]
  %v421 = vld [vmem:[%s418 + $0x8] sm:$0xf]
  %v425 = vunpack.c.l.b16 %v419
  %v426 = vunpack.c.l.b16 %v420
  %v427 = vunpack.c.l.b16 %v421
  %v428 = vpack.c.b16 %v426, %v425
  %v429 = vpack.c.b16 %v427, %v427
  %430 = vrot.lane.b32.xlu0 %v85, 115
  %v431 = vpop.permute.xlu0 %430
  %432 = vrot.lane.b32.xlu0 %v86, 115
  %v433 = vpop.permute.xlu0 %432
  %434 = vrot.lane.b32.xlu0 %v87, 115
  %v435 = vpop.permute.xlu0 %434
  %vm436 = vcmask 941056
  %v437 = vsel %vm436, %v431, %v433
  %v438 = vsel %vm436, %v433, %v435
  %v443 = vsel %vm100, %v428, 0
  %v446 = vsel %vm100, %v429, 0
  %448 = vmatpush.bf16.msra.mxu0 0
  %449 = vmatpush.bf16.msra.mxu0 0
  %450 = vmatpush.bf16.msra.mxu0 0
  %451 = vmatpush.bf16.msra.mxu0 0
  %452 = vmatpush.bf16.msra.mxu0 0
  %453 = vmatpush.bf16.msra.mxu0 0
  %454 = vmatpush.bf16.msra.mxu0 0
  %455 = vmatpush.bf16.msra.mxu0 %v437
  %456 = vmatmul.bf16.gmra.mxu0 %v443
  %v457 = vpop.f32.mrf.mxu0
  %v458 = vadd.f32 0.0, %v457
  %v459 = vpop.f32.mrf.mxu0
  %v460 = vadd.f32 0.0, %v459
  %461 = vmatmul.bf16.gmra.mxu0 %v446
  %v462 = vpop.f32.mrf.mxu0
  %v463 = vadd.f32 0.0, %v462
  %v464 = vpop.f32.mrf.mxu0
  %465 = vdwg.mxu0
  %466 = vmatpush.bf16.msra.mxu0 0
  %467 = vmatpush.bf16.msra.mxu0 0
  %468 = vmatpush.bf16.msra.mxu0 0
  %469 = vmatpush.bf16.msra.mxu0 0
  %470 = vmatpush.bf16.msra.mxu0 0
  %471 = vmatpush.bf16.msra.mxu0 0
  %472 = vmatpush.bf16.msra.mxu0 0
  %473 = vmatpush.bf16.msra.mxu0 %v438
  %474 = vmatmul.bf16.gmra.mxu0 %v443
  %v475 = vpop.f32.mrf.mxu0
  %v476 = vadd.f32 0.0, %v475
  %v477 = vpop.f32.mrf.mxu0
  %v478 = vadd.f32 0.0, %v477
  %479 = vmatmul.bf16.gmra.mxu0 %v446
  %v480 = vpop.f32.mrf.mxu0
  %v481 = vadd.f32 0.0, %v480
  %v482 = vpop.f32.mrf.mxu0
  %483 = vdwg.mxu0
  %484 = vmatpush.bf16.msra.mxu0 0
  %485 = vmatpush.bf16.msra.mxu0 0
  %486 = vmatpush.bf16.msra.mxu0 0
  %487 = vmatpush.bf16.msra.mxu0 0
  %488 = vmatpush.bf16.msra.mxu0 0
  %489 = vmatpush.bf16.msra.mxu0 0
  %490 = vmatpush.bf16.msra.mxu0 0
  %491 = vmatpush.bf16.msra.mxu0 %v435
  %492 = vmatmul.bf16.gmra.mxu0 %v443
  %v493 = vpop.f32.mrf.mxu0
  %v494 = vadd.f32 0.0, %v493
  %v495 = vpop.f32.mrf.mxu0
  %v496 = vadd.f32 0.0, %v495
  %497 = vmatmul.bf16.gmra.mxu0 %v446
  %v498 = vpop.f32.mrf.mxu0
  %v499 = vadd.f32 0.0, %v498
  %v500 = vpop.f32.mrf.mxu0
  %501 = vdwg.mxu0
  %v502 = vadd.f32 %v409, %v458
  %v503 = vadd.f32 %v410, %v476
  %v504 = vadd.f32 %v411, %v494
  %v505 = vadd.f32 %v412, %v460
  %v506 = vadd.f32 %v413, %v478
  %v507 = vadd.f32 %v414, %v496
  %v508 = vadd.f32 %v415, %v463
  %v509 = vadd.f32 %v416, %v481
  %v510 = vadd.f32 %v417, %v499
  %s511 = scalar_lea.vmem %s1, 60
  %v512 = vld [vmem:[%s511] sm:$0xf]
  %v513 = vld [vmem:[%s511 + $0x4] sm:$0xf]
  %v514 = vld [vmem:[%s511 + $0x8] sm:$0xf]
  %v518 = vunpack.c.l.b16 %v512
  %v519 = vunpack.c.l.b16 %v513
  %v520 = vunpack.c.l.b16 %v514
  %v521 = vpack.c.b16 %v519, %v518
  %v522 = vpack.c.b16 %v520, %v520
  %523 = vrot.lane.b32.xlu0 %v85, 114
  %v524 = vpop.permute.xlu0 %523
  %525 = vrot.lane.b32.xlu0 %v86, 114
  %v526 = vpop.permute.xlu0 %525
  %527 = vrot.lane.b32.xlu0 %v87, 114
  %v528 = vpop.permute.xlu0 %527
  %vm529 = vcmask 932864
  %v530 = vsel %vm529, %v524, %v526
  %v531 = vsel %vm529, %v526, %v528
  %v536 = vsel %vm100, %v521, 0
  %v539 = vsel %vm100, %v522, 0
  %541 = vmatpush.bf16.msra.mxu0 0
  %542 = vmatpush.bf16.msra.mxu0 0
  %543 = vmatpush.bf16.msra.mxu0 0
  %544 = vmatpush.bf16.msra.mxu0 0
  %545 = vmatpush.bf16.msra.mxu0 0
  %546 = vmatpush.bf16.msra.mxu0 0
  %547 = vmatpush.bf16.msra.mxu0 0
  %548 = vmatpush.bf16.msra.mxu0 %v530
  %549 = vmatmul.bf16.gmra.mxu0 %v536
  %v550 = vpop.f32.mrf.mxu0
  %v551 = vadd.f32 0.0, %v550
  %v552 = vpop.f32.mrf.mxu0
  %v553 = vadd.f32 0.0, %v552
  %554 = vmatmul.bf16.gmra.mxu0 %v539
  %v555 = vpop.f32.mrf.mxu0
  %v556 = vadd.f32 0.0, %v555
  %v557 = vpop.f32.mrf.mxu0
  %558 = vdwg.mxu0
  %559 = vmatpush.bf16.msra.mxu0 0
  %560 = vmatpush.bf16.msra.mxu0 0
  %561 = vmatpush.bf16.msra.mxu0 0
  %562 = vmatpush.bf16.msra.mxu0 0
  %563 = vmatpush.bf16.msra.mxu0 0
  %564 = vmatpush.bf16.msra.mxu0 0
  %565 = vmatpush.bf16.msra.mxu0 0
  %566 = vmatpush.bf16.msra.mxu0 %v531
  %567 = vmatmul.bf16.gmra.mxu0 %v536
  %v568 = vpop.f32.mrf.mxu0
  %v569 = vadd.f32 0.0, %v568
  %v570 = vpop.f32.mrf.mxu0
  %v571 = vadd.f32 0.0, %v570
  %572 = vmatmul.bf16.gmra.mxu0 %v539
  %v573 = vpop.f32.mrf.mxu0
  %v574 = vadd.f32 0.0, %v573
  %v575 = vpop.f32.mrf.mxu0
  %576 = vdwg.mxu0
  %577 = vmatpush.bf16.msra.mxu0 0
  %578 = vmatpush.bf16.msra.mxu0 0
  %579 = vmatpush.bf16.msra.mxu0 0
  %580 = vmatpush.bf16.msra.mxu0 0
  %581 = vmatpush.bf16.msra.mxu0 0
  %582 = vmatpush.bf16.msra.mxu0 0
  %583 = vmatpush.bf16.msra.mxu0 0
  %584 = vmatpush.bf16.msra.mxu0 %v528
  %585 = vmatmul.bf16.gmra.mxu0 %v536
  %v586 = vpop.f32.mrf.mxu0
  %v587 = vadd.f32 0.0, %v586
  %v588 = vpop.f32.mrf.mxu0
  %v589 = vadd.f32 0.0, %v588
  %590 = vmatmul.bf16.gmra.mxu0 %v539
  %v591 = vpop.f32.mrf.mxu0
  %v592 = vadd.f32 0.0, %v591
  %v593 = vpop.f32.mrf.mxu0
  %594 = vdwg.mxu0
  %v595 = vadd.f32 %v502, %v551
  %v596 = vadd.f32 %v503, %v569
  %v597 = vadd.f32 %v504, %v587
  %v598 = vadd.f32 %v505, %v553
  %v599 = vadd.f32 %v506, %v571
  %v600 = vadd.f32 %v507, %v589
  %v601 = vadd.f32 %v508, %v556
  %v602 = vadd.f32 %v509, %v574
  %v603 = vadd.f32 %v510, %v592
  %s604 = scalar_lea.vmem %s1, 72
  %v605 = vld [vmem:[%s604] sm:$0xf]
  %v606 = vld [vmem:[%s604 + $0x4] sm:$0xf]
  %v607 = vld [vmem:[%s604 + $0x8] sm:$0xf]
  %v611 = vunpack.c.l.b16 %v605
  %v612 = vunpack.c.l.b16 %v606
  %v613 = vunpack.c.l.b16 %v607
  %v614 = vpack.c.b16 %v612, %v611
  %v615 = vpack.c.b16 %v613, %v613
  %616 = vrot.lane.b32.xlu0 %v85, 104
  %v617 = vpop.permute.xlu0 %616
  %618 = vrot.lane.b32.xlu0 %v86, 104
  %v619 = vpop.permute.xlu0 %618
  %620 = vrot.lane.b32.xlu0 %v87, 104
  %v621 = vpop.permute.xlu0 %620
  %vm622 = vcmask 850944
  %v623 = vsel %vm622, %v617, %v619
  %v624 = vsel %vm622, %v619, %v621
  %v629 = vsel %vm100, %v614, 0
  %v632 = vsel %vm100, %v615, 0
  %634 = vmatpush.bf16.msra.mxu0 0
  %635 = vmatpush.bf16.msra.mxu0 0
  %636 = vmatpush.bf16.msra.mxu0 0
  %637 = vmatpush.bf16.msra.mxu0 0
  %638 = vmatpush.bf16.msra.mxu0 0
  %639 = vmatpush.bf16.msra.mxu0 0
  %640 = vmatpush.bf16.msra.mxu0 0
  %641 = vmatpush.bf16.msra.mxu0 %v623
  %642 = vmatmul.bf16.gmra.mxu0 %v629
  %v643 = vpop.f32.mrf.mxu0
  %v644 = vadd.f32 0.0, %v643
  %v645 = vpop.f32.mrf.mxu0
  %v646 = vadd.f32 0.0, %v645
  %647 = vmatmul.bf16.gmra.mxu0 %v632
  %v648 = vpop.f32.mrf.mxu0
  %v649 = vadd.f32 0.0, %v648
  %v650 = vpop.f32.mrf.mxu0
  %651 = vdwg.mxu0
  %652 = vmatpush.bf16.msra.mxu0 0
  %653 = vmatpush.bf16.msra.mxu0 0
  %654 = vmatpush.bf16.msra.mxu0 0
  %655 = vmatpush.bf16.msra.mxu0 0
  %656 = vmatpush.bf16.msra.mxu0 0
  %657 = vmatpush.bf16.msra.mxu0 0
  %658 = vmatpush.bf16.msra.mxu0 0
  %659 = vmatpush.bf16.msra.mxu0 %v624
  %660 = vmatmul.bf16.gmra.mxu0 %v629
  %v661 = vpop.f32.mrf.mxu0
  %v662 = vadd.f32 0.0, %v661
  %v663 = vpop.f32.mrf.mxu0
  %v664 = vadd.f32 0.0, %v663
  %665 = vmatmul.bf16.gmra.mxu0 %v632
  %v666 = vpop.f32.mrf.mxu0
  %v667 = vadd.f32 0.0, %v666
  %v668 = vpop.f32.mrf.mxu0
  %669 = vdwg.mxu0
  %670 = vmatpush.bf16.msra.mxu0 0
  %671 = vmatpush.bf16.msra.mxu0 0
  %672 = vmatpush.bf16.msra.mxu0 0
  %673 = vmatpush.bf16.msra.mxu0 0
  %674 = vmatpush.bf16.msra.mxu0 0
  %675 = vmatpush.bf16.msra.mxu0 0
  %676 = vmatpush.bf16.msra.mxu0 0
  %677 = vmatpush.bf16.msra.mxu0 %v621
  %678 = vmatmul.bf16.gmra.mxu0 %v629
  %v679 = vpop.f32.mrf.mxu0
  %v680 = vadd.f32 0.0, %v679
  %v681 = vpop.f32.mrf.mxu0
  %v682 = vadd.f32 0.0, %v681
  %683 = vmatmul.bf16.gmra.mxu0 %v632
  %v684 = vpop.f32.mrf.mxu0
  %v685 = vadd.f32 0.0, %v684
  %v686 = vpop.f32.mrf.mxu0
  %687 = vdwg.mxu0
  %v688 = vadd.f32 %v595, %v644
  %v689 = vadd.f32 %v596, %v662
  %v690 = vadd.f32 %v597, %v680
  %v691 = vadd.f32 %v598, %v646
  %v692 = vadd.f32 %v599, %v664
  %v693 = vadd.f32 %v600, %v682
  %v694 = vadd.f32 %v601, %v649
  %v695 = vadd.f32 %v602, %v667
  %v696 = vadd.f32 %v603, %v685
  %s697 = scalar_lea.vmem %s1, 84
  %v698 = vld [vmem:[%s697] sm:$0xf]
  %v699 = vld [vmem:[%s697 + $0x4] sm:$0xf]
  %v700 = vld [vmem:[%s697 + $0x8] sm:$0xf]
  %v704 = vunpack.c.l.b16 %v698
  %v705 = vunpack.c.l.b16 %v699
  %v706 = vunpack.c.l.b16 %v700
  %v707 = vpack.c.b16 %v705, %v704
  %v708 = vpack.c.b16 %v706, %v706
  %709 = vrot.lane.b32.xlu0 %v85, 103
  %v710 = vpop.permute.xlu0 %709
  %711 = vrot.lane.b32.xlu0 %v86, 103
  %v712 = vpop.permute.xlu0 %711
  %713 = vrot.lane.b32.xlu0 %v87, 103
  %v714 = vpop.permute.xlu0 %713
  %vm715 = vcmask 842752
  %v716 = vsel %vm715, %v710, %v712
  %v717 = vsel %vm715, %v712, %v714
  %v722 = vsel %vm100, %v707, 0
  %v725 = vsel %vm100, %v708, 0
  %727 = vmatpush.bf16.msra.mxu0 0
  %728 = vmatpush.bf16.msra.mxu0 0
  %729 = vmatpush.bf16.msra.mxu0 0
  %730 = vmatpush.bf16.msra.mxu0 0
  %731 = vmatpush.bf16.msra.mxu0 0
  %732 = vmatpush.bf16.msra.mxu0 0
  %733 = vmatpush.bf16.msra.mxu0 0
  %734 = vmatpush.bf16.msra.mxu0 %v716
  %735 = vmatmul.bf16.gmra.mxu0 %v722
  %v736 = vpop.f32.mrf.mxu0
  %v737 = vadd.f32 0.0, %v736
  %v738 = vpop.f32.mrf.mxu0
  %v739 = vadd.f32 0.0, %v738
  %740 = vmatmul.bf16.gmra.mxu0 %v725
  %v741 = vpop.f32.mrf.mxu0
  %v742 = vadd.f32 0.0, %v741
  %v743 = vpop.f32.mrf.mxu0
  %744 = vdwg.mxu0
  %745 = vmatpush.bf16.msra.mxu0 0
  %746 = vmatpush.bf16.msra.mxu0 0
  %747 = vmatpush.bf16.msra.mxu0 0
  %748 = vmatpush.bf16.msra.mxu0 0
  %749 = vmatpush.bf16.msra.mxu0 0
  %750 = vmatpush.bf16.msra.mxu0 0
  %751 = vmatpush.bf16.msra.mxu0 0
  %752 = vmatpush.bf16.msra.mxu0 %v717
  %753 = vmatmul.bf16.gmra.mxu0 %v722
  %v754 = vpop.f32.mrf.mxu0
  %v755 = vadd.f32 0.0, %v754
  %v756 = vpop.f32.mrf.mxu0
  %v757 = vadd.f32 0.0, %v756
  %758 = vmatmul.bf16.gmra.mxu0 %v725
  %v759 = vpop.f32.mrf.mxu0
  %v760 = vadd.f32 0.0, %v759
  %v761 = vpop.f32.mrf.mxu0
  %762 = vdwg.mxu0
  %763 = vmatpush.bf16.msra.mxu0 0
  %764 = vmatpush.bf16.msra.mxu0 0
  %765 = vmatpush.bf16.msra.mxu0 0
  %766 = vmatpush.bf16.msra.mxu0 0
  %767 = vmatpush.bf16.msra.mxu0 0
  %768 = vmatpush.bf16.msra.mxu0 0
  %769 = vmatpush.bf16.msra.mxu0 0
  %770 = vmatpush.bf16.msra.mxu0 %v714
  %771 = vmatmul.bf16.gmra.mxu0 %v722
  %v772 = vpop.f32.mrf.mxu0
  %v773 = vadd.f32 0.0, %v772
  %v774 = vpop.f32.mrf.mxu0
  %v775 = vadd.f32 0.0, %v774
  %776 = vmatmul.bf16.gmra.mxu0 %v725
  %v777 = vpop.f32.mrf.mxu0
  %v778 = vadd.f32 0.0, %v777
  %v779 = vpop.f32.mrf.mxu0
  %780 = vdwg.mxu0
  %v781 = vadd.f32 %v688, %v737
  %v782 = vadd.f32 %v689, %v755
  %v783 = vadd.f32 %v690, %v773
  %v784 = vadd.f32 %v691, %v739
  %v785 = vadd.f32 %v692, %v757
  %v786 = vadd.f32 %v693, %v775
  %v787 = vadd.f32 %v694, %v742
  %v788 = vadd.f32 %v695, %v760
  %v789 = vadd.f32 %v696, %v778
  %s790 = scalar_lea.vmem %s1, 96
  %v791 = vld [vmem:[%s790] sm:$0xf]
  %v792 = vld [vmem:[%s790 + $0x4] sm:$0xf]
  %v793 = vld [vmem:[%s790 + $0x8] sm:$0xf]
  %v797 = vunpack.c.l.b16 %v791
  %v798 = vunpack.c.l.b16 %v792
  %v799 = vunpack.c.l.b16 %v793
  %v800 = vpack.c.b16 %v798, %v797
  %v801 = vpack.c.b16 %v799, %v799
  %802 = vrot.lane.b32.xlu0 %v85, 102
  %v803 = vpop.permute.xlu0 %802
  %804 = vrot.lane.b32.xlu0 %v86, 102
  %v805 = vpop.permute.xlu0 %804
  %806 = vrot.lane.b32.xlu0 %v87, 102
  %v807 = vpop.permute.xlu0 %806
  %vm808 = vcmask 834560
  %v809 = vsel %vm808, %v803, %v805
  %v810 = vsel %vm808, %v805, %v807
  %v815 = vsel %vm100, %v800, 0
  %v818 = vsel %vm100, %v801, 0
  %820 = vmatpush.bf16.msra.mxu0 0
  %821 = vmatpush.bf16.msra.mxu0 0
  %822 = vmatpush.bf16.msra.mxu0 0
  %823 = vmatpush.bf16.msra.mxu0 0
  %824 = vmatpush.bf16.msra.mxu0 0
  %825 = vmatpush.bf16.msra.mxu0 0
  %826 = vmatpush.bf16.msra.mxu0 0
  %827 = vmatpush.bf16.msra.mxu0 %v809
  %828 = vmatmul.bf16.gmra.mxu0 %v815
  %v829 = vpop.f32.mrf.mxu0
  %v830 = vadd.f32 0.0, %v829
  %v831 = vpop.f32.mrf.mxu0
  %v832 = vadd.f32 0.0, %v831
  %833 = vmatmul.bf16.gmra.mxu0 %v818
  %v834 = vpop.f32.mrf.mxu0
  %v835 = vadd.f32 0.0, %v834
  %v836 = vpop.f32.mrf.mxu0
  %837 = vdwg.mxu0
  %838 = vmatpush.bf16.msra.mxu0 0
  %839 = vmatpush.bf16.msra.mxu0 0
  %840 = vmatpush.bf16.msra.mxu0 0
  %841 = vmatpush.bf16.msra.mxu0 0
  %842 = vmatpush.bf16.msra.mxu0 0
  %843 = vmatpush.bf16.msra.mxu0 0
  %844 = vmatpush.bf16.msra.mxu0 0
  %845 = vmatpush.bf16.msra.mxu0 %v810
  %846 = vmatmul.bf16.gmra.mxu0 %v815
  %v847 = vpop.f32.mrf.mxu0
  %v848 = vadd.f32 0.0, %v847
  %v849 = vpop.f32.mrf.mxu0
  %v850 = vadd.f32 0.0, %v849
  %851 = vmatmul.bf16.gmra.mxu0 %v818
  %v852 = vpop.f32.mrf.mxu0
  %v853 = vadd.f32 0.0, %v852
  %v854 = vpop.f32.mrf.mxu0
  %855 = vdwg.mxu0
  %856 = vmatpush.bf16.msra.mxu0 0
  %857 = vmatpush.bf16.msra.mxu0 0
  %858 = vmatpush.bf16.msra.mxu0 0
  %859 = vmatpush.bf16.msra.mxu0 0
  %860 = vmatpush.bf16.msra.mxu0 0
  %861 = vmatpush.bf16.msra.mxu0 0
  %862 = vmatpush.bf16.msra.mxu0 0
  %863 = vmatpush.bf16.msra.mxu0 %v807
  %864 = vmatmul.bf16.gmra.mxu0 %v815
  %v865 = vpop.f32.mrf.mxu0
  %v866 = vadd.f32 0.0, %v865
  %v867 = vpop.f32.mrf.mxu0
  %v868 = vadd.f32 0.0, %v867
  %869 = vmatmul.bf16.gmra.mxu0 %v818
  %v870 = vpop.f32.mrf.mxu0
  %v871 = vadd.f32 0.0, %v870
  %v872 = vpop.f32.mrf.mxu0
  %873 = vdwg.mxu0
  %v874 = vadd.f32 %v781, %v830
  %v875 = vadd.f32 %v782, %v848
  %v876 = vadd.f32 %v783, %v866
  %v877 = vadd.f32 %v784, %v832
  %v878 = vadd.f32 %v785, %v850
  %v879 = vadd.f32 %v786, %v868
  %v880 = vadd.f32 %v787, %v835
  %v881 = vadd.f32 %v788, %v853
  %v882 = vadd.f32 %v789, %v871
  %v883 = vld [vmem:[%s2] sm:$0xff]
  %v884 = vld [vmem:[%s2 + $0x8] sm:$0xff]
  %v885 = vld [vmem:[%s2 + $0x10] sm:$0xff]
  %887 = vset.pattern.permute.xlu0 0
  %888 = vperm.xlu0 %887, %v883
  %v889 = vpop.permute.xlu0 %888
  %892 = vset.pattern.permute.xlu0 0
  %893 = vperm.xlu0 %892, %v884
  %v894 = vpop.permute.xlu0 %893
  %897 = vset.pattern.permute.xlu0 0
  %898 = vperm.xlu0 %897, %v885
  %v899 = vpop.permute.xlu0 %898
  %v901 = vadd.f32 %v874, %v889
  %v902 = vadd.f32 %v875, %v889
  %v903 = vadd.f32 %v876, %v889
  %v904 = vadd.f32 %v877, %v894
  %v905 = vadd.f32 %v878, %v894
  %v906 = vadd.f32 %v879, %v894
  %v907 = vadd.f32 %v880, %v899
  %v908 = vadd.f32 %v881, %v899
  %v909 = vadd.f32 %v882, %v899
  %vm910 = vcmp.ge.f32.partialorder %v901, 0.0
  %vm911 = vcmp.ge.f32.partialorder %v902, 0.0
  %vm912 = vcmp.ge.f32.partialorder %v903, 0.0
  %vm913 = vcmp.ge.f32.partialorder %v904, 0.0
  %vm914 = vcmp.ge.f32.partialorder %v905, 0.0
  %vm915 = vcmp.ge.f32.partialorder %v906, 0.0
  %vm916 = vcmp.ge.f32.partialorder %v907, 0.0
  %vm917 = vcmp.ge.f32.partialorder %v908, 0.0
  %vm918 = vcmp.ge.f32.partialorder %v909, 0.0
  %v919 = vstv %s55
  %v920 = vmul.f32 %v919, %v901
  %v921 = vmul.f32 %v919, %v902
  %v922 = vmul.f32 %v919, %v903
  %v923 = vmul.f32 %v919, %v904
  %v924 = vmul.f32 %v919, %v905
  %v925 = vmul.f32 %v919, %v906
  %v926 = vmul.f32 %v919, %v907
  %v927 = vmul.f32 %v919, %v908
  %v928 = vmul.f32 %v919, %v909
  %v929 = vsel %vm910, %v901, %v920
  %v930 = vsel %vm911, %v902, %v921
  %v931 = vsel %vm912, %v903, %v922
  %v932 = vsel %vm913, %v904, %v923
  %v933 = vsel %vm914, %v905, %v924
  %v934 = vsel %vm915, %v906, %v925
  %v935 = vsel %vm916, %v907, %v926
  %v936 = vsel %vm917, %v908, %v927
  %v937 = vsel %vm918, %v909, %v928
  %vm938 = vcmask 261120
  %v939 = vsel %vm938, %v931, 0.0
  %v940 = vsel %vm938, %v934, 0.0
  %v941 = vsel %vm938, %v937, 0.0
  %v942 = vpack.c.bf16 %v930, %v929
  %v943 = vpack.c.bf16 %v939, %v939
  %v944 = vpack.c.bf16 %v933, %v932
  %v945 = vpack.c.bf16 %v940, %v940
  %v946 = vpack.c.bf16 %v936, %v935
  %v947 = vpack.c.bf16 %v941, %v941
  %v948 = vld [vmem:[%s3] sm:$0xf]
  %v949 = vld [vmem:[%s3 + $0x4] sm:$0xf]
  %v950 = vld [vmem:[%s3 + $0x8] sm:$0xf]
  %s951 = scalar_lea.vmem %s3, 12
  %v952 = vld [vmem:[%s951] sm:$0xf]
  %v953 = vld [vmem:[%s951 + $0x4] sm:$0xf]
  %v954 = vld [vmem:[%s951 + $0x8] sm:$0xf]
  %v958 = vunpack.c.l.b16 %v952
  %v959 = vunpack.c.l.b16 %v953
  %v960 = vunpack.c.l.b16 %v954
  %v961 = vpack.c.b16 %v959, %v958
  %v962 = vpack.c.b16 %v960, %v960
  %v969 = vunpack.c.l.b16 %v942
  %v970 = vunpack.c.h.b16 %v942
  %v971 = vunpack.c.l.b16 %v943
  %v972 = vunpack.c.l.b16 %v944
  %v973 = vunpack.c.h.b16 %v944
  %v974 = vunpack.c.l.b16 %v945
  %v975 = vunpack.c.l.b16 %v946
  %v976 = vunpack.c.h.b16 %v946
  %v977 = vunpack.c.l.b16 %v947
  %v978 = vpack.c.b16 %v972, %v969
  %v979 = vpack.c.b16 %v973, %v970
  %v980 = vpack.c.b16 %v974, %v971
  %v981 = vpack.c.b16 %v975, %v975
  %v982 = vpack.c.b16 %v976, %v976
  %v983 = vpack.c.b16 %v977, %v977
  %984 = vrot.lane.b32.xlu0 %v978, 127
  %v985 = vpop.permute.xlu0 %984
  %986 = vrot.lane.b32.xlu0 %v979, 127
  %v987 = vpop.permute.xlu0 %986
  %988 = vrot.lane.b32.xlu0 %v980, 127
  %v989 = vpop.permute.xlu0 %988
  %990 = vrot.lane.b32.xlu0 %v981, 127
  %v991 = vpop.permute.xlu0 %990
  %992 = vrot.lane.b32.xlu0 %v982, 127
  %v993 = vpop.permute.xlu0 %992
  %994 = vrot.lane.b32.xlu0 %v983, 127
  %v995 = vpop.permute.xlu0 %994
  %v996 = vsel %vm94, %v985, %v987
  %v997 = vsel %vm94, %v987, %v989
  %v998 = vsel %vm94, %v991, %v993
  %v999 = vsel %vm94, %v993, %v995
  %vm1002 = vcmask 195584
  %v1004 = vsel %vm1002, %v961, 0
  %v1007 = vsel %vm1002, %v962, 0
  %vm1009 = vcmask 1043456
  %v1011 = vsel %vm1009, %v998, 0
  %v1014 = vsel %vm1009, %v999, 0
  %1016 = vmatpush.bf16.msra.mxu0 0
  %1017 = vmatpush.bf16.msra.mxu0 0
  %1018 = vmatpush.bf16.msra.mxu0 0
  %1019 = vmatpush.bf16.msra.mxu0 0
  %1020 = vmatpush.bf16.msra.mxu0 0
  %1021 = vmatpush.bf16.msra.mxu0 0
  %1022 = vmatpush.bf16.msra.mxu0 %v1011
  %1023 = vmatpush.bf16.msra.mxu0 %v996
  %1024 = vmatmul.bf16.gmra.mxu0 %v1004
  %v1025 = vpop.f32.mrf.mxu0
  %v1026 = vadd.f32 0.0, %v1025
  %v1027 = vpop.f32.mrf.mxu0
  %v1028 = vadd.f32 0.0, %v1027
  %1029 = vmatmul.bf16.gmra.mxu0 %v1007
  %v1030 = vpop.f32.mrf.mxu0
  %v1031 = vadd.f32 0.0, %v1030
  %v1032 = vpop.f32.mrf.mxu0
  %1033 = vdwg.mxu0
  %1034 = vmatpush.bf16.msra.mxu0 0
  %1035 = vmatpush.bf16.msra.mxu0 0
  %1036 = vmatpush.bf16.msra.mxu0 0
  %1037 = vmatpush.bf16.msra.mxu0 0
  %1038 = vmatpush.bf16.msra.mxu0 0
  %1039 = vmatpush.bf16.msra.mxu0 0
  %1040 = vmatpush.bf16.msra.mxu0 %v1014
  %1041 = vmatpush.bf16.msra.mxu0 %v997
  %1042 = vmatmul.bf16.gmra.mxu0 %v1004
  %v1043 = vpop.f32.mrf.mxu0
  %v1044 = vadd.f32 0.0, %v1043
  %v1045 = vpop.f32.mrf.mxu0
  %v1046 = vadd.f32 0.0, %v1045
  %1047 = vmatmul.bf16.gmra.mxu0 %v1007
  %v1048 = vpop.f32.mrf.mxu0
  %v1049 = vadd.f32 0.0, %v1048
  %v1050 = vpop.f32.mrf.mxu0
  %1051 = vdwg.mxu0
  %v1055 = vunpack.c.l.b16 %v948
  %v1056 = vunpack.c.l.b16 %v949
  %v1057 = vunpack.c.l.b16 %v950
  %v1058 = vpack.c.b16 %v1056, %v1055
  %v1059 = vpack.c.b16 %v1057, %v1057
  %v1063 = vsel %vm1002, %v1058, 0
  %v1066 = vsel %vm1002, %v1059, 0
  %v1069 = vsel %vm1009, %v981, 0
  %v1072 = vsel %vm1009, %v982, 0
  %1074 = vmatpush.bf16.msra.mxu0 0
  %1075 = vmatpush.bf16.msra.mxu0 0
  %1076 = vmatpush.bf16.msra.mxu0 0
  %1077 = vmatpush.bf16.msra.mxu0 0
  %1078 = vmatpush.bf16.msra.mxu0 0
  %1079 = vmatpush.bf16.msra.mxu0 0
  %1080 = vmatpush.bf16.msra.mxu0 %v1069
  %1081 = vmatpush.bf16.msra.mxu0 %v978
  %1082 = vmatmul.bf16.gmra.mxu0 %v1063
  %v1083 = vpop.f32.mrf.mxu0
  %v1084 = vadd.f32 %v1026, %v1083
  %v1085 = vpop.f32.mrf.mxu0
  %v1086 = vadd.f32 %v1028, %v1085
  %1087 = vmatmul.bf16.gmra.mxu0 %v1066
  %v1088 = vpop.f32.mrf.mxu0
  %v1089 = vadd.f32 %v1031, %v1088
  %v1090 = vpop.f32.mrf.mxu0
  %1091 = vdwg.mxu0
  %1092 = vmatpush.bf16.msra.mxu0 0
  %1093 = vmatpush.bf16.msra.mxu0 0
  %1094 = vmatpush.bf16.msra.mxu0 0
  %1095 = vmatpush.bf16.msra.mxu0 0
  %1096 = vmatpush.bf16.msra.mxu0 0
  %1097 = vmatpush.bf16.msra.mxu0 0
  %1098 = vmatpush.bf16.msra.mxu0 %v1072
  %1099 = vmatpush.bf16.msra.mxu0 %v979
  %1100 = vmatmul.bf16.gmra.mxu0 %v1063
  %v1101 = vpop.f32.mrf.mxu0
  %v1102 = vadd.f32 %v1044, %v1101
  %v1103 = vpop.f32.mrf.mxu0
  %v1104 = vadd.f32 %v1046, %v1103
  %1105 = vmatmul.bf16.gmra.mxu0 %v1066
  %v1106 = vpop.f32.mrf.mxu0
  %v1107 = vadd.f32 %v1049, %v1106
  %v1108 = vpop.f32.mrf.mxu0
  %1109 = vdwg.mxu0
  %s1110 = scalar_lea.vmem %s3, 24
  %v1111 = vld [vmem:[%s1110] sm:$0xf]
  %v1112 = vld [vmem:[%s1110 + $0x4] sm:$0xf]
  %v1113 = vld [vmem:[%s1110 + $0x8] sm:$0xf]
  %v1117 = vunpack.c.l.b16 %v1111
  %v1118 = vunpack.c.l.b16 %v1112
  %v1119 = vunpack.c.l.b16 %v1113
  %v1120 = vpack.c.b16 %v1118, %v1117
  %v1121 = vpack.c.b16 %v1119, %v1119
  %1122 = vrot.lane.b32.xlu0 %v978, 126
  %v1123 = vpop.permute.xlu0 %1122
  %1124 = vrot.lane.b32.xlu0 %v979, 126
  %v1125 = vpop.permute.xlu0 %1124
  %1126 = vrot.lane.b32.xlu0 %v980, 126
  %v1127 = vpop.permute.xlu0 %1126
  %1128 = vrot.lane.b32.xlu0 %v981, 126
  %v1129 = vpop.permute.xlu0 %1128
  %1130 = vrot.lane.b32.xlu0 %v982, 126
  %v1131 = vpop.permute.xlu0 %1130
  %1132 = vrot.lane.b32.xlu0 %v983, 126
  %v1133 = vpop.permute.xlu0 %1132
  %v1134 = vsel %vm250, %v1123, %v1125
  %v1135 = vsel %vm250, %v1125, %v1127
  %v1136 = vsel %vm250, %v1129, %v1131
  %v1137 = vsel %vm250, %v1131, %v1133
  %v1141 = vsel %vm1002, %v1120, 0
  %v1144 = vsel %vm1002, %v1121, 0
  %v1147 = vsel %vm1009, %v1136, 0
  %v1150 = vsel %vm1009, %v1137, 0
  %1152 = vmatpush.bf16.msra.mxu0 0
  %1153 = vmatpush.bf16.msra.mxu0 0
  %1154 = vmatpush.bf16.msra.mxu0 0
  %1155 = vmatpush.bf16.msra.mxu0 0
  %1156 = vmatpush.bf16.msra.mxu0 0
  %1157 = vmatpush.bf16.msra.mxu0 0
  %1158 = vmatpush.bf16.msra.mxu0 %v1147
  %1159 = vmatpush.bf16.msra.mxu0 %v1134
  %1160 = vmatmul.bf16.gmra.mxu0 %v1141
  %v1161 = vpop.f32.mrf.mxu0
  %v1162 = vadd.f32 0.0, %v1161
  %v1163 = vpop.f32.mrf.mxu0
  %v1164 = vadd.f32 0.0, %v1163
  %1165 = vmatmul.bf16.gmra.mxu0 %v1144
  %v1166 = vpop.f32.mrf.mxu0
  %v1167 = vadd.f32 0.0, %v1166
  %v1168 = vpop.f32.mrf.mxu0
  %1169 = vdwg.mxu0
  %1170 = vmatpush.bf16.msra.mxu0 0
  %1171 = vmatpush.bf16.msra.mxu0 0
  %1172 = vmatpush.bf16.msra.mxu0 0
  %1173 = vmatpush.bf16.msra.mxu0 0
  %1174 = vmatpush.bf16.msra.mxu0 0
  %1175 = vmatpush.bf16.msra.mxu0 0
  %1176 = vmatpush.bf16.msra.mxu0 %v1150
  %1177 = vmatpush.bf16.msra.mxu0 %v1135
  %1178 = vmatmul.bf16.gmra.mxu0 %v1141
  %v1179 = vpop.f32.mrf.mxu0
  %v1180 = vadd.f32 0.0, %v1179
  %v1181 = vpop.f32.mrf.mxu0
  %v1182 = vadd.f32 0.0, %v1181
  %1183 = vmatmul.bf16.gmra.mxu0 %v1144
  %v1184 = vpop.f32.mrf.mxu0
  %v1185 = vadd.f32 0.0, %v1184
  %v1186 = vpop.f32.mrf.mxu0
  %1187 = vdwg.mxu0
  %v1188 = vadd.f32 %v1084, %v1162
  %v1189 = vadd.f32 %v1102, %v1180
  %v1190 = vadd.f32 %v1086, %v1164
  %v1191 = vadd.f32 %v1104, %v1182
  %v1192 = vadd.f32 %v1089, %v1167
  %v1193 = vadd.f32 %v1107, %v1185
  %s1194 = scalar_lea.vmem %s3, 36
  %v1195 = vld [vmem:[%s1194] sm:$0xf]
  %v1196 = vld [vmem:[%s1194 + $0x4] sm:$0xf]
  %v1197 = vld [vmem:[%s1194 + $0x8] sm:$0xf]
  %v1201 = vunpack.c.l.b16 %v1195
  %v1202 = vunpack.c.l.b16 %v1196
  %v1203 = vunpack.c.l.b16 %v1197
  %v1204 = vpack.c.b16 %v1202, %v1201
  %v1205 = vpack.c.b16 %v1203, %v1203
  %1206 = vrot.lane.b32.xlu0 %v978, 116
  %v1207 = vpop.permute.xlu0 %1206
  %1208 = vrot.lane.b32.xlu0 %v979, 116
  %v1209 = vpop.permute.xlu0 %1208
  %1210 = vrot.lane.b32.xlu0 %v980, 116
  %v1211 = vpop.permute.xlu0 %1210
  %1212 = vrot.lane.b32.xlu0 %v981, 116
  %v1213 = vpop.permute.xlu0 %1212
  %1214 = vrot.lane.b32.xlu0 %v982, 116
  %v1215 = vpop.permute.xlu0 %1214
  %1216 = vrot.lane.b32.xlu0 %v983, 116
  %v1217 = vpop.permute.xlu0 %1216
  %v1218 = vsel %vm343, %v1207, %v1209
  %v1219 = vsel %vm343, %v1209, %v1211
  %v1220 = vsel %vm343, %v1213, %v1215
  %v1221 = vsel %vm343, %v1215, %v1217
  %v1225 = vsel %vm1002, %v1204, 0
  %v1228 = vsel %vm1002, %v1205, 0
  %v1231 = vsel %vm1009, %v1220, 0
  %v1234 = vsel %vm1009, %v1221, 0
  %1236 = vmatpush.bf16.msra.mxu0 0
  %1237 = vmatpush.bf16.msra.mxu0 0
  %1238 = vmatpush.bf16.msra.mxu0 0
  %1239 = vmatpush.bf16.msra.mxu0 0
  %1240 = vmatpush.bf16.msra.mxu0 0
  %1241 = vmatpush.bf16.msra.mxu0 0
  %1242 = vmatpush.bf16.msra.mxu0 %v1231
  %1243 = vmatpush.bf16.msra.mxu0 %v1218
  %1244 = vmatmul.bf16.gmra.mxu0 %v1225
  %v1245 = vpop.f32.mrf.mxu0
  %v1246 = vadd.f32 0.0, %v1245
  %v1247 = vpop.f32.mrf.mxu0
  %v1248 = vadd.f32 0.0, %v1247
  %1249 = vmatmul.bf16.gmra.mxu0 %v1228
  %v1250 = vpop.f32.mrf.mxu0
  %v1251 = vadd.f32 0.0, %v1250
  %v1252 = vpop.f32.mrf.mxu0
  %1253 = vdwg.mxu0
  %1254 = vmatpush.bf16.msra.mxu0 0
  %1255 = vmatpush.bf16.msra.mxu0 0
  %1256 = vmatpush.bf16.msra.mxu0 0
  %1257 = vmatpush.bf16.msra.mxu0 0
  %1258 = vmatpush.bf16.msra.mxu0 0
  %1259 = vmatpush.bf16.msra.mxu0 0
  %1260 = vmatpush.bf16.msra.mxu0 %v1234
  %1261 = vmatpush.bf16.msra.mxu0 %v1219
  %1262 = vmatmul.bf16.gmra.mxu0 %v1225
  %v1263 = vpop.f32.mrf.mxu0
  %v1264 = vadd.f32 0.0, %v1263
  %v1265 = vpop.f32.mrf.mxu0
  %v1266 = vadd.f32 0.0, %v1265
  %1267 = vmatmul.bf16.gmra.mxu0 %v1228
  %v1268 = vpop.f32.mrf.mxu0
  %v1269 = vadd.f32 0.0, %v1268
  %v1270 = vpop.f32.mrf.mxu0
  %1271 = vdwg.mxu0
  %v1272 = vadd.f32 %v1188, %v1246
  %v1273 = vadd.f32 %v1189, %v1264
  %v1274 = vadd.f32 %v1190, %v1248
  %v1275 = vadd.f32 %v1191, %v1266
  %v1276 = vadd.f32 %v1192, %v1251
  %v1277 = vadd.f32 %v1193, %v1269
  %s1278 = scalar_lea.vmem %s3, 48
  %v1279 = vld [vmem:[%s1278] sm:$0xf]
  %v1280 = vld [vmem:[%s1278 + $0x4] sm:$0xf]
  %v1281 = vld [vmem:[%s1278 + $0x8] sm:$0xf]
  %v1285 = vunpack.c.l.b16 %v1279
  %v1286 = vunpack.c.l.b16 %v1280
  %v1287 = vunpack.c.l.b16 %v1281
  %v1288 = vpack.c.b16 %v1286, %v1285
  %v1289 = vpack.c.b16 %v1287, %v1287
  %1290 = vrot.lane.b32.xlu0 %v978, 115
  %v1291 = vpop.permute.xlu0 %1290
  %1292 = vrot.lane.b32.xlu0 %v979, 115
  %v1293 = vpop.permute.xlu0 %1292
  %1294 = vrot.lane.b32.xlu0 %v980, 115
  %v1295 = vpop.permute.xlu0 %1294
  %1296 = vrot.lane.b32.xlu0 %v981, 115
  %v1297 = vpop.permute.xlu0 %1296
  %1298 = vrot.lane.b32.xlu0 %v982, 115
  %v1299 = vpop.permute.xlu0 %1298
  %1300 = vrot.lane.b32.xlu0 %v983, 115
  %v1301 = vpop.permute.xlu0 %1300
  %v1302 = vsel %vm436, %v1291, %v1293
  %v1303 = vsel %vm436, %v1293, %v1295
  %v1304 = vsel %vm436, %v1297, %v1299
  %v1305 = vsel %vm436, %v1299, %v1301
  %v1309 = vsel %vm1002, %v1288, 0
  %v1312 = vsel %vm1002, %v1289, 0
  %v1315 = vsel %vm1009, %v1304, 0
  %v1318 = vsel %vm1009, %v1305, 0
  %1320 = vmatpush.bf16.msra.mxu0 0
  %1321 = vmatpush.bf16.msra.mxu0 0
  %1322 = vmatpush.bf16.msra.mxu0 0
  %1323 = vmatpush.bf16.msra.mxu0 0
  %1324 = vmatpush.bf16.msra.mxu0 0
  %1325 = vmatpush.bf16.msra.mxu0 0
  %1326 = vmatpush.bf16.msra.mxu0 %v1315
  %1327 = vmatpush.bf16.msra.mxu0 %v1302
  %1328 = vmatmul.bf16.gmra.mxu0 %v1309
  %v1329 = vpop.f32.mrf.mxu0
  %v1330 = vadd.f32 0.0, %v1329
  %v1331 = vpop.f32.mrf.mxu0
  %v1332 = vadd.f32 0.0, %v1331
  %1333 = vmatmul.bf16.gmra.mxu0 %v1312
  %v1334 = vpop.f32.mrf.mxu0
  %v1335 = vadd.f32 0.0, %v1334
  %v1336 = vpop.f32.mrf.mxu0
  %1337 = vdwg.mxu0
  %1338 = vmatpush.bf16.msra.mxu0 0
  %1339 = vmatpush.bf16.msra.mxu0 0
  %1340 = vmatpush.bf16.msra.mxu0 0
  %1341 = vmatpush.bf16.msra.mxu0 0
  %1342 = vmatpush.bf16.msra.mxu0 0
  %1343 = vmatpush.bf16.msra.mxu0 0
  %1344 = vmatpush.bf16.msra.mxu0 %v1318
  %1345 = vmatpush.bf16.msra.mxu0 %v1303
  %1346 = vmatmul.bf16.gmra.mxu0 %v1309
  %v1347 = vpop.f32.mrf.mxu0
  %v1348 = vadd.f32 0.0, %v1347
  %v1349 = vpop.f32.mrf.mxu0
  %v1350 = vadd.f32 0.0, %v1349
  %1351 = vmatmul.bf16.gmra.mxu0 %v1312
  %v1352 = vpop.f32.mrf.mxu0
  %v1353 = vadd.f32 0.0, %v1352
  %v1354 = vpop.f32.mrf.mxu0
  %1355 = vdwg.mxu0
  %v1356 = vadd.f32 %v1272, %v1330
  %v1357 = vadd.f32 %v1273, %v1348
  %v1358 = vadd.f32 %v1274, %v1332
  %v1359 = vadd.f32 %v1275, %v1350
  %v1360 = vadd.f32 %v1276, %v1335
  %v1361 = vadd.f32 %v1277, %v1353
  %s1362 = scalar_lea.vmem %s3, 60
  %v1363 = vld [vmem:[%s1362] sm:$0xf]
  %v1364 = vld [vmem:[%s1362 + $0x4] sm:$0xf]
  %v1365 = vld [vmem:[%s1362 + $0x8] sm:$0xf]
  %v1369 = vunpack.c.l.b16 %v1363
  %v1370 = vunpack.c.l.b16 %v1364
  %v1371 = vunpack.c.l.b16 %v1365
  %v1372 = vpack.c.b16 %v1370, %v1369
  %v1373 = vpack.c.b16 %v1371, %v1371
  %1374 = vrot.lane.b32.xlu0 %v978, 114
  %v1375 = vpop.permute.xlu0 %1374
  %1376 = vrot.lane.b32.xlu0 %v979, 114
  %v1377 = vpop.permute.xlu0 %1376
  %1378 = vrot.lane.b32.xlu0 %v980, 114
  %v1379 = vpop.permute.xlu0 %1378
  %1380 = vrot.lane.b32.xlu0 %v981, 114
  %v1381 = vpop.permute.xlu0 %1380
  %1382 = vrot.lane.b32.xlu0 %v982, 114
  %v1383 = vpop.permute.xlu0 %1382
  %1384 = vrot.lane.b32.xlu0 %v983, 114
  %v1385 = vpop.permute.xlu0 %1384
  %v1386 = vsel %vm529, %v1375, %v1377
  %v1387 = vsel %vm529, %v1377, %v1379
  %v1388 = vsel %vm529, %v1381, %v1383
  %v1389 = vsel %vm529, %v1383, %v1385
  %v1393 = vsel %vm1002, %v1372, 0
  %v1396 = vsel %vm1002, %v1373, 0
  %v1399 = vsel %vm1009, %v1388, 0
  %v1402 = vsel %vm1009, %v1389, 0
  %1404 = vmatpush.bf16.msra.mxu0 0
  %1405 = vmatpush.bf16.msra.mxu0 0
  %1406 = vmatpush.bf16.msra.mxu0 0
  %1407 = vmatpush.bf16.msra.mxu0 0
  %1408 = vmatpush.bf16.msra.mxu0 0
  %1409 = vmatpush.bf16.msra.mxu0 0
  %1410 = vmatpush.bf16.msra.mxu0 %v1399
  %1411 = vmatpush.bf16.msra.mxu0 %v1386
  %1412 = vmatmul.bf16.gmra.mxu0 %v1393
  %v1413 = vpop.f32.mrf.mxu0
  %v1414 = vadd.f32 0.0, %v1413
  %v1415 = vpop.f32.mrf.mxu0
  %v1416 = vadd.f32 0.0, %v1415
  %1417 = vmatmul.bf16.gmra.mxu0 %v1396
  %v1418 = vpop.f32.mrf.mxu0
  %v1419 = vadd.f32 0.0, %v1418
  %v1420 = vpop.f32.mrf.mxu0
  %1421 = vdwg.mxu0
  %1422 = vmatpush.bf16.msra.mxu0 0
  %1423 = vmatpush.bf16.msra.mxu0 0
  %1424 = vmatpush.bf16.msra.mxu0 0
  %1425 = vmatpush.bf16.msra.mxu0 0
  %1426 = vmatpush.bf16.msra.mxu0 0
  %1427 = vmatpush.bf16.msra.mxu0 0
  %1428 = vmatpush.bf16.msra.mxu0 %v1402
  %1429 = vmatpush.bf16.msra.mxu0 %v1387
  %1430 = vmatmul.bf16.gmra.mxu0 %v1393
  %v1431 = vpop.f32.mrf.mxu0
  %v1432 = vadd.f32 0.0, %v1431
  %v1433 = vpop.f32.mrf.mxu0
  %v1434 = vadd.f32 0.0, %v1433
  %1435 = vmatmul.bf16.gmra.mxu0 %v1396
  %v1436 = vpop.f32.mrf.mxu0
  %v1437 = vadd.f32 0.0, %v1436
  %v1438 = vpop.f32.mrf.mxu0
  %1439 = vdwg.mxu0
  %v1440 = vadd.f32 %v1356, %v1414
  %v1441 = vadd.f32 %v1357, %v1432
  %v1442 = vadd.f32 %v1358, %v1416
  %v1443 = vadd.f32 %v1359, %v1434
  %v1444 = vadd.f32 %v1360, %v1419
  %v1445 = vadd.f32 %v1361, %v1437
  %s1446 = scalar_lea.vmem %s3, 72
  %v1447 = vld [vmem:[%s1446] sm:$0xf]
  %v1448 = vld [vmem:[%s1446 + $0x4] sm:$0xf]
  %v1449 = vld [vmem:[%s1446 + $0x8] sm:$0xf]
  %v1453 = vunpack.c.l.b16 %v1447
  %v1454 = vunpack.c.l.b16 %v1448
  %v1455 = vunpack.c.l.b16 %v1449
  %v1456 = vpack.c.b16 %v1454, %v1453
  %v1457 = vpack.c.b16 %v1455, %v1455
  %1458 = vrot.lane.b32.xlu0 %v978, 104
  %v1459 = vpop.permute.xlu0 %1458
  %1460 = vrot.lane.b32.xlu0 %v979, 104
  %v1461 = vpop.permute.xlu0 %1460
  %1462 = vrot.lane.b32.xlu0 %v980, 104
  %v1463 = vpop.permute.xlu0 %1462
  %1464 = vrot.lane.b32.xlu0 %v981, 104
  %v1465 = vpop.permute.xlu0 %1464
  %1466 = vrot.lane.b32.xlu0 %v982, 104
  %v1467 = vpop.permute.xlu0 %1466
  %1468 = vrot.lane.b32.xlu0 %v983, 104
  %v1469 = vpop.permute.xlu0 %1468
  %v1470 = vsel %vm622, %v1459, %v1461
  %v1471 = vsel %vm622, %v1461, %v1463
  %v1472 = vsel %vm622, %v1465, %v1467
  %v1473 = vsel %vm622, %v1467, %v1469
  %v1477 = vsel %vm1002, %v1456, 0
  %v1480 = vsel %vm1002, %v1457, 0
  %v1483 = vsel %vm1009, %v1472, 0
  %v1486 = vsel %vm1009, %v1473, 0
  %1488 = vmatpush.bf16.msra.mxu0 0
  %1489 = vmatpush.bf16.msra.mxu0 0
  %1490 = vmatpush.bf16.msra.mxu0 0
  %1491 = vmatpush.bf16.msra.mxu0 0
  %1492 = vmatpush.bf16.msra.mxu0 0
  %1493 = vmatpush.bf16.msra.mxu0 0
  %1494 = vmatpush.bf16.msra.mxu0 %v1483
  %1495 = vmatpush.bf16.msra.mxu0 %v1470
  %1496 = vmatmul.bf16.gmra.mxu0 %v1477
  %v1497 = vpop.f32.mrf.mxu0
  %v1498 = vadd.f32 0.0, %v1497
  %v1499 = vpop.f32.mrf.mxu0
  %v1500 = vadd.f32 0.0, %v1499
  %1501 = vmatmul.bf16.gmra.mxu0 %v1480
  %v1502 = vpop.f32.mrf.mxu0
  %v1503 = vadd.f32 0.0, %v1502
  %v1504 = vpop.f32.mrf.mxu0
  %1505 = vdwg.mxu0
  %1506 = vmatpush.bf16.msra.mxu0 0
  %1507 = vmatpush.bf16.msra.mxu0 0
  %1508 = vmatpush.bf16.msra.mxu0 0
  %1509 = vmatpush.bf16.msra.mxu0 0
  %1510 = vmatpush.bf16.msra.mxu0 0
  %1511 = vmatpush.bf16.msra.mxu0 0
  %1512 = vmatpush.bf16.msra.mxu0 %v1486
  %1513 = vmatpush.bf16.msra.mxu0 %v1471
  %1514 = vmatmul.bf16.gmra.mxu0 %v1477
  %v1515 = vpop.f32.mrf.mxu0
  %v1516 = vadd.f32 0.0, %v1515
  %v1517 = vpop.f32.mrf.mxu0
  %v1518 = vadd.f32 0.0, %v1517
  %1519 = vmatmul.bf16.gmra.mxu0 %v1480
  %v1520 = vpop.f32.mrf.mxu0
  %v1521 = vadd.f32 0.0, %v1520
  %v1522 = vpop.f32.mrf.mxu0
  %1523 = vdwg.mxu0
  %v1524 = vadd.f32 %v1440, %v1498
  %v1525 = vadd.f32 %v1441, %v1516
  %v1526 = vadd.f32 %v1442, %v1500
  %v1527 = vadd.f32 %v1443, %v1518
  %v1528 = vadd.f32 %v1444, %v1503
  %v1529 = vadd.f32 %v1445, %v1521
  %s1530 = scalar_lea.vmem %s3, 84
  %v1531 = vld [vmem:[%s1530] sm:$0xf]
  %v1532 = vld [vmem:[%s1530 + $0x4] sm:$0xf]
  %v1533 = vld [vmem:[%s1530 + $0x8] sm:$0xf]
  %v1537 = vunpack.c.l.b16 %v1531
  %v1538 = vunpack.c.l.b16 %v1532
  %v1539 = vunpack.c.l.b16 %v1533
  %v1540 = vpack.c.b16 %v1538, %v1537
  %v1541 = vpack.c.b16 %v1539, %v1539
  %1542 = vrot.lane.b32.xlu0 %v978, 103
  %v1543 = vpop.permute.xlu0 %1542
  %1544 = vrot.lane.b32.xlu0 %v979, 103
  %v1545 = vpop.permute.xlu0 %1544
  %1546 = vrot.lane.b32.xlu0 %v980, 103
  %v1547 = vpop.permute.xlu0 %1546
  %1548 = vrot.lane.b32.xlu0 %v981, 103
  %v1549 = vpop.permute.xlu0 %1548
  %1550 = vrot.lane.b32.xlu0 %v982, 103
  %v1551 = vpop.permute.xlu0 %1550
  %1552 = vrot.lane.b32.xlu0 %v983, 103
  %v1553 = vpop.permute.xlu0 %1552
  %v1554 = vsel %vm715, %v1543, %v1545
  %v1555 = vsel %vm715, %v1545, %v1547
  %v1556 = vsel %vm715, %v1549, %v1551
  %v1557 = vsel %vm715, %v1551, %v1553
  %v1561 = vsel %vm1002, %v1540, 0
  %v1564 = vsel %vm1002, %v1541, 0
  %v1567 = vsel %vm1009, %v1556, 0
  %v1570 = vsel %vm1009, %v1557, 0
  %1572 = vmatpush.bf16.msra.mxu0 0
  %1573 = vmatpush.bf16.msra.mxu0 0
  %1574 = vmatpush.bf16.msra.mxu0 0
  %1575 = vmatpush.bf16.msra.mxu0 0
  %1576 = vmatpush.bf16.msra.mxu0 0
  %1577 = vmatpush.bf16.msra.mxu0 0
  %1578 = vmatpush.bf16.msra.mxu0 %v1567
  %1579 = vmatpush.bf16.msra.mxu0 %v1554
  %1580 = vmatmul.bf16.gmra.mxu0 %v1561
  %v1581 = vpop.f32.mrf.mxu0
  %v1582 = vadd.f32 0.0, %v1581
  %v1583 = vpop.f32.mrf.mxu0
  %v1584 = vadd.f32 0.0, %v1583
  %1585 = vmatmul.bf16.gmra.mxu0 %v1564
  %v1586 = vpop.f32.mrf.mxu0
  %v1587 = vadd.f32 0.0, %v1586
  %v1588 = vpop.f32.mrf.mxu0
  %1589 = vdwg.mxu0
  %1590 = vmatpush.bf16.msra.mxu0 0
  %1591 = vmatpush.bf16.msra.mxu0 0
  %1592 = vmatpush.bf16.msra.mxu0 0
  %1593 = vmatpush.bf16.msra.mxu0 0
  %1594 = vmatpush.bf16.msra.mxu0 0
  %1595 = vmatpush.bf16.msra.mxu0 0
  %1596 = vmatpush.bf16.msra.mxu0 %v1570
  %1597 = vmatpush.bf16.msra.mxu0 %v1555
  %1598 = vmatmul.bf16.gmra.mxu0 %v1561
  %v1599 = vpop.f32.mrf.mxu0
  %v1600 = vadd.f32 0.0, %v1599
  %v1601 = vpop.f32.mrf.mxu0
  %v1602 = vadd.f32 0.0, %v1601
  %1603 = vmatmul.bf16.gmra.mxu0 %v1564
  %v1604 = vpop.f32.mrf.mxu0
  %v1605 = vadd.f32 0.0, %v1604
  %v1606 = vpop.f32.mrf.mxu0
  %1607 = vdwg.mxu0
  %v1608 = vadd.f32 %v1524, %v1582
  %v1609 = vadd.f32 %v1525, %v1600
  %v1610 = vadd.f32 %v1526, %v1584
  %v1611 = vadd.f32 %v1527, %v1602
  %v1612 = vadd.f32 %v1528, %v1587
  %v1613 = vadd.f32 %v1529, %v1605
  %s1614 = scalar_lea.vmem %s3, 96
  %v1615 = vld [vmem:[%s1614] sm:$0xf]
  %v1616 = vld [vmem:[%s1614 + $0x4] sm:$0xf]
  %v1617 = vld [vmem:[%s1614 + $0x8] sm:$0xf]
  %v1621 = vunpack.c.l.b16 %v1615
  %v1622 = vunpack.c.l.b16 %v1616
  %v1623 = vunpack.c.l.b16 %v1617
  %v1624 = vpack.c.b16 %v1622, %v1621
  %v1625 = vpack.c.b16 %v1623, %v1623
  %1626 = vrot.lane.b32.xlu0 %v978, 102
  %v1627 = vpop.permute.xlu0 %1626
  %1628 = vrot.lane.b32.xlu0 %v979, 102
  %v1629 = vpop.permute.xlu0 %1628
  %1630 = vrot.lane.b32.xlu0 %v980, 102
  %v1631 = vpop.permute.xlu0 %1630
  %1632 = vrot.lane.b32.xlu0 %v981, 102
  %v1633 = vpop.permute.xlu0 %1632
  %1634 = vrot.lane.b32.xlu0 %v982, 102
  %v1635 = vpop.permute.xlu0 %1634
  %1636 = vrot.lane.b32.xlu0 %v983, 102
  %v1637 = vpop.permute.xlu0 %1636
  %v1638 = vsel %vm808, %v1627, %v1629
  %v1639 = vsel %vm808, %v1629, %v1631
  %v1640 = vsel %vm808, %v1633, %v1635
  %v1641 = vsel %vm808, %v1635, %v1637
  %v1645 = vsel %vm1002, %v1624, 0
  %v1648 = vsel %vm1002, %v1625, 0
  %v1651 = vsel %vm1009, %v1640, 0
  %v1654 = vsel %vm1009, %v1641, 0
  %1656 = vmatpush.bf16.msra.mxu0 0
  %1657 = vmatpush.bf16.msra.mxu0 0
  %1658 = vmatpush.bf16.msra.mxu0 0
  %1659 = vmatpush.bf16.msra.mxu0 0
  %1660 = vmatpush.bf16.msra.mxu0 0
  %1661 = vmatpush.bf16.msra.mxu0 0
  %1662 = vmatpush.bf16.msra.mxu0 %v1651
  %1663 = vmatpush.bf16.msra.mxu0 %v1638
  %1664 = vmatmul.bf16.gmra.mxu0 %v1645
  %v1665 = vpop.f32.mrf.mxu0
  %v1666 = vadd.f32 0.0, %v1665
  %v1667 = vpop.f32.mrf.mxu0
  %v1668 = vadd.f32 0.0, %v1667
  %1669 = vmatmul.bf16.gmra.mxu0 %v1648
  %v1670 = vpop.f32.mrf.mxu0
  %v1671 = vadd.f32 0.0, %v1670
  %v1672 = vpop.f32.mrf.mxu0
  %1673 = vdwg.mxu0
  %1674 = vmatpush.bf16.msra.mxu0 0
  %1675 = vmatpush.bf16.msra.mxu0 0
  %1676 = vmatpush.bf16.msra.mxu0 0
  %1677 = vmatpush.bf16.msra.mxu0 0
  %1678 = vmatpush.bf16.msra.mxu0 0
  %1679 = vmatpush.bf16.msra.mxu0 0
  %1680 = vmatpush.bf16.msra.mxu0 %v1654
  %1681 = vmatpush.bf16.msra.mxu0 %v1639
  %1682 = vmatmul.bf16.gmra.mxu0 %v1645
  %v1683 = vpop.f32.mrf.mxu0
  %v1684 = vadd.f32 0.0, %v1683
  %v1685 = vpop.f32.mrf.mxu0
  %v1686 = vadd.f32 0.0, %v1685
  %1687 = vmatmul.bf16.gmra.mxu0 %v1648
  %v1688 = vpop.f32.mrf.mxu0
  %v1689 = vadd.f32 0.0, %v1688
  %v1690 = vpop.f32.mrf.mxu0
  %1691 = vdwg.mxu0
  %v1692 = vadd.f32 %v1608, %v1666
  %v1693 = vadd.f32 %v1609, %v1684
  %v1694 = vadd.f32 %v1610, %v1668
  %v1695 = vadd.f32 %v1611, %v1686
  %v1696 = vadd.f32 %v1612, %v1671
  %v1697 = vadd.f32 %v1613, %v1689
  %v1698 = vld [vmem:[%s4] sm:$0xff]
  %v1699 = vld [vmem:[%s4 + $0x8] sm:$0xff]
  %v1700 = vld [vmem:[%s4 + $0x10] sm:$0xff]
  %1702 = vset.pattern.permute.xlu0 0
  %1703 = vperm.xlu0 %1702, %v1698
  %v1704 = vpop.permute.xlu0 %1703
  %1707 = vset.pattern.permute.xlu0 0
  %1708 = vperm.xlu0 %1707, %v1699
  %v1709 = vpop.permute.xlu0 %1708
  %1712 = vset.pattern.permute.xlu0 0
  %1713 = vperm.xlu0 %1712, %v1700
  %v1714 = vpop.permute.xlu0 %1713
  %v1716 = vadd.f32 %v1692, %v1704
  %v1717 = vadd.f32 %v1693, %v1704
  %v1718 = vadd.f32 %v1694, %v1709
  %v1719 = vadd.f32 %v1695, %v1709
  %v1720 = vadd.f32 %v1696, %v1714
  %v1721 = vadd.f32 %v1697, %v1714
  %vm1722 = vcmp.ge.f32.partialorder %v1716, 0.0
  %vm1723 = vcmp.ge.f32.partialorder %v1717, 0.0
  %vm1724 = vcmp.ge.f32.partialorder %v1718, 0.0
  %vm1725 = vcmp.ge.f32.partialorder %v1719, 0.0
  %vm1726 = vcmp.ge.f32.partialorder %v1720, 0.0
  %vm1727 = vcmp.ge.f32.partialorder %v1721, 0.0
  %v1728 = vmul.f32 %v919, %v1716
  %v1729 = vmul.f32 %v919, %v1717
  %v1730 = vmul.f32 %v919, %v1718
  %v1731 = vmul.f32 %v919, %v1719
  %v1732 = vmul.f32 %v919, %v1720
  %v1733 = vmul.f32 %v919, %v1721
  %v1734 = vsel %vm1722, %v1716, %v1728
  %v1735 = vsel %vm1723, %v1717, %v1729
  %v1736 = vsel %vm1724, %v1718, %v1730
  %v1737 = vsel %vm1725, %v1719, %v1731
  %v1738 = vsel %vm1726, %v1720, %v1732
  %v1739 = vsel %vm1727, %v1721, %v1733
  %1743 = vrot.lane.b32.xlu0 %v1734, 116
  %v1744 = vpop.permute.xlu0 %1743
  %1745 = vrot.lane.b32.xlu0 %v1736, 116
  %v1746 = vpop.permute.xlu0 %1745
  %1747 = vrot.lane.b32.xlu0 %v1738, 116
  %v1748 = vpop.permute.xlu0 %1747
  %v1752 = vadd.f32 %v1734, %v1744
  %v1753 = vadd.f32 %v1736, %v1746
  %v1754 = vadd.f32 %v1738, %v1748
  %1758 = vrot.lane.b32.xlu0 %v1752, 127
  %v1759 = vpop.permute.xlu0 %1758
  %1760 = vrot.lane.b32.xlu0 %v1753, 127
  %v1761 = vpop.permute.xlu0 %1760
  %1762 = vrot.lane.b32.xlu0 %v1754, 127
  %v1763 = vpop.permute.xlu0 %1762
  %v1767 = vadd.f32 %v1752, %v1759
  %v1768 = vadd.f32 %v1753, %v1761
  %v1769 = vadd.f32 %v1754, %v1763
  %1773 = vrot.lane.b32.xlu0 %v1767, 127
  %v1774 = vpop.permute.xlu0 %1773
  %1775 = vrot.lane.b32.xlu0 %v1768, 127
  %v1776 = vpop.permute.xlu0 %1775
  %1777 = vrot.lane.b32.xlu0 %v1769, 127
  %v1778 = vpop.permute.xlu0 %1777
  %1782 = vrot.lane.b32.xlu0 %v1767, 126
  %v1783 = vpop.permute.xlu0 %1782
  %1784 = vrot.lane.b32.xlu0 %v1768, 126
  %v1785 = vpop.permute.xlu0 %1784
  %1786 = vrot.lane.b32.xlu0 %v1769, 126
  %v1787 = vpop.permute.xlu0 %1786
  %1791 = vrot.lane.b32.xlu0 %v1767, 125
  %v1792 = vpop.permute.xlu0 %1791
  %1793 = vrot.lane.b32.xlu0 %v1768, 125
  %v1794 = vpop.permute.xlu0 %1793
  %1795 = vrot.lane.b32.xlu0 %v1769, 125
  %v1796 = vpop.permute.xlu0 %1795
  %vm1800 = vcmask 7168
  %v1801 = vsel %vm1800, %v1767, %v1774
  %v1802 = vsel %vm1800, %v1768, %v1776
  %v1803 = vsel %vm1800, %v1769, %v1778
  %vm1804 = vcmask 15360
  %v1805 = vsel %vm1804, %v1801, %v1783
  %v1806 = vsel %vm1804, %v1802, %v1785
  %v1807 = vsel %vm1804, %v1803, %v1787
  %vm1808 = vcmask 23552
  %v1809 = vsel %vm1808, %v1805, %v1792
  %v1810 = vsel %vm1808, %v1806, %v1794
  %v1811 = vsel %vm1808, %v1807, %v1796
  %v1812 = vmul.f32 %v1809, 0.25
  %v1813 = vmul.f32 %v1810, 0.25
  %v1814 = vmul.f32 %v1811, 0.25
  %1815 = vrot.lane.b32.xlu0 %v1767, 104
  %v1816 = vpop.permute.xlu0 %1815
  %1817 = vrot.lane.b32.xlu0 %v1768, 104
  %v1818 = vpop.permute.xlu0 %1817
  %1819 = vrot.lane.b32.xlu0 %v1769, 104
  %v1820 = vpop.permute.xlu0 %1819
  %1824 = vrot.lane.b32.xlu0 %v1767, 103
  %v1825 = vpop.permute.xlu0 %1824
  %1826 = vrot.lane.b32.xlu0 %v1768, 103
  %v1827 = vpop.permute.xlu0 %1826
  %1828 = vrot.lane.b32.xlu0 %v1769, 103
  %v1829 = vpop.permute.xlu0 %1828
  %1833 = vrot.lane.b32.xlu0 %v1767, 102
  %v1834 = vpop.permute.xlu0 %1833
  %1835 = vrot.lane.b32.xlu0 %v1768, 102
  %v1836 = vpop.permute.xlu0 %1835
  %1837 = vrot.lane.b32.xlu0 %v1769, 102
  %v1838 = vpop.permute.xlu0 %1837
  %1842 = vrot.lane.b32.xlu0 %v1767, 101
  %v1843 = vpop.permute.xlu0 %1842
  %1844 = vrot.lane.b32.xlu0 %v1768, 101
  %v1845 = vpop.permute.xlu0 %1844
  %1846 = vrot.lane.b32.xlu0 %v1769, 101
  %v1847 = vpop.permute.xlu0 %1846
  %v1851 = vsel %vm1800, %v1816, %v1825
  %v1852 = vsel %vm1800, %v1818, %v1827
  %v1853 = vsel %vm1800, %v1820, %v1829
  %v1854 = vsel %vm1804, %v1851, %v1834
  %v1855 = vsel %vm1804, %v1852, %v1836
  %v1856 = vsel %vm1804, %v1853, %v1838
  %v1857 = vsel %vm1808, %v1854, %v1843
  %v1858 = vsel %vm1808, %v1855, %v1845
  %v1859 = vsel %vm1808, %v1856, %v1847
  %v1860 = vmul.f32 %v1857, 0.25
  %v1861 = vmul.f32 %v1858, 0.25
  %v1862 = vmul.f32 %v1859, 0.25
  %1863 = vrot.lane.b32.xlu0 %v1767, 80
  %v1864 = vpop.permute.xlu0 %1863
  %1865 = vrot.lane.b32.xlu0 %v1768, 80
  %v1866 = vpop.permute.xlu0 %1865
  %1867 = vrot.lane.b32.xlu0 %v1769, 80
  %v1868 = vpop.permute.xlu0 %1867
  %1872 = vrot.lane.b32.xlu0 %v1767, 79
  %v1873 = vpop.permute.xlu0 %1872
  %1874 = vrot.lane.b32.xlu0 %v1768, 79
  %v1875 = vpop.permute.xlu0 %1874
  %1876 = vrot.lane.b32.xlu0 %v1769, 79
  %v1877 = vpop.permute.xlu0 %1876
  %1881 = vrot.lane.b32.xlu0 %v1767, 78
  %v1882 = vpop.permute.xlu0 %1881
  %1883 = vrot.lane.b32.xlu0 %v1768, 78
  %v1884 = vpop.permute.xlu0 %1883
  %1885 = vrot.lane.b32.xlu0 %v1769, 78
  %v1886 = vpop.permute.xlu0 %1885
  %1890 = vrot.lane.b32.xlu0 %v1767, 77
  %v1891 = vpop.permute.xlu0 %1890
  %1892 = vrot.lane.b32.xlu0 %v1768, 77
  %v1893 = vpop.permute.xlu0 %1892
  %1894 = vrot.lane.b32.xlu0 %v1769, 77
  %v1895 = vpop.permute.xlu0 %1894
  %v1899 = vsel %vm1800, %v1864, %v1873
  %v1900 = vsel %vm1800, %v1866, %v1875
  %v1901 = vsel %vm1800, %v1868, %v1877
  %v1902 = vsel %vm1804, %v1899, %v1882
  %v1903 = vsel %vm1804, %v1900, %v1884
  %v1904 = vsel %vm1804, %v1901, %v1886
  %v1905 = vsel %vm1808, %v1902, %v1891
  %v1906 = vsel %vm1808, %v1903, %v1893
  %v1907 = vsel %vm1808, %v1904, %v1895
  %v1908 = vmul.f32 %v1905, 0.25
  %v1909 = vmul.f32 %v1906, 0.25
  %v1910 = vmul.f32 %v1907, 0.25
  %1911 = vrot.lane.b32.xlu0 %v1767, 56
  %v1912 = vpop.permute.xlu0 %1911
  %1913 = vrot.lane.b32.xlu0 %v1768, 56
  %v1914 = vpop.permute.xlu0 %1913
  %1915 = vrot.lane.b32.xlu0 %v1769, 56
  %v1916 = vpop.permute.xlu0 %1915
  %1920 = vrot.lane.b32.xlu0 %v1767, 55
  %v1921 = vpop.permute.xlu0 %1920
  %1922 = vrot.lane.b32.xlu0 %v1768, 55
  %v1923 = vpop.permute.xlu0 %1922
  %1924 = vrot.lane.b32.xlu0 %v1769, 55
  %v1925 = vpop.permute.xlu0 %1924
  %1929 = vrot.lane.b32.xlu0 %v1767, 54
  %v1930 = vpop.permute.xlu0 %1929
  %1931 = vrot.lane.b32.xlu0 %v1768, 54
  %v1932 = vpop.permute.xlu0 %1931
  %1933 = vrot.lane.b32.xlu0 %v1769, 54
  %v1934 = vpop.permute.xlu0 %1933
  %1938 = vrot.lane.b32.xlu0 %v1767, 53
  %v1939 = vpop.permute.xlu0 %1938
  %1940 = vrot.lane.b32.xlu0 %v1768, 53
  %v1941 = vpop.permute.xlu0 %1940
  %1942 = vrot.lane.b32.xlu0 %v1769, 53
  %v1943 = vpop.permute.xlu0 %1942
  %v1947 = vsel %vm1800, %v1912, %v1921
  %v1948 = vsel %vm1800, %v1914, %v1923
  %v1949 = vsel %vm1800, %v1916, %v1925
  %v1950 = vsel %vm1804, %v1947, %v1930
  %v1951 = vsel %vm1804, %v1948, %v1932
  %v1952 = vsel %vm1804, %v1949, %v1934
  %v1953 = vsel %vm1808, %v1950, %v1939
  %v1954 = vsel %vm1808, %v1951, %v1941
  %v1955 = vsel %vm1808, %v1952, %v1943
  %v1956 = vmul.f32 %v1953, 0.25
  %v1957 = vmul.f32 %v1954, 0.25
  %v1958 = vmul.f32 %v1955, 0.25
  %1962 = vrot.lane.b32.xlu0 %v1735, 116
  %v1963 = vpop.permute.xlu0 %1962
  %1964 = vrot.lane.b32.xlu0 %v1737, 116
  %v1965 = vpop.permute.xlu0 %1964
  %1966 = vrot.lane.b32.xlu0 %v1739, 116
  %v1967 = vpop.permute.xlu0 %1966
  %v1971 = vadd.f32 %v1735, %v1963
  %v1972 = vadd.f32 %v1737, %v1965
  %v1973 = vadd.f32 %v1739, %v1967
  %1977 = vrot.lane.b32.xlu0 %v1971, 127
  %v1978 = vpop.permute.xlu0 %1977
  %1979 = vrot.lane.b32.xlu0 %v1972, 127
  %v1980 = vpop.permute.xlu0 %1979
  %1981 = vrot.lane.b32.xlu0 %v1973, 127
  %v1982 = vpop.permute.xlu0 %1981
  %v1986 = vadd.f32 %v1971, %v1978
  %v1987 = vadd.f32 %v1972, %v1980
  %v1988 = vadd.f32 %v1973, %v1982
  %1992 = vrot.lane.b32.xlu0 %v1986, 112
  %v1993 = vpop.permute.xlu0 %1992
  %1994 = vrot.lane.b32.xlu0 %v1987, 112
  %v1995 = vpop.permute.xlu0 %1994
  %1996 = vrot.lane.b32.xlu0 %v1988, 112
  %v1997 = vpop.permute.xlu0 %1996
  %2001 = vrot.lane.b32.xlu0 %v1986, 111
  %v2002 = vpop.permute.xlu0 %2001
  %2003 = vrot.lane.b32.xlu0 %v1987, 111
  %v2004 = vpop.permute.xlu0 %2003
  %2005 = vrot.lane.b32.xlu0 %v1988, 111
  %v2006 = vpop.permute.xlu0 %2005
  %2010 = vrot.lane.b32.xlu0 %v1986, 110
  %v2011 = vpop.permute.xlu0 %2010
  %2012 = vrot.lane.b32.xlu0 %v1987, 110
  %v2013 = vpop.permute.xlu0 %2012
  %2014 = vrot.lane.b32.xlu0 %v1988, 110
  %v2015 = vpop.permute.xlu0 %2014
  %2019 = vrot.lane.b32.xlu0 %v1986, 109
  %v2020 = vpop.permute.xlu0 %2019
  %2021 = vrot.lane.b32.xlu0 %v1987, 109
  %v2022 = vpop.permute.xlu0 %2021
  %2023 = vrot.lane.b32.xlu0 %v1988, 109
  %v2024 = vpop.permute.xlu0 %2023
  %v2028 = vsel %vm1800, %v1993, %v2002
  %v2029 = vsel %vm1800, %v1995, %v2004
  %v2030 = vsel %vm1800, %v1997, %v2006
  %v2031 = vsel %vm1804, %v2028, %v2011
  %v2032 = vsel %vm1804, %v2029, %v2013
  %v2033 = vsel %vm1804, %v2030, %v2015
  %v2034 = vsel %vm1808, %v2031, %v2020
  %v2035 = vsel %vm1808, %v2032, %v2022
  %v2036 = vsel %vm1808, %v2033, %v2024
  %v2037 = vmul.f32 %v2034, 0.25
  %v2038 = vmul.f32 %v2035, 0.25
  %v2039 = vmul.f32 %v2036, 0.25
  %2040 = vrot.lane.b32.xlu0 %v1986, 88
  %v2041 = vpop.permute.xlu0 %2040
  %2042 = vrot.lane.b32.xlu0 %v1987, 88
  %v2043 = vpop.permute.xlu0 %2042
  %2044 = vrot.lane.b32.xlu0 %v1988, 88
  %v2045 = vpop.permute.xlu0 %2044
  %2049 = vrot.lane.b32.xlu0 %v1986, 87
  %v2050 = vpop.permute.xlu0 %2049
  %2051 = vrot.lane.b32.xlu0 %v1987, 87
  %v2052 = vpop.permute.xlu0 %2051
  %2053 = vrot.lane.b32.xlu0 %v1988, 87
  %v2054 = vpop.permute.xlu0 %2053
  %2058 = vrot.lane.b32.xlu0 %v1986, 86
  %v2059 = vpop.permute.xlu0 %2058
  %2060 = vrot.lane.b32.xlu0 %v1987, 86
  %v2061 = vpop.permute.xlu0 %2060
  %2062 = vrot.lane.b32.xlu0 %v1988, 86
  %v2063 = vpop.permute.xlu0 %2062
  %2067 = vrot.lane.b32.xlu0 %v1986, 85
  %v2068 = vpop.permute.xlu0 %2067
  %2069 = vrot.lane.b32.xlu0 %v1987, 85
  %v2070 = vpop.permute.xlu0 %2069
  %2071 = vrot.lane.b32.xlu0 %v1988, 85
  %v2072 = vpop.permute.xlu0 %2071
  %v2076 = vsel %vm1800, %v2041, %v2050
  %v2077 = vsel %vm1800, %v2043, %v2052
  %v2078 = vsel %vm1800, %v2045, %v2054
  %v2079 = vsel %vm1804, %v2076, %v2059
  %v2080 = vsel %vm1804, %v2077, %v2061
  %v2081 = vsel %vm1804, %v2078, %v2063
  %v2082 = vsel %vm1808, %v2079, %v2068
  %v2083 = vsel %vm1808, %v2080, %v2070
  %v2084 = vsel %vm1808, %v2081, %v2072
  %v2085 = vmul.f32 %v2082, 0.25
  %v2086 = vmul.f32 %v2083, 0.25
  %v2087 = vmul.f32 %v2084, 0.25
  %2088 = vrot.lane.b32.xlu0 %v1986, 64
  %v2089 = vpop.permute.xlu0 %2088
  %2090 = vrot.lane.b32.xlu0 %v1987, 64
  %v2091 = vpop.permute.xlu0 %2090
  %2092 = vrot.lane.b32.xlu0 %v1988, 64
  %v2093 = vpop.permute.xlu0 %2092
  %2097 = vrot.lane.b32.xlu0 %v1986, 63
  %v2098 = vpop.permute.xlu0 %2097
  %2099 = vrot.lane.b32.xlu0 %v1987, 63
  %v2100 = vpop.permute.xlu0 %2099
  %2101 = vrot.lane.b32.xlu0 %v1988, 63
  %v2102 = vpop.permute.xlu0 %2101
  %2106 = vrot.lane.b32.xlu0 %v1986, 62
  %v2107 = vpop.permute.xlu0 %2106
  %2108 = vrot.lane.b32.xlu0 %v1987, 62
  %v2109 = vpop.permute.xlu0 %2108
  %2110 = vrot.lane.b32.xlu0 %v1988, 62
  %v2111 = vpop.permute.xlu0 %2110
  %2115 = vrot.lane.b32.xlu0 %v1986, 61
  %v2116 = vpop.permute.xlu0 %2115
  %2117 = vrot.lane.b32.xlu0 %v1987, 61
  %v2118 = vpop.permute.xlu0 %2117
  %2119 = vrot.lane.b32.xlu0 %v1988, 61
  %v2120 = vpop.permute.xlu0 %2119
  %v2124 = vsel %vm1800, %v2089, %v2098
  %v2125 = vsel %vm1800, %v2091, %v2100
  %v2126 = vsel %vm1800, %v2093, %v2102
  %v2127 = vsel %vm1804, %v2124, %v2107
  %v2128 = vsel %vm1804, %v2125, %v2109
  %v2129 = vsel %vm1804, %v2126, %v2111
  %v2130 = vsel %vm1808, %v2127, %v2116
  %v2131 = vsel %vm1808, %v2128, %v2118
  %v2132 = vsel %vm1808, %v2129, %v2120
  %v2133 = vmul.f32 %v2130, 0.25
  %v2134 = vmul.f32 %v2131, 0.25
  %v2135 = vmul.f32 %v2132, 0.25
  %2136 = vrot.lane.b32.xlu0 %v1986, 40
  %v2137 = vpop.permute.xlu0 %2136
  %2138 = vrot.lane.b32.xlu0 %v1987, 40
  %v2139 = vpop.permute.xlu0 %2138
  %2140 = vrot.lane.b32.xlu0 %v1988, 40
  %v2141 = vpop.permute.xlu0 %2140
  %2145 = vrot.lane.b32.xlu0 %v1986, 39
  %v2146 = vpop.permute.xlu0 %2145
  %2147 = vrot.lane.b32.xlu0 %v1987, 39
  %v2148 = vpop.permute.xlu0 %2147
  %2149 = vrot.lane.b32.xlu0 %v1988, 39
  %v2150 = vpop.permute.xlu0 %2149
  %2154 = vrot.lane.b32.xlu0 %v1986, 38
  %v2155 = vpop.permute.xlu0 %2154
  %2156 = vrot.lane.b32.xlu0 %v1987, 38
  %v2157 = vpop.permute.xlu0 %2156
  %2158 = vrot.lane.b32.xlu0 %v1988, 38
  %v2159 = vpop.permute.xlu0 %2158
  %2163 = vrot.lane.b32.xlu0 %v1986, 37
  %v2164 = vpop.permute.xlu0 %2163
  %2165 = vrot.lane.b32.xlu0 %v1987, 37
  %v2166 = vpop.permute.xlu0 %2165
  %2167 = vrot.lane.b32.xlu0 %v1988, 37
  %v2168 = vpop.permute.xlu0 %2167
  %v2172 = vsel %vm1800, %v2137, %v2146
  %v2173 = vsel %vm1800, %v2139, %v2148
  %v2174 = vsel %vm1800, %v2141, %v2150
  %v2175 = vsel %vm1804, %v2172, %v2155
  %v2176 = vsel %vm1804, %v2173, %v2157
  %v2177 = vsel %vm1804, %v2174, %v2159
  %v2178 = vsel %vm1808, %v2175, %v2164
  %v2179 = vsel %vm1808, %v2176, %v2166
  %v2180 = vsel %vm1808, %v2177, %v2168
  %v2181 = vmul.f32 %v2178, 0.25
  %v2182 = vmul.f32 %v2179, 0.25
  %v2183 = vmul.f32 %v2180, 0.25
  %2187 = vrot.lane.b32.xlu0 %v1812, 7
  %v2188 = vpop.permute.xlu0 %2187
  %2189 = vrot.lane.b32.xlu0 %v1813, 7
  %v2190 = vpop.permute.xlu0 %2189
  %2191 = vrot.lane.b32.xlu0 %v1814, 7
  %v2192 = vpop.permute.xlu0 %2191
  %2199 = vrot.lane.b32.xlu0 %v1860, 13
  %v2200 = vpop.permute.xlu0 %2199
  %2201 = vrot.lane.b32.xlu0 %v1861, 13
  %v2202 = vpop.permute.xlu0 %2201
  %2203 = vrot.lane.b32.xlu0 %v1862, 13
  %v2204 = vpop.permute.xlu0 %2203
  %2211 = vrot.lane.b32.xlu0 %v1908, 19
  %v2212 = vpop.permute.xlu0 %2211
  %2213 = vrot.lane.b32.xlu0 %v1909, 19
  %v2214 = vpop.permute.xlu0 %2213
  %2215 = vrot.lane.b32.xlu0 %v1910, 19
  %v2216 = vpop.permute.xlu0 %2215
  %2223 = vrot.lane.b32.xlu0 %v1956, 25
  %v2224 = vpop.permute.xlu0 %2223
  %2225 = vrot.lane.b32.xlu0 %v1957, 25
  %v2226 = vpop.permute.xlu0 %2225
  %2227 = vrot.lane.b32.xlu0 %v1958, 25
  %v2228 = vpop.permute.xlu0 %2227
  %vm2232 = vcmask 56320
  %v2233 = vsel %vm2232, 0.0, %v2188
  %v2234 = vsel %vm2232, 0.0, %v2190
  %v2235 = vsel %vm2232, 0.0, %v2192
  %vm2236 = vcmask 89088
  %v2237 = vsel %vm2236, %v2233, 0.0
  %v2238 = vsel %vm2236, %v2234, 0.0
  %v2239 = vsel %vm2236, %v2235, 0.0
  %vm2240 = vcmask 97280
  %v2241 = vsel %vm2240, %v2237, 0.0
  %v2242 = vsel %vm2240, %v2238, 0.0
  %v2243 = vsel %vm2240, %v2239, 0.0
  %vm2244 = vcmask 105472
  %v2245 = vsel %vm2244, %v2241, %v2200
  %v2246 = vsel %vm2244, %v2242, %v2202
  %v2247 = vsel %vm2244, %v2243, %v2204
  %vm2248 = vcmask 138240
  %v2249 = vsel %vm2248, %v2245, 0.0
  %v2250 = vsel %vm2248, %v2246, 0.0
  %v2251 = vsel %vm2248, %v2247, 0.0
  %vm2252 = vcmask 146432
  %v2253 = vsel %vm2252, %v2249, 0.0
  %v2254 = vsel %vm2252, %v2250, 0.0
  %v2255 = vsel %vm2252, %v2251, 0.0
  %vm2256 = vcmask 154624
  %v2257 = vsel %vm2256, %v2253, %v2212
  %v2258 = vsel %vm2256, %v2254, %v2214
  %v2259 = vsel %vm2256, %v2255, %v2216
  %vm2260 = vcmask 187392
  %v2261 = vsel %vm2260, %v2257, 0.0
  %v2262 = vsel %vm2260, %v2258, 0.0
  %v2263 = vsel %vm2260, %v2259, 0.0
  %v2264 = vsel %vm1002, %v2261, 0.0
  %v2265 = vsel %vm1002, %v2262, 0.0
  %v2266 = vsel %vm1002, %v2263, 0.0
  %vm2267 = vcmask 203776
  %v2268 = vsel %vm2267, %v2264, %v2224
  %v2269 = vsel %vm2267, %v2265, %v2226
  %v2270 = vsel %vm2267, %v2266, %v2228
  %vm2271 = vcmask 236544
  %v2272 = vsel %vm2271, %v2268, 0.0
  %v2273 = vsel %vm2271, %v2269, 0.0
  %v2274 = vsel %vm2271, %v2270, 0.0
  %vm2275 = vcmask 244736
  %v2276 = vsel %vm2275, %v2272, 0.0
  %v2277 = vsel %vm2275, %v2273, 0.0
  %v2278 = vsel %vm2275, %v2274, 0.0
  %vm2279 = vcmask 293888
  %v2280 = vsel %vm2279, %v2276, 0.0
  %v2281 = vsel %vm2279, %v2277, 0.0
  %v2282 = vsel %vm2279, %v2278, 0.0
  %vm2283 = vcmask 343040
  %v2284 = vsel %vm2283, %v2280, 0.0
  %v2285 = vsel %vm2283, %v2281, 0.0
  %v2286 = vsel %vm2283, %v2282, 0.0
  %2290 = vrot.lane.b32.xlu0 %v2085, 6
  %v2291 = vpop.permute.xlu0 %2290
  %2292 = vrot.lane.b32.xlu0 %v2086, 6
  %v2293 = vpop.permute.xlu0 %2292
  %2294 = vrot.lane.b32.xlu0 %v2087, 6
  %v2295 = vpop.permute.xlu0 %2294
  %2302 = vrot.lane.b32.xlu0 %v2133, 12
  %v2303 = vpop.permute.xlu0 %2302
  %2304 = vrot.lane.b32.xlu0 %v2134, 12
  %v2305 = vpop.permute.xlu0 %2304
  %2306 = vrot.lane.b32.xlu0 %v2135, 12
  %v2307 = vpop.permute.xlu0 %2306
  %2314 = vrot.lane.b32.xlu0 %v2181, 18
  %v2315 = vpop.permute.xlu0 %2314
  %2316 = vrot.lane.b32.xlu0 %v2182, 18
  %v2317 = vpop.permute.xlu0 %2316
  %2318 = vrot.lane.b32.xlu0 %v2183, 18
  %v2319 = vpop.permute.xlu0 %2318
  %vm2323 = vcmask 31744
  %v2324 = vsel %vm2323, %v2037, 0.0
  %v2325 = vsel %vm2323, %v2038, 0.0
  %v2326 = vsel %vm2323, %v2039, 0.0
  %vm2327 = vcmask 39936
  %v2328 = vsel %vm2327, %v2324, 0.0
  %v2329 = vsel %vm2327, %v2325, 0.0
  %v2330 = vsel %vm2327, %v2326, 0.0
  %vm2331 = vcmask 48128
  %v2332 = vsel %vm2331, %v2328, %v2291
  %v2333 = vsel %vm2331, %v2329, %v2293
  %v2334 = vsel %vm2331, %v2330, %v2295
  %vm2335 = vcmask 80896
  %v2336 = vsel %vm2335, %v2332, 0.0
  %v2337 = vsel %vm2335, %v2333, 0.0
  %v2338 = vsel %vm2335, %v2334, 0.0
  %v2339 = vsel %vm2236, %v2336, 0.0
  %v2340 = vsel %vm2236, %v2337, 0.0
  %v2341 = vsel %vm2236, %v2338, 0.0
  %v2342 = vsel %vm2240, %v2339, %v2303
  %v2343 = vsel %vm2240, %v2340, %v2305
  %v2344 = vsel %vm2240, %v2341, %v2307
  %v2345 = vsel %vm100, %v2342, 0.0
  %v2346 = vsel %vm100, %v2343, 0.0
  %v2347 = vsel %vm100, %v2344, 0.0
  %v2348 = vsel %vm2248, %v2345, 0.0
  %v2349 = vsel %vm2248, %v2346, 0.0
  %v2350 = vsel %vm2248, %v2347, 0.0
  %v2351 = vsel %vm2252, %v2348, %v2315
  %v2352 = vsel %vm2252, %v2349, %v2317
  %v2353 = vsel %vm2252, %v2350, %v2319
  %vm2354 = vcmask 179200
  %v2355 = vsel %vm2354, %v2351, 0.0
  %v2356 = vsel %vm2354, %v2352, 0.0
  %v2357 = vsel %vm2354, %v2353, 0.0
  %v2358 = vsel %vm2260, %v2355, 0.0
  %v2359 = vsel %vm2260, %v2356, 0.0
  %v2360 = vsel %vm2260, %v2357, 0.0
  %v2361 = vsel %vm2271, %v2358, 0.0
  %v2362 = vsel %vm2271, %v2359, 0.0
  %v2363 = vsel %vm2271, %v2360, 0.0
  %2367 = vrot.lane.b32.xlu0 %v2361, 43
  %v2368 = vpop.permute.xlu0 %2367
  %2369 = vrot.lane.b32.xlu0 %v2362, 43
  %v2370 = vpop.permute.xlu0 %2369
  %2371 = vrot.lane.b32.xlu0 %v2363, 43
  %v2372 = vpop.permute.xlu0 %2371
  %vm2376 = vcmask 351232
  %v2377 = vsel %vm2376, %v2284, %v2368
  %v2378 = vsel %vm2376, %v2285, %v2370
  %v2379 = vsel %vm2376, %v2286, %v2372
  %v2380 = vpack.c.bf16 %v2377, %v2377
  %v2381 = vpack.c.bf16 %v2378, %v2378
  %v2382 = vpack.c.bf16 %v2379, %v2379
  %v2383 = vld [vmem:[%s5] sm:$0xf]
  %v2384 = vld [vmem:[%s5 + $0x4] sm:$0xf]
  %v2385 = vld [vmem:[%s5 + $0x8] sm:$0xf]
  %v2386 = vld [vmem:[%s5 + $0xc] sm:$0xf]
  %v2387 = vld [vmem:[%s5 + $0x10] sm:$0xf]
  %s2388 = scalar_lea.vmem %s5, 20
  %v2389 = vld [vmem:[%s2388] sm:$0xf]
  %v2390 = vld [vmem:[%s2388 + $0x4] sm:$0xf]
  %v2391 = vld [vmem:[%s2388 + $0x8] sm:$0xf]
  %v2392 = vld [vmem:[%s2388 + $0xc] sm:$0xf]
  %v2393 = vld [vmem:[%s2388 + $0x10] sm:$0xf]
  %v2399 = vunpack.c.l.b16 %v2389
  %v2400 = vunpack.c.l.b16 %v2390
  %v2401 = vunpack.c.l.b16 %v2391
  %v2402 = vunpack.c.l.b16 %v2392
  %v2403 = vunpack.c.l.b16 %v2393
  %v2404 = vpack.c.b16 %v2400, %v2399
  %v2405 = vpack.c.b16 %v2402, %v2401
  %v2406 = vpack.c.b16 %v2403, %v2403
  %v2410 = vunpack.c.l.b16 %v2380
  %v2411 = vunpack.c.l.b16 %v2381
  %v2412 = vunpack.c.l.b16 %v2382
  %v2413 = vpack.c.b16 %v2411, %v2410
  %v2414 = vpack.c.b16 %v2412, %v2412
  %2415 = vrot.lane.b32.xlu0 %v2413, 127
  %v2416 = vpop.permute.xlu0 %2415
  %2417 = vrot.lane.b32.xlu0 %v2414, 127
  %v2418 = vpop.permute.xlu0 %2417
  %v2421 = vsel %vm1002, %v2404, 0
  %v2424 = vsel %vm1002, %v2405, 0
  %v2427 = vsel %vm1002, %v2406, 0
  %v2430 = vsel %vm1009, %v2418, 0
  %2432 = vmatpush.bf16.msra.mxu0 0
  %2433 = vmatpush.bf16.msra.mxu0 0
  %2434 = vmatpush.bf16.msra.mxu0 0
  %2435 = vmatpush.bf16.msra.mxu0 0
  %2436 = vmatpush.bf16.msra.mxu0 0
  %2437 = vmatpush.bf16.msra.mxu0 0
  %2438 = vmatpush.bf16.msra.mxu0 %v2430
  %2439 = vmatpush.bf16.msra.mxu0 %v2416
  %2440 = vmatmul.bf16.gmra.mxu0 %v2421
  %v2441 = vpop.f32.mrf.mxu0
  %v2442 = vadd.f32 0.0, %v2441
  %v2443 = vpop.f32.mrf.mxu0
  %v2444 = vadd.f32 0.0, %v2443
  %2445 = vmatmul.bf16.gmra.mxu0 %v2424
  %v2446 = vpop.f32.mrf.mxu0
  %v2447 = vadd.f32 0.0, %v2446
  %v2448 = vpop.f32.mrf.mxu0
  %v2449 = vadd.f32 0.0, %v2448
  %2450 = vmatmul.bf16.gmra.mxu0 %v2427
  %v2451 = vpop.f32.mrf.mxu0
  %v2452 = vadd.f32 0.0, %v2451
  %v2453 = vpop.f32.mrf.mxu0
  %2454 = vdwg.mxu0
  %v2460 = vunpack.c.l.b16 %v2383
  %v2461 = vunpack.c.l.b16 %v2384
  %v2462 = vunpack.c.l.b16 %v2385
  %v2463 = vunpack.c.l.b16 %v2386
  %v2464 = vunpack.c.l.b16 %v2387
  %v2465 = vpack.c.b16 %v2461, %v2460
  %v2466 = vpack.c.b16 %v2463, %v2462
  %v2467 = vpack.c.b16 %v2464, %v2464
  %v2470 = vsel %vm1002, %v2465, 0
  %v2473 = vsel %vm1002, %v2466, 0
  %v2476 = vsel %vm1002, %v2467, 0
  %v2479 = vsel %vm1009, %v2414, 0
  %2481 = vmatpush.bf16.msra.mxu0 0
  %2482 = vmatpush.bf16.msra.mxu0 0
  %2483 = vmatpush.bf16.msra.mxu0 0
  %2484 = vmatpush.bf16.msra.mxu0 0
  %2485 = vmatpush.bf16.msra.mxu0 0
  %2486 = vmatpush.bf16.msra.mxu0 0
  %2487 = vmatpush.bf16.msra.mxu0 %v2479
  %2488 = vmatpush.bf16.msra.mxu0 %v2413
  %2489 = vmatmul.bf16.gmra.mxu0 %v2470
  %v2490 = vpop.f32.mrf.mxu0
  %v2491 = vadd.f32 %v2442, %v2490
  %v2492 = vpop.f32.mrf.mxu0
  %v2493 = vadd.f32 %v2444, %v2492
  %2494 = vmatmul.bf16.gmra.mxu0 %v2473
  %v2495 = vpop.f32.mrf.mxu0
  %v2496 = vadd.f32 %v2447, %v2495
  %v2497 = vpop.f32.mrf.mxu0
  %v2498 = vadd.f32 %v2449, %v2497
  %2499 = vmatmul.bf16.gmra.mxu0 %v2476
  %v2500 = vpop.f32.mrf.mxu0
  %v2501 = vadd.f32 %v2452, %v2500
  %v2502 = vpop.f32.mrf.mxu0
  %2503 = vdwg.mxu0
  %s2504 = scalar_lea.vmem %s5, 40
  %v2505 = vld [vmem:[%s2504] sm:$0xf]
  %v2506 = vld [vmem:[%s2504 + $0x4] sm:$0xf]
  %v2507 = vld [vmem:[%s2504 + $0x8] sm:$0xf]
  %v2508 = vld [vmem:[%s2504 + $0xc] sm:$0xf]
  %v2509 = vld [vmem:[%s2504 + $0x10] sm:$0xf]
  %v2515 = vunpack.c.l.b16 %v2505
  %v2516 = vunpack.c.l.b16 %v2506
  %v2517 = vunpack.c.l.b16 %v2507
  %v2518 = vunpack.c.l.b16 %v2508
  %v2519 = vunpack.c.l.b16 %v2509
  %v2520 = vpack.c.b16 %v2516, %v2515
  %v2521 = vpack.c.b16 %v2518, %v2517
  %v2522 = vpack.c.b16 %v2519, %v2519
  %2523 = vrot.lane.b32.xlu0 %v2413, 126
  %v2524 = vpop.permute.xlu0 %2523
  %2525 = vrot.lane.b32.xlu0 %v2414, 126
  %v2526 = vpop.permute.xlu0 %2525
  %v2529 = vsel %vm1002, %v2520, 0
  %v2532 = vsel %vm1002, %v2521, 0
  %v2535 = vsel %vm1002, %v2522, 0
  %v2538 = vsel %vm1009, %v2526, 0
  %2540 = vmatpush.bf16.msra.mxu0 0
  %2541 = vmatpush.bf16.msra.mxu0 0
  %2542 = vmatpush.bf16.msra.mxu0 0
  %2543 = vmatpush.bf16.msra.mxu0 0
  %2544 = vmatpush.bf16.msra.mxu0 0
  %2545 = vmatpush.bf16.msra.mxu0 0
  %2546 = vmatpush.bf16.msra.mxu0 %v2538
  %2547 = vmatpush.bf16.msra.mxu0 %v2524
  %2548 = vmatmul.bf16.gmra.mxu0 %v2529
  %v2549 = vpop.f32.mrf.mxu0
  %v2550 = vadd.f32 0.0, %v2549
  %v2551 = vpop.f32.mrf.mxu0
  %v2552 = vadd.f32 0.0, %v2551
  %2553 = vmatmul.bf16.gmra.mxu0 %v2532
  %v2554 = vpop.f32.mrf.mxu0
  %v2555 = vadd.f32 0.0, %v2554
  %v2556 = vpop.f32.mrf.mxu0
  %v2557 = vadd.f32 0.0, %v2556
  %2558 = vmatmul.bf16.gmra.mxu0 %v2535
  %v2559 = vpop.f32.mrf.mxu0
  %v2560 = vadd.f32 0.0, %v2559
  %v2561 = vpop.f32.mrf.mxu0
  %2562 = vdwg.mxu0
  %v2563 = vadd.f32 %v2491, %v2550
  %v2564 = vadd.f32 %v2493, %v2552
  %v2565 = vadd.f32 %v2496, %v2555
  %v2566 = vadd.f32 %v2498, %v2557
  %v2567 = vadd.f32 %v2501, %v2560
  %s2568 = scalar_lea.vmem %s5, 60
  %v2569 = vld [vmem:[%s2568] sm:$0xf]
  %v2570 = vld [vmem:[%s2568 + $0x4] sm:$0xf]
  %v2571 = vld [vmem:[%s2568 + $0x8] sm:$0xf]
  %v2572 = vld [vmem:[%s2568 + $0xc] sm:$0xf]
  %v2573 = vld [vmem:[%s2568 + $0x10] sm:$0xf]
  %v2579 = vunpack.c.l.b16 %v2569
  %v2580 = vunpack.c.l.b16 %v2570
  %v2581 = vunpack.c.l.b16 %v2571
  %v2582 = vunpack.c.l.b16 %v2572
  %v2583 = vunpack.c.l.b16 %v2573
  %v2584 = vpack.c.b16 %v2580, %v2579
  %v2585 = vpack.c.b16 %v2582, %v2581
  %v2586 = vpack.c.b16 %v2583, %v2583
  %2587 = vrot.lane.b32.xlu0 %v2413, 122
  %v2588 = vpop.permute.xlu0 %2587
  %2589 = vrot.lane.b32.xlu0 %v2414, 122
  %v2590 = vpop.permute.xlu0 %2589
  %v2593 = vsel %vm1002, %v2584, 0
  %v2596 = vsel %vm1002, %v2585, 0
  %v2599 = vsel %vm1002, %v2586, 0
  %v2602 = vsel %vm1009, %v2590, 0
  %2604 = vmatpush.bf16.msra.mxu0 0
  %2605 = vmatpush.bf16.msra.mxu0 0
  %2606 = vmatpush.bf16.msra.mxu0 0
  %2607 = vmatpush.bf16.msra.mxu0 0
  %2608 = vmatpush.bf16.msra.mxu0 0
  %2609 = vmatpush.bf16.msra.mxu0 0
  %2610 = vmatpush.bf16.msra.mxu0 %v2602
  %2611 = vmatpush.bf16.msra.mxu0 %v2588
  %2612 = vmatmul.bf16.gmra.mxu0 %v2593
  %v2613 = vpop.f32.mrf.mxu0
  %v2614 = vadd.f32 0.0, %v2613
  %v2615 = vpop.f32.mrf.mxu0
  %v2616 = vadd.f32 0.0, %v2615
  %2617 = vmatmul.bf16.gmra.mxu0 %v2596
  %v2618 = vpop.f32.mrf.mxu0
  %v2619 = vadd.f32 0.0, %v2618
  %v2620 = vpop.f32.mrf.mxu0
  %v2621 = vadd.f32 0.0, %v2620
  %2622 = vmatmul.bf16.gmra.mxu0 %v2599
  %v2623 = vpop.f32.mrf.mxu0
  %v2624 = vadd.f32 0.0, %v2623
  %v2625 = vpop.f32.mrf.mxu0
  %2626 = vdwg.mxu0
  %v2627 = vadd.f32 %v2563, %v2614
  %v2628 = vadd.f32 %v2564, %v2616
  %v2629 = vadd.f32 %v2565, %v2619
  %v2630 = vadd.f32 %v2566, %v2621
  %v2631 = vadd.f32 %v2567, %v2624
  %s2632 = scalar_lea.vmem %s5, 80
  %v2633 = vld [vmem:[%s2632] sm:$0xf]
  %v2634 = vld [vmem:[%s2632 + $0x4] sm:$0xf]
  %v2635 = vld [vmem:[%s2632 + $0x8] sm:$0xf]
  %v2636 = vld [vmem:[%s2632 + $0xc] sm:$0xf]
  %v2637 = vld [vmem:[%s2632 + $0x10] sm:$0xf]
  %v2643 = vunpack.c.l.b16 %v2633
  %v2644 = vunpack.c.l.b16 %v2634
  %v2645 = vunpack.c.l.b16 %v2635
  %v2646 = vunpack.c.l.b16 %v2636
  %v2647 = vunpack.c.l.b16 %v2637
  %v2648 = vpack.c.b16 %v2644, %v2643
  %v2649 = vpack.c.b16 %v2646, %v2645
  %v2650 = vpack.c.b16 %v2647, %v2647
  %2651 = vrot.lane.b32.xlu0 %v2413, 121
  %v2652 = vpop.permute.xlu0 %2651
  %2653 = vrot.lane.b32.xlu0 %v2414, 121
  %v2654 = vpop.permute.xlu0 %2653
  %v2657 = vsel %vm1002, %v2648, 0
  %v2660 = vsel %vm1002, %v2649, 0
  %v2663 = vsel %vm1002, %v2650, 0
  %v2666 = vsel %vm1009, %v2654, 0
  %2668 = vmatpush.bf16.msra.mxu0 0
  %2669 = vmatpush.bf16.msra.mxu0 0
  %2670 = vmatpush.bf16.msra.mxu0 0
  %2671 = vmatpush.bf16.msra.mxu0 0
  %2672 = vmatpush.bf16.msra.mxu0 0
  %2673 = vmatpush.bf16.msra.mxu0 0
  %2674 = vmatpush.bf16.msra.mxu0 %v2666
  %2675 = vmatpush.bf16.msra.mxu0 %v2652
  %2676 = vmatmul.bf16.gmra.mxu0 %v2657
  %v2677 = vpop.f32.mrf.mxu0
  %v2678 = vadd.f32 0.0, %v2677
  %v2679 = vpop.f32.mrf.mxu0
  %v2680 = vadd.f32 0.0, %v2679
  %2681 = vmatmul.bf16.gmra.mxu0 %v2660
  %v2682 = vpop.f32.mrf.mxu0
  %v2683 = vadd.f32 0.0, %v2682
  %v2684 = vpop.f32.mrf.mxu0
  %v2685 = vadd.f32 0.0, %v2684
  %2686 = vmatmul.bf16.gmra.mxu0 %v2663
  %v2687 = vpop.f32.mrf.mxu0
  %v2688 = vadd.f32 0.0, %v2687
  %v2689 = vpop.f32.mrf.mxu0
  %2690 = vdwg.mxu0
  %v2691 = vadd.f32 %v2627, %v2678
  %v2692 = vadd.f32 %v2628, %v2680
  %v2693 = vadd.f32 %v2629, %v2683
  %v2694 = vadd.f32 %v2630, %v2685
  %v2695 = vadd.f32 %v2631, %v2688
  %s2696 = scalar_lea.vmem %s5, 100
  %v2697 = vld [vmem:[%s2696] sm:$0xf]
  %v2698 = vld [vmem:[%s2696 + $0x4] sm:$0xf]
  %v2699 = vld [vmem:[%s2696 + $0x8] sm:$0xf]
  %v2700 = vld [vmem:[%s2696 + $0xc] sm:$0xf]
  %v2701 = vld [vmem:[%s2696 + $0x10] sm:$0xf]
  %v2707 = vunpack.c.l.b16 %v2697
  %v2708 = vunpack.c.l.b16 %v2698
  %v2709 = vunpack.c.l.b16 %v2699
  %v2710 = vunpack.c.l.b16 %v2700
  %v2711 = vunpack.c.l.b16 %v2701
  %v2712 = vpack.c.b16 %v2708, %v2707
  %v2713 = vpack.c.b16 %v2710, %v2709
  %v2714 = vpack.c.b16 %v2711, %v2711
  %2715 = vrot.lane.b32.xlu0 %v2413, 120
  %v2716 = vpop.permute.xlu0 %2715
  %2717 = vrot.lane.b32.xlu0 %v2414, 120
  %v2718 = vpop.permute.xlu0 %2717
  %v2721 = vsel %vm1002, %v2712, 0
  %v2724 = vsel %vm1002, %v2713, 0
  %v2727 = vsel %vm1002, %v2714, 0
  %v2730 = vsel %vm1009, %v2718, 0
  %2732 = vmatpush.bf16.msra.mxu0 0
  %2733 = vmatpush.bf16.msra.mxu0 0
  %2734 = vmatpush.bf16.msra.mxu0 0
  %2735 = vmatpush.bf16.msra.mxu0 0
  %2736 = vmatpush.bf16.msra.mxu0 0
  %2737 = vmatpush.bf16.msra.mxu0 0
  %2738 = vmatpush.bf16.msra.mxu0 %v2730
  %2739 = vmatpush.bf16.msra.mxu0 %v2716
  %2740 = vmatmul.bf16.gmra.mxu0 %v2721
  %v2741 = vpop.f32.mrf.mxu0
  %v2742 = vadd.f32 0.0, %v2741
  %v2743 = vpop.f32.mrf.mxu0
  %v2744 = vadd.f32 0.0, %v2743
  %2745 = vmatmul.bf16.gmra.mxu0 %v2724
  %v2746 = vpop.f32.mrf.mxu0
  %v2747 = vadd.f32 0.0, %v2746
  %v2748 = vpop.f32.mrf.mxu0
  %v2749 = vadd.f32 0.0, %v2748
  %2750 = vmatmul.bf16.gmra.mxu0 %v2727
  %v2751 = vpop.f32.mrf.mxu0
  %v2752 = vadd.f32 0.0, %v2751
  %v2753 = vpop.f32.mrf.mxu0
  %2754 = vdwg.mxu0
  %v2755 = vadd.f32 %v2691, %v2742
  %v2756 = vadd.f32 %v2692, %v2744
  %v2757 = vadd.f32 %v2693, %v2747
  %v2758 = vadd.f32 %v2694, %v2749
  %v2759 = vadd.f32 %v2695, %v2752
  %s2760 = scalar_lea.vmem %s5, 120
  %v2761 = vld [vmem:[%s2760] sm:$0xf]
  %v2762 = vld [vmem:[%s2760 + $0x4] sm:$0xf]
  %v2763 = vld [vmem:[%s2760 + $0x8] sm:$0xf]
  %v2764 = vld [vmem:[%s2760 + $0xc] sm:$0xf]
  %v2765 = vld [vmem:[%s2760 + $0x10] sm:$0xf]
  %v2771 = vunpack.c.l.b16 %v2761
  %v2772 = vunpack.c.l.b16 %v2762
  %v2773 = vunpack.c.l.b16 %v2763
  %v2774 = vunpack.c.l.b16 %v2764
  %v2775 = vunpack.c.l.b16 %v2765
  %v2776 = vpack.c.b16 %v2772, %v2771
  %v2777 = vpack.c.b16 %v2774, %v2773
  %v2778 = vpack.c.b16 %v2775, %v2775
  %2779 = vrot.lane.b32.xlu0 %v2413, 116
  %v2780 = vpop.permute.xlu0 %2779
  %2781 = vrot.lane.b32.xlu0 %v2414, 116
  %v2782 = vpop.permute.xlu0 %2781
  %v2785 = vsel %vm1002, %v2776, 0
  %v2788 = vsel %vm1002, %v2777, 0
  %v2791 = vsel %vm1002, %v2778, 0
  %v2794 = vsel %vm1009, %v2782, 0
  %2796 = vmatpush.bf16.msra.mxu0 0
  %2797 = vmatpush.bf16.msra.mxu0 0
  %2798 = vmatpush.bf16.msra.mxu0 0
  %2799 = vmatpush.bf16.msra.mxu0 0
  %2800 = vmatpush.bf16.msra.mxu0 0
  %2801 = vmatpush.bf16.msra.mxu0 0
  %2802 = vmatpush.bf16.msra.mxu0 %v2794
  %2803 = vmatpush.bf16.msra.mxu0 %v2780
  %2804 = vmatmul.bf16.gmra.mxu0 %v2785
  %v2805 = vpop.f32.mrf.mxu0
  %v2806 = vadd.f32 0.0, %v2805
  %v2807 = vpop.f32.mrf.mxu0
  %v2808 = vadd.f32 0.0, %v2807
  %2809 = vmatmul.bf16.gmra.mxu0 %v2788
  %v2810 = vpop.f32.mrf.mxu0
  %v2811 = vadd.f32 0.0, %v2810
  %v2812 = vpop.f32.mrf.mxu0
  %v2813 = vadd.f32 0.0, %v2812
  %2814 = vmatmul.bf16.gmra.mxu0 %v2791
  %v2815 = vpop.f32.mrf.mxu0
  %v2816 = vadd.f32 0.0, %v2815
  %v2817 = vpop.f32.mrf.mxu0
  %2818 = vdwg.mxu0
  %v2819 = vadd.f32 %v2755, %v2806
  %v2820 = vadd.f32 %v2756, %v2808
  %v2821 = vadd.f32 %v2757, %v2811
  %v2822 = vadd.f32 %v2758, %v2813
  %v2823 = vadd.f32 %v2759, %v2816
  %s2824 = scalar_lea.vmem %s5, 140
  %v2825 = vld [vmem:[%s2824] sm:$0xf]
  %v2826 = vld [vmem:[%s2824 + $0x4] sm:$0xf]
  %v2827 = vld [vmem:[%s2824 + $0x8] sm:$0xf]
  %v2828 = vld [vmem:[%s2824 + $0xc] sm:$0xf]
  %v2829 = vld [vmem:[%s2824 + $0x10] sm:$0xf]
  %v2835 = vunpack.c.l.b16 %v2825
  %v2836 = vunpack.c.l.b16 %v2826
  %v2837 = vunpack.c.l.b16 %v2827
  %v2838 = vunpack.c.l.b16 %v2828
  %v2839 = vunpack.c.l.b16 %v2829
  %v2840 = vpack.c.b16 %v2836, %v2835
  %v2841 = vpack.c.b16 %v2838, %v2837
  %v2842 = vpack.c.b16 %v2839, %v2839
  %2843 = vrot.lane.b32.xlu0 %v2413, 115
  %v2844 = vpop.permute.xlu0 %2843
  %2845 = vrot.lane.b32.xlu0 %v2414, 115
  %v2846 = vpop.permute.xlu0 %2845
  %v2849 = vsel %vm1002, %v2840, 0
  %v2852 = vsel %vm1002, %v2841, 0
  %v2855 = vsel %vm1002, %v2842, 0
  %v2858 = vsel %vm1009, %v2846, 0
  %2860 = vmatpush.bf16.msra.mxu0 0
  %2861 = vmatpush.bf16.msra.mxu0 0
  %2862 = vmatpush.bf16.msra.mxu0 0
  %2863 = vmatpush.bf16.msra.mxu0 0
  %2864 = vmatpush.bf16.msra.mxu0 0
  %2865 = vmatpush.bf16.msra.mxu0 0
  %2866 = vmatpush.bf16.msra.mxu0 %v2858
  %2867 = vmatpush.bf16.msra.mxu0 %v2844
  %2868 = vmatmul.bf16.gmra.mxu0 %v2849
  %v2869 = vpop.f32.mrf.mxu0
  %v2870 = vadd.f32 0.0, %v2869
  %v2871 = vpop.f32.mrf.mxu0
  %v2872 = vadd.f32 0.0, %v2871
  %2873 = vmatmul.bf16.gmra.mxu0 %v2852
  %v2874 = vpop.f32.mrf.mxu0
  %v2875 = vadd.f32 0.0, %v2874
  %v2876 = vpop.f32.mrf.mxu0
  %v2877 = vadd.f32 0.0, %v2876
  %2878 = vmatmul.bf16.gmra.mxu0 %v2855
  %v2879 = vpop.f32.mrf.mxu0
  %v2880 = vadd.f32 0.0, %v2879
  %v2881 = vpop.f32.mrf.mxu0
  %2882 = vdwg.mxu0
  %v2883 = vadd.f32 %v2819, %v2870
  %v2884 = vadd.f32 %v2820, %v2872
  %v2885 = vadd.f32 %v2821, %v2875
  %v2886 = vadd.f32 %v2822, %v2877
  %v2887 = vadd.f32 %v2823, %v2880
  %s2888 = scalar_lea.vmem %s5, 160
  %v2889 = vld [vmem:[%s2888] sm:$0xf]
  %v2890 = vld [vmem:[%s2888 + $0x4] sm:$0xf]
  %v2891 = vld [vmem:[%s2888 + $0x8] sm:$0xf]
  %v2892 = vld [vmem:[%s2888 + $0xc] sm:$0xf]
  %v2893 = vld [vmem:[%s2888 + $0x10] sm:$0xf]
  %v2899 = vunpack.c.l.b16 %v2889
  %v2900 = vunpack.c.l.b16 %v2890
  %v2901 = vunpack.c.l.b16 %v2891
  %v2902 = vunpack.c.l.b16 %v2892
  %v2903 = vunpack.c.l.b16 %v2893
  %v2904 = vpack.c.b16 %v2900, %v2899
  %v2905 = vpack.c.b16 %v2902, %v2901
  %v2906 = vpack.c.b16 %v2903, %v2903
  %2907 = vrot.lane.b32.xlu0 %v2413, 114
  %v2908 = vpop.permute.xlu0 %2907
  %2909 = vrot.lane.b32.xlu0 %v2414, 114
  %v2910 = vpop.permute.xlu0 %2909
  %v2913 = vsel %vm1002, %v2904, 0
  %v2916 = vsel %vm1002, %v2905, 0
  %v2919 = vsel %vm1002, %v2906, 0
  %v2922 = vsel %vm1009, %v2910, 0
  %2924 = vmatpush.bf16.msra.mxu0 0
  %2925 = vmatpush.bf16.msra.mxu0 0
  %2926 = vmatpush.bf16.msra.mxu0 0
  %2927 = vmatpush.bf16.msra.mxu0 0
  %2928 = vmatpush.bf16.msra.mxu0 0
  %2929 = vmatpush.bf16.msra.mxu0 0
  %2930 = vmatpush.bf16.msra.mxu0 %v2922
  %2931 = vmatpush.bf16.msra.mxu0 %v2908
  %2932 = vmatmul.bf16.gmra.mxu0 %v2913
  %v2933 = vpop.f32.mrf.mxu0
  %v2934 = vadd.f32 0.0, %v2933
  %v2935 = vpop.f32.mrf.mxu0
  %v2936 = vadd.f32 0.0, %v2935
  %2937 = vmatmul.bf16.gmra.mxu0 %v2916
  %v2938 = vpop.f32.mrf.mxu0
  %v2939 = vadd.f32 0.0, %v2938
  %v2940 = vpop.f32.mrf.mxu0
  %v2941 = vadd.f32 0.0, %v2940
  %2942 = vmatmul.bf16.gmra.mxu0 %v2919
  %v2943 = vpop.f32.mrf.mxu0
  %v2944 = vadd.f32 0.0, %v2943
  %v2945 = vpop.f32.mrf.mxu0
  %2946 = vdwg.mxu0
  %v2947 = vadd.f32 %v2883, %v2934
  %v2948 = vadd.f32 %v2884, %v2936
  %v2949 = vadd.f32 %v2885, %v2939
  %v2950 = vadd.f32 %v2886, %v2941
  %v2951 = vadd.f32 %v2887, %v2944
  %v2952 = vld [vmem:[%s6] sm:$0xff]
  %v2953 = vld [vmem:[%s6 + $0x8] sm:$0xff]
  %v2954 = vld [vmem:[%s6 + $0x10] sm:$0xff]
  %v2955 = vld [vmem:[%s6 + $0x18] sm:$0xff]
  %v2956 = vld [vmem:[%s6 + $0x20] sm:$0xff]
  %2958 = vset.pattern.permute.xlu0 0
  %2959 = vperm.xlu0 %2958, %v2952
  %v2960 = vpop.permute.xlu0 %2959
  %2963 = vset.pattern.permute.xlu0 0
  %2964 = vperm.xlu0 %2963, %v2953
  %v2965 = vpop.permute.xlu0 %2964
  %2968 = vset.pattern.permute.xlu0 0
  %2969 = vperm.xlu0 %2968, %v2954
  %v2970 = vpop.permute.xlu0 %2969
  %2973 = vset.pattern.permute.xlu0 0
  %2974 = vperm.xlu0 %2973, %v2955
  %v2975 = vpop.permute.xlu0 %2974
  %2978 = vset.pattern.permute.xlu0 0
  %2979 = vperm.xlu0 %2978, %v2956
  %v2980 = vpop.permute.xlu0 %2979
  %v2982 = vadd.f32 %v2947, %v2960
  %v2983 = vadd.f32 %v2948, %v2965
  %v2984 = vadd.f32 %v2949, %v2970
  %v2985 = vadd.f32 %v2950, %v2975
  %v2986 = vadd.f32 %v2951, %v2980
  %vm2987 = vcmp.ge.f32.partialorder %v2982, 0.0
  %vm2988 = vcmp.ge.f32.partialorder %v2983, 0.0
  %vm2989 = vcmp.ge.f32.partialorder %v2984, 0.0
  %vm2990 = vcmp.ge.f32.partialorder %v2985, 0.0
  %vm2991 = vcmp.ge.f32.partialorder %v2986, 0.0
  %v2992 = vmul.f32 %v919, %v2982
  %v2993 = vmul.f32 %v919, %v2983
  %v2994 = vmul.f32 %v919, %v2984
  %v2995 = vmul.f32 %v919, %v2985
  %v2996 = vmul.f32 %v919, %v2986
  %v2997 = vsel %vm2987, %v2982, %v2992
  %v2998 = vsel %vm2988, %v2983, %v2993
  %v2999 = vsel %vm2989, %v2984, %v2994
  %v3000 = vsel %vm2990, %v2985, %v2995
  %v3001 = vsel %vm2991, %v2986, %v2996
  %3007 = vrot.lane.b32.xlu0 %v2997, 7
  %v3008 = vpop.permute.xlu0 %3007
  %3009 = vrot.lane.b32.xlu0 %v2998, 7
  %v3010 = vpop.permute.xlu0 %3009
  %3011 = vrot.lane.b32.xlu0 %v2999, 7
  %v3012 = vpop.permute.xlu0 %3011
  %3013 = vrot.lane.b32.xlu0 %v3000, 7
  %v3014 = vpop.permute.xlu0 %3013
  %3015 = vrot.lane.b32.xlu0 %v3001, 7
  %v3016 = vpop.permute.xlu0 %3015
  %v3022 = vsel %vm2232, 0.0, %v3008
  %v3023 = vsel %vm2232, 0.0, %v3010
  %v3024 = vsel %vm2232, 0.0, %v3012
  %v3025 = vsel %vm2232, 0.0, %v3014
  %v3026 = vsel %vm2232, 0.0, %v3016
  %v3027 = vsel %vm2236, %v3022, 0.0
  %v3028 = vsel %vm2236, %v3023, 0.0
  %v3029 = vsel %vm2236, %v3024, 0.0
  %v3030 = vsel %vm2236, %v3025, 0.0
  %v3031 = vsel %vm2236, %v3026, 0.0
  %v3032 = vsel %vm2240, %v3027, 0.0
  %v3033 = vsel %vm2240, %v3028, 0.0
  %v3034 = vsel %vm2240, %v3029, 0.0
  %v3035 = vsel %vm2240, %v3030, 0.0
  %v3036 = vsel %vm2240, %v3031, 0.0
  %v3037 = vsel %vm2244, %v3032, %v3008
  %v3038 = vsel %vm2244, %v3033, %v3010
  %v3039 = vsel %vm2244, %v3034, %v3012
  %v3040 = vsel %vm2244, %v3035, %v3014
  %v3041 = vsel %vm2244, %v3036, %v3016
  %v3042 = vsel %vm2248, %v3037, 0.0
  %v3043 = vsel %vm2248, %v3038, 0.0
  %v3044 = vsel %vm2248, %v3039, 0.0
  %v3045 = vsel %vm2248, %v3040, 0.0
  %v3046 = vsel %vm2248, %v3041, 0.0
  %v3047 = vsel %vm2252, %v3042, 0.0
  %v3048 = vsel %vm2252, %v3043, 0.0
  %v3049 = vsel %vm2252, %v3044, 0.0
  %v3050 = vsel %vm2252, %v3045, 0.0
  %v3051 = vsel %vm2252, %v3046, 0.0
  %v3052 = vsel %vm2256, %v3047, %v3008
  %v3053 = vsel %vm2256, %v3048, %v3010
  %v3054 = vsel %vm2256, %v3049, %v3012
  %v3055 = vsel %vm2256, %v3050, %v3014
  %v3056 = vsel %vm2256, %v3051, %v3016
  %v3057 = vsel %vm2260, %v3052, 0.0
  %v3058 = vsel %vm2260, %v3053, 0.0
  %v3059 = vsel %vm2260, %v3054, 0.0
  %v3060 = vsel %vm2260, %v3055, 0.0
  %v3061 = vsel %vm2260, %v3056, 0.0
  %v3062 = vsel %vm1002, %v3057, 0.0
  %v3063 = vsel %vm1002, %v3058, 0.0
  %v3064 = vsel %vm1002, %v3059, 0.0
  %v3065 = vsel %vm1002, %v3060, 0.0
  %v3066 = vsel %vm1002, %v3061, 0.0
  %v3067 = vsel %vm2267, %v3062, %v3008
  %v3068 = vsel %vm2267, %v3063, %v3010
  %v3069 = vsel %vm2267, %v3064, %v3012
  %v3070 = vsel %vm2267, %v3065, %v3014
  %v3071 = vsel %vm2267, %v3066, %v3016
  %v3072 = vsel %vm2271, %v3067, 0.0
  %v3073 = vsel %vm2271, %v3068, 0.0
  %v3074 = vsel %vm2271, %v3069, 0.0
  %v3075 = vsel %vm2271, %v3070, 0.0
  %v3076 = vsel %vm2271, %v3071, 0.0
  %v3077 = vsel %vm2275, %v3072, 0.0
  %v3078 = vsel %vm2275, %v3073, 0.0
  %v3079 = vsel %vm2275, %v3074, 0.0
  %v3080 = vsel %vm2275, %v3075, 0.0
  %v3081 = vsel %vm2275, %v3076, 0.0
  %v3082 = vsel %vm2279, %v3077, 0.0
  %v3083 = vsel %vm2279, %v3078, 0.0
  %v3084 = vsel %vm2279, %v3079, 0.0
  %v3085 = vsel %vm2279, %v3080, 0.0
  %v3086 = vsel %vm2279, %v3081, 0.0
  %v3087 = vsel %vm2283, %v3082, 0.0
  %v3088 = vsel %vm2283, %v3083, 0.0
  %v3089 = vsel %vm2283, %v3084, 0.0
  %v3090 = vsel %vm2283, %v3085, 0.0
  %v3091 = vsel %vm2283, %v3086, 0.0
  %3092 = vrot.lane.b32.xlu0 %v2997, 92
  %v3093 = vpop.permute.xlu0 %3092
  %3094 = vrot.lane.b32.xlu0 %v2998, 92
  %v3095 = vpop.permute.xlu0 %3094
  %3096 = vrot.lane.b32.xlu0 %v2999, 92
  %v3097 = vpop.permute.xlu0 %3096
  %3098 = vrot.lane.b32.xlu0 %v3000, 92
  %v3099 = vpop.permute.xlu0 %3098
  %3100 = vrot.lane.b32.xlu0 %v3001, 92
  %v3101 = vpop.permute.xlu0 %3100
  %v3107 = vsel %vm2323, %v3093, 0.0
  %v3108 = vsel %vm2323, %v3095, 0.0
  %v3109 = vsel %vm2323, %v3097, 0.0
  %v3110 = vsel %vm2323, %v3099, 0.0
  %v3111 = vsel %vm2323, %v3101, 0.0
  %v3112 = vsel %vm2327, %v3107, 0.0
  %v3113 = vsel %vm2327, %v3108, 0.0
  %v3114 = vsel %vm2327, %v3109, 0.0
  %v3115 = vsel %vm2327, %v3110, 0.0
  %v3116 = vsel %vm2327, %v3111, 0.0
  %v3117 = vsel %vm2331, %v3112, %v3093
  %v3118 = vsel %vm2331, %v3113, %v3095
  %v3119 = vsel %vm2331, %v3114, %v3097
  %v3120 = vsel %vm2331, %v3115, %v3099
  %v3121 = vsel %vm2331, %v3116, %v3101
  %v3122 = vsel %vm2335, %v3117, 0.0
  %v3123 = vsel %vm2335, %v3118, 0.0
  %v3124 = vsel %vm2335, %v3119, 0.0
  %v3125 = vsel %vm2335, %v3120, 0.0
  %v3126 = vsel %vm2335, %v3121, 0.0
  %v3127 = vsel %vm2236, %v3122, 0.0
  %v3128 = vsel %vm2236, %v3123, 0.0
  %v3129 = vsel %vm2236, %v3124, 0.0
  %v3130 = vsel %vm2236, %v3125, 0.0
  %v3131 = vsel %vm2236, %v3126, 0.0
  %v3132 = vsel %vm2240, %v3127, %v3093
  %v3133 = vsel %vm2240, %v3128, %v3095
  %v3134 = vsel %vm2240, %v3129, %v3097
  %v3135 = vsel %vm2240, %v3130, %v3099
  %v3136 = vsel %vm2240, %v3131, %v3101
  %v3137 = vsel %vm100, %v3132, 0.0
  %v3138 = vsel %vm100, %v3133, 0.0
  %v3139 = vsel %vm100, %v3134, 0.0
  %v3140 = vsel %vm100, %v3135, 0.0
  %v3141 = vsel %vm100, %v3136, 0.0
  %v3142 = vsel %vm2248, %v3137, 0.0
  %v3143 = vsel %vm2248, %v3138, 0.0
  %v3144 = vsel %vm2248, %v3139, 0.0
  %v3145 = vsel %vm2248, %v3140, 0.0
  %v3146 = vsel %vm2248, %v3141, 0.0
  %v3147 = vsel %vm2252, %v3142, %v3093
  %v3148 = vsel %vm2252, %v3143, %v3095
  %v3149 = vsel %vm2252, %v3144, %v3097
  %v3150 = vsel %vm2252, %v3145, %v3099
  %v3151 = vsel %vm2252, %v3146, %v3101
  %v3152 = vsel %vm2354, %v3147, 0.0
  %v3153 = vsel %vm2354, %v3148, 0.0
  %v3154 = vsel %vm2354, %v3149, 0.0
  %v3155 = vsel %vm2354, %v3150, 0.0
  %v3156 = vsel %vm2354, %v3151, 0.0
  %v3157 = vsel %vm2260, %v3152, 0.0
  %v3158 = vsel %vm2260, %v3153, 0.0
  %v3159 = vsel %vm2260, %v3154, 0.0
  %v3160 = vsel %vm2260, %v3155, 0.0
  %v3161 = vsel %vm2260, %v3156, 0.0
  %v3162 = vsel %vm2271, %v3157, 0.0
  %v3163 = vsel %vm2271, %v3158, 0.0
  %v3164 = vsel %vm2271, %v3159, 0.0
  %v3165 = vsel %vm2271, %v3160, 0.0
  %v3166 = vsel %vm2271, %v3161, 0.0
  %3172 = vrot.lane.b32.xlu0 %v3162, 43
  %v3173 = vpop.permute.xlu0 %3172
  %3174 = vrot.lane.b32.xlu0 %v3163, 43
  %v3175 = vpop.permute.xlu0 %3174
  %3176 = vrot.lane.b32.xlu0 %v3164, 43
  %v3177 = vpop.permute.xlu0 %3176
  %3178 = vrot.lane.b32.xlu0 %v3165, 43
  %v3179 = vpop.permute.xlu0 %3178
  %3180 = vrot.lane.b32.xlu0 %v3166, 43
  %v3181 = vpop.permute.xlu0 %3180
  %v3187 = vsel %vm2376, %v3087, %v3173
  %v3188 = vsel %vm2376, %v3088, %v3175
  %v3189 = vsel %vm2376, %v3089, %v3177
  %v3190 = vsel %vm2376, %v3090, %v3179
  %v3191 = vsel %vm2376, %v3091, %v3181
  %v3192 = vpack.c.bf16 %v3187, %v3187
  %v3193 = vpack.c.bf16 %v3188, %v3188
  %v3194 = vpack.c.bf16 %v3189, %v3189
  %v3195 = vpack.c.bf16 %v3190, %v3190
  %v3196 = vpack.c.bf16 %v3191, %v3191
  %v3197 = vld [vmem:[%s7] sm:$0xf]
  %v3198 = vld [vmem:[%s7 + $0x4] sm:$0xf]
  %v3199 = vld [vmem:[%s7 + $0x8] sm:$0xf]
  %v3200 = vld [vmem:[%s7 + $0xc] sm:$0xf]
  %v3201 = vld [vmem:[%s7 + $0x10] sm:$0xf]
  %v3202 = vld [vmem:[%s7 + $0x14] sm:$0xf]
  %v3203 = vld [vmem:[%s7 + $0x18] sm:$0xf]
  %v3204 = vld [vmem:[%s7 + $0x1c] sm:$0xf]
  %v3205 = vld [vmem:[%s7 + $0x20] sm:$0xf]
  %v3206 = vld [vmem:[%s7 + $0x24] sm:$0xf]
  %s3207 = scalar_lea.vmem %s7, 40
  %v3208 = vld [vmem:[%s3207] sm:$0xf]
  %v3209 = vld [vmem:[%s3207 + $0x4] sm:$0xf]
  %v3210 = vld [vmem:[%s3207 + $0x8] sm:$0xf]
  %v3211 = vld [vmem:[%s3207 + $0xc] sm:$0xf]
  %v3212 = vld [vmem:[%s3207 + $0x10] sm:$0xf]
  %v3213 = vld [vmem:[%s3207 + $0x14] sm:$0xf]
  %v3214 = vld [vmem:[%s3207 + $0x18] sm:$0xf]
  %v3215 = vld [vmem:[%s3207 + $0x1c] sm:$0xf]
  %v3216 = vld [vmem:[%s3207 + $0x20] sm:$0xf]
  %v3217 = vld [vmem:[%s3207 + $0x24] sm:$0xf]
  %v3228 = vunpack.c.l.b16 %v3208
  %v3229 = vunpack.c.l.b16 %v3209
  %v3230 = vunpack.c.l.b16 %v3210
  %v3231 = vunpack.c.l.b16 %v3211
  %v3232 = vunpack.c.l.b16 %v3212
  %v3233 = vunpack.c.l.b16 %v3213
  %v3234 = vunpack.c.l.b16 %v3214
  %v3235 = vunpack.c.l.b16 %v3215
  %v3236 = vunpack.c.l.b16 %v3216
  %v3237 = vunpack.c.l.b16 %v3217
  %v3238 = vpack.c.b16 %v3229, %v3228
  %v3239 = vpack.c.b16 %v3231, %v3230
  %v3240 = vpack.c.b16 %v3233, %v3232
  %v3241 = vpack.c.b16 %v3235, %v3234
  %v3242 = vpack.c.b16 %v3237, %v3236
  %v3248 = vunpack.c.l.b16 %v3192
  %v3249 = vunpack.c.l.b16 %v3193
  %v3250 = vunpack.c.l.b16 %v3194
  %v3251 = vunpack.c.l.b16 %v3195
  %v3252 = vunpack.c.l.b16 %v3196
  %v3253 = vpack.c.b16 %v3249, %v3248
  %v3254 = vpack.c.b16 %v3251, %v3250
  %v3255 = vpack.c.b16 %v3252, %v3252
  %3256 = vrot.lane.b32.xlu0 %v3253, 127
  %v3257 = vpop.permute.xlu0 %3256
  %3258 = vrot.lane.b32.xlu0 %v3254, 127
  %v3259 = vpop.permute.xlu0 %3258
  %3260 = vrot.lane.b32.xlu0 %v3255, 127
  %v3261 = vpop.permute.xlu0 %3260
  %vm3264 = vcmask 326656
  %v3266 = vsel %vm3264, %v3238, 0
  %v3269 = vsel %vm3264, %v3239, 0
  %v3272 = vsel %vm3264, %v3240, 0
  %v3275 = vsel %vm3264, %v3241, 0
  %v3278 = vsel %vm3264, %v3242, 0
  %v3281 = vsel %vm1009, %v3261, 0
  %3283 = vmatpush.bf16.msra.mxu0 0
  %3284 = vmatpush.bf16.msra.mxu0 0
  %3285 = vmatpush.bf16.msra.mxu0 0
  %3286 = vmatpush.bf16.msra.mxu0 0
  %3287 = vmatpush.bf16.msra.mxu0 0
  %3288 = vmatpush.bf16.msra.mxu0 %v3281
  %3289 = vmatpush.bf16.msra.mxu0 %v3259
  %3290 = vmatpush.bf16.msra.mxu0 %v3257
  %3291 = vmatmul.bf16.gmra.mxu0 %v3266
  %v3292 = vpop.f32.mrf.mxu0
  %v3293 = vadd.f32 0.0, %v3292
  %v3294 = vpop.f32.mrf.mxu0
  %v3295 = vadd.f32 0.0, %v3294
  %3296 = vmatmul.bf16.gmra.mxu0 %v3269
  %v3297 = vpop.f32.mrf.mxu0
  %v3298 = vadd.f32 0.0, %v3297
  %v3299 = vpop.f32.mrf.mxu0
  %v3300 = vadd.f32 0.0, %v3299
  %3301 = vmatmul.bf16.gmra.mxu0 %v3272
  %v3302 = vpop.f32.mrf.mxu0
  %v3303 = vadd.f32 0.0, %v3302
  %v3304 = vpop.f32.mrf.mxu0
  %v3305 = vadd.f32 0.0, %v3304
  %3306 = vmatmul.bf16.gmra.mxu0 %v3275
  %v3307 = vpop.f32.mrf.mxu0
  %v3308 = vadd.f32 0.0, %v3307
  %v3309 = vpop.f32.mrf.mxu0
  %v3310 = vadd.f32 0.0, %v3309
  %3311 = vmatmul.bf16.gmra.mxu0 %v3278
  %v3312 = vpop.f32.mrf.mxu0
  %v3313 = vadd.f32 0.0, %v3312
  %v3314 = vpop.f32.mrf.mxu0
  %v3315 = vadd.f32 0.0, %v3314
  %3316 = vdwg.mxu0
  %v3327 = vunpack.c.l.b16 %v3197
  %v3328 = vunpack.c.l.b16 %v3198
  %v3329 = vunpack.c.l.b16 %v3199
  %v3330 = vunpack.c.l.b16 %v3200
  %v3331 = vunpack.c.l.b16 %v3201
  %v3332 = vunpack.c.l.b16 %v3202
  %v3333 = vunpack.c.l.b16 %v3203
  %v3334 = vunpack.c.l.b16 %v3204
  %v3335 = vunpack.c.l.b16 %v3205
  %v3336 = vunpack.c.l.b16 %v3206
  %v3337 = vpack.c.b16 %v3328, %v3327
  %v3338 = vpack.c.b16 %v3330, %v3329
  %v3339 = vpack.c.b16 %v3332, %v3331
  %v3340 = vpack.c.b16 %v3334, %v3333
  %v3341 = vpack.c.b16 %v3336, %v3335
  %v3345 = vsel %vm3264, %v3337, 0
  %v3348 = vsel %vm3264, %v3338, 0
  %v3351 = vsel %vm3264, %v3339, 0
  %v3354 = vsel %vm3264, %v3340, 0
  %v3357 = vsel %vm3264, %v3341, 0
  %v3360 = vsel %vm1009, %v3255, 0
  %3362 = vmatpush.bf16.msra.mxu0 0
  %3363 = vmatpush.bf16.msra.mxu0 0
  %3364 = vmatpush.bf16.msra.mxu0 0
  %3365 = vmatpush.bf16.msra.mxu0 0
  %3366 = vmatpush.bf16.msra.mxu0 0
  %3367 = vmatpush.bf16.msra.mxu0 %v3360
  %3368 = vmatpush.bf16.msra.mxu0 %v3254
  %3369 = vmatpush.bf16.msra.mxu0 %v3253
  %3370 = vmatmul.bf16.gmra.mxu0 %v3345
  %v3371 = vpop.f32.mrf.mxu0
  %v3372 = vadd.f32 %v3293, %v3371
  %v3373 = vpop.f32.mrf.mxu0
  %v3374 = vadd.f32 %v3295, %v3373
  %3375 = vmatmul.bf16.gmra.mxu0 %v3348
  %v3376 = vpop.f32.mrf.mxu0
  %v3377 = vadd.f32 %v3298, %v3376
  %v3378 = vpop.f32.mrf.mxu0
  %v3379 = vadd.f32 %v3300, %v3378
  %3380 = vmatmul.bf16.gmra.mxu0 %v3351
  %v3381 = vpop.f32.mrf.mxu0
  %v3382 = vadd.f32 %v3303, %v3381
  %v3383 = vpop.f32.mrf.mxu0
  %v3384 = vadd.f32 %v3305, %v3383
  %3385 = vmatmul.bf16.gmra.mxu0 %v3354
  %v3386 = vpop.f32.mrf.mxu0
  %v3387 = vadd.f32 %v3308, %v3386
  %v3388 = vpop.f32.mrf.mxu0
  %v3389 = vadd.f32 %v3310, %v3388
  %3390 = vmatmul.bf16.gmra.mxu0 %v3357
  %v3391 = vpop.f32.mrf.mxu0
  %v3392 = vadd.f32 %v3313, %v3391
  %v3393 = vpop.f32.mrf.mxu0
  %v3394 = vadd.f32 %v3315, %v3393
  %3395 = vdwg.mxu0
  %s3396 = scalar_lea.vmem %s7, 80
  %v3397 = vld [vmem:[%s3396] sm:$0xf]
  %v3398 = vld [vmem:[%s3396 + $0x4] sm:$0xf]
  %v3399 = vld [vmem:[%s3396 + $0x8] sm:$0xf]
  %v3400 = vld [vmem:[%s3396 + $0xc] sm:$0xf]
  %v3401 = vld [vmem:[%s3396 + $0x10] sm:$0xf]
  %v3402 = vld [vmem:[%s3396 + $0x14] sm:$0xf]
  %v3403 = vld [vmem:[%s3396 + $0x18] sm:$0xf]
  %v3404 = vld [vmem:[%s3396 + $0x1c] sm:$0xf]
  %v3405 = vld [vmem:[%s3396 + $0x20] sm:$0xf]
  %v3406 = vld [vmem:[%s3396 + $0x24] sm:$0xf]
  %v3417 = vunpack.c.l.b16 %v3397
  %v3418 = vunpack.c.l.b16 %v3398
  %v3419 = vunpack.c.l.b16 %v3399
  %v3420 = vunpack.c.l.b16 %v3400
  %v3421 = vunpack.c.l.b16 %v3401
  %v3422 = vunpack.c.l.b16 %v3402
  %v3423 = vunpack.c.l.b16 %v3403
  %v3424 = vunpack.c.l.b16 %v3404
  %v3425 = vunpack.c.l.b16 %v3405
  %v3426 = vunpack.c.l.b16 %v3406
  %v3427 = vpack.c.b16 %v3418, %v3417
  %v3428 = vpack.c.b16 %v3420, %v3419
  %v3429 = vpack.c.b16 %v3422, %v3421
  %v3430 = vpack.c.b16 %v3424, %v3423
  %v3431 = vpack.c.b16 %v3426, %v3425
  %3432 = vrot.lane.b32.xlu0 %v3253, 126
  %v3433 = vpop.permute.xlu0 %3432
  %3434 = vrot.lane.b32.xlu0 %v3254, 126
  %v3435 = vpop.permute.xlu0 %3434
  %3436 = vrot.lane.b32.xlu0 %v3255, 126
  %v3437 = vpop.permute.xlu0 %3436
  %v3441 = vsel %vm3264, %v3427, 0
  %v3444 = vsel %vm3264, %v3428, 0
  %v3447 = vsel %vm3264, %v3429, 0
  %v3450 = vsel %vm3264, %v3430, 0
  %v3453 = vsel %vm3264, %v3431, 0
  %v3456 = vsel %vm1009, %v3437, 0
  %3458 = vmatpush.bf16.msra.mxu0 0
  %3459 = vmatpush.bf16.msra.mxu0 0
  %3460 = vmatpush.bf16.msra.mxu0 0
  %3461 = vmatpush.bf16.msra.mxu0 0
  %3462 = vmatpush.bf16.msra.mxu0 0
  %3463 = vmatpush.bf16.msra.mxu0 %v3456
  %3464 = vmatpush.bf16.msra.mxu0 %v3435
  %3465 = vmatpush.bf16.msra.mxu0 %v3433
  %3466 = vmatmul.bf16.gmra.mxu0 %v3441
  %v3467 = vpop.f32.mrf.mxu0
  %v3468 = vadd.f32 0.0, %v3467
  %v3469 = vpop.f32.mrf.mxu0
  %v3470 = vadd.f32 0.0, %v3469
  %3471 = vmatmul.bf16.gmra.mxu0 %v3444
  %v3472 = vpop.f32.mrf.mxu0
  %v3473 = vadd.f32 0.0, %v3472
  %v3474 = vpop.f32.mrf.mxu0
  %v3475 = vadd.f32 0.0, %v3474
  %3476 = vmatmul.bf16.gmra.mxu0 %v3447
  %v3477 = vpop.f32.mrf.mxu0
  %v3478 = vadd.f32 0.0, %v3477
  %v3479 = vpop.f32.mrf.mxu0
  %v3480 = vadd.f32 0.0, %v3479
  %3481 = vmatmul.bf16.gmra.mxu0 %v3450
  %v3482 = vpop.f32.mrf.mxu0
  %v3483 = vadd.f32 0.0, %v3482
  %v3484 = vpop.f32.mrf.mxu0
  %v3485 = vadd.f32 0.0, %v3484
  %3486 = vmatmul.bf16.gmra.mxu0 %v3453
  %v3487 = vpop.f32.mrf.mxu0
  %v3488 = vadd.f32 0.0, %v3487
  %v3489 = vpop.f32.mrf.mxu0
  %v3490 = vadd.f32 0.0, %v3489
  %3491 = vdwg.mxu0
  %v3492 = vadd.f32 %v3372, %v3468
  %v3493 = vadd.f32 %v3374, %v3470
  %v3494 = vadd.f32 %v3377, %v3473
  %v3495 = vadd.f32 %v3379, %v3475
  %v3496 = vadd.f32 %v3382, %v3478
  %v3497 = vadd.f32 %v3384, %v3480
  %v3498 = vadd.f32 %v3387, %v3483
  %v3499 = vadd.f32 %v3389, %v3485
  %v3500 = vadd.f32 %v3392, %v3488
  %v3501 = vadd.f32 %v3394, %v3490
  %s3502 = scalar_lea.vmem %s7, 120
  %v3503 = vld [vmem:[%s3502] sm:$0xf]
  %v3504 = vld [vmem:[%s3502 + $0x4] sm:$0xf]
  %v3505 = vld [vmem:[%s3502 + $0x8] sm:$0xf]
  %v3506 = vld [vmem:[%s3502 + $0xc] sm:$0xf]
  %v3507 = vld [vmem:[%s3502 + $0x10] sm:$0xf]
  %v3508 = vld [vmem:[%s3502 + $0x14] sm:$0xf]
  %v3509 = vld [vmem:[%s3502 + $0x18] sm:$0xf]
  %v3510 = vld [vmem:[%s3502 + $0x1c] sm:$0xf]
  %v3511 = vld [vmem:[%s3502 + $0x20] sm:$0xf]
  %v3512 = vld [vmem:[%s3502 + $0x24] sm:$0xf]
  %v3523 = vunpack.c.l.b16 %v3503
  %v3524 = vunpack.c.l.b16 %v3504
  %v3525 = vunpack.c.l.b16 %v3505
  %v3526 = vunpack.c.l.b16 %v3506
  %v3527 = vunpack.c.l.b16 %v3507
  %v3528 = vunpack.c.l.b16 %v3508
  %v3529 = vunpack.c.l.b16 %v3509
  %v3530 = vunpack.c.l.b16 %v3510
  %v3531 = vunpack.c.l.b16 %v3511
  %v3532 = vunpack.c.l.b16 %v3512
  %v3533 = vpack.c.b16 %v3524, %v3523
  %v3534 = vpack.c.b16 %v3526, %v3525
  %v3535 = vpack.c.b16 %v3528, %v3527
  %v3536 = vpack.c.b16 %v3530, %v3529
  %v3537 = vpack.c.b16 %v3532, %v3531
  %3538 = vrot.lane.b32.xlu0 %v3253, 122
  %v3539 = vpop.permute.xlu0 %3538
  %3540 = vrot.lane.b32.xlu0 %v3254, 122
  %v3541 = vpop.permute.xlu0 %3540
  %3542 = vrot.lane.b32.xlu0 %v3255, 122
  %v3543 = vpop.permute.xlu0 %3542
  %v3547 = vsel %vm3264, %v3533, 0
  %v3550 = vsel %vm3264, %v3534, 0
  %v3553 = vsel %vm3264, %v3535, 0
  %v3556 = vsel %vm3264, %v3536, 0
  %v3559 = vsel %vm3264, %v3537, 0
  %v3562 = vsel %vm1009, %v3543, 0
  %3564 = vmatpush.bf16.msra.mxu0 0
  %3565 = vmatpush.bf16.msra.mxu0 0
  %3566 = vmatpush.bf16.msra.mxu0 0
  %3567 = vmatpush.bf16.msra.mxu0 0
  %3568 = vmatpush.bf16.msra.mxu0 0
  %3569 = vmatpush.bf16.msra.mxu0 %v3562
  %3570 = vmatpush.bf16.msra.mxu0 %v3541
  %3571 = vmatpush.bf16.msra.mxu0 %v3539
  %3572 = vmatmul.bf16.gmra.mxu0 %v3547
  %v3573 = vpop.f32.mrf.mxu0
  %v3574 = vadd.f32 0.0, %v3573
  %v3575 = vpop.f32.mrf.mxu0
  %v3576 = vadd.f32 0.0, %v3575
  %3577 = vmatmul.bf16.gmra.mxu0 %v3550
  %v3578 = vpop.f32.mrf.mxu0
  %v3579 = vadd.f32 0.0, %v3578
  %v3580 = vpop.f32.mrf.mxu0
  %v3581 = vadd.f32 0.0, %v3580
  %3582 = vmatmul.bf16.gmra.mxu0 %v3553
  %v3583 = vpop.f32.mrf.mxu0
  %v3584 = vadd.f32 0.0, %v3583
  %v3585 = vpop.f32.mrf.mxu0
  %v3586 = vadd.f32 0.0, %v3585
  %3587 = vmatmul.bf16.gmra.mxu0 %v3556
  %v3588 = vpop.f32.mrf.mxu0
  %v3589 = vadd.f32 0.0, %v3588
  %v3590 = vpop.f32.mrf.mxu0
  %v3591 = vadd.f32 0.0, %v3590
  %3592 = vmatmul.bf16.gmra.mxu0 %v3559
  %v3593 = vpop.f32.mrf.mxu0
  %v3594 = vadd.f32 0.0, %v3593
  %v3595 = vpop.f32.mrf.mxu0
  %v3596 = vadd.f32 0.0, %v3595
  %3597 = vdwg.mxu0
  %v3598 = vadd.f32 %v3492, %v3574
  %v3599 = vadd.f32 %v3493, %v3576
  %v3600 = vadd.f32 %v3494, %v3579
  %v3601 = vadd.f32 %v3495, %v3581
  %v3602 = vadd.f32 %v3496, %v3584
  %v3603 = vadd.f32 %v3497, %v3586
  %v3604 = vadd.f32 %v3498, %v3589
  %v3605 = vadd.f32 %v3499, %v3591
  %v3606 = vadd.f32 %v3500, %v3594
  %v3607 = vadd.f32 %v3501, %v3596
  %s3608 = scalar_lea.vmem %s7, 160
  %v3609 = vld [vmem:[%s3608] sm:$0xf]
  %v3610 = vld [vmem:[%s3608 + $0x4] sm:$0xf]
  %v3611 = vld [vmem:[%s3608 + $0x8] sm:$0xf]
  %v3612 = vld [vmem:[%s3608 + $0xc] sm:$0xf]
  %v3613 = vld [vmem:[%s3608 + $0x10] sm:$0xf]
  %v3614 = vld [vmem:[%s3608 + $0x14] sm:$0xf]
  %v3615 = vld [vmem:[%s3608 + $0x18] sm:$0xf]
  %v3616 = vld [vmem:[%s3608 + $0x1c] sm:$0xf]
  %v3617 = vld [vmem:[%s3608 + $0x20] sm:$0xf]
  %v3618 = vld [vmem:[%s3608 + $0x24] sm:$0xf]
  %v3629 = vunpack.c.l.b16 %v3609
  %v3630 = vunpack.c.l.b16 %v3610
  %v3631 = vunpack.c.l.b16 %v3611
  %v3632 = vunpack.c.l.b16 %v3612
  %v3633 = vunpack.c.l.b16 %v3613
  %v3634 = vunpack.c.l.b16 %v3614
  %v3635 = vunpack.c.l.b16 %v3615
  %v3636 = vunpack.c.l.b16 %v3616
  %v3637 = vunpack.c.l.b16 %v3617
  %v3638 = vunpack.c.l.b16 %v3618
  %v3639 = vpack.c.b16 %v3630, %v3629
  %v3640 = vpack.c.b16 %v3632, %v3631
  %v3641 = vpack.c.b16 %v3634, %v3633
  %v3642 = vpack.c.b16 %v3636, %v3635
  %v3643 = vpack.c.b16 %v3638, %v3637
  %3644 = vrot.lane.b32.xlu0 %v3253, 121
  %v3645 = vpop.permute.xlu0 %3644
  %3646 = vrot.lane.b32.xlu0 %v3254, 121
  %v3647 = vpop.permute.xlu0 %3646
  %3648 = vrot.lane.b32.xlu0 %v3255, 121
  %v3649 = vpop.permute.xlu0 %3648
  %v3653 = vsel %vm3264, %v3639, 0
  %v3656 = vsel %vm3264, %v3640, 0
  %v3659 = vsel %vm3264, %v3641, 0
  %v3662 = vsel %vm3264, %v3642, 0
  %v3665 = vsel %vm3264, %v3643, 0
  %v3668 = vsel %vm1009, %v3649, 0
  %3670 = vmatpush.bf16.msra.mxu0 0
  %3671 = vmatpush.bf16.msra.mxu0 0
  %3672 = vmatpush.bf16.msra.mxu0 0
  %3673 = vmatpush.bf16.msra.mxu0 0
  %3674 = vmatpush.bf16.msra.mxu0 0
  %3675 = vmatpush.bf16.msra.mxu0 %v3668
  %3676 = vmatpush.bf16.msra.mxu0 %v3647
  %3677 = vmatpush.bf16.msra.mxu0 %v3645
  %3678 = vmatmul.bf16.gmra.mxu0 %v3653
  %v3679 = vpop.f32.mrf.mxu0
  %v3680 = vadd.f32 0.0, %v3679
  %v3681 = vpop.f32.mrf.mxu0
  %v3682 = vadd.f32 0.0, %v3681
  %3683 = vmatmul.bf16.gmra.mxu0 %v3656
  %v3684 = vpop.f32.mrf.mxu0
  %v3685 = vadd.f32 0.0, %v3684
  %v3686 = vpop.f32.mrf.mxu0
  %v3687 = vadd.f32 0.0, %v3686
  %3688 = vmatmul.bf16.gmra.mxu0 %v3659
  %v3689 = vpop.f32.mrf.mxu0
  %v3690 = vadd.f32 0.0, %v3689
  %v3691 = vpop.f32.mrf.mxu0
  %v3692 = vadd.f32 0.0, %v3691
  %3693 = vmatmul.bf16.gmra.mxu0 %v3662
  %v3694 = vpop.f32.mrf.mxu0
  %v3695 = vadd.f32 0.0, %v3694
  %v3696 = vpop.f32.mrf.mxu0
  %v3697 = vadd.f32 0.0, %v3696
  %3698 = vmatmul.bf16.gmra.mxu0 %v3665
  %v3699 = vpop.f32.mrf.mxu0
  %v3700 = vadd.f32 0.0, %v3699
  %v3701 = vpop.f32.mrf.mxu0
  %v3702 = vadd.f32 0.0, %v3701
  %3703 = vdwg.mxu0
  %v3704 = vadd.f32 %v3598, %v3680
  %v3705 = vadd.f32 %v3599, %v3682
  %v3706 = vadd.f32 %v3600, %v3685
  %v3707 = vadd.f32 %v3601, %v3687
  %v3708 = vadd.f32 %v3602, %v3690
  %v3709 = vadd.f32 %v3603, %v3692
  %v3710 = vadd.f32 %v3604, %v3695
  %v3711 = vadd.f32 %v3605, %v3697
  %v3712 = vadd.f32 %v3606, %v3700
  %v3713 = vadd.f32 %v3607, %v3702
  %s3714 = scalar_lea.vmem %s7, 200
  %v3715 = vld [vmem:[%s3714] sm:$0xf]
  %v3716 = vld [vmem:[%s3714 + $0x4] sm:$0xf]
  %v3717 = vld [vmem:[%s3714 + $0x8] sm:$0xf]
  %v3718 = vld [vmem:[%s3714 + $0xc] sm:$0xf]
  %v3719 = vld [vmem:[%s3714 + $0x10] sm:$0xf]
  %v3720 = vld [vmem:[%s3714 + $0x14] sm:$0xf]
  %v3721 = vld [vmem:[%s3714 + $0x18] sm:$0xf]
  %v3722 = vld [vmem:[%s3714 + $0x1c] sm:$0xf]
  %v3723 = vld [vmem:[%s3714 + $0x20] sm:$0xf]
  %v3724 = vld [vmem:[%s3714 + $0x24] sm:$0xf]
  %v3735 = vunpack.c.l.b16 %v3715
  %v3736 = vunpack.c.l.b16 %v3716
  %v3737 = vunpack.c.l.b16 %v3717
  %v3738 = vunpack.c.l.b16 %v3718
  %v3739 = vunpack.c.l.b16 %v3719
  %v3740 = vunpack.c.l.b16 %v3720
  %v3741 = vunpack.c.l.b16 %v3721
  %v3742 = vunpack.c.l.b16 %v3722
  %v3743 = vunpack.c.l.b16 %v3723
  %v3744 = vunpack.c.l.b16 %v3724
  %v3745 = vpack.c.b16 %v3736, %v3735
  %v3746 = vpack.c.b16 %v3738, %v3737
  %v3747 = vpack.c.b16 %v3740, %v3739
  %v3748 = vpack.c.b16 %v3742, %v3741
  %v3749 = vpack.c.b16 %v3744, %v3743
  %3750 = vrot.lane.b32.xlu0 %v3253, 120
  %v3751 = vpop.permute.xlu0 %3750
  %3752 = vrot.lane.b32.xlu0 %v3254, 120
  %v3753 = vpop.permute.xlu0 %3752
  %3754 = vrot.lane.b32.xlu0 %v3255, 120
  %v3755 = vpop.permute.xlu0 %3754
  %v3759 = vsel %vm3264, %v3745, 0
  %v3762 = vsel %vm3264, %v3746, 0
  %v3765 = vsel %vm3264, %v3747, 0
  %v3768 = vsel %vm3264, %v3748, 0
  %v3771 = vsel %vm3264, %v3749, 0
  %v3774 = vsel %vm1009, %v3755, 0
  %3776 = vmatpush.bf16.msra.mxu0 0
  %3777 = vmatpush.bf16.msra.mxu0 0
  %3778 = vmatpush.bf16.msra.mxu0 0
  %3779 = vmatpush.bf16.msra.mxu0 0
  %3780 = vmatpush.bf16.msra.mxu0 0
  %3781 = vmatpush.bf16.msra.mxu0 %v3774
  %3782 = vmatpush.bf16.msra.mxu0 %v3753
  %3783 = vmatpush.bf16.msra.mxu0 %v3751
  %3784 = vmatmul.bf16.gmra.mxu0 %v3759
  %v3785 = vpop.f32.mrf.mxu0
  %v3786 = vadd.f32 0.0, %v3785
  %v3787 = vpop.f32.mrf.mxu0
  %v3788 = vadd.f32 0.0, %v3787
  %3789 = vmatmul.bf16.gmra.mxu0 %v3762
  %v3790 = vpop.f32.mrf.mxu0
  %v3791 = vadd.f32 0.0, %v3790
  %v3792 = vpop.f32.mrf.mxu0
  %v3793 = vadd.f32 0.0, %v3792
  %3794 = vmatmul.bf16.gmra.mxu0 %v3765
  %v3795 = vpop.f32.mrf.mxu0
  %v3796 = vadd.f32 0.0, %v3795
  %v3797 = vpop.f32.mrf.mxu0
  %v3798 = vadd.f32 0.0, %v3797
  %3799 = vmatmul.bf16.gmra.mxu0 %v3768
  %v3800 = vpop.f32.mrf.mxu0
  %v3801 = vadd.f32 0.0, %v3800
  %v3802 = vpop.f32.mrf.mxu0
  %v3803 = vadd.f32 0.0, %v3802
  %3804 = vmatmul.bf16.gmra.mxu0 %v3771
  %v3805 = vpop.f32.mrf.mxu0
  %v3806 = vadd.f32 0.0, %v3805
  %v3807 = vpop.f32.mrf.mxu0
  %v3808 = vadd.f32 0.0, %v3807
  %3809 = vdwg.mxu0
  %v3810 = vadd.f32 %v3704, %v3786
  %v3811 = vadd.f32 %v3705, %v3788
  %v3812 = vadd.f32 %v3706, %v3791
  %v3813 = vadd.f32 %v3707, %v3793
  %v3814 = vadd.f32 %v3708, %v3796
  %v3815 = vadd.f32 %v3709, %v3798
  %v3816 = vadd.f32 %v3710, %v3801
  %v3817 = vadd.f32 %v3711, %v3803
  %v3818 = vadd.f32 %v3712, %v3806
  %v3819 = vadd.f32 %v3713, %v3808
  %s3820 = scalar_lea.vmem %s7, 240
  %v3821 = vld [vmem:[%s3820] sm:$0xf]
  %v3822 = vld [vmem:[%s3820 + $0x4] sm:$0xf]
  %v3823 = vld [vmem:[%s3820 + $0x8] sm:$0xf]
  %v3824 = vld [vmem:[%s3820 + $0xc] sm:$0xf]
  %v3825 = vld [vmem:[%s3820 + $0x10] sm:$0xf]
  %v3826 = vld [vmem:[%s3820 + $0x14] sm:$0xf]
  %v3827 = vld [vmem:[%s3820 + $0x18] sm:$0xf]
  %v3828 = vld [vmem:[%s3820 + $0x1c] sm:$0xf]
  %v3829 = vld [vmem:[%s3820 + $0x20] sm:$0xf]
  %v3830 = vld [vmem:[%s3820 + $0x24] sm:$0xf]
  %v3841 = vunpack.c.l.b16 %v3821
  %v3842 = vunpack.c.l.b16 %v3822
  %v3843 = vunpack.c.l.b16 %v3823
  %v3844 = vunpack.c.l.b16 %v3824
  %v3845 = vunpack.c.l.b16 %v3825
  %v3846 = vunpack.c.l.b16 %v3826
  %v3847 = vunpack.c.l.b16 %v3827
  %v3848 = vunpack.c.l.b16 %v3828
  %v3849 = vunpack.c.l.b16 %v3829
  %v3850 = vunpack.c.l.b16 %v3830
  %v3851 = vpack.c.b16 %v3842, %v3841
  %v3852 = vpack.c.b16 %v3844, %v3843
  %v3853 = vpack.c.b16 %v3846, %v3845
  %v3854 = vpack.c.b16 %v3848, %v3847
  %v3855 = vpack.c.b16 %v3850, %v3849
  %3856 = vrot.lane.b32.xlu0 %v3253, 116
  %v3857 = vpop.permute.xlu0 %3856
  %3858 = vrot.lane.b32.xlu0 %v3254, 116
  %v3859 = vpop.permute.xlu0 %3858
  %3860 = vrot.lane.b32.xlu0 %v3255, 116
  %v3861 = vpop.permute.xlu0 %3860
  %v3865 = vsel %vm3264, %v3851, 0
  %v3868 = vsel %vm3264, %v3852, 0
  %v3871 = vsel %vm3264, %v3853, 0
  %v3874 = vsel %vm3264, %v3854, 0
  %v3877 = vsel %vm3264, %v3855, 0
  %v3880 = vsel %vm1009, %v3861, 0
  %3882 = vmatpush.bf16.msra.mxu0 0
  %3883 = vmatpush.bf16.msra.mxu0 0
  %3884 = vmatpush.bf16.msra.mxu0 0
  %3885 = vmatpush.bf16.msra.mxu0 0
  %3886 = vmatpush.bf16.msra.mxu0 0
  %3887 = vmatpush.bf16.msra.mxu0 %v3880
  %3888 = vmatpush.bf16.msra.mxu0 %v3859
  %3889 = vmatpush.bf16.msra.mxu0 %v3857
  %3890 = vmatmul.bf16.gmra.mxu0 %v3865
  %v3891 = vpop.f32.mrf.mxu0
  %v3892 = vadd.f32 0.0, %v3891
  %v3893 = vpop.f32.mrf.mxu0
  %v3894 = vadd.f32 0.0, %v3893
  %3895 = vmatmul.bf16.gmra.mxu0 %v3868
  %v3896 = vpop.f32.mrf.mxu0
  %v3897 = vadd.f32 0.0, %v3896
  %v3898 = vpop.f32.mrf.mxu0
  %v3899 = vadd.f32 0.0, %v3898
  %3900 = vmatmul.bf16.gmra.mxu0 %v3871
  %v3901 = vpop.f32.mrf.mxu0
  %v3902 = vadd.f32 0.0, %v3901
  %v3903 = vpop.f32.mrf.mxu0
  %v3904 = vadd.f32 0.0, %v3903
  %3905 = vmatmul.bf16.gmra.mxu0 %v3874
  %v3906 = vpop.f32.mrf.mxu0
  %v3907 = vadd.f32 0.0, %v3906
  %v3908 = vpop.f32.mrf.mxu0
  %v3909 = vadd.f32 0.0, %v3908
  %3910 = vmatmul.bf16.gmra.mxu0 %v3877
  %v3911 = vpop.f32.mrf.mxu0
  %v3912 = vadd.f32 0.0, %v3911
  %v3913 = vpop.f32.mrf.mxu0
  %v3914 = vadd.f32 0.0, %v3913
  %3915 = vdwg.mxu0
  %v3916 = vadd.f32 %v3810, %v3892
  %v3917 = vadd.f32 %v3811, %v3894
  %v3918 = vadd.f32 %v3812, %v3897
  %v3919 = vadd.f32 %v3813, %v3899
  %v3920 = vadd.f32 %v3814, %v3902
  %v3921 = vadd.f32 %v3815, %v3904
  %v3922 = vadd.f32 %v3816, %v3907
  %v3923 = vadd.f32 %v3817, %v3909
  %v3924 = vadd.f32 %v3818, %v3912
  %v3925 = vadd.f32 %v3819, %v3914
  %s3926 = scalar_lea.vmem %s7, 280
  %v3927 = vld [vmem:[%s3926] sm:$0xf]
  %v3928 = vld [vmem:[%s3926 + $0x4] sm:$0xf]
  %v3929 = vld [vmem:[%s3926 + $0x8] sm:$0xf]
  %v3930 = vld [vmem:[%s3926 + $0xc] sm:$0xf]
  %v3931 = vld [vmem:[%s3926 + $0x10] sm:$0xf]
  %v3932 = vld [vmem:[%s3926 + $0x14] sm:$0xf]
  %v3933 = vld [vmem:[%s3926 + $0x18] sm:$0xf]
  %v3934 = vld [vmem:[%s3926 + $0x1c] sm:$0xf]
  %v3935 = vld [vmem:[%s3926 + $0x20] sm:$0xf]
  %v3936 = vld [vmem:[%s3926 + $0x24] sm:$0xf]
  %v3947 = vunpack.c.l.b16 %v3927
  %v3948 = vunpack.c.l.b16 %v3928
  %v3949 = vunpack.c.l.b16 %v3929
  %v3950 = vunpack.c.l.b16 %v3930
  %v3951 = vunpack.c.l.b16 %v3931
  %v3952 = vunpack.c.l.b16 %v3932
  %v3953 = vunpack.c.l.b16 %v3933
  %v3954 = vunpack.c.l.b16 %v3934
  %v3955 = vunpack.c.l.b16 %v3935
  %v3956 = vunpack.c.l.b16 %v3936
  %v3957 = vpack.c.b16 %v3948, %v3947
  %v3958 = vpack.c.b16 %v3950, %v3949
  %v3959 = vpack.c.b16 %v3952, %v3951
  %v3960 = vpack.c.b16 %v3954, %v3953
  %v3961 = vpack.c.b16 %v3956, %v3955
  %3962 = vrot.lane.b32.xlu0 %v3253, 115
  %v3963 = vpop.permute.xlu0 %3962
  %3964 = vrot.lane.b32.xlu0 %v3254, 115
  %v3965 = vpop.permute.xlu0 %3964
  %3966 = vrot.lane.b32.xlu0 %v3255, 115
  %v3967 = vpop.permute.xlu0 %3966
  %v3971 = vsel %vm3264, %v3957, 0
  %v3974 = vsel %vm3264, %v3958, 0
  %v3977 = vsel %vm3264, %v3959, 0
  %v3980 = vsel %vm3264, %v3960, 0
  %v3983 = vsel %vm3264, %v3961, 0
  %v3986 = vsel %vm1009, %v3967, 0
  %3988 = vmatpush.bf16.msra.mxu0 0
  %3989 = vmatpush.bf16.msra.mxu0 0
  %3990 = vmatpush.bf16.msra.mxu0 0
  %3991 = vmatpush.bf16.msra.mxu0 0
  %3992 = vmatpush.bf16.msra.mxu0 0
  %3993 = vmatpush.bf16.msra.mxu0 %v3986
  %3994 = vmatpush.bf16.msra.mxu0 %v3965
  %3995 = vmatpush.bf16.msra.mxu0 %v3963
  %3996 = vmatmul.bf16.gmra.mxu0 %v3971
  %v3997 = vpop.f32.mrf.mxu0
  %v3998 = vadd.f32 0.0, %v3997
  %v3999 = vpop.f32.mrf.mxu0
  %v4000 = vadd.f32 0.0, %v3999
  %4001 = vmatmul.bf16.gmra.mxu0 %v3974
  %v4002 = vpop.f32.mrf.mxu0
  %v4003 = vadd.f32 0.0, %v4002
  %v4004 = vpop.f32.mrf.mxu0
  %v4005 = vadd.f32 0.0, %v4004
  %4006 = vmatmul.bf16.gmra.mxu0 %v3977
  %v4007 = vpop.f32.mrf.mxu0
  %v4008 = vadd.f32 0.0, %v4007
  %v4009 = vpop.f32.mrf.mxu0
  %v4010 = vadd.f32 0.0, %v4009
  %4011 = vmatmul.bf16.gmra.mxu0 %v3980
  %v4012 = vpop.f32.mrf.mxu0
  %v4013 = vadd.f32 0.0, %v4012
  %v4014 = vpop.f32.mrf.mxu0
  %v4015 = vadd.f32 0.0, %v4014
  %4016 = vmatmul.bf16.gmra.mxu0 %v3983
  %v4017 = vpop.f32.mrf.mxu0
  %v4018 = vadd.f32 0.0, %v4017
  %v4019 = vpop.f32.mrf.mxu0
  %v4020 = vadd.f32 0.0, %v4019
  %4021 = vdwg.mxu0
  %v4022 = vadd.f32 %v3916, %v3998
  %v4023 = vadd.f32 %v3917, %v4000
  %v4024 = vadd.f32 %v3918, %v4003
  %v4025 = vadd.f32 %v3919, %v4005
  %v4026 = vadd.f32 %v3920, %v4008
  %v4027 = vadd.f32 %v3921, %v4010
  %v4028 = vadd.f32 %v3922, %v4013
  %v4029 = vadd.f32 %v3923, %v4015
  %v4030 = vadd.f32 %v3924, %v4018
  %v4031 = vadd.f32 %v3925, %v4020
  %s4032 = scalar_lea.vmem %s7, 320
  %v4033 = vld [vmem:[%s4032] sm:$0xf]
  %v4034 = vld [vmem:[%s4032 + $0x4] sm:$0xf]
  %v4035 = vld [vmem:[%s4032 + $0x8] sm:$0xf]
  %v4036 = vld [vmem:[%s4032 + $0xc] sm:$0xf]
  %v4037 = vld [vmem:[%s4032 + $0x10] sm:$0xf]
  %v4038 = vld [vmem:[%s4032 + $0x14] sm:$0xf]
  %v4039 = vld [vmem:[%s4032 + $0x18] sm:$0xf]
  %v4040 = vld [vmem:[%s4032 + $0x1c] sm:$0xf]
  %v4041 = vld [vmem:[%s4032 + $0x20] sm:$0xf]
  %v4042 = vld [vmem:[%s4032 + $0x24] sm:$0xf]
  %v4053 = vunpack.c.l.b16 %v4033
  %v4054 = vunpack.c.l.b16 %v4034
  %v4055 = vunpack.c.l.b16 %v4035
  %v4056 = vunpack.c.l.b16 %v4036
  %v4057 = vunpack.c.l.b16 %v4037
  %v4058 = vunpack.c.l.b16 %v4038
  %v4059 = vunpack.c.l.b16 %v4039
  %v4060 = vunpack.c.l.b16 %v4040
  %v4061 = vunpack.c.l.b16 %v4041
  %v4062 = vunpack.c.l.b16 %v4042
  %v4063 = vpack.c.b16 %v4054, %v4053
  %v4064 = vpack.c.b16 %v4056, %v4055
  %v4065 = vpack.c.b16 %v4058, %v4057
  %v4066 = vpack.c.b16 %v4060, %v4059
  %v4067 = vpack.c.b16 %v4062, %v4061
  %4068 = vrot.lane.b32.xlu0 %v3253, 114
  %v4069 = vpop.permute.xlu0 %4068
  %4070 = vrot.lane.b32.xlu0 %v3254, 114
  %v4071 = vpop.permute.xlu0 %4070
  %4072 = vrot.lane.b32.xlu0 %v3255, 114
  %v4073 = vpop.permute.xlu0 %4072
  %v4077 = vsel %vm3264, %v4063, 0
  %v4080 = vsel %vm3264, %v4064, 0
  %v4083 = vsel %vm3264, %v4065, 0
  %v4086 = vsel %vm3264, %v4066, 0
  %v4089 = vsel %vm3264, %v4067, 0
  %v4092 = vsel %vm1009, %v4073, 0
  %4094 = vmatpush.bf16.msra.mxu0 0
  %4095 = vmatpush.bf16.msra.mxu0 0
  %4096 = vmatpush.bf16.msra.mxu0 0
  %4097 = vmatpush.bf16.msra.mxu0 0
  %4098 = vmatpush.bf16.msra.mxu0 0
  %4099 = vmatpush.bf16.msra.mxu0 %v4092
  %4100 = vmatpush.bf16.msra.mxu0 %v4071
  %4101 = vmatpush.bf16.msra.mxu0 %v4069
  %4102 = vmatmul.bf16.gmra.mxu0 %v4077
  %v4103 = vpop.f32.mrf.mxu0
  %v4104 = vadd.f32 0.0, %v4103
  %v4105 = vpop.f32.mrf.mxu0
  %v4106 = vadd.f32 0.0, %v4105
  %4107 = vmatmul.bf16.gmra.mxu0 %v4080
  %v4108 = vpop.f32.mrf.mxu0
  %v4109 = vadd.f32 0.0, %v4108
  %v4110 = vpop.f32.mrf.mxu0
  %v4111 = vadd.f32 0.0, %v4110
  %4112 = vmatmul.bf16.gmra.mxu0 %v4083
  %v4113 = vpop.f32.mrf.mxu0
  %v4114 = vadd.f32 0.0, %v4113
  %v4115 = vpop.f32.mrf.mxu0
  %v4116 = vadd.f32 0.0, %v4115
  %4117 = vmatmul.bf16.gmra.mxu0 %v4086
  %v4118 = vpop.f32.mrf.mxu0
  %v4119 = vadd.f32 0.0, %v4118
  %v4120 = vpop.f32.mrf.mxu0
  %v4121 = vadd.f32 0.0, %v4120
  %4122 = vmatmul.bf16.gmra.mxu0 %v4089
  %v4123 = vpop.f32.mrf.mxu0
  %v4124 = vadd.f32 0.0, %v4123
  %v4125 = vpop.f32.mrf.mxu0
  %v4126 = vadd.f32 0.0, %v4125
  %4127 = vdwg.mxu0
  %v4128 = vadd.f32 %v4022, %v4104
  %v4129 = vadd.f32 %v4023, %v4106
  %v4130 = vadd.f32 %v4024, %v4109
  %v4131 = vadd.f32 %v4025, %v4111
  %v4132 = vadd.f32 %v4026, %v4114
  %v4133 = vadd.f32 %v4027, %v4116
  %v4134 = vadd.f32 %v4028, %v4119
  %v4135 = vadd.f32 %v4029, %v4121
  %v4136 = vadd.f32 %v4030, %v4124
  %v4137 = vadd.f32 %v4031, %v4126
  %v4138 = vld [vmem:[%s8] sm:$0xff]
  %v4139 = vld [vmem:[%s8 + $0x8] sm:$0xff]
  %v4140 = vld [vmem:[%s8 + $0x10] sm:$0xff]
  %v4141 = vld [vmem:[%s8 + $0x18] sm:$0xff]
  %v4142 = vld [vmem:[%s8 + $0x20] sm:$0xff]
  %v4143 = vld [vmem:[%s8 + $0x28] sm:$0xff]
  %v4144 = vld [vmem:[%s8 + $0x30] sm:$0xff]
  %v4145 = vld [vmem:[%s8 + $0x38] sm:$0xff]
  %v4146 = vld [vmem:[%s8 + $0x40] sm:$0xff]
  %v4147 = vld [vmem:[%s8 + $0x48] sm:$0xff]
  %4149 = vset.pattern.permute.xlu0 0
  %4150 = vperm.xlu0 %4149, %v4138
  %v4151 = vpop.permute.xlu0 %4150
  %4154 = vset.pattern.permute.xlu0 0
  %4155 = vperm.xlu0 %4154, %v4139
  %v4156 = vpop.permute.xlu0 %4155
  %4159 = vset.pattern.permute.xlu0 0
  %4160 = vperm.xlu0 %4159, %v4140
  %v4161 = vpop.permute.xlu0 %4160
  %4164 = vset.pattern.permute.xlu0 0
  %4165 = vperm.xlu0 %4164, %v4141
  %v4166 = vpop.permute.xlu0 %4165
  %4169 = vset.pattern.permute.xlu0 0
  %4170 = vperm.xlu0 %4169, %v4142
  %v4171 = vpop.permute.xlu0 %4170
  %4174 = vset.pattern.permute.xlu0 0
  %4175 = vperm.xlu0 %4174, %v4143
  %v4176 = vpop.permute.xlu0 %4175
  %4179 = vset.pattern.permute.xlu0 0
  %4180 = vperm.xlu0 %4179, %v4144
  %v4181 = vpop.permute.xlu0 %4180
  %4184 = vset.pattern.permute.xlu0 0
  %4185 = vperm.xlu0 %4184, %v4145
  %v4186 = vpop.permute.xlu0 %4185
  %4189 = vset.pattern.permute.xlu0 0
  %4190 = vperm.xlu0 %4189, %v4146
  %v4191 = vpop.permute.xlu0 %4190
  %4194 = vset.pattern.permute.xlu0 0
  %4195 = vperm.xlu0 %4194, %v4147
  %v4196 = vpop.permute.xlu0 %4195
  %v4198 = vadd.f32 %v4128, %v4151
  %v4199 = vadd.f32 %v4129, %v4156
  %v4200 = vadd.f32 %v4130, %v4161
  %v4201 = vadd.f32 %v4131, %v4166
  %v4202 = vadd.f32 %v4132, %v4171
  %v4203 = vadd.f32 %v4133, %v4176
  %v4204 = vadd.f32 %v4134, %v4181
  %v4205 = vadd.f32 %v4135, %v4186
  %v4206 = vadd.f32 %v4136, %v4191
  %v4207 = vadd.f32 %v4137, %v4196
  %vm4208 = vcmp.ge.f32.partialorder %v4198, 0.0
  %vm4209 = vcmp.ge.f32.partialorder %v4199, 0.0
  %vm4210 = vcmp.ge.f32.partialorder %v4200, 0.0
  %vm4211 = vcmp.ge.f32.partialorder %v4201, 0.0
  %vm4212 = vcmp.ge.f32.partialorder %v4202, 0.0
  %vm4213 = vcmp.ge.f32.partialorder %v4203, 0.0
  %vm4214 = vcmp.ge.f32.partialorder %v4204, 0.0
  %vm4215 = vcmp.ge.f32.partialorder %v4205, 0.0
  %vm4216 = vcmp.ge.f32.partialorder %v4206, 0.0
  %vm4217 = vcmp.ge.f32.partialorder %v4207, 0.0
  %v4218 = vmul.f32 %v919, %v4198
  %v4219 = vmul.f32 %v919, %v4199
  %v4220 = vmul.f32 %v919, %v4200
  %v4221 = vmul.f32 %v919, %v4201
  %v4222 = vmul.f32 %v919, %v4202
  %v4223 = vmul.f32 %v919, %v4203
  %v4224 = vmul.f32 %v919, %v4204
  %v4225 = vmul.f32 %v919, %v4205
  %v4226 = vmul.f32 %v919, %v4206
  %v4227 = vmul.f32 %v919, %v4207
  %v4228 = vsel %vm4208, %v4198, %v4218
  %v4229 = vsel %vm4209, %v4199, %v4219
  %v4230 = vsel %vm4210, %v4200, %v4220
  %v4231 = vsel %vm4211, %v4201, %v4221
  %v4232 = vsel %vm4212, %v4202, %v4222
  %v4233 = vsel %vm4213, %v4203, %v4223
  %v4234 = vsel %vm4214, %v4204, %v4224
  %v4235 = vsel %vm4215, %v4205, %v4225
  %v4236 = vsel %vm4216, %v4206, %v4226
  %v4237 = vsel %vm4217, %v4207, %v4227
  %4248 = vrot.lane.b32.xlu0 %v4228, 93
  %v4249 = vpop.permute.xlu0 %4248
  %4250 = vrot.lane.b32.xlu0 %v4229, 93
  %v4251 = vpop.permute.xlu0 %4250
  %4252 = vrot.lane.b32.xlu0 %v4230, 93
  %v4253 = vpop.permute.xlu0 %4252
  %4254 = vrot.lane.b32.xlu0 %v4231, 93
  %v4255 = vpop.permute.xlu0 %4254
  %4256 = vrot.lane.b32.xlu0 %v4232, 93
  %v4257 = vpop.permute.xlu0 %4256
  %4258 = vrot.lane.b32.xlu0 %v4233, 93
  %v4259 = vpop.permute.xlu0 %4258
  %4260 = vrot.lane.b32.xlu0 %v4234, 93
  %v4261 = vpop.permute.xlu0 %4260
  %4262 = vrot.lane.b32.xlu0 %v4235, 93
  %v4263 = vpop.permute.xlu0 %4262
  %4264 = vrot.lane.b32.xlu0 %v4236, 93
  %v4265 = vpop.permute.xlu0 %4264
  %4266 = vrot.lane.b32.xlu0 %v4237, 93
  %v4267 = vpop.permute.xlu0 %4266
  %v4278 = vsel %vm1800, %v4228, %v4249
  %v4279 = vsel %vm1800, %v4229, %v4251
  %v4280 = vsel %vm1800, %v4230, %v4253
  %v4281 = vsel %vm1800, %v4231, %v4255
  %v4282 = vsel %vm1800, %v4232, %v4257
  %v4283 = vsel %vm1800, %v4233, %v4259
  %v4284 = vsel %vm1800, %v4234, %v4261
  %v4285 = vsel %vm1800, %v4235, %v4263
  %v4286 = vsel %vm1800, %v4236, %v4265
  %v4287 = vsel %vm1800, %v4237, %v4267
  %v4288 = vpack.c.bf16 %v4279, %v4278
  %v4289 = vpack.c.bf16 %v4281, %v4280
  %v4290 = vpack.c.bf16 %v4283, %v4282
  %v4291 = vpack.c.bf16 %v4285, %v4284
  %v4292 = vpack.c.bf16 %v4287, %v4286
  %v4293 = vld [vmem:[%s9] sm:$0xf]
  %v4294 = vld [vmem:[%s9 + $0x4] sm:$0xf]
  %v4295 = vld [vmem:[%s9 + $0x8] sm:$0xf]
  %v4296 = vld [vmem:[%s9 + $0xc] sm:$0xf]
  %v4297 = vld [vmem:[%s9 + $0x10] sm:$0xf]
  %v4298 = vld [vmem:[%s9 + $0x14] sm:$0xf]
  %v4299 = vld [vmem:[%s9 + $0x18] sm:$0xf]
  %v4300 = vld [vmem:[%s9 + $0x1c] sm:$0xf]
  %v4301 = vld [vmem:[%s9 + $0x20] sm:$0xf]
  %v4302 = vld [vmem:[%s9 + $0x24] sm:$0xf]
  %v4303 = vld [vmem:[%s9 + $0x28] sm:$0xf]
  %v4304 = vld [vmem:[%s9 + $0x2c] sm:$0xf]
  %v4305 = vld [vmem:[%s9 + $0x30] sm:$0xf]
  %v4306 = vld [vmem:[%s9 + $0x34] sm:$0xf]
  %v4307 = vld [vmem:[%s9 + $0x38] sm:$0xf]
  %v4308 = vld [vmem:[%s9 + $0x3c] sm:$0xf]
  %4309 = vrot.lane.b32.xlu0 %v4228, 127
  %v4310 = vpop.permute.xlu0 %4309
  %4311 = vrot.lane.b32.xlu0 %v4229, 127
  %v4312 = vpop.permute.xlu0 %4311
  %4313 = vrot.lane.b32.xlu0 %v4230, 127
  %v4314 = vpop.permute.xlu0 %4313
  %4315 = vrot.lane.b32.xlu0 %v4231, 127
  %v4316 = vpop.permute.xlu0 %4315
  %4317 = vrot.lane.b32.xlu0 %v4232, 127
  %v4318 = vpop.permute.xlu0 %4317
  %4319 = vrot.lane.b32.xlu0 %v4233, 127
  %v4320 = vpop.permute.xlu0 %4319
  %4321 = vrot.lane.b32.xlu0 %v4234, 127
  %v4322 = vpop.permute.xlu0 %4321
  %4323 = vrot.lane.b32.xlu0 %v4235, 127
  %v4324 = vpop.permute.xlu0 %4323
  %4325 = vrot.lane.b32.xlu0 %v4236, 127
  %v4326 = vpop.permute.xlu0 %4325
  %4327 = vrot.lane.b32.xlu0 %v4237, 127
  %v4328 = vpop.permute.xlu0 %4327
  %4339 = vrot.lane.b32.xlu0 %v4228, 92
  %v4340 = vpop.permute.xlu0 %4339
  %4341 = vrot.lane.b32.xlu0 %v4229, 92
  %v4342 = vpop.permute.xlu0 %4341
  %4343 = vrot.lane.b32.xlu0 %v4230, 92
  %v4344 = vpop.permute.xlu0 %4343
  %4345 = vrot.lane.b32.xlu0 %v4231, 92
  %v4346 = vpop.permute.xlu0 %4345
  %4347 = vrot.lane.b32.xlu0 %v4232, 92
  %v4348 = vpop.permute.xlu0 %4347
  %4349 = vrot.lane.b32.xlu0 %v4233, 92
  %v4350 = vpop.permute.xlu0 %4349
  %4351 = vrot.lane.b32.xlu0 %v4234, 92
  %v4352 = vpop.permute.xlu0 %4351
  %4353 = vrot.lane.b32.xlu0 %v4235, 92
  %v4354 = vpop.permute.xlu0 %4353
  %4355 = vrot.lane.b32.xlu0 %v4236, 92
  %v4356 = vpop.permute.xlu0 %4355
  %4357 = vrot.lane.b32.xlu0 %v4237, 92
  %v4358 = vpop.permute.xlu0 %4357
  %v4369 = vsel %vm1800, %v4310, %v4340
  %v4370 = vsel %vm1800, %v4312, %v4342
  %v4371 = vsel %vm1800, %v4314, %v4344
  %v4372 = vsel %vm1800, %v4316, %v4346
  %v4373 = vsel %vm1800, %v4318, %v4348
  %v4374 = vsel %vm1800, %v4320, %v4350
  %v4375 = vsel %vm1800, %v4322, %v4352
  %v4376 = vsel %vm1800, %v4324, %v4354
  %v4377 = vsel %vm1800, %v4326, %v4356
  %v4378 = vsel %vm1800, %v4328, %v4358
  %v4379 = vpack.c.bf16 %v4370, %v4369
  %v4380 = vpack.c.bf16 %v4372, %v4371
  %v4381 = vpack.c.bf16 %v4374, %v4373
  %v4382 = vpack.c.bf16 %v4376, %v4375
  %v4383 = vpack.c.bf16 %v4378, %v4377
  %s4384 = scalar_lea.vmem %s9, 64
  %v4385 = vld [vmem:[%s4384] sm:$0xf]
  %v4386 = vld [vmem:[%s4384 + $0x4] sm:$0xf]
  %v4387 = vld [vmem:[%s4384 + $0x8] sm:$0xf]
  %v4388 = vld [vmem:[%s4384 + $0xc] sm:$0xf]
  %v4389 = vld [vmem:[%s4384 + $0x10] sm:$0xf]
  %v4390 = vld [vmem:[%s4384 + $0x14] sm:$0xf]
  %v4391 = vld [vmem:[%s4384 + $0x18] sm:$0xf]
  %v4392 = vld [vmem:[%s4384 + $0x1c] sm:$0xf]
  %v4393 = vld [vmem:[%s4384 + $0x20] sm:$0xf]
  %v4394 = vld [vmem:[%s4384 + $0x24] sm:$0xf]
  %v4395 = vld [vmem:[%s4384 + $0x28] sm:$0xf]
  %v4396 = vld [vmem:[%s4384 + $0x2c] sm:$0xf]
  %v4397 = vld [vmem:[%s4384 + $0x30] sm:$0xf]
  %v4398 = vld [vmem:[%s4384 + $0x34] sm:$0xf]
  %v4399 = vld [vmem:[%s4384 + $0x38] sm:$0xf]
  %v4400 = vld [vmem:[%s4384 + $0x3c] sm:$0xf]
  %v4417 = vunpack.c.l.b16 %v4385
  %v4418 = vunpack.c.l.b16 %v4386
  %v4419 = vunpack.c.l.b16 %v4387
  %v4420 = vunpack.c.l.b16 %v4388
  %v4421 = vunpack.c.l.b16 %v4389
  %v4422 = vunpack.c.l.b16 %v4390
  %v4423 = vunpack.c.l.b16 %v4391
  %v4424 = vunpack.c.l.b16 %v4392
  %v4425 = vunpack.c.l.b16 %v4393
  %v4426 = vunpack.c.l.b16 %v4394
  %v4427 = vunpack.c.l.b16 %v4395
  %v4428 = vunpack.c.l.b16 %v4396
  %v4429 = vunpack.c.l.b16 %v4397
  %v4430 = vunpack.c.l.b16 %v4398
  %v4431 = vunpack.c.l.b16 %v4399
  %v4432 = vunpack.c.l.b16 %v4400
  %v4433 = vpack.c.b16 %v4418, %v4417
  %v4434 = vpack.c.b16 %v4420, %v4419
  %v4435 = vpack.c.b16 %v4422, %v4421
  %v4436 = vpack.c.b16 %v4424, %v4423
  %v4437 = vpack.c.b16 %v4426, %v4425
  %v4438 = vpack.c.b16 %v4428, %v4427
  %v4439 = vpack.c.b16 %v4430, %v4429
  %v4440 = vpack.c.b16 %v4432, %v4431
  %vm4441 = vcmask 654336
  %v4443 = vsel %vm4441, %v4433, 0
  %v4446 = vsel %vm4441, %v4434, 0
  %v4449 = vsel %vm4441, %v4435, 0
  %v4452 = vsel %vm4441, %v4436, 0
  %v4455 = vsel %vm4441, %v4437, 0
  %v4458 = vsel %vm4441, %v4438, 0
  %v4461 = vsel %vm4441, %v4439, 0
  %v4464 = vsel %vm4441, %v4440, 0
  %4466 = vmatpush.bf16.msra.mxu0 0
  %4467 = vmatpush.bf16.msra.mxu0 0
  %4468 = vmatpush.bf16.msra.mxu0 0
  %4469 = vmatpush.bf16.msra.mxu0 %v4383
  %4470 = vmatpush.bf16.msra.mxu0 %v4382
  %4471 = vmatpush.bf16.msra.mxu0 %v4381
  %4472 = vmatpush.bf16.msra.mxu0 %v4380
  %4473 = vmatpush.bf16.msra.mxu0 %v4379
  %4474 = vmatmul.bf16.gmra.mxu0 %v4443
  %v4475 = vpop.f32.mrf.mxu0
  %v4476 = vadd.f32 0.0, %v4475
  %v4477 = vpop.f32.mrf.mxu0
  %v4478 = vadd.f32 0.0, %v4477
  %4479 = vmatmul.bf16.gmra.mxu0 %v4446
  %v4480 = vpop.f32.mrf.mxu0
  %v4481 = vadd.f32 0.0, %v4480
  %v4482 = vpop.f32.mrf.mxu0
  %v4483 = vadd.f32 0.0, %v4482
  %4484 = vmatmul.bf16.gmra.mxu0 %v4449
  %v4485 = vpop.f32.mrf.mxu0
  %v4486 = vadd.f32 0.0, %v4485
  %v4487 = vpop.f32.mrf.mxu0
  %v4488 = vadd.f32 0.0, %v4487
  %4489 = vmatmul.bf16.gmra.mxu0 %v4452
  %v4490 = vpop.f32.mrf.mxu0
  %v4491 = vadd.f32 0.0, %v4490
  %v4492 = vpop.f32.mrf.mxu0
  %v4493 = vadd.f32 0.0, %v4492
  %4494 = vmatmul.bf16.gmra.mxu0 %v4455
  %v4495 = vpop.f32.mrf.mxu0
  %v4496 = vadd.f32 0.0, %v4495
  %v4497 = vpop.f32.mrf.mxu0
  %v4498 = vadd.f32 0.0, %v4497
  %4499 = vmatmul.bf16.gmra.mxu0 %v4458
  %v4500 = vpop.f32.mrf.mxu0
  %v4501 = vadd.f32 0.0, %v4500
  %v4502 = vpop.f32.mrf.mxu0
  %v4503 = vadd.f32 0.0, %v4502
  %4504 = vmatmul.bf16.gmra.mxu0 %v4461
  %v4505 = vpop.f32.mrf.mxu0
  %v4506 = vadd.f32 0.0, %v4505
  %v4507 = vpop.f32.mrf.mxu0
  %v4508 = vadd.f32 0.0, %v4507
  %4509 = vmatmul.bf16.gmra.mxu0 %v4464
  %v4510 = vpop.f32.mrf.mxu0
  %v4511 = vadd.f32 0.0, %v4510
  %v4512 = vpop.f32.mrf.mxu0
  %v4513 = vadd.f32 0.0, %v4512
  %4514 = vdwg.mxu0
  %v4531 = vunpack.c.l.b16 %v4293
  %v4532 = vunpack.c.l.b16 %v4294
  %v4533 = vunpack.c.l.b16 %v4295
  %v4534 = vunpack.c.l.b16 %v4296
  %v4535 = vunpack.c.l.b16 %v4297
  %v4536 = vunpack.c.l.b16 %v4298
  %v4537 = vunpack.c.l.b16 %v4299
  %v4538 = vunpack.c.l.b16 %v4300
  %v4539 = vunpack.c.l.b16 %v4301
  %v4540 = vunpack.c.l.b16 %v4302
  %v4541 = vunpack.c.l.b16 %v4303
  %v4542 = vunpack.c.l.b16 %v4304
  %v4543 = vunpack.c.l.b16 %v4305
  %v4544 = vunpack.c.l.b16 %v4306
  %v4545 = vunpack.c.l.b16 %v4307
  %v4546 = vunpack.c.l.b16 %v4308
  %v4547 = vpack.c.b16 %v4532, %v4531
  %v4548 = vpack.c.b16 %v4534, %v4533
  %v4549 = vpack.c.b16 %v4536, %v4535
  %v4550 = vpack.c.b16 %v4538, %v4537
  %v4551 = vpack.c.b16 %v4540, %v4539
  %v4552 = vpack.c.b16 %v4542, %v4541
  %v4553 = vpack.c.b16 %v4544, %v4543
  %v4554 = vpack.c.b16 %v4546, %v4545
  %v4556 = vsel %vm4441, %v4547, 0
  %v4559 = vsel %vm4441, %v4548, 0
  %v4562 = vsel %vm4441, %v4549, 0
  %v4565 = vsel %vm4441, %v4550, 0
  %v4568 = vsel %vm4441, %v4551, 0
  %v4571 = vsel %vm4441, %v4552, 0
  %v4574 = vsel %vm4441, %v4553, 0
  %v4577 = vsel %vm4441, %v4554, 0
  %4579 = vmatpush.bf16.msra.mxu0 0
  %4580 = vmatpush.bf16.msra.mxu0 0
  %4581 = vmatpush.bf16.msra.mxu0 0
  %4582 = vmatpush.bf16.msra.mxu0 %v4292
  %4583 = vmatpush.bf16.msra.mxu0 %v4291
  %4584 = vmatpush.bf16.msra.mxu0 %v4290
  %4585 = vmatpush.bf16.msra.mxu0 %v4289
  %4586 = vmatpush.bf16.msra.mxu0 %v4288
  %4587 = vmatmul.bf16.gmra.mxu0 %v4556
  %v4588 = vpop.f32.mrf.mxu0
  %v4589 = vadd.f32 %v4476, %v4588
  %v4590 = vpop.f32.mrf.mxu0
  %v4591 = vadd.f32 %v4478, %v4590
  %4592 = vmatmul.bf16.gmra.mxu0 %v4559
  %v4593 = vpop.f32.mrf.mxu0
  %v4594 = vadd.f32 %v4481, %v4593
  %v4595 = vpop.f32.mrf.mxu0
  %v4596 = vadd.f32 %v4483, %v4595
  %4597 = vmatmul.bf16.gmra.mxu0 %v4562
  %v4598 = vpop.f32.mrf.mxu0
  %v4599 = vadd.f32 %v4486, %v4598
  %v4600 = vpop.f32.mrf.mxu0
  %v4601 = vadd.f32 %v4488, %v4600
  %4602 = vmatmul.bf16.gmra.mxu0 %v4565
  %v4603 = vpop.f32.mrf.mxu0
  %v4604 = vadd.f32 %v4491, %v4603
  %v4605 = vpop.f32.mrf.mxu0
  %v4606 = vadd.f32 %v4493, %v4605
  %4607 = vmatmul.bf16.gmra.mxu0 %v4568
  %v4608 = vpop.f32.mrf.mxu0
  %v4609 = vadd.f32 %v4496, %v4608
  %v4610 = vpop.f32.mrf.mxu0
  %v4611 = vadd.f32 %v4498, %v4610
  %4612 = vmatmul.bf16.gmra.mxu0 %v4571
  %v4613 = vpop.f32.mrf.mxu0
  %v4614 = vadd.f32 %v4501, %v4613
  %v4615 = vpop.f32.mrf.mxu0
  %v4616 = vadd.f32 %v4503, %v4615
  %4617 = vmatmul.bf16.gmra.mxu0 %v4574
  %v4618 = vpop.f32.mrf.mxu0
  %v4619 = vadd.f32 %v4506, %v4618
  %v4620 = vpop.f32.mrf.mxu0
  %v4621 = vadd.f32 %v4508, %v4620
  %4622 = vmatmul.bf16.gmra.mxu0 %v4577
  %v4623 = vpop.f32.mrf.mxu0
  %v4624 = vadd.f32 %v4511, %v4623
  %v4625 = vpop.f32.mrf.mxu0
  %v4626 = vadd.f32 %v4513, %v4625
  %4627 = vdwg.mxu0
  %4628 = vrot.lane.b32.xlu0 %v4228, 126
  %v4629 = vpop.permute.xlu0 %4628
  %4630 = vrot.lane.b32.xlu0 %v4229, 126
  %v4631 = vpop.permute.xlu0 %4630
  %4632 = vrot.lane.b32.xlu0 %v4230, 126
  %v4633 = vpop.permute.xlu0 %4632
  %4634 = vrot.lane.b32.xlu0 %v4231, 126
  %v4635 = vpop.permute.xlu0 %4634
  %4636 = vrot.lane.b32.xlu0 %v4232, 126
  %v4637 = vpop.permute.xlu0 %4636
  %4638 = vrot.lane.b32.xlu0 %v4233, 126
  %v4639 = vpop.permute.xlu0 %4638
  %4640 = vrot.lane.b32.xlu0 %v4234, 126
  %v4641 = vpop.permute.xlu0 %4640
  %4642 = vrot.lane.b32.xlu0 %v4235, 126
  %v4643 = vpop.permute.xlu0 %4642
  %4644 = vrot.lane.b32.xlu0 %v4236, 126
  %v4645 = vpop.permute.xlu0 %4644
  %4646 = vrot.lane.b32.xlu0 %v4237, 126
  %v4647 = vpop.permute.xlu0 %4646
  %4658 = vrot.lane.b32.xlu0 %v4228, 91
  %v4659 = vpop.permute.xlu0 %4658
  %4660 = vrot.lane.b32.xlu0 %v4229, 91
  %v4661 = vpop.permute.xlu0 %4660
  %4662 = vrot.lane.b32.xlu0 %v4230, 91
  %v4663 = vpop.permute.xlu0 %4662
  %4664 = vrot.lane.b32.xlu0 %v4231, 91
  %v4665 = vpop.permute.xlu0 %4664
  %4666 = vrot.lane.b32.xlu0 %v4232, 91
  %v4667 = vpop.permute.xlu0 %4666
  %4668 = vrot.lane.b32.xlu0 %v4233, 91
  %v4669 = vpop.permute.xlu0 %4668
  %4670 = vrot.lane.b32.xlu0 %v4234, 91
  %v4671 = vpop.permute.xlu0 %4670
  %4672 = vrot.lane.b32.xlu0 %v4235, 91
  %v4673 = vpop.permute.xlu0 %4672
  %4674 = vrot.lane.b32.xlu0 %v4236, 91
  %v4675 = vpop.permute.xlu0 %4674
  %4676 = vrot.lane.b32.xlu0 %v4237, 91
  %v4677 = vpop.permute.xlu0 %4676
  %v4688 = vsel %vm1800, %v4629, %v4659
  %v4689 = vsel %vm1800, %v4631, %v4661
  %v4690 = vsel %vm1800, %v4633, %v4663
  %v4691 = vsel %vm1800, %v4635, %v4665
  %v4692 = vsel %vm1800, %v4637, %v4667
  %v4693 = vsel %vm1800, %v4639, %v4669
  %v4694 = vsel %vm1800, %v4641, %v4671
  %v4695 = vsel %vm1800, %v4643, %v4673
  %v4696 = vsel %vm1800, %v4645, %v4675
  %v4697 = vsel %vm1800, %v4647, %v4677
  %v4698 = vpack.c.bf16 %v4689, %v4688
  %v4699 = vpack.c.bf16 %v4691, %v4690
  %v4700 = vpack.c.bf16 %v4693, %v4692
  %v4701 = vpack.c.bf16 %v4695, %v4694
  %v4702 = vpack.c.bf16 %v4697, %v4696
  %s4703 = scalar_lea.vmem %s9, 128
  %v4704 = vld [vmem:[%s4703] sm:$0xf]
  %v4705 = vld [vmem:[%s4703 + $0x4] sm:$0xf]
  %v4706 = vld [vmem:[%s4703 + $0x8] sm:$0xf]
  %v4707 = vld [vmem:[%s4703 + $0xc] sm:$0xf]
  %v4708 = vld [vmem:[%s4703 + $0x10] sm:$0xf]
  %v4709 = vld [vmem:[%s4703 + $0x14] sm:$0xf]
  %v4710 = vld [vmem:[%s4703 + $0x18] sm:$0xf]
  %v4711 = vld [vmem:[%s4703 + $0x1c] sm:$0xf]
  %v4712 = vld [vmem:[%s4703 + $0x20] sm:$0xf]
  %v4713 = vld [vmem:[%s4703 + $0x24] sm:$0xf]
  %v4714 = vld [vmem:[%s4703 + $0x28] sm:$0xf]
  %v4715 = vld [vmem:[%s4703 + $0x2c] sm:$0xf]
  %v4716 = vld [vmem:[%s4703 + $0x30] sm:$0xf]
  %v4717 = vld [vmem:[%s4703 + $0x34] sm:$0xf]
  %v4718 = vld [vmem:[%s4703 + $0x38] sm:$0xf]
  %v4719 = vld [vmem:[%s4703 + $0x3c] sm:$0xf]
  %v4736 = vunpack.c.l.b16 %v4704
  %v4737 = vunpack.c.l.b16 %v4705
  %v4738 = vunpack.c.l.b16 %v4706
  %v4739 = vunpack.c.l.b16 %v4707
  %v4740 = vunpack.c.l.b16 %v4708
  %v4741 = vunpack.c.l.b16 %v4709
  %v4742 = vunpack.c.l.b16 %v4710
  %v4743 = vunpack.c.l.b16 %v4711
  %v4744 = vunpack.c.l.b16 %v4712
  %v4745 = vunpack.c.l.b16 %v4713
  %v4746 = vunpack.c.l.b16 %v4714
  %v4747 = vunpack.c.l.b16 %v4715
  %v4748 = vunpack.c.l.b16 %v4716
  %v4749 = vunpack.c.l.b16 %v4717
  %v4750 = vunpack.c.l.b16 %v4718
  %v4751 = vunpack.c.l.b16 %v4719
  %v4752 = vpack.c.b16 %v4737, %v4736
  %v4753 = vpack.c.b16 %v4739, %v4738
  %v4754 = vpack.c.b16 %v4741, %v4740
  %v4755 = vpack.c.b16 %v4743, %v4742
  %v4756 = vpack.c.b16 %v4745, %v4744
  %v4757 = vpack.c.b16 %v4747, %v4746
  %v4758 = vpack.c.b16 %v4749, %v4748
  %v4759 = vpack.c.b16 %v4751, %v4750
  %v4761 = vsel %vm4441, %v4752, 0
  %v4764 = vsel %vm4441, %v4753, 0
  %v4767 = vsel %vm4441, %v4754, 0
  %v4770 = vsel %vm4441, %v4755, 0
  %v4773 = vsel %vm4441, %v4756, 0
  %v4776 = vsel %vm4441, %v4757, 0
  %v4779 = vsel %vm4441, %v4758, 0
  %v4782 = vsel %vm4441, %v4759, 0
  %4784 = vmatpush.bf16.msra.mxu0 0
  %4785 = vmatpush.bf16.msra.mxu0 0
  %4786 = vmatpush.bf16.msra.mxu0 0
  %4787 = vmatpush.bf16.msra.mxu0 %v4702
  %4788 = vmatpush.bf16.msra.mxu0 %v4701
  %4789 = vmatpush.bf16.msra.mxu0 %v4700
  %4790 = vmatpush.bf16.msra.mxu0 %v4699
  %4791 = vmatpush.bf16.msra.mxu0 %v4698
  %4792 = vmatmul.bf16.gmra.mxu0 %v4761
  %v4793 = vpop.f32.mrf.mxu0
  %v4794 = vadd.f32 0.0, %v4793
  %v4795 = vpop.f32.mrf.mxu0
  %v4796 = vadd.f32 0.0, %v4795
  %4797 = vmatmul.bf16.gmra.mxu0 %v4764
  %v4798 = vpop.f32.mrf.mxu0
  %v4799 = vadd.f32 0.0, %v4798
  %v4800 = vpop.f32.mrf.mxu0
  %v4801 = vadd.f32 0.0, %v4800
  %4802 = vmatmul.bf16.gmra.mxu0 %v4767
  %v4803 = vpop.f32.mrf.mxu0
  %v4804 = vadd.f32 0.0, %v4803
  %v4805 = vpop.f32.mrf.mxu0
  %v4806 = vadd.f32 0.0, %v4805
  %4807 = vmatmul.bf16.gmra.mxu0 %v4770
  %v4808 = vpop.f32.mrf.mxu0
  %v4809 = vadd.f32 0.0, %v4808
  %v4810 = vpop.f32.mrf.mxu0
  %v4811 = vadd.f32 0.0, %v4810
  %4812 = vmatmul.bf16.gmra.mxu0 %v4773
  %v4813 = vpop.f32.mrf.mxu0
  %v4814 = vadd.f32 0.0, %v4813
  %v4815 = vpop.f32.mrf.mxu0
  %v4816 = vadd.f32 0.0, %v4815
  %4817 = vmatmul.bf16.gmra.mxu0 %v4776
  %v4818 = vpop.f32.mrf.mxu0
  %v4819 = vadd.f32 0.0, %v4818
  %v4820 = vpop.f32.mrf.mxu0
  %v4821 = vadd.f32 0.0, %v4820
  %4822 = vmatmul.bf16.gmra.mxu0 %v4779
  %v4823 = vpop.f32.mrf.mxu0
  %v4824 = vadd.f32 0.0, %v4823
  %v4825 = vpop.f32.mrf.mxu0
  %v4826 = vadd.f32 0.0, %v4825
  %4827 = vmatmul.bf16.gmra.mxu0 %v4782
  %v4828 = vpop.f32.mrf.mxu0
  %v4829 = vadd.f32 0.0, %v4828
  %v4830 = vpop.f32.mrf.mxu0
  %v4831 = vadd.f32 0.0, %v4830
  %4832 = vdwg.mxu0
  %v4833 = vadd.f32 %v4589, %v4794
  %v4834 = vadd.f32 %v4591, %v4796
  %v4835 = vadd.f32 %v4594, %v4799
  %v4836 = vadd.f32 %v4596, %v4801
  %v4837 = vadd.f32 %v4599, %v4804
  %v4838 = vadd.f32 %v4601, %v4806
  %v4839 = vadd.f32 %v4604, %v4809
  %v4840 = vadd.f32 %v4606, %v4811
  %v4841 = vadd.f32 %v4609, %v4814
  %v4842 = vadd.f32 %v4611, %v4816
  %v4843 = vadd.f32 %v4614, %v4819
  %v4844 = vadd.f32 %v4616, %v4821
  %v4845 = vadd.f32 %v4619, %v4824
  %v4846 = vadd.f32 %v4621, %v4826
  %v4847 = vadd.f32 %v4624, %v4829
  %v4848 = vadd.f32 %v4626, %v4831
  %4849 = vrot.lane.b32.xlu0 %v4228, 125
  %v4850 = vpop.permute.xlu0 %4849
  %4851 = vrot.lane.b32.xlu0 %v4229, 125
  %v4852 = vpop.permute.xlu0 %4851
  %4853 = vrot.lane.b32.xlu0 %v4230, 125
  %v4854 = vpop.permute.xlu0 %4853
  %4855 = vrot.lane.b32.xlu0 %v4231, 125
  %v4856 = vpop.permute.xlu0 %4855
  %4857 = vrot.lane.b32.xlu0 %v4232, 125
  %v4858 = vpop.permute.xlu0 %4857
  %4859 = vrot.lane.b32.xlu0 %v4233, 125
  %v4860 = vpop.permute.xlu0 %4859
  %4861 = vrot.lane.b32.xlu0 %v4234, 125
  %v4862 = vpop.permute.xlu0 %4861
  %4863 = vrot.lane.b32.xlu0 %v4235, 125
  %v4864 = vpop.permute.xlu0 %4863
  %4865 = vrot.lane.b32.xlu0 %v4236, 125
  %v4866 = vpop.permute.xlu0 %4865
  %4867 = vrot.lane.b32.xlu0 %v4237, 125
  %v4868 = vpop.permute.xlu0 %4867
  %4879 = vrot.lane.b32.xlu0 %v4228, 90
  %v4880 = vpop.permute.xlu0 %4879
  %4881 = vrot.lane.b32.xlu0 %v4229, 90
  %v4882 = vpop.permute.xlu0 %4881
  %4883 = vrot.lane.b32.xlu0 %v4230, 90
  %v4884 = vpop.permute.xlu0 %4883
  %4885 = vrot.lane.b32.xlu0 %v4231, 90
  %v4886 = vpop.permute.xlu0 %4885
  %4887 = vrot.lane.b32.xlu0 %v4232, 90
  %v4888 = vpop.permute.xlu0 %4887
  %4889 = vrot.lane.b32.xlu0 %v4233, 90
  %v4890 = vpop.permute.xlu0 %4889
  %4891 = vrot.lane.b32.xlu0 %v4234, 90
  %v4892 = vpop.permute.xlu0 %4891
  %4893 = vrot.lane.b32.xlu0 %v4235, 90
  %v4894 = vpop.permute.xlu0 %4893
  %4895 = vrot.lane.b32.xlu0 %v4236, 90
  %v4896 = vpop.permute.xlu0 %4895
  %4897 = vrot.lane.b32.xlu0 %v4237, 90
  %v4898 = vpop.permute.xlu0 %4897
  %v4909 = vsel %vm1800, %v4850, %v4880
  %v4910 = vsel %vm1800, %v4852, %v4882
  %v4911 = vsel %vm1800, %v4854, %v4884
  %v4912 = vsel %vm1800, %v4856, %v4886
  %v4913 = vsel %vm1800, %v4858, %v4888
  %v4914 = vsel %vm1800, %v4860, %v4890
  %v4915 = vsel %vm1800, %v4862, %v4892
  %v4916 = vsel %vm1800, %v4864, %v4894
  %v4917 = vsel %vm1800, %v4866, %v4896
  %v4918 = vsel %vm1800, %v4868, %v4898
  %v4919 = vpack.c.bf16 %v4910, %v4909
  %v4920 = vpack.c.bf16 %v4912, %v4911
  %v4921 = vpack.c.bf16 %v4914, %v4913
  %v4922 = vpack.c.bf16 %v4916, %v4915
  %v4923 = vpack.c.bf16 %v4918, %v4917
  %s4924 = scalar_lea.vmem %s9, 192
  %v4925 = vld [vmem:[%s4924] sm:$0xf]
  %v4926 = vld [vmem:[%s4924 + $0x4] sm:$0xf]
  %v4927 = vld [vmem:[%s4924 + $0x8] sm:$0xf]
  %v4928 = vld [vmem:[%s4924 + $0xc] sm:$0xf]
  %v4929 = vld [vmem:[%s4924 + $0x10] sm:$0xf]
  %v4930 = vld [vmem:[%s4924 + $0x14] sm:$0xf]
  %v4931 = vld [vmem:[%s4924 + $0x18] sm:$0xf]
  %v4932 = vld [vmem:[%s4924 + $0x1c] sm:$0xf]
  %v4933 = vld [vmem:[%s4924 + $0x20] sm:$0xf]
  %v4934 = vld [vmem:[%s4924 + $0x24] sm:$0xf]
  %v4935 = vld [vmem:[%s4924 + $0x28] sm:$0xf]
  %v4936 = vld [vmem:[%s4924 + $0x2c] sm:$0xf]
  %v4937 = vld [vmem:[%s4924 + $0x30] sm:$0xf]
  %v4938 = vld [vmem:[%s4924 + $0x34] sm:$0xf]
  %v4939 = vld [vmem:[%s4924 + $0x38] sm:$0xf]
  %v4940 = vld [vmem:[%s4924 + $0x3c] sm:$0xf]
  %v4957 = vunpack.c.l.b16 %v4925
  %v4958 = vunpack.c.l.b16 %v4926
  %v4959 = vunpack.c.l.b16 %v4927
  %v4960 = vunpack.c.l.b16 %v4928
  %v4961 = vunpack.c.l.b16 %v4929
  %v4962 = vunpack.c.l.b16 %v4930
  %v4963 = vunpack.c.l.b16 %v4931
  %v4964 = vunpack.c.l.b16 %v4932
  %v4965 = vunpack.c.l.b16 %v4933
  %v4966 = vunpack.c.l.b16 %v4934
  %v4967 = vunpack.c.l.b16 %v4935
  %v4968 = vunpack.c.l.b16 %v4936
  %v4969 = vunpack.c.l.b16 %v4937
  %v4970 = vunpack.c.l.b16 %v4938
  %v4971 = vunpack.c.l.b16 %v4939
  %v4972 = vunpack.c.l.b16 %v4940
  %v4973 = vpack.c.b16 %v4958, %v4957
  %v4974 = vpack.c.b16 %v4960, %v4959
  %v4975 = vpack.c.b16 %v4962, %v4961
  %v4976 = vpack.c.b16 %v4964, %v4963
  %v4977 = vpack.c.b16 %v4966, %v4965
  %v4978 = vpack.c.b16 %v4968, %v4967
  %v4979 = vpack.c.b16 %v4970, %v4969
  %v4980 = vpack.c.b16 %v4972, %v4971
  %v4982 = vsel %vm4441, %v4973, 0
  %v4985 = vsel %vm4441, %v4974, 0
  %v4988 = vsel %vm4441, %v4975, 0
  %v4991 = vsel %vm4441, %v4976, 0
  %v4994 = vsel %vm4441, %v4977, 0
  %v4997 = vsel %vm4441, %v4978, 0
  %v5000 = vsel %vm4441, %v4979, 0
  %v5003 = vsel %vm4441, %v4980, 0
  %5005 = vmatpush.bf16.msra.mxu0 0
  %5006 = vmatpush.bf16.msra.mxu0 0
  %5007 = vmatpush.bf16.msra.mxu0 0
  %5008 = vmatpush.bf16.msra.mxu0 %v4923
  %5009 = vmatpush.bf16.msra.mxu0 %v4922
  %5010 = vmatpush.bf16.msra.mxu0 %v4921
  %5011 = vmatpush.bf16.msra.mxu0 %v4920
  %5012 = vmatpush.bf16.msra.mxu0 %v4919
  %5013 = vmatmul.bf16.gmra.mxu0 %v4982
  %v5014 = vpop.f32.mrf.mxu0
  %v5015 = vadd.f32 0.0, %v5014
  %v5016 = vpop.f32.mrf.mxu0
  %v5017 = vadd.f32 0.0, %v5016
  %5018 = vmatmul.bf16.gmra.mxu0 %v4985
  %v5019 = vpop.f32.mrf.mxu0
  %v5020 = vadd.f32 0.0, %v5019
  %v5021 = vpop.f32.mrf.mxu0
  %v5022 = vadd.f32 0.0, %v5021
  %5023 = vmatmul.bf16.gmra.mxu0 %v4988
  %v5024 = vpop.f32.mrf.mxu0
  %v5025 = vadd.f32 0.0, %v5024
  %v5026 = vpop.f32.mrf.mxu0
  %v5027 = vadd.f32 0.0, %v5026
  %5028 = vmatmul.bf16.gmra.mxu0 %v4991
  %v5029 = vpop.f32.mrf.mxu0
  %v5030 = vadd.f32 0.0, %v5029
  %v5031 = vpop.f32.mrf.mxu0
  %v5032 = vadd.f32 0.0, %v5031
  %5033 = vmatmul.bf16.gmra.mxu0 %v4994
  %v5034 = vpop.f32.mrf.mxu0
  %v5035 = vadd.f32 0.0, %v5034
  %v5036 = vpop.f32.mrf.mxu0
  %v5037 = vadd.f32 0.0, %v5036
  %5038 = vmatmul.bf16.gmra.mxu0 %v4997
  %v5039 = vpop.f32.mrf.mxu0
  %v5040 = vadd.f32 0.0, %v5039
  %v5041 = vpop.f32.mrf.mxu0
  %v5042 = vadd.f32 0.0, %v5041
  %5043 = vmatmul.bf16.gmra.mxu0 %v5000
  %v5044 = vpop.f32.mrf.mxu0
  %v5045 = vadd.f32 0.0, %v5044
  %v5046 = vpop.f32.mrf.mxu0
  %v5047 = vadd.f32 0.0, %v5046
  %5048 = vmatmul.bf16.gmra.mxu0 %v5003
  %v5049 = vpop.f32.mrf.mxu0
  %v5050 = vadd.f32 0.0, %v5049
  %v5051 = vpop.f32.mrf.mxu0
  %v5052 = vadd.f32 0.0, %v5051
  %5053 = vdwg.mxu0
  %v5054 = vadd.f32 %v4833, %v5015
  %v5055 = vadd.f32 %v4834, %v5017
  %v5056 = vadd.f32 %v4835, %v5020
  %v5057 = vadd.f32 %v4836, %v5022
  %v5058 = vadd.f32 %v4837, %v5025
  %v5059 = vadd.f32 %v4838, %v5027
  %v5060 = vadd.f32 %v4839, %v5030
  %v5061 = vadd.f32 %v4840, %v5032
  %v5062 = vadd.f32 %v4841, %v5035
  %v5063 = vadd.f32 %v4842, %v5037
  %v5064 = vadd.f32 %v4843, %v5040
  %v5065 = vadd.f32 %v4844, %v5042
  %v5066 = vadd.f32 %v4845, %v5045
  %v5067 = vadd.f32 %v4846, %v5047
  %v5068 = vadd.f32 %v4847, %v5050
  %v5069 = vadd.f32 %v4848, %v5052
  %5070 = vrot.lane.b32.xlu0 %v4228, 122
  %v5071 = vpop.permute.xlu0 %5070
  %5072 = vrot.lane.b32.xlu0 %v4229, 122
  %v5073 = vpop.permute.xlu0 %5072
  %5074 = vrot.lane.b32.xlu0 %v4230, 122
  %v5075 = vpop.permute.xlu0 %5074
  %5076 = vrot.lane.b32.xlu0 %v4231, 122
  %v5077 = vpop.permute.xlu0 %5076
  %5078 = vrot.lane.b32.xlu0 %v4232, 122
  %v5079 = vpop.permute.xlu0 %5078
  %5080 = vrot.lane.b32.xlu0 %v4233, 122
  %v5081 = vpop.permute.xlu0 %5080
  %5082 = vrot.lane.b32.xlu0 %v4234, 122
  %v5083 = vpop.permute.xlu0 %5082
  %5084 = vrot.lane.b32.xlu0 %v4235, 122
  %v5085 = vpop.permute.xlu0 %5084
  %5086 = vrot.lane.b32.xlu0 %v4236, 122
  %v5087 = vpop.permute.xlu0 %5086
  %5088 = vrot.lane.b32.xlu0 %v4237, 122
  %v5089 = vpop.permute.xlu0 %5088
  %5100 = vrot.lane.b32.xlu0 %v4228, 87
  %v5101 = vpop.permute.xlu0 %5100
  %5102 = vrot.lane.b32.xlu0 %v4229, 87
  %v5103 = vpop.permute.xlu0 %5102
  %5104 = vrot.lane.b32.xlu0 %v4230, 87
  %v5105 = vpop.permute.xlu0 %5104
  %5106 = vrot.lane.b32.xlu0 %v4231, 87
  %v5107 = vpop.permute.xlu0 %5106
  %5108 = vrot.lane.b32.xlu0 %v4232, 87
  %v5109 = vpop.permute.xlu0 %5108
  %5110 = vrot.lane.b32.xlu0 %v4233, 87
  %v5111 = vpop.permute.xlu0 %5110
  %5112 = vrot.lane.b32.xlu0 %v4234, 87
  %v5113 = vpop.permute.xlu0 %5112
  %5114 = vrot.lane.b32.xlu0 %v4235, 87
  %v5115 = vpop.permute.xlu0 %5114
  %5116 = vrot.lane.b32.xlu0 %v4236, 87
  %v5117 = vpop.permute.xlu0 %5116
  %5118 = vrot.lane.b32.xlu0 %v4237, 87
  %v5119 = vpop.permute.xlu0 %5118
  %v5130 = vsel %vm1800, %v5071, %v5101
  %v5131 = vsel %vm1800, %v5073, %v5103
  %v5132 = vsel %vm1800, %v5075, %v5105
  %v5133 = vsel %vm1800, %v5077, %v5107
  %v5134 = vsel %vm1800, %v5079, %v5109
  %v5135 = vsel %vm1800, %v5081, %v5111
  %v5136 = vsel %vm1800, %v5083, %v5113
  %v5137 = vsel %vm1800, %v5085, %v5115
  %v5138 = vsel %vm1800, %v5087, %v5117
  %v5139 = vsel %vm1800, %v5089, %v5119
  %v5140 = vpack.c.bf16 %v5131, %v5130
  %v5141 = vpack.c.bf16 %v5133, %v5132
  %v5142 = vpack.c.bf16 %v5135, %v5134
  %v5143 = vpack.c.bf16 %v5137, %v5136
  %v5144 = vpack.c.bf16 %v5139, %v5138
  %s5145 = scalar_lea.vmem %s9, 256
  %v5146 = vld [vmem:[%s5145] sm:$0xf]
  %v5147 = vld [vmem:[%s5145 + $0x4] sm:$0xf]
  %v5148 = vld [vmem:[%s5145 + $0x8] sm:$0xf]
  %v5149 = vld [vmem:[%s5145 + $0xc] sm:$0xf]
  %v5150 = vld [vmem:[%s5145 + $0x10] sm:$0xf]
  %v5151 = vld [vmem:[%s5145 + $0x14] sm:$0xf]
  %v5152 = vld [vmem:[%s5145 + $0x18] sm:$0xf]
  %v5153 = vld [vmem:[%s5145 + $0x1c] sm:$0xf]
  %v5154 = vld [vmem:[%s5145 + $0x20] sm:$0xf]
  %v5155 = vld [vmem:[%s5145 + $0x24] sm:$0xf]
  %v5156 = vld [vmem:[%s5145 + $0x28] sm:$0xf]
  %v5157 = vld [vmem:[%s5145 + $0x2c] sm:$0xf]
  %v5158 = vld [vmem:[%s5145 + $0x30] sm:$0xf]
  %v5159 = vld [vmem:[%s5145 + $0x34] sm:$0xf]
  %v5160 = vld [vmem:[%s5145 + $0x38] sm:$0xf]
  %v5161 = vld [vmem:[%s5145 + $0x3c] sm:$0xf]
  %v5178 = vunpack.c.l.b16 %v5146
  %v5179 = vunpack.c.l.b16 %v5147
  %v5180 = vunpack.c.l.b16 %v5148
  %v5181 = vunpack.c.l.b16 %v5149
  %v5182 = vunpack.c.l.b16 %v5150
  %v5183 = vunpack.c.l.b16 %v5151
  %v5184 = vunpack.c.l.b16 %v5152
  %v5185 = vunpack.c.l.b16 %v5153
  %v5186 = vunpack.c.l.b16 %v5154
  %v5187 = vunpack.c.l.b16 %v5155
  %v5188 = vunpack.c.l.b16 %v5156
  %v5189 = vunpack.c.l.b16 %v5157
  %v5190 = vunpack.c.l.b16 %v5158
  %v5191 = vunpack.c.l.b16 %v5159
  %v5192 = vunpack.c.l.b16 %v5160
  %v5193 = vunpack.c.l.b16 %v5161
  %v5194 = vpack.c.b16 %v5179, %v5178
  %v5195 = vpack.c.b16 %v5181, %v5180
  %v5196 = vpack.c.b16 %v5183, %v5182
  %v5197 = vpack.c.b16 %v5185, %v5184
  %v5198 = vpack.c.b16 %v5187, %v5186
  %v5199 = vpack.c.b16 %v5189, %v5188
  %v5200 = vpack.c.b16 %v5191, %v5190
  %v5201 = vpack.c.b16 %v5193, %v5192
  %v5203 = vsel %vm4441, %v5194, 0
  %v5206 = vsel %vm4441, %v5195, 0
  %v5209 = vsel %vm4441, %v5196, 0
  %v5212 = vsel %vm4441, %v5197, 0
  %v5215 = vsel %vm4441, %v5198, 0
  %v5218 = vsel %vm4441, %v5199, 0
  %v5221 = vsel %vm4441, %v5200, 0
  %v5224 = vsel %vm4441, %v5201, 0
  %5226 = vmatpush.bf16.msra.mxu0 0
  %5227 = vmatpush.bf16.msra.mxu0 0
  %5228 = vmatpush.bf16.msra.mxu0 0
  %5229 = vmatpush.bf16.msra.mxu0 %v5144
  %5230 = vmatpush.bf16.msra.mxu0 %v5143
  %5231 = vmatpush.bf16.msra.mxu0 %v5142
  %5232 = vmatpush.bf16.msra.mxu0 %v5141
  %5233 = vmatpush.bf16.msra.mxu0 %v5140
  %5234 = vmatmul.bf16.gmra.mxu0 %v5203
  %v5235 = vpop.f32.mrf.mxu0
  %v5236 = vadd.f32 0.0, %v5235
  %v5237 = vpop.f32.mrf.mxu0
  %v5238 = vadd.f32 0.0, %v5237
  %5239 = vmatmul.bf16.gmra.mxu0 %v5206
  %v5240 = vpop.f32.mrf.mxu0
  %v5241 = vadd.f32 0.0, %v5240
  %v5242 = vpop.f32.mrf.mxu0
  %v5243 = vadd.f32 0.0, %v5242
  %5244 = vmatmul.bf16.gmra.mxu0 %v5209
  %v5245 = vpop.f32.mrf.mxu0
  %v5246 = vadd.f32 0.0, %v5245
  %v5247 = vpop.f32.mrf.mxu0
  %v5248 = vadd.f32 0.0, %v5247
  %5249 = vmatmul.bf16.gmra.mxu0 %v5212
  %v5250 = vpop.f32.mrf.mxu0
  %v5251 = vadd.f32 0.0, %v5250
  %v5252 = vpop.f32.mrf.mxu0
  %v5253 = vadd.f32 0.0, %v5252
  %5254 = vmatmul.bf16.gmra.mxu0 %v5215
  %v5255 = vpop.f32.mrf.mxu0
  %v5256 = vadd.f32 0.0, %v5255
  %v5257 = vpop.f32.mrf.mxu0
  %v5258 = vadd.f32 0.0, %v5257
  %5259 = vmatmul.bf16.gmra.mxu0 %v5218
  %v5260 = vpop.f32.mrf.mxu0
  %v5261 = vadd.f32 0.0, %v5260
  %v5262 = vpop.f32.mrf.mxu0
  %v5263 = vadd.f32 0.0, %v5262
  %5264 = vmatmul.bf16.gmra.mxu0 %v5221
  %v5265 = vpop.f32.mrf.mxu0
  %v5266 = vadd.f32 0.0, %v5265
  %v5267 = vpop.f32.mrf.mxu0
  %v5268 = vadd.f32 0.0, %v5267
  %5269 = vmatmul.bf16.gmra.mxu0 %v5224
  %v5270 = vpop.f32.mrf.mxu0
  %v5271 = vadd.f32 0.0, %v5270
  %v5272 = vpop.f32.mrf.mxu0
  %v5273 = vadd.f32 0.0, %v5272
  %5274 = vdwg.mxu0
  %v5275 = vadd.f32 %v5054, %v5236
  %v5276 = vadd.f32 %v5055, %v5238
  %v5277 = vadd.f32 %v5056, %v5241
  %v5278 = vadd.f32 %v5057, %v5243
  %v5279 = vadd.f32 %v5058, %v5246
  %v5280 = vadd.f32 %v5059, %v5248
  %v5281 = vadd.f32 %v5060, %v5251
  %v5282 = vadd.f32 %v5061, %v5253
  %v5283 = vadd.f32 %v5062, %v5256
  %v5284 = vadd.f32 %v5063, %v5258
  %v5285 = vadd.f32 %v5064, %v5261
  %v5286 = vadd.f32 %v5065, %v5263
  %v5287 = vadd.f32 %v5066, %v5266
  %v5288 = vadd.f32 %v5067, %v5268
  %v5289 = vadd.f32 %v5068, %v5271
  %v5290 = vadd.f32 %v5069, %v5273
  %5291 = vrot.lane.b32.xlu0 %v4228, 121
  %v5292 = vpop.permute.xlu0 %5291
  %5293 = vrot.lane.b32.xlu0 %v4229, 121
  %v5294 = vpop.permute.xlu0 %5293
  %5295 = vrot.lane.b32.xlu0 %v4230, 121
  %v5296 = vpop.permute.xlu0 %5295
  %5297 = vrot.lane.b32.xlu0 %v4231, 121
  %v5298 = vpop.permute.xlu0 %5297
  %5299 = vrot.lane.b32.xlu0 %v4232, 121
  %v5300 = vpop.permute.xlu0 %5299
  %5301 = vrot.lane.b32.xlu0 %v4233, 121
  %v5302 = vpop.permute.xlu0 %5301
  %5303 = vrot.lane.b32.xlu0 %v4234, 121
  %v5304 = vpop.permute.xlu0 %5303
  %5305 = vrot.lane.b32.xlu0 %v4235, 121
  %v5306 = vpop.permute.xlu0 %5305
  %5307 = vrot.lane.b32.xlu0 %v4236, 121
  %v5308 = vpop.permute.xlu0 %5307
  %5309 = vrot.lane.b32.xlu0 %v4237, 121
  %v5310 = vpop.permute.xlu0 %5309
  %5321 = vrot.lane.b32.xlu0 %v4228, 86
  %v5322 = vpop.permute.xlu0 %5321
  %5323 = vrot.lane.b32.xlu0 %v4229, 86
  %v5324 = vpop.permute.xlu0 %5323
  %5325 = vrot.lane.b32.xlu0 %v4230, 86
  %v5326 = vpop.permute.xlu0 %5325
  %5327 = vrot.lane.b32.xlu0 %v4231, 86
  %v5328 = vpop.permute.xlu0 %5327
  %5329 = vrot.lane.b32.xlu0 %v4232, 86
  %v5330 = vpop.permute.xlu0 %5329
  %5331 = vrot.lane.b32.xlu0 %v4233, 86
  %v5332 = vpop.permute.xlu0 %5331
  %5333 = vrot.lane.b32.xlu0 %v4234, 86
  %v5334 = vpop.permute.xlu0 %5333
  %5335 = vrot.lane.b32.xlu0 %v4235, 86
  %v5336 = vpop.permute.xlu0 %5335
  %5337 = vrot.lane.b32.xlu0 %v4236, 86
  %v5338 = vpop.permute.xlu0 %5337
  %5339 = vrot.lane.b32.xlu0 %v4237, 86
  %v5340 = vpop.permute.xlu0 %5339
  %v5351 = vsel %vm1800, %v5292, %v5322
  %v5352 = vsel %vm1800, %v5294, %v5324
  %v5353 = vsel %vm1800, %v5296, %v5326
  %v5354 = vsel %vm1800, %v5298, %v5328
  %v5355 = vsel %vm1800, %v5300, %v5330
  %v5356 = vsel %vm1800, %v5302, %v5332
  %v5357 = vsel %vm1800, %v5304, %v5334
  %v5358 = vsel %vm1800, %v5306, %v5336
  %v5359 = vsel %vm1800, %v5308, %v5338
  %v5360 = vsel %vm1800, %v5310, %v5340
  %v5361 = vpack.c.bf16 %v5352, %v5351
  %v5362 = vpack.c.bf16 %v5354, %v5353
  %v5363 = vpack.c.bf16 %v5356, %v5355
  %v5364 = vpack.c.bf16 %v5358, %v5357
  %v5365 = vpack.c.bf16 %v5360, %v5359
  %s5366 = scalar_lea.vmem %s9, 320
  %v5367 = vld [vmem:[%s5366] sm:$0xf]
  %v5368 = vld [vmem:[%s5366 + $0x4] sm:$0xf]
  %v5369 = vld [vmem:[%s5366 + $0x8] sm:$0xf]
  %v5370 = vld [vmem:[%s5366 + $0xc] sm:$0xf]
  %v5371 = vld [vmem:[%s5366 + $0x10] sm:$0xf]
  %v5372 = vld [vmem:[%s5366 + $0x14] sm:$0xf]
  %v5373 = vld [vmem:[%s5366 + $0x18] sm:$0xf]
  %v5374 = vld [vmem:[%s5366 + $0x1c] sm:$0xf]
  %v5375 = vld [vmem:[%s5366 + $0x20] sm:$0xf]
  %v5376 = vld [vmem:[%s5366 + $0x24] sm:$0xf]
  %v5377 = vld [vmem:[%s5366 + $0x28] sm:$0xf]
  %v5378 = vld [vmem:[%s5366 + $0x2c] sm:$0xf]
  %v5379 = vld [vmem:[%s5366 + $0x30] sm:$0xf]
  %v5380 = vld [vmem:[%s5366 + $0x34] sm:$0xf]
  %v5381 = vld [vmem:[%s5366 + $0x38] sm:$0xf]
  %v5382 = vld [vmem:[%s5366 + $0x3c] sm:$0xf]
  %v5399 = vunpack.c.l.b16 %v5367
  %v5400 = vunpack.c.l.b16 %v5368
  %v5401 = vunpack.c.l.b16 %v5369
  %v5402 = vunpack.c.l.b16 %v5370
  %v5403 = vunpack.c.l.b16 %v5371
  %v5404 = vunpack.c.l.b16 %v5372
  %v5405 = vunpack.c.l.b16 %v5373
  %v5406 = vunpack.c.l.b16 %v5374
  %v5407 = vunpack.c.l.b16 %v5375
  %v5408 = vunpack.c.l.b16 %v5376
  %v5409 = vunpack.c.l.b16 %v5377
  %v5410 = vunpack.c.l.b16 %v5378
  %v5411 = vunpack.c.l.b16 %v5379
  %v5412 = vunpack.c.l.b16 %v5380
  %v5413 = vunpack.c.l.b16 %v5381
  %v5414 = vunpack.c.l.b16 %v5382
  %v5415 = vpack.c.b16 %v5400, %v5399
  %v5416 = vpack.c.b16 %v5402, %v5401
  %v5417 = vpack.c.b16 %v5404, %v5403
  %v5418 = vpack.c.b16 %v5406, %v5405
  %v5419 = vpack.c.b16 %v5408, %v5407
  %v5420 = vpack.c.b16 %v5410, %v5409
  %v5421 = vpack.c.b16 %v5412, %v5411
  %v5422 = vpack.c.b16 %v5414, %v5413
  %v5424 = vsel %vm4441, %v5415, 0
  %v5427 = vsel %vm4441, %v5416, 0
  %v5430 = vsel %vm4441, %v5417, 0
  %v5433 = vsel %vm4441, %v5418, 0
  %v5436 = vsel %vm4441, %v5419, 0
  %v5439 = vsel %vm4441, %v5420, 0
  %v5442 = vsel %vm4441, %v5421, 0
  %v5445 = vsel %vm4441, %v5422, 0
  %5447 = vmatpush.bf16.msra.mxu0 0
  %5448 = vmatpush.bf16.msra.mxu0 0
  %5449 = vmatpush.bf16.msra.mxu0 0
  %5450 = vmatpush.bf16.msra.mxu0 %v5365
  %5451 = vmatpush.bf16.msra.mxu0 %v5364
  %5452 = vmatpush.bf16.msra.mxu0 %v5363
  %5453 = vmatpush.bf16.msra.mxu0 %v5362
  %5454 = vmatpush.bf16.msra.mxu0 %v5361
  %5455 = vmatmul.bf16.gmra.mxu0 %v5424
  %v5456 = vpop.f32.mrf.mxu0
  %v5457 = vadd.f32 0.0, %v5456
  %v5458 = vpop.f32.mrf.mxu0
  %v5459 = vadd.f32 0.0, %v5458
  %5460 = vmatmul.bf16.gmra.mxu0 %v5427
  %v5461 = vpop.f32.mrf.mxu0
  %v5462 = vadd.f32 0.0, %v5461
  %v5463 = vpop.f32.mrf.mxu0
  %v5464 = vadd.f32 0.0, %v5463
  %5465 = vmatmul.bf16.gmra.mxu0 %v5430
  %v5466 = vpop.f32.mrf.mxu0
  %v5467 = vadd.f32 0.0, %v5466
  %v5468 = vpop.f32.mrf.mxu0
  %v5469 = vadd.f32 0.0, %v5468
  %5470 = vmatmul.bf16.gmra.mxu0 %v5433
  %v5471 = vpop.f32.mrf.mxu0
  %v5472 = vadd.f32 0.0, %v5471
  %v5473 = vpop.f32.mrf.mxu0
  %v5474 = vadd.f32 0.0, %v5473
  %5475 = vmatmul.bf16.gmra.mxu0 %v5436
  %v5476 = vpop.f32.mrf.mxu0
  %v5477 = vadd.f32 0.0, %v5476
  %v5478 = vpop.f32.mrf.mxu0
  %v5479 = vadd.f32 0.0, %v5478
  %5480 = vmatmul.bf16.gmra.mxu0 %v5439
  %v5481 = vpop.f32.mrf.mxu0
  %v5482 = vadd.f32 0.0, %v5481
  %v5483 = vpop.f32.mrf.mxu0
  %v5484 = vadd.f32 0.0, %v5483
  %5485 = vmatmul.bf16.gmra.mxu0 %v5442
  %v5486 = vpop.f32.mrf.mxu0
  %v5487 = vadd.f32 0.0, %v5486
  %v5488 = vpop.f32.mrf.mxu0
  %v5489 = vadd.f32 0.0, %v5488
  %5490 = vmatmul.bf16.gmra.mxu0 %v5445
  %v5491 = vpop.f32.mrf.mxu0
  %v5492 = vadd.f32 0.0, %v5491
  %v5493 = vpop.f32.mrf.mxu0
  %v5494 = vadd.f32 0.0, %v5493
  %5495 = vdwg.mxu0
  %v5496 = vadd.f32 %v5275, %v5457
  %v5497 = vadd.f32 %v5276, %v5459
  %v5498 = vadd.f32 %v5277, %v5462
  %v5499 = vadd.f32 %v5278, %v5464
  %v5500 = vadd.f32 %v5279, %v5467
  %v5501 = vadd.f32 %v5280, %v5469
  %v5502 = vadd.f32 %v5281, %v5472
  %v5503 = vadd.f32 %v5282, %v5474
  %v5504 = vadd.f32 %v5283, %v5477
  %v5505 = vadd.f32 %v5284, %v5479
  %v5506 = vadd.f32 %v5285, %v5482
  %v5507 = vadd.f32 %v5286, %v5484
  %v5508 = vadd.f32 %v5287, %v5487
  %v5509 = vadd.f32 %v5288, %v5489
  %v5510 = vadd.f32 %v5289, %v5492
  %v5511 = vadd.f32 %v5290, %v5494
  %5512 = vrot.lane.b32.xlu0 %v4228, 120
  %v5513 = vpop.permute.xlu0 %5512
  %5514 = vrot.lane.b32.xlu0 %v4229, 120
  %v5515 = vpop.permute.xlu0 %5514
  %5516 = vrot.lane.b32.xlu0 %v4230, 120
  %v5517 = vpop.permute.xlu0 %5516
  %5518 = vrot.lane.b32.xlu0 %v4231, 120
  %v5519 = vpop.permute.xlu0 %5518
  %5520 = vrot.lane.b32.xlu0 %v4232, 120
  %v5521 = vpop.permute.xlu0 %5520
  %5522 = vrot.lane.b32.xlu0 %v4233, 120
  %v5523 = vpop.permute.xlu0 %5522
  %5524 = vrot.lane.b32.xlu0 %v4234, 120
  %v5525 = vpop.permute.xlu0 %5524
  %5526 = vrot.lane.b32.xlu0 %v4235, 120
  %v5527 = vpop.permute.xlu0 %5526
  %5528 = vrot.lane.b32.xlu0 %v4236, 120
  %v5529 = vpop.permute.xlu0 %5528
  %5530 = vrot.lane.b32.xlu0 %v4237, 120
  %v5531 = vpop.permute.xlu0 %5530
  %5542 = vrot.lane.b32.xlu0 %v4228, 85
  %v5543 = vpop.permute.xlu0 %5542
  %5544 = vrot.lane.b32.xlu0 %v4229, 85
  %v5545 = vpop.permute.xlu0 %5544
  %5546 = vrot.lane.b32.xlu0 %v4230, 85
  %v5547 = vpop.permute.xlu0 %5546
  %5548 = vrot.lane.b32.xlu0 %v4231, 85
  %v5549 = vpop.permute.xlu0 %5548
  %5550 = vrot.lane.b32.xlu0 %v4232, 85
  %v5551 = vpop.permute.xlu0 %5550
  %5552 = vrot.lane.b32.xlu0 %v4233, 85
  %v5553 = vpop.permute.xlu0 %5552
  %5554 = vrot.lane.b32.xlu0 %v4234, 85
  %v5555 = vpop.permute.xlu0 %5554
  %5556 = vrot.lane.b32.xlu0 %v4235, 85
  %v5557 = vpop.permute.xlu0 %5556
  %5558 = vrot.lane.b32.xlu0 %v4236, 85
  %v5559 = vpop.permute.xlu0 %5558
  %5560 = vrot.lane.b32.xlu0 %v4237, 85
  %v5561 = vpop.permute.xlu0 %5560
  %v5572 = vsel %vm1800, %v5513, %v5543
  %v5573 = vsel %vm1800, %v5515, %v5545
  %v5574 = vsel %vm1800, %v5517, %v5547
  %v5575 = vsel %vm1800, %v5519, %v5549
  %v5576 = vsel %vm1800, %v5521, %v5551
  %v5577 = vsel %vm1800, %v5523, %v5553
  %v5578 = vsel %vm1800, %v5525, %v5555
  %v5579 = vsel %vm1800, %v5527, %v5557
  %v5580 = vsel %vm1800, %v5529, %v5559
  %v5581 = vsel %vm1800, %v5531, %v5561
  %v5582 = vpack.c.bf16 %v5573, %v5572
  %v5583 = vpack.c.bf16 %v5575, %v5574
  %v5584 = vpack.c.bf16 %v5577, %v5576
  %v5585 = vpack.c.bf16 %v5579, %v5578
  %v5586 = vpack.c.bf16 %v5581, %v5580
  %s5587 = scalar_lea.vmem %s9, 384
  %v5588 = vld [vmem:[%s5587] sm:$0xf]
  %v5589 = vld [vmem:[%s5587 + $0x4] sm:$0xf]
  %v5590 = vld [vmem:[%s5587 + $0x8] sm:$0xf]
  %v5591 = vld [vmem:[%s5587 + $0xc] sm:$0xf]
  %v5592 = vld [vmem:[%s5587 + $0x10] sm:$0xf]
  %v5593 = vld [vmem:[%s5587 + $0x14] sm:$0xf]
  %v5594 = vld [vmem:[%s5587 + $0x18] sm:$0xf]
  %v5595 = vld [vmem:[%s5587 + $0x1c] sm:$0xf]
  %v5596 = vld [vmem:[%s5587 + $0x20] sm:$0xf]
  %v5597 = vld [vmem:[%s5587 + $0x24] sm:$0xf]
  %v5598 = vld [vmem:[%s5587 + $0x28] sm:$0xf]
  %v5599 = vld [vmem:[%s5587 + $0x2c] sm:$0xf]
  %v5600 = vld [vmem:[%s5587 + $0x30] sm:$0xf]
  %v5601 = vld [vmem:[%s5587 + $0x34] sm:$0xf]
  %v5602 = vld [vmem:[%s5587 + $0x38] sm:$0xf]
  %v5603 = vld [vmem:[%s5587 + $0x3c] sm:$0xf]
  %v5620 = vunpack.c.l.b16 %v5588
  %v5621 = vunpack.c.l.b16 %v5589
  %v5622 = vunpack.c.l.b16 %v5590
  %v5623 = vunpack.c.l.b16 %v5591
  %v5624 = vunpack.c.l.b16 %v5592
  %v5625 = vunpack.c.l.b16 %v5593
  %v5626 = vunpack.c.l.b16 %v5594
  %v5627 = vunpack.c.l.b16 %v5595
  %v5628 = vunpack.c.l.b16 %v5596
  %v5629 = vunpack.c.l.b16 %v5597
  %v5630 = vunpack.c.l.b16 %v5598
  %v5631 = vunpack.c.l.b16 %v5599
  %v5632 = vunpack.c.l.b16 %v5600
  %v5633 = vunpack.c.l.b16 %v5601
  %v5634 = vunpack.c.l.b16 %v5602
  %v5635 = vunpack.c.l.b16 %v5603
  %v5636 = vpack.c.b16 %v5621, %v5620
  %v5637 = vpack.c.b16 %v5623, %v5622
  %v5638 = vpack.c.b16 %v5625, %v5624
  %v5639 = vpack.c.b16 %v5627, %v5626
  %v5640 = vpack.c.b16 %v5629, %v5628
  %v5641 = vpack.c.b16 %v5631, %v5630
  %v5642 = vpack.c.b16 %v5633, %v5632
  %v5643 = vpack.c.b16 %v5635, %v5634
  %v5645 = vsel %vm4441, %v5636, 0
  %v5648 = vsel %vm4441, %v5637, 0
  %v5651 = vsel %vm4441, %v5638, 0
  %v5654 = vsel %vm4441, %v5639, 0
  %v5657 = vsel %vm4441, %v5640, 0
  %v5660 = vsel %vm4441, %v5641, 0
  %v5663 = vsel %vm4441, %v5642, 0
  %v5666 = vsel %vm4441, %v5643, 0
  %5668 = vmatpush.bf16.msra.mxu0 0
  %5669 = vmatpush.bf16.msra.mxu0 0
  %5670 = vmatpush.bf16.msra.mxu0 0
  %5671 = vmatpush.bf16.msra.mxu0 %v5586
  %5672 = vmatpush.bf16.msra.mxu0 %v5585
  %5673 = vmatpush.bf16.msra.mxu0 %v5584
  %5674 = vmatpush.bf16.msra.mxu0 %v5583
  %5675 = vmatpush.bf16.msra.mxu0 %v5582
  %5676 = vmatmul.bf16.gmra.mxu0 %v5645
  %v5677 = vpop.f32.mrf.mxu0
  %v5678 = vadd.f32 0.0, %v5677
  %v5679 = vpop.f32.mrf.mxu0
  %v5680 = vadd.f32 0.0, %v5679
  %5681 = vmatmul.bf16.gmra.mxu0 %v5648
  %v5682 = vpop.f32.mrf.mxu0
  %v5683 = vadd.f32 0.0, %v5682
  %v5684 = vpop.f32.mrf.mxu0
  %v5685 = vadd.f32 0.0, %v5684
  %5686 = vmatmul.bf16.gmra.mxu0 %v5651
  %v5687 = vpop.f32.mrf.mxu0
  %v5688 = vadd.f32 0.0, %v5687
  %v5689 = vpop.f32.mrf.mxu0
  %v5690 = vadd.f32 0.0, %v5689
  %5691 = vmatmul.bf16.gmra.mxu0 %v5654
  %v5692 = vpop.f32.mrf.mxu0
  %v5693 = vadd.f32 0.0, %v5692
  %v5694 = vpop.f32.mrf.mxu0
  %v5695 = vadd.f32 0.0, %v5694
  %5696 = vmatmul.bf16.gmra.mxu0 %v5657
  %v5697 = vpop.f32.mrf.mxu0
  %v5698 = vadd.f32 0.0, %v5697
  %v5699 = vpop.f32.mrf.mxu0
  %v5700 = vadd.f32 0.0, %v5699
  %5701 = vmatmul.bf16.gmra.mxu0 %v5660
  %v5702 = vpop.f32.mrf.mxu0
  %v5703 = vadd.f32 0.0, %v5702
  %v5704 = vpop.f32.mrf.mxu0
  %v5705 = vadd.f32 0.0, %v5704
  %5706 = vmatmul.bf16.gmra.mxu0 %v5663
  %v5707 = vpop.f32.mrf.mxu0
  %v5708 = vadd.f32 0.0, %v5707
  %v5709 = vpop.f32.mrf.mxu0
  %v5710 = vadd.f32 0.0, %v5709
  %5711 = vmatmul.bf16.gmra.mxu0 %v5666
  %v5712 = vpop.f32.mrf.mxu0
  %v5713 = vadd.f32 0.0, %v5712
  %v5714 = vpop.f32.mrf.mxu0
  %v5715 = vadd.f32 0.0, %v5714
  %5716 = vdwg.mxu0
  %v5717 = vadd.f32 %v5496, %v5678
  %v5718 = vadd.f32 %v5497, %v5680
  %v5719 = vadd.f32 %v5498, %v5683
  %v5720 = vadd.f32 %v5499, %v5685
  %v5721 = vadd.f32 %v5500, %v5688
  %v5722 = vadd.f32 %v5501, %v5690
  %v5723 = vadd.f32 %v5502, %v5693
  %v5724 = vadd.f32 %v5503, %v5695
  %v5725 = vadd.f32 %v5504, %v5698
  %v5726 = vadd.f32 %v5505, %v5700
  %v5727 = vadd.f32 %v5506, %v5703
  %v5728 = vadd.f32 %v5507, %v5705
  %v5729 = vadd.f32 %v5508, %v5708
  %v5730 = vadd.f32 %v5509, %v5710
  %v5731 = vadd.f32 %v5510, %v5713
  %v5732 = vadd.f32 %v5511, %v5715
  %5733 = vrot.lane.b32.xlu0 %v4228, 119
  %v5734 = vpop.permute.xlu0 %5733
  %5735 = vrot.lane.b32.xlu0 %v4229, 119
  %v5736 = vpop.permute.xlu0 %5735
  %5737 = vrot.lane.b32.xlu0 %v4230, 119
  %v5738 = vpop.permute.xlu0 %5737
  %5739 = vrot.lane.b32.xlu0 %v4231, 119
  %v5740 = vpop.permute.xlu0 %5739
  %5741 = vrot.lane.b32.xlu0 %v4232, 119
  %v5742 = vpop.permute.xlu0 %5741
  %5743 = vrot.lane.b32.xlu0 %v4233, 119
  %v5744 = vpop.permute.xlu0 %5743
  %5745 = vrot.lane.b32.xlu0 %v4234, 119
  %v5746 = vpop.permute.xlu0 %5745
  %5747 = vrot.lane.b32.xlu0 %v4235, 119
  %v5748 = vpop.permute.xlu0 %5747
  %5749 = vrot.lane.b32.xlu0 %v4236, 119
  %v5750 = vpop.permute.xlu0 %5749
  %5751 = vrot.lane.b32.xlu0 %v4237, 119
  %v5752 = vpop.permute.xlu0 %5751
  %5763 = vrot.lane.b32.xlu0 %v4228, 84
  %v5764 = vpop.permute.xlu0 %5763
  %5765 = vrot.lane.b32.xlu0 %v4229, 84
  %v5766 = vpop.permute.xlu0 %5765
  %5767 = vrot.lane.b32.xlu0 %v4230, 84
  %v5768 = vpop.permute.xlu0 %5767
  %5769 = vrot.lane.b32.xlu0 %v4231, 84
  %v5770 = vpop.permute.xlu0 %5769
  %5771 = vrot.lane.b32.xlu0 %v4232, 84
  %v5772 = vpop.permute.xlu0 %5771
  %5773 = vrot.lane.b32.xlu0 %v4233, 84
  %v5774 = vpop.permute.xlu0 %5773
  %5775 = vrot.lane.b32.xlu0 %v4234, 84
  %v5776 = vpop.permute.xlu0 %5775
  %5777 = vrot.lane.b32.xlu0 %v4235, 84
  %v5778 = vpop.permute.xlu0 %5777
  %5779 = vrot.lane.b32.xlu0 %v4236, 84
  %v5780 = vpop.permute.xlu0 %5779
  %5781 = vrot.lane.b32.xlu0 %v4237, 84
  %v5782 = vpop.permute.xlu0 %5781
  %v5793 = vsel %vm1800, %v5734, %v5764
  %v5794 = vsel %vm1800, %v5736, %v5766
  %v5795 = vsel %vm1800, %v5738, %v5768
  %v5796 = vsel %vm1800, %v5740, %v5770
  %v5797 = vsel %vm1800, %v5742, %v5772
  %v5798 = vsel %vm1800, %v5744, %v5774
  %v5799 = vsel %vm1800, %v5746, %v5776
  %v5800 = vsel %vm1800, %v5748, %v5778
  %v5801 = vsel %vm1800, %v5750, %v5780
  %v5802 = vsel %vm1800, %v5752, %v5782
  %v5803 = vpack.c.bf16 %v5794, %v5793
  %v5804 = vpack.c.bf16 %v5796, %v5795
  %v5805 = vpack.c.bf16 %v5798, %v5797
  %v5806 = vpack.c.bf16 %v5800, %v5799
  %v5807 = vpack.c.bf16 %v5802, %v5801
  %s5808 = scalar_lea.vmem %s9, 448
  %v5809 = vld [vmem:[%s5808] sm:$0xf]
  %v5810 = vld [vmem:[%s5808 + $0x4] sm:$0xf]
  %v5811 = vld [vmem:[%s5808 + $0x8] sm:$0xf]
  %v5812 = vld [vmem:[%s5808 + $0xc] sm:$0xf]
  %v5813 = vld [vmem:[%s5808 + $0x10] sm:$0xf]
  %v5814 = vld [vmem:[%s5808 + $0x14] sm:$0xf]
  %v5815 = vld [vmem:[%s5808 + $0x18] sm:$0xf]
  %v5816 = vld [vmem:[%s5808 + $0x1c] sm:$0xf]
  %v5817 = vld [vmem:[%s5808 + $0x20] sm:$0xf]
  %v5818 = vld [vmem:[%s5808 + $0x24] sm:$0xf]
  %v5819 = vld [vmem:[%s5808 + $0x28] sm:$0xf]
  %v5820 = vld [vmem:[%s5808 + $0x2c] sm:$0xf]
  %v5821 = vld [vmem:[%s5808 + $0x30] sm:$0xf]
  %v5822 = vld [vmem:[%s5808 + $0x34] sm:$0xf]
  %v5823 = vld [vmem:[%s5808 + $0x38] sm:$0xf]
  %v5824 = vld [vmem:[%s5808 + $0x3c] sm:$0xf]
  %v5841 = vunpack.c.l.b16 %v5809
  %v5842 = vunpack.c.l.b16 %v5810
  %v5843 = vunpack.c.l.b16 %v5811
  %v5844 = vunpack.c.l.b16 %v5812
  %v5845 = vunpack.c.l.b16 %v5813
  %v5846 = vunpack.c.l.b16 %v5814
  %v5847 = vunpack.c.l.b16 %v5815
  %v5848 = vunpack.c.l.b16 %v5816
  %v5849 = vunpack.c.l.b16 %v5817
  %v5850 = vunpack.c.l.b16 %v5818
  %v5851 = vunpack.c.l.b16 %v5819
  %v5852 = vunpack.c.l.b16 %v5820
  %v5853 = vunpack.c.l.b16 %v5821
  %v5854 = vunpack.c.l.b16 %v5822
  %v5855 = vunpack.c.l.b16 %v5823
  %v5856 = vunpack.c.l.b16 %v5824
  %v5857 = vpack.c.b16 %v5842, %v5841
  %v5858 = vpack.c.b16 %v5844, %v5843
  %v5859 = vpack.c.b16 %v5846, %v5845
  %v5860 = vpack.c.b16 %v5848, %v5847
  %v5861 = vpack.c.b16 %v5850, %v5849
  %v5862 = vpack.c.b16 %v5852, %v5851
  %v5863 = vpack.c.b16 %v5854, %v5853
  %v5864 = vpack.c.b16 %v5856, %v5855
  %v5866 = vsel %vm4441, %v5857, 0
  %v5869 = vsel %vm4441, %v5858, 0
  %v5872 = vsel %vm4441, %v5859, 0
  %v5875 = vsel %vm4441, %v5860, 0
  %v5878 = vsel %vm4441, %v5861, 0
  %v5881 = vsel %vm4441, %v5862, 0
  %v5884 = vsel %vm4441, %v5863, 0
  %v5887 = vsel %vm4441, %v5864, 0
  %5889 = vmatpush.bf16.msra.mxu0 0
  %5890 = vmatpush.bf16.msra.mxu0 0
  %5891 = vmatpush.bf16.msra.mxu0 0
  %5892 = vmatpush.bf16.msra.mxu0 %v5807
  %5893 = vmatpush.bf16.msra.mxu0 %v5806
  %5894 = vmatpush.bf16.msra.mxu0 %v5805
  %5895 = vmatpush.bf16.msra.mxu0 %v5804
  %5896 = vmatpush.bf16.msra.mxu0 %v5803
  %5897 = vmatmul.bf16.gmra.mxu0 %v5866
  %v5898 = vpop.f32.mrf.mxu0
  %v5899 = vadd.f32 0.0, %v5898
  %v5900 = vpop.f32.mrf.mxu0
  %v5901 = vadd.f32 0.0, %v5900
  %5902 = vmatmul.bf16.gmra.mxu0 %v5869
  %v5903 = vpop.f32.mrf.mxu0
  %v5904 = vadd.f32 0.0, %v5903
  %v5905 = vpop.f32.mrf.mxu0
  %v5906 = vadd.f32 0.0, %v5905
  %5907 = vmatmul.bf16.gmra.mxu0 %v5872
  %v5908 = vpop.f32.mrf.mxu0
  %v5909 = vadd.f32 0.0, %v5908
  %v5910 = vpop.f32.mrf.mxu0
  %v5911 = vadd.f32 0.0, %v5910
  %5912 = vmatmul.bf16.gmra.mxu0 %v5875
  %v5913 = vpop.f32.mrf.mxu0
  %v5914 = vadd.f32 0.0, %v5913
  %v5915 = vpop.f32.mrf.mxu0
  %v5916 = vadd.f32 0.0, %v5915
  %5917 = vmatmul.bf16.gmra.mxu0 %v5878
  %v5918 = vpop.f32.mrf.mxu0
  %v5919 = vadd.f32 0.0, %v5918
  %v5920 = vpop.f32.mrf.mxu0
  %v5921 = vadd.f32 0.0, %v5920
  %5922 = vmatmul.bf16.gmra.mxu0 %v5881
  %v5923 = vpop.f32.mrf.mxu0
  %v5924 = vadd.f32 0.0, %v5923
  %v5925 = vpop.f32.mrf.mxu0
  %v5926 = vadd.f32 0.0, %v5925
  %5927 = vmatmul.bf16.gmra.mxu0 %v5884
  %v5928 = vpop.f32.mrf.mxu0
  %v5929 = vadd.f32 0.0, %v5928
  %v5930 = vpop.f32.mrf.mxu0
  %v5931 = vadd.f32 0.0, %v5930
  %5932 = vmatmul.bf16.gmra.mxu0 %v5887
  %v5933 = vpop.f32.mrf.mxu0
  %v5934 = vadd.f32 0.0, %v5933
  %v5935 = vpop.f32.mrf.mxu0
  %v5936 = vadd.f32 0.0, %v5935
  %5937 = vdwg.mxu0
  %v5938 = vadd.f32 %v5717, %v5899
  %v5939 = vadd.f32 %v5718, %v5901
  %v5940 = vadd.f32 %v5719, %v5904
  %v5941 = vadd.f32 %v5720, %v5906
  %v5942 = vadd.f32 %v5721, %v5909
  %v5943 = vadd.f32 %v5722, %v5911
  %v5944 = vadd.f32 %v5723, %v5914
  %v5945 = vadd.f32 %v5724, %v5916
  %v5946 = vadd.f32 %v5725, %v5919
  %v5947 = vadd.f32 %v5726, %v5921
  %v5948 = vadd.f32 %v5727, %v5924
  %v5949 = vadd.f32 %v5728, %v5926
  %v5950 = vadd.f32 %v5729, %v5929
  %v5951 = vadd.f32 %v5730, %v5931
  %v5952 = vadd.f32 %v5731, %v5934
  %v5953 = vadd.f32 %v5732, %v5936
  %5954 = vrot.lane.b32.xlu0 %v4228, 116
  %v5955 = vpop.permute.xlu0 %5954
  %5956 = vrot.lane.b32.xlu0 %v4229, 116
  %v5957 = vpop.permute.xlu0 %5956
  %5958 = vrot.lane.b32.xlu0 %v4230, 116
  %v5959 = vpop.permute.xlu0 %5958
  %5960 = vrot.lane.b32.xlu0 %v4231, 116
  %v5961 = vpop.permute.xlu0 %5960
  %5962 = vrot.lane.b32.xlu0 %v4232, 116
  %v5963 = vpop.permute.xlu0 %5962
  %5964 = vrot.lane.b32.xlu0 %v4233, 116
  %v5965 = vpop.permute.xlu0 %5964
  %5966 = vrot.lane.b32.xlu0 %v4234, 116
  %v5967 = vpop.permute.xlu0 %5966
  %5968 = vrot.lane.b32.xlu0 %v4235, 116
  %v5969 = vpop.permute.xlu0 %5968
  %5970 = vrot.lane.b32.xlu0 %v4236, 116
  %v5971 = vpop.permute.xlu0 %5970
  %5972 = vrot.lane.b32.xlu0 %v4237, 116
  %v5973 = vpop.permute.xlu0 %5972
  %5984 = vrot.lane.b32.xlu0 %v4228, 81
  %v5985 = vpop.permute.xlu0 %5984
  %5986 = vrot.lane.b32.xlu0 %v4229, 81
  %v5987 = vpop.permute.xlu0 %5986
  %5988 = vrot.lane.b32.xlu0 %v4230, 81
  %v5989 = vpop.permute.xlu0 %5988
  %5990 = vrot.lane.b32.xlu0 %v4231, 81
  %v5991 = vpop.permute.xlu0 %5990
  %5992 = vrot.lane.b32.xlu0 %v4232, 81
  %v5993 = vpop.permute.xlu0 %5992
  %5994 = vrot.lane.b32.xlu0 %v4233, 81
  %v5995 = vpop.permute.xlu0 %5994
  %5996 = vrot.lane.b32.xlu0 %v4234, 81
  %v5997 = vpop.permute.xlu0 %5996
  %5998 = vrot.lane.b32.xlu0 %v4235, 81
  %v5999 = vpop.permute.xlu0 %5998
  %6000 = vrot.lane.b32.xlu0 %v4236, 81
  %v6001 = vpop.permute.xlu0 %6000
  %6002 = vrot.lane.b32.xlu0 %v4237, 81
  %v6003 = vpop.permute.xlu0 %6002
  %v6014 = vsel %vm1800, %v5955, %v5985
  %v6015 = vsel %vm1800, %v5957, %v5987
  %v6016 = vsel %vm1800, %v5959, %v5989
  %v6017 = vsel %vm1800, %v5961, %v5991
  %v6018 = vsel %vm1800, %v5963, %v5993
  %v6019 = vsel %vm1800, %v5965, %v5995
  %v6020 = vsel %vm1800, %v5967, %v5997
  %v6021 = vsel %vm1800, %v5969, %v5999
  %v6022 = vsel %vm1800, %v5971, %v6001
  %v6023 = vsel %vm1800, %v5973, %v6003
  %v6024 = vpack.c.bf16 %v6015, %v6014
  %v6025 = vpack.c.bf16 %v6017, %v6016
  %v6026 = vpack.c.bf16 %v6019, %v6018
  %v6027 = vpack.c.bf16 %v6021, %v6020
  %v6028 = vpack.c.bf16 %v6023, %v6022
  %s6029 = scalar_lea.vmem %s9, 512
  %v6030 = vld [vmem:[%s6029] sm:$0xf]
  %v6031 = vld [vmem:[%s6029 + $0x4] sm:$0xf]
  %v6032 = vld [vmem:[%s6029 + $0x8] sm:$0xf]
  %v6033 = vld [vmem:[%s6029 + $0xc] sm:$0xf]
  %v6034 = vld [vmem:[%s6029 + $0x10] sm:$0xf]
  %v6035 = vld [vmem:[%s6029 + $0x14] sm:$0xf]
  %v6036 = vld [vmem:[%s6029 + $0x18] sm:$0xf]
  %v6037 = vld [vmem:[%s6029 + $0x1c] sm:$0xf]
  %v6038 = vld [vmem:[%s6029 + $0x20] sm:$0xf]
  %v6039 = vld [vmem:[%s6029 + $0x24] sm:$0xf]
  %v6040 = vld [vmem:[%s6029 + $0x28] sm:$0xf]
  %v6041 = vld [vmem:[%s6029 + $0x2c] sm:$0xf]
  %v6042 = vld [vmem:[%s6029 + $0x30] sm:$0xf]
  %v6043 = vld [vmem:[%s6029 + $0x34] sm:$0xf]
  %v6044 = vld [vmem:[%s6029 + $0x38] sm:$0xf]
  %v6045 = vld [vmem:[%s6029 + $0x3c] sm:$0xf]
  %v6062 = vunpack.c.l.b16 %v6030
  %v6063 = vunpack.c.l.b16 %v6031
  %v6064 = vunpack.c.l.b16 %v6032
  %v6065 = vunpack.c.l.b16 %v6033
  %v6066 = vunpack.c.l.b16 %v6034
  %v6067 = vunpack.c.l.b16 %v6035
  %v6068 = vunpack.c.l.b16 %v6036
  %v6069 = vunpack.c.l.b16 %v6037
  %v6070 = vunpack.c.l.b16 %v6038
  %v6071 = vunpack.c.l.b16 %v6039
  %v6072 = vunpack.c.l.b16 %v6040
  %v6073 = vunpack.c.l.b16 %v6041
  %v6074 = vunpack.c.l.b16 %v6042
  %v6075 = vunpack.c.l.b16 %v6043
  %v6076 = vunpack.c.l.b16 %v6044
  %v6077 = vunpack.c.l.b16 %v6045
  %v6078 = vpack.c.b16 %v6063, %v6062
  %v6079 = vpack.c.b16 %v6065, %v6064
  %v6080 = vpack.c.b16 %v6067, %v6066
  %v6081 = vpack.c.b16 %v6069, %v6068
  %v6082 = vpack.c.b16 %v6071, %v6070
  %v6083 = vpack.c.b16 %v6073, %v6072
  %v6084 = vpack.c.b16 %v6075, %v6074
  %v6085 = vpack.c.b16 %v6077, %v6076
  %v6087 = vsel %vm4441, %v6078, 0
  %v6090 = vsel %vm4441, %v6079, 0
  %v6093 = vsel %vm4441, %v6080, 0
  %v6096 = vsel %vm4441, %v6081, 0
  %v6099 = vsel %vm4441, %v6082, 0
  %v6102 = vsel %vm4441, %v6083, 0
  %v6105 = vsel %vm4441, %v6084, 0
  %v6108 = vsel %vm4441, %v6085, 0
  %6110 = vmatpush.bf16.msra.mxu0 0
  %6111 = vmatpush.bf16.msra.mxu0 0
  %6112 = vmatpush.bf16.msra.mxu0 0
  %6113 = vmatpush.bf16.msra.mxu0 %v6028
  %6114 = vmatpush.bf16.msra.mxu0 %v6027
  %6115 = vmatpush.bf16.msra.mxu0 %v6026
  %6116 = vmatpush.bf16.msra.mxu0 %v6025
  %6117 = vmatpush.bf16.msra.mxu0 %v6024
  %6118 = vmatmul.bf16.gmra.mxu0 %v6087
  %v6119 = vpop.f32.mrf.mxu0
  %v6120 = vadd.f32 0.0, %v6119
  %v6121 = vpop.f32.mrf.mxu0
  %v6122 = vadd.f32 0.0, %v6121
  %6123 = vmatmul.bf16.gmra.mxu0 %v6090
  %v6124 = vpop.f32.mrf.mxu0
  %v6125 = vadd.f32 0.0, %v6124
  %v6126 = vpop.f32.mrf.mxu0
  %v6127 = vadd.f32 0.0, %v6126
  %6128 = vmatmul.bf16.gmra.mxu0 %v6093
  %v6129 = vpop.f32.mrf.mxu0
  %v6130 = vadd.f32 0.0, %v6129
  %v6131 = vpop.f32.mrf.mxu0
  %v6132 = vadd.f32 0.0, %v6131
  %6133 = vmatmul.bf16.gmra.mxu0 %v6096
  %v6134 = vpop.f32.mrf.mxu0
  %v6135 = vadd.f32 0.0, %v6134
  %v6136 = vpop.f32.mrf.mxu0
  %v6137 = vadd.f32 0.0, %v6136
  %6138 = vmatmul.bf16.gmra.mxu0 %v6099
  %v6139 = vpop.f32.mrf.mxu0
  %v6140 = vadd.f32 0.0, %v6139
  %v6141 = vpop.f32.mrf.mxu0
  %v6142 = vadd.f32 0.0, %v6141
  %6143 = vmatmul.bf16.gmra.mxu0 %v6102
  %v6144 = vpop.f32.mrf.mxu0
  %v6145 = vadd.f32 0.0, %v6144
  %v6146 = vpop.f32.mrf.mxu0
  %v6147 = vadd.f32 0.0, %v6146
  %6148 = vmatmul.bf16.gmra.mxu0 %v6105
  %v6149 = vpop.f32.mrf.mxu0
  %v6150 = vadd.f32 0.0, %v6149
  %v6151 = vpop.f32.mrf.mxu0
  %v6152 = vadd.f32 0.0, %v6151
  %6153 = vmatmul.bf16.gmra.mxu0 %v6108
  %v6154 = vpop.f32.mrf.mxu0
  %v6155 = vadd.f32 0.0, %v6154
  %v6156 = vpop.f32.mrf.mxu0
  %v6157 = vadd.f32 0.0, %v6156
  %6158 = vdwg.mxu0
  %v6159 = vadd.f32 %v5938, %v6120
  %v6160 = vadd.f32 %v5939, %v6122
  %v6161 = vadd.f32 %v5940, %v6125
  %v6162 = vadd.f32 %v5941, %v6127
  %v6163 = vadd.f32 %v5942, %v6130
  %v6164 = vadd.f32 %v5943, %v6132
  %v6165 = vadd.f32 %v5944, %v6135
  %v6166 = vadd.f32 %v5945, %v6137
  %v6167 = vadd.f32 %v5946, %v6140
  %v6168 = vadd.f32 %v5947, %v6142
  %v6169 = vadd.f32 %v5948, %v6145
  %v6170 = vadd.f32 %v5949, %v6147
  %v6171 = vadd.f32 %v5950, %v6150
  %v6172 = vadd.f32 %v5951, %v6152
  %v6173 = vadd.f32 %v5952, %v6155
  %v6174 = vadd.f32 %v5953, %v6157
  %6175 = vrot.lane.b32.xlu0 %v4228, 115
  %v6176 = vpop.permute.xlu0 %6175
  %6177 = vrot.lane.b32.xlu0 %v4229, 115
  %v6178 = vpop.permute.xlu0 %6177
  %6179 = vrot.lane.b32.xlu0 %v4230, 115
  %v6180 = vpop.permute.xlu0 %6179
  %6181 = vrot.lane.b32.xlu0 %v4231, 115
  %v6182 = vpop.permute.xlu0 %6181
  %6183 = vrot.lane.b32.xlu0 %v4232, 115
  %v6184 = vpop.permute.xlu0 %6183
  %6185 = vrot.lane.b32.xlu0 %v4233, 115
  %v6186 = vpop.permute.xlu0 %6185
  %6187 = vrot.lane.b32.xlu0 %v4234, 115
  %v6188 = vpop.permute.xlu0 %6187
  %6189 = vrot.lane.b32.xlu0 %v4235, 115
  %v6190 = vpop.permute.xlu0 %6189
  %6191 = vrot.lane.b32.xlu0 %v4236, 115
  %v6192 = vpop.permute.xlu0 %6191
  %6193 = vrot.lane.b32.xlu0 %v4237, 115
  %v6194 = vpop.permute.xlu0 %6193
  %6205 = vrot.lane.b32.xlu0 %v4228, 80
  %v6206 = vpop.permute.xlu0 %6205
  %6207 = vrot.lane.b32.xlu0 %v4229, 80
  %v6208 = vpop.permute.xlu0 %6207
  %6209 = vrot.lane.b32.xlu0 %v4230, 80
  %v6210 = vpop.permute.xlu0 %6209
  %6211 = vrot.lane.b32.xlu0 %v4231, 80
  %v6212 = vpop.permute.xlu0 %6211
  %6213 = vrot.lane.b32.xlu0 %v4232, 80
  %v6214 = vpop.permute.xlu0 %6213
  %6215 = vrot.lane.b32.xlu0 %v4233, 80
  %v6216 = vpop.permute.xlu0 %6215
  %6217 = vrot.lane.b32.xlu0 %v4234, 80
  %v6218 = vpop.permute.xlu0 %6217
  %6219 = vrot.lane.b32.xlu0 %v4235, 80
  %v6220 = vpop.permute.xlu0 %6219
  %6221 = vrot.lane.b32.xlu0 %v4236, 80
  %v6222 = vpop.permute.xlu0 %6221
  %6223 = vrot.lane.b32.xlu0 %v4237, 80
  %v6224 = vpop.permute.xlu0 %6223
  %v6235 = vsel %vm1800, %v6176, %v6206
  %v6236 = vsel %vm1800, %v6178, %v6208
  %v6237 = vsel %vm1800, %v6180, %v6210
  %v6238 = vsel %vm1800, %v6182, %v6212
  %v6239 = vsel %vm1800, %v6184, %v6214
  %v6240 = vsel %vm1800, %v6186, %v6216
  %v6241 = vsel %vm1800, %v6188, %v6218
  %v6242 = vsel %vm1800, %v6190, %v6220
  %v6243 = vsel %vm1800, %v6192, %v6222
  %v6244 = vsel %vm1800, %v6194, %v6224
  %v6245 = vpack.c.bf16 %v6236, %v6235
  %v6246 = vpack.c.bf16 %v6238, %v6237
  %v6247 = vpack.c.bf16 %v6240, %v6239
  %v6248 = vpack.c.bf16 %v6242, %v6241
  %v6249 = vpack.c.bf16 %v6244, %v6243
  %s6250 = scalar_lea.vmem %s9, 576
  %v6251 = vld [vmem:[%s6250] sm:$0xf]
  %v6252 = vld [vmem:[%s6250 + $0x4] sm:$0xf]
  %v6253 = vld [vmem:[%s6250 + $0x8] sm:$0xf]
  %v6254 = vld [vmem:[%s6250 + $0xc] sm:$0xf]
  %v6255 = vld [vmem:[%s6250 + $0x10] sm:$0xf]
  %v6256 = vld [vmem:[%s6250 + $0x14] sm:$0xf]
  %v6257 = vld [vmem:[%s6250 + $0x18] sm:$0xf]
  %v6258 = vld [vmem:[%s6250 + $0x1c] sm:$0xf]
  %v6259 = vld [vmem:[%s6250 + $0x20] sm:$0xf]
  %v6260 = vld [vmem:[%s6250 + $0x24] sm:$0xf]
  %v6261 = vld [vmem:[%s6250 + $0x28] sm:$0xf]
  %v6262 = vld [vmem:[%s6250 + $0x2c] sm:$0xf]
  %v6263 = vld [vmem:[%s6250 + $0x30] sm:$0xf]
  %v6264 = vld [vmem:[%s6250 + $0x34] sm:$0xf]
  %v6265 = vld [vmem:[%s6250 + $0x38] sm:$0xf]
  %v6266 = vld [vmem:[%s6250 + $0x3c] sm:$0xf]
  %v6283 = vunpack.c.l.b16 %v6251
  %v6284 = vunpack.c.l.b16 %v6252
  %v6285 = vunpack.c.l.b16 %v6253
  %v6286 = vunpack.c.l.b16 %v6254
  %v6287 = vunpack.c.l.b16 %v6255
  %v6288 = vunpack.c.l.b16 %v6256
  %v6289 = vunpack.c.l.b16 %v6257
  %v6290 = vunpack.c.l.b16 %v6258
  %v6291 = vunpack.c.l.b16 %v6259
  %v6292 = vunpack.c.l.b16 %v6260
  %v6293 = vunpack.c.l.b16 %v6261
  %v6294 = vunpack.c.l.b16 %v6262
  %v6295 = vunpack.c.l.b16 %v6263
  %v6296 = vunpack.c.l.b16 %v6264
  %v6297 = vunpack.c.l.b16 %v6265
  %v6298 = vunpack.c.l.b16 %v6266
  %v6299 = vpack.c.b16 %v6284, %v6283
  %v6300 = vpack.c.b16 %v6286, %v6285
  %v6301 = vpack.c.b16 %v6288, %v6287
  %v6302 = vpack.c.b16 %v6290, %v6289
  %v6303 = vpack.c.b16 %v6292, %v6291
  %v6304 = vpack.c.b16 %v6294, %v6293
  %v6305 = vpack.c.b16 %v6296, %v6295
  %v6306 = vpack.c.b16 %v6298, %v6297
  %v6308 = vsel %vm4441, %v6299, 0
  %v6311 = vsel %vm4441, %v6300, 0
  %v6314 = vsel %vm4441, %v6301, 0
  %v6317 = vsel %vm4441, %v6302, 0
  %v6320 = vsel %vm4441, %v6303, 0
  %v6323 = vsel %vm4441, %v6304, 0
  %v6326 = vsel %vm4441, %v6305, 0
  %v6329 = vsel %vm4441, %v6306, 0
  %6331 = vmatpush.bf16.msra.mxu0 0
  %6332 = vmatpush.bf16.msra.mxu0 0
  %6333 = vmatpush.bf16.msra.mxu0 0
  %6334 = vmatpush.bf16.msra.mxu0 %v6249
  %6335 = vmatpush.bf16.msra.mxu0 %v6248
  %6336 = vmatpush.bf16.msra.mxu0 %v6247
  %6337 = vmatpush.bf16.msra.mxu0 %v6246
  %6338 = vmatpush.bf16.msra.mxu0 %v6245
  %6339 = vmatmul.bf16.gmra.mxu0 %v6308
  %v6340 = vpop.f32.mrf.mxu0
  %v6341 = vadd.f32 0.0, %v6340
  %v6342 = vpop.f32.mrf.mxu0
  %v6343 = vadd.f32 0.0, %v6342
  %6344 = vmatmul.bf16.gmra.mxu0 %v6311
  %v6345 = vpop.f32.mrf.mxu0
  %v6346 = vadd.f32 0.0, %v6345
  %v6347 = vpop.f32.mrf.mxu0
  %v6348 = vadd.f32 0.0, %v6347
  %6349 = vmatmul.bf16.gmra.mxu0 %v6314
  %v6350 = vpop.f32.mrf.mxu0
  %v6351 = vadd.f32 0.0, %v6350
  %v6352 = vpop.f32.mrf.mxu0
  %v6353 = vadd.f32 0.0, %v6352
  %6354 = vmatmul.bf16.gmra.mxu0 %v6317
  %v6355 = vpop.f32.mrf.mxu0
  %v6356 = vadd.f32 0.0, %v6355
  %v6357 = vpop.f32.mrf.mxu0
  %v6358 = vadd.f32 0.0, %v6357
  %6359 = vmatmul.bf16.gmra.mxu0 %v6320
  %v6360 = vpop.f32.mrf.mxu0
  %v6361 = vadd.f32 0.0, %v6360
  %v6362 = vpop.f32.mrf.mxu0
  %v6363 = vadd.f32 0.0, %v6362
  %6364 = vmatmul.bf16.gmra.mxu0 %v6323
  %v6365 = vpop.f32.mrf.mxu0
  %v6366 = vadd.f32 0.0, %v6365
  %v6367 = vpop.f32.mrf.mxu0
  %v6368 = vadd.f32 0.0, %v6367
  %6369 = vmatmul.bf16.gmra.mxu0 %v6326
  %v6370 = vpop.f32.mrf.mxu0
  %v6371 = vadd.f32 0.0, %v6370
  %v6372 = vpop.f32.mrf.mxu0
  %v6373 = vadd.f32 0.0, %v6372
  %6374 = vmatmul.bf16.gmra.mxu0 %v6329
  %v6375 = vpop.f32.mrf.mxu0
  %v6376 = vadd.f32 0.0, %v6375
  %v6377 = vpop.f32.mrf.mxu0
  %v6378 = vadd.f32 0.0, %v6377
  %6379 = vdwg.mxu0
  %v6380 = vadd.f32 %v6159, %v6341
  %v6381 = vadd.f32 %v6160, %v6343
  %v6382 = vadd.f32 %v6161, %v6346
  %v6383 = vadd.f32 %v6162, %v6348
  %v6384 = vadd.f32 %v6163, %v6351
  %v6385 = vadd.f32 %v6164, %v6353
  %v6386 = vadd.f32 %v6165, %v6356
  %v6387 = vadd.f32 %v6166, %v6358
  %v6388 = vadd.f32 %v6167, %v6361
  %v6389 = vadd.f32 %v6168, %v6363
  %v6390 = vadd.f32 %v6169, %v6366
  %v6391 = vadd.f32 %v6170, %v6368
  %v6392 = vadd.f32 %v6171, %v6371
  %v6393 = vadd.f32 %v6172, %v6373
  %v6394 = vadd.f32 %v6173, %v6376
  %v6395 = vadd.f32 %v6174, %v6378
  %6396 = vrot.lane.b32.xlu0 %v4228, 114
  %v6397 = vpop.permute.xlu0 %6396
  %6398 = vrot.lane.b32.xlu0 %v4229, 114
  %v6399 = vpop.permute.xlu0 %6398
  %6400 = vrot.lane.b32.xlu0 %v4230, 114
  %v6401 = vpop.permute.xlu0 %6400
  %6402 = vrot.lane.b32.xlu0 %v4231, 114
  %v6403 = vpop.permute.xlu0 %6402
  %6404 = vrot.lane.b32.xlu0 %v4232, 114
  %v6405 = vpop.permute.xlu0 %6404
  %6406 = vrot.lane.b32.xlu0 %v4233, 114
  %v6407 = vpop.permute.xlu0 %6406
  %6408 = vrot.lane.b32.xlu0 %v4234, 114
  %v6409 = vpop.permute.xlu0 %6408
  %6410 = vrot.lane.b32.xlu0 %v4235, 114
  %v6411 = vpop.permute.xlu0 %6410
  %6412 = vrot.lane.b32.xlu0 %v4236, 114
  %v6413 = vpop.permute.xlu0 %6412
  %6414 = vrot.lane.b32.xlu0 %v4237, 114
  %v6415 = vpop.permute.xlu0 %6414
  %6426 = vrot.lane.b32.xlu0 %v4228, 79
  %v6427 = vpop.permute.xlu0 %6426
  %6428 = vrot.lane.b32.xlu0 %v4229, 79
  %v6429 = vpop.permute.xlu0 %6428
  %6430 = vrot.lane.b32.xlu0 %v4230, 79
  %v6431 = vpop.permute.xlu0 %6430
  %6432 = vrot.lane.b32.xlu0 %v4231, 79
  %v6433 = vpop.permute.xlu0 %6432
  %6434 = vrot.lane.b32.xlu0 %v4232, 79
  %v6435 = vpop.permute.xlu0 %6434
  %6436 = vrot.lane.b32.xlu0 %v4233, 79
  %v6437 = vpop.permute.xlu0 %6436
  %6438 = vrot.lane.b32.xlu0 %v4234, 79
  %v6439 = vpop.permute.xlu0 %6438
  %6440 = vrot.lane.b32.xlu0 %v4235, 79
  %v6441 = vpop.permute.xlu0 %6440
  %6442 = vrot.lane.b32.xlu0 %v4236, 79
  %v6443 = vpop.permute.xlu0 %6442
  %6444 = vrot.lane.b32.xlu0 %v4237, 79
  %v6445 = vpop.permute.xlu0 %6444
  %v6456 = vsel %vm1800, %v6397, %v6427
  %v6457 = vsel %vm1800, %v6399, %v6429
  %v6458 = vsel %vm1800, %v6401, %v6431
  %v6459 = vsel %vm1800, %v6403, %v6433
  %v6460 = vsel %vm1800, %v6405, %v6435
  %v6461 = vsel %vm1800, %v6407, %v6437
  %v6462 = vsel %vm1800, %v6409, %v6439
  %v6463 = vsel %vm1800, %v6411, %v6441
  %v6464 = vsel %vm1800, %v6413, %v6443
  %v6465 = vsel %vm1800, %v6415, %v6445
  %v6466 = vpack.c.bf16 %v6457, %v6456
  %v6467 = vpack.c.bf16 %v6459, %v6458
  %v6468 = vpack.c.bf16 %v6461, %v6460
  %v6469 = vpack.c.bf16 %v6463, %v6462
  %v6470 = vpack.c.bf16 %v6465, %v6464
  %s6471 = scalar_lea.vmem %s9, 640
  %v6472 = vld [vmem:[%s6471] sm:$0xf]
  %v6473 = vld [vmem:[%s6471 + $0x4] sm:$0xf]
  %v6474 = vld [vmem:[%s6471 + $0x8] sm:$0xf]
  %v6475 = vld [vmem:[%s6471 + $0xc] sm:$0xf]
  %v6476 = vld [vmem:[%s6471 + $0x10] sm:$0xf]
  %v6477 = vld [vmem:[%s6471 + $0x14] sm:$0xf]
  %v6478 = vld [vmem:[%s6471 + $0x18] sm:$0xf]
  %v6479 = vld [vmem:[%s6471 + $0x1c] sm:$0xf]
  %v6480 = vld [vmem:[%s6471 + $0x20] sm:$0xf]
  %v6481 = vld [vmem:[%s6471 + $0x24] sm:$0xf]
  %v6482 = vld [vmem:[%s6471 + $0x28] sm:$0xf]
  %v6483 = vld [vmem:[%s6471 + $0x2c] sm:$0xf]
  %v6484 = vld [vmem:[%s6471 + $0x30] sm:$0xf]
  %v6485 = vld [vmem:[%s6471 + $0x34] sm:$0xf]
  %v6486 = vld [vmem:[%s6471 + $0x38] sm:$0xf]
  %v6487 = vld [vmem:[%s6471 + $0x3c] sm:$0xf]
  %v6504 = vunpack.c.l.b16 %v6472
  %v6505 = vunpack.c.l.b16 %v6473
  %v6506 = vunpack.c.l.b16 %v6474
  %v6507 = vunpack.c.l.b16 %v6475
  %v6508 = vunpack.c.l.b16 %v6476
  %v6509 = vunpack.c.l.b16 %v6477
  %v6510 = vunpack.c.l.b16 %v6478
  %v6511 = vunpack.c.l.b16 %v6479
  %v6512 = vunpack.c.l.b16 %v6480
  %v6513 = vunpack.c.l.b16 %v6481
  %v6514 = vunpack.c.l.b16 %v6482
  %v6515 = vunpack.c.l.b16 %v6483
  %v6516 = vunpack.c.l.b16 %v6484
  %v6517 = vunpack.c.l.b16 %v6485
  %v6518 = vunpack.c.l.b16 %v6486
  %v6519 = vunpack.c.l.b16 %v6487
  %v6520 = vpack.c.b16 %v6505, %v6504
  %v6521 = vpack.c.b16 %v6507, %v6506
  %v6522 = vpack.c.b16 %v6509, %v6508
  %v6523 = vpack.c.b16 %v6511, %v6510
  %v6524 = vpack.c.b16 %v6513, %v6512
  %v6525 = vpack.c.b16 %v6515, %v6514
  %v6526 = vpack.c.b16 %v6517, %v6516
  %v6527 = vpack.c.b16 %v6519, %v6518
  %v6529 = vsel %vm4441, %v6520, 0
  %v6532 = vsel %vm4441, %v6521, 0
  %v6535 = vsel %vm4441, %v6522, 0
  %v6538 = vsel %vm4441, %v6523, 0
  %v6541 = vsel %vm4441, %v6524, 0
  %v6544 = vsel %vm4441, %v6525, 0
  %v6547 = vsel %vm4441, %v6526, 0
  %v6550 = vsel %vm4441, %v6527, 0
  %6552 = vmatpush.bf16.msra.mxu0 0
  %6553 = vmatpush.bf16.msra.mxu0 0
  %6554 = vmatpush.bf16.msra.mxu0 0
  %6555 = vmatpush.bf16.msra.mxu0 %v6470
  %6556 = vmatpush.bf16.msra.mxu0 %v6469
  %6557 = vmatpush.bf16.msra.mxu0 %v6468
  %6558 = vmatpush.bf16.msra.mxu0 %v6467
  %6559 = vmatpush.bf16.msra.mxu0 %v6466
  %6560 = vmatmul.bf16.gmra.mxu0 %v6529
  %v6561 = vpop.f32.mrf.mxu0
  %v6562 = vadd.f32 0.0, %v6561
  %v6563 = vpop.f32.mrf.mxu0
  %v6564 = vadd.f32 0.0, %v6563
  %6565 = vmatmul.bf16.gmra.mxu0 %v6532
  %v6566 = vpop.f32.mrf.mxu0
  %v6567 = vadd.f32 0.0, %v6566
  %v6568 = vpop.f32.mrf.mxu0
  %v6569 = vadd.f32 0.0, %v6568
  %6570 = vmatmul.bf16.gmra.mxu0 %v6535
  %v6571 = vpop.f32.mrf.mxu0
  %v6572 = vadd.f32 0.0, %v6571
  %v6573 = vpop.f32.mrf.mxu0
  %v6574 = vadd.f32 0.0, %v6573
  %6575 = vmatmul.bf16.gmra.mxu0 %v6538
  %v6576 = vpop.f32.mrf.mxu0
  %v6577 = vadd.f32 0.0, %v6576
  %v6578 = vpop.f32.mrf.mxu0
  %v6579 = vadd.f32 0.0, %v6578
  %6580 = vmatmul.bf16.gmra.mxu0 %v6541
  %v6581 = vpop.f32.mrf.mxu0
  %v6582 = vadd.f32 0.0, %v6581
  %v6583 = vpop.f32.mrf.mxu0
  %v6584 = vadd.f32 0.0, %v6583
  %6585 = vmatmul.bf16.gmra.mxu0 %v6544
  %v6586 = vpop.f32.mrf.mxu0
  %v6587 = vadd.f32 0.0, %v6586
  %v6588 = vpop.f32.mrf.mxu0
  %v6589 = vadd.f32 0.0, %v6588
  %6590 = vmatmul.bf16.gmra.mxu0 %v6547
  %v6591 = vpop.f32.mrf.mxu0
  %v6592 = vadd.f32 0.0, %v6591
  %v6593 = vpop.f32.mrf.mxu0
  %v6594 = vadd.f32 0.0, %v6593
  %6595 = vmatmul.bf16.gmra.mxu0 %v6550
  %v6596 = vpop.f32.mrf.mxu0
  %v6597 = vadd.f32 0.0, %v6596
  %v6598 = vpop.f32.mrf.mxu0
  %v6599 = vadd.f32 0.0, %v6598
  %6600 = vdwg.mxu0
  %v6601 = vadd.f32 %v6380, %v6562
  %v6602 = vadd.f32 %v6381, %v6564
  %v6603 = vadd.f32 %v6382, %v6567
  %v6604 = vadd.f32 %v6383, %v6569
  %v6605 = vadd.f32 %v6384, %v6572
  %v6606 = vadd.f32 %v6385, %v6574
  %v6607 = vadd.f32 %v6386, %v6577
  %v6608 = vadd.f32 %v6387, %v6579
  %v6609 = vadd.f32 %v6388, %v6582
  %v6610 = vadd.f32 %v6389, %v6584
  %v6611 = vadd.f32 %v6390, %v6587
  %v6612 = vadd.f32 %v6391, %v6589
  %v6613 = vadd.f32 %v6392, %v6592
  %v6614 = vadd.f32 %v6393, %v6594
  %v6615 = vadd.f32 %v6394, %v6597
  %v6616 = vadd.f32 %v6395, %v6599
  %6617 = vrot.lane.b32.xlu0 %v4228, 113
  %v6618 = vpop.permute.xlu0 %6617
  %6619 = vrot.lane.b32.xlu0 %v4229, 113
  %v6620 = vpop.permute.xlu0 %6619
  %6621 = vrot.lane.b32.xlu0 %v4230, 113
  %v6622 = vpop.permute.xlu0 %6621
  %6623 = vrot.lane.b32.xlu0 %v4231, 113
  %v6624 = vpop.permute.xlu0 %6623
  %6625 = vrot.lane.b32.xlu0 %v4232, 113
  %v6626 = vpop.permute.xlu0 %6625
  %6627 = vrot.lane.b32.xlu0 %v4233, 113
  %v6628 = vpop.permute.xlu0 %6627
  %6629 = vrot.lane.b32.xlu0 %v4234, 113
  %v6630 = vpop.permute.xlu0 %6629
  %6631 = vrot.lane.b32.xlu0 %v4235, 113
  %v6632 = vpop.permute.xlu0 %6631
  %6633 = vrot.lane.b32.xlu0 %v4236, 113
  %v6634 = vpop.permute.xlu0 %6633
  %6635 = vrot.lane.b32.xlu0 %v4237, 113
  %v6636 = vpop.permute.xlu0 %6635
  %6647 = vrot.lane.b32.xlu0 %v4228, 78
  %v6648 = vpop.permute.xlu0 %6647
  %6649 = vrot.lane.b32.xlu0 %v4229, 78
  %v6650 = vpop.permute.xlu0 %6649
  %6651 = vrot.lane.b32.xlu0 %v4230, 78
  %v6652 = vpop.permute.xlu0 %6651
  %6653 = vrot.lane.b32.xlu0 %v4231, 78
  %v6654 = vpop.permute.xlu0 %6653
  %6655 = vrot.lane.b32.xlu0 %v4232, 78
  %v6656 = vpop.permute.xlu0 %6655
  %6657 = vrot.lane.b32.xlu0 %v4233, 78
  %v6658 = vpop.permute.xlu0 %6657
  %6659 = vrot.lane.b32.xlu0 %v4234, 78
  %v6660 = vpop.permute.xlu0 %6659
  %6661 = vrot.lane.b32.xlu0 %v4235, 78
  %v6662 = vpop.permute.xlu0 %6661
  %6663 = vrot.lane.b32.xlu0 %v4236, 78
  %v6664 = vpop.permute.xlu0 %6663
  %6665 = vrot.lane.b32.xlu0 %v4237, 78
  %v6666 = vpop.permute.xlu0 %6665
  %v6677 = vsel %vm1800, %v6618, %v6648
  %v6678 = vsel %vm1800, %v6620, %v6650
  %v6679 = vsel %vm1800, %v6622, %v6652
  %v6680 = vsel %vm1800, %v6624, %v6654
  %v6681 = vsel %vm1800, %v6626, %v6656
  %v6682 = vsel %vm1800, %v6628, %v6658
  %v6683 = vsel %vm1800, %v6630, %v6660
  %v6684 = vsel %vm1800, %v6632, %v6662
  %v6685 = vsel %vm1800, %v6634, %v6664
  %v6686 = vsel %vm1800, %v6636, %v6666
  %v6687 = vpack.c.bf16 %v6678, %v6677
  %v6688 = vpack.c.bf16 %v6680, %v6679
  %v6689 = vpack.c.bf16 %v6682, %v6681
  %v6690 = vpack.c.bf16 %v6684, %v6683
  %v6691 = vpack.c.bf16 %v6686, %v6685
  %s6692 = scalar_lea.vmem %s9, 704
  %v6693 = vld [vmem:[%s6692] sm:$0xf]
  %v6694 = vld [vmem:[%s6692 + $0x4] sm:$0xf]
  %v6695 = vld [vmem:[%s6692 + $0x8] sm:$0xf]
  %v6696 = vld [vmem:[%s6692 + $0xc] sm:$0xf]
  %v6697 = vld [vmem:[%s6692 + $0x10] sm:$0xf]
  %v6698 = vld [vmem:[%s6692 + $0x14] sm:$0xf]
  %v6699 = vld [vmem:[%s6692 + $0x18] sm:$0xf]
  %v6700 = vld [vmem:[%s6692 + $0x1c] sm:$0xf]
  %v6701 = vld [vmem:[%s6692 + $0x20] sm:$0xf]
  %v6702 = vld [vmem:[%s6692 + $0x24] sm:$0xf]
  %v6703 = vld [vmem:[%s6692 + $0x28] sm:$0xf]
  %v6704 = vld [vmem:[%s6692 + $0x2c] sm:$0xf]
  %v6705 = vld [vmem:[%s6692 + $0x30] sm:$0xf]
  %v6706 = vld [vmem:[%s6692 + $0x34] sm:$0xf]
  %v6707 = vld [vmem:[%s6692 + $0x38] sm:$0xf]
  %v6708 = vld [vmem:[%s6692 + $0x3c] sm:$0xf]
  %v6725 = vunpack.c.l.b16 %v6693
  %v6726 = vunpack.c.l.b16 %v6694
  %v6727 = vunpack.c.l.b16 %v6695
  %v6728 = vunpack.c.l.b16 %v6696
  %v6729 = vunpack.c.l.b16 %v6697
  %v6730 = vunpack.c.l.b16 %v6698
  %v6731 = vunpack.c.l.b16 %v6699
  %v6732 = vunpack.c.l.b16 %v6700
  %v6733 = vunpack.c.l.b16 %v6701
  %v6734 = vunpack.c.l.b16 %v6702
  %v6735 = vunpack.c.l.b16 %v6703
  %v6736 = vunpack.c.l.b16 %v6704
  %v6737 = vunpack.c.l.b16 %v6705
  %v6738 = vunpack.c.l.b16 %v6706
  %v6739 = vunpack.c.l.b16 %v6707
  %v6740 = vunpack.c.l.b16 %v6708
  %v6741 = vpack.c.b16 %v6726, %v6725
  %v6742 = vpack.c.b16 %v6728, %v6727
  %v6743 = vpack.c.b16 %v6730, %v6729
  %v6744 = vpack.c.b16 %v6732, %v6731
  %v6745 = vpack.c.b16 %v6734, %v6733
  %v6746 = vpack.c.b16 %v6736, %v6735
  %v6747 = vpack.c.b16 %v6738, %v6737
  %v6748 = vpack.c.b16 %v6740, %v6739
  %v6750 = vsel %vm4441, %v6741, 0
  %v6753 = vsel %vm4441, %v6742, 0
  %v6756 = vsel %vm4441, %v6743, 0
  %v6759 = vsel %vm4441, %v6744, 0
  %v6762 = vsel %vm4441, %v6745, 0
  %v6765 = vsel %vm4441, %v6746, 0
  %v6768 = vsel %vm4441, %v6747, 0
  %v6771 = vsel %vm4441, %v6748, 0
  %6773 = vmatpush.bf16.msra.mxu0 0
  %6774 = vmatpush.bf16.msra.mxu0 0
  %6775 = vmatpush.bf16.msra.mxu0 0
  %6776 = vmatpush.bf16.msra.mxu0 %v6691
  %6777 = vmatpush.bf16.msra.mxu0 %v6690
  %6778 = vmatpush.bf16.msra.mxu0 %v6689
  %6779 = vmatpush.bf16.msra.mxu0 %v6688
  %6780 = vmatpush.bf16.msra.mxu0 %v6687
  %6781 = vmatmul.bf16.gmra.mxu0 %v6750
  %v6782 = vpop.f32.mrf.mxu0
  %v6783 = vadd.f32 0.0, %v6782
  %v6784 = vpop.f32.mrf.mxu0
  %v6785 = vadd.f32 0.0, %v6784
  %6786 = vmatmul.bf16.gmra.mxu0 %v6753
  %v6787 = vpop.f32.mrf.mxu0
  %v6788 = vadd.f32 0.0, %v6787
  %v6789 = vpop.f32.mrf.mxu0
  %v6790 = vadd.f32 0.0, %v6789
  %6791 = vmatmul.bf16.gmra.mxu0 %v6756
  %v6792 = vpop.f32.mrf.mxu0
  %v6793 = vadd.f32 0.0, %v6792
  %v6794 = vpop.f32.mrf.mxu0
  %v6795 = vadd.f32 0.0, %v6794
  %6796 = vmatmul.bf16.gmra.mxu0 %v6759
  %v6797 = vpop.f32.mrf.mxu0
  %v6798 = vadd.f32 0.0, %v6797
  %v6799 = vpop.f32.mrf.mxu0
  %v6800 = vadd.f32 0.0, %v6799
  %6801 = vmatmul.bf16.gmra.mxu0 %v6762
  %v6802 = vpop.f32.mrf.mxu0
  %v6803 = vadd.f32 0.0, %v6802
  %v6804 = vpop.f32.mrf.mxu0
  %v6805 = vadd.f32 0.0, %v6804
  %6806 = vmatmul.bf16.gmra.mxu0 %v6765
  %v6807 = vpop.f32.mrf.mxu0
  %v6808 = vadd.f32 0.0, %v6807
  %v6809 = vpop.f32.mrf.mxu0
  %v6810 = vadd.f32 0.0, %v6809
  %6811 = vmatmul.bf16.gmra.mxu0 %v6768
  %v6812 = vpop.f32.mrf.mxu0
  %v6813 = vadd.f32 0.0, %v6812
  %v6814 = vpop.f32.mrf.mxu0
  %v6815 = vadd.f32 0.0, %v6814
  %6816 = vmatmul.bf16.gmra.mxu0 %v6771
  %v6817 = vpop.f32.mrf.mxu0
  %v6818 = vadd.f32 0.0, %v6817
  %v6819 = vpop.f32.mrf.mxu0
  %v6820 = vadd.f32 0.0, %v6819
  %6821 = vdwg.mxu0
  %v6822 = vadd.f32 %v6601, %v6783
  %v6823 = vadd.f32 %v6602, %v6785
  %v6824 = vadd.f32 %v6603, %v6788
  %v6825 = vadd.f32 %v6604, %v6790
  %v6826 = vadd.f32 %v6605, %v6793
  %v6827 = vadd.f32 %v6606, %v6795
  %v6828 = vadd.f32 %v6607, %v6798
  %v6829 = vadd.f32 %v6608, %v6800
  %v6830 = vadd.f32 %v6609, %v6803
  %v6831 = vadd.f32 %v6610, %v6805
  %v6832 = vadd.f32 %v6611, %v6808
  %v6833 = vadd.f32 %v6612, %v6810
  %v6834 = vadd.f32 %v6613, %v6813
  %v6835 = vadd.f32 %v6614, %v6815
  %v6836 = vadd.f32 %v6615, %v6818
  %v6837 = vadd.f32 %v6616, %v6820
  %6838 = vrot.lane.b32.xlu0 %v4228, 110
  %v6839 = vpop.permute.xlu0 %6838
  %6840 = vrot.lane.b32.xlu0 %v4229, 110
  %v6841 = vpop.permute.xlu0 %6840
  %6842 = vrot.lane.b32.xlu0 %v4230, 110
  %v6843 = vpop.permute.xlu0 %6842
  %6844 = vrot.lane.b32.xlu0 %v4231, 110
  %v6845 = vpop.permute.xlu0 %6844
  %6846 = vrot.lane.b32.xlu0 %v4232, 110
  %v6847 = vpop.permute.xlu0 %6846
  %6848 = vrot.lane.b32.xlu0 %v4233, 110
  %v6849 = vpop.permute.xlu0 %6848
  %6850 = vrot.lane.b32.xlu0 %v4234, 110
  %v6851 = vpop.permute.xlu0 %6850
  %6852 = vrot.lane.b32.xlu0 %v4235, 110
  %v6853 = vpop.permute.xlu0 %6852
  %6854 = vrot.lane.b32.xlu0 %v4236, 110
  %v6855 = vpop.permute.xlu0 %6854
  %6856 = vrot.lane.b32.xlu0 %v4237, 110
  %v6857 = vpop.permute.xlu0 %6856
  %6868 = vrot.lane.b32.xlu0 %v4228, 75
  %v6869 = vpop.permute.xlu0 %6868
  %6870 = vrot.lane.b32.xlu0 %v4229, 75
  %v6871 = vpop.permute.xlu0 %6870
  %6872 = vrot.lane.b32.xlu0 %v4230, 75
  %v6873 = vpop.permute.xlu0 %6872
  %6874 = vrot.lane.b32.xlu0 %v4231, 75
  %v6875 = vpop.permute.xlu0 %6874
  %6876 = vrot.lane.b32.xlu0 %v4232, 75
  %v6877 = vpop.permute.xlu0 %6876
  %6878 = vrot.lane.b32.xlu0 %v4233, 75
  %v6879 = vpop.permute.xlu0 %6878
  %6880 = vrot.lane.b32.xlu0 %v4234, 75
  %v6881 = vpop.permute.xlu0 %6880
  %6882 = vrot.lane.b32.xlu0 %v4235, 75
  %v6883 = vpop.permute.xlu0 %6882
  %6884 = vrot.lane.b32.xlu0 %v4236, 75
  %v6885 = vpop.permute.xlu0 %6884
  %6886 = vrot.lane.b32.xlu0 %v4237, 75
  %v6887 = vpop.permute.xlu0 %6886
  %v6898 = vsel %vm1800, %v6839, %v6869
  %v6899 = vsel %vm1800, %v6841, %v6871
  %v6900 = vsel %vm1800, %v6843, %v6873
  %v6901 = vsel %vm1800, %v6845, %v6875
  %v6902 = vsel %vm1800, %v6847, %v6877
  %v6903 = vsel %vm1800, %v6849, %v6879
  %v6904 = vsel %vm1800, %v6851, %v6881
  %v6905 = vsel %vm1800, %v6853, %v6883
  %v6906 = vsel %vm1800, %v6855, %v6885
  %v6907 = vsel %vm1800, %v6857, %v6887
  %v6908 = vpack.c.bf16 %v6899, %v6898
  %v6909 = vpack.c.bf16 %v6901, %v6900
  %v6910 = vpack.c.bf16 %v6903, %v6902
  %v6911 = vpack.c.bf16 %v6905, %v6904
  %v6912 = vpack.c.bf16 %v6907, %v6906
  %s6913 = scalar_lea.vmem %s9, 768
  %v6914 = vld [vmem:[%s6913] sm:$0xf]
  %v6915 = vld [vmem:[%s6913 + $0x4] sm:$0xf]
  %v6916 = vld [vmem:[%s6913 + $0x8] sm:$0xf]
  %v6917 = vld [vmem:[%s6913 + $0xc] sm:$0xf]
  %v6918 = vld [vmem:[%s6913 + $0x10] sm:$0xf]
  %v6919 = vld [vmem:[%s6913 + $0x14] sm:$0xf]
  %v6920 = vld [vmem:[%s6913 + $0x18] sm:$0xf]
  %v6921 = vld [vmem:[%s6913 + $0x1c] sm:$0xf]
  %v6922 = vld [vmem:[%s6913 + $0x20] sm:$0xf]
  %v6923 = vld [vmem:[%s6913 + $0x24] sm:$0xf]
  %v6924 = vld [vmem:[%s6913 + $0x28] sm:$0xf]
  %v6925 = vld [vmem:[%s6913 + $0x2c] sm:$0xf]
  %v6926 = vld [vmem:[%s6913 + $0x30] sm:$0xf]
  %v6927 = vld [vmem:[%s6913 + $0x34] sm:$0xf]
  %v6928 = vld [vmem:[%s6913 + $0x38] sm:$0xf]
  %v6929 = vld [vmem:[%s6913 + $0x3c] sm:$0xf]
  %v6946 = vunpack.c.l.b16 %v6914
  %v6947 = vunpack.c.l.b16 %v6915
  %v6948 = vunpack.c.l.b16 %v6916
  %v6949 = vunpack.c.l.b16 %v6917
  %v6950 = vunpack.c.l.b16 %v6918
  %v6951 = vunpack.c.l.b16 %v6919
  %v6952 = vunpack.c.l.b16 %v6920
  %v6953 = vunpack.c.l.b16 %v6921
  %v6954 = vunpack.c.l.b16 %v6922
  %v6955 = vunpack.c.l.b16 %v6923
  %v6956 = vunpack.c.l.b16 %v6924
  %v6957 = vunpack.c.l.b16 %v6925
  %v6958 = vunpack.c.l.b16 %v6926
  %v6959 = vunpack.c.l.b16 %v6927
  %v6960 = vunpack.c.l.b16 %v6928
  %v6961 = vunpack.c.l.b16 %v6929
  %v6962 = vpack.c.b16 %v6947, %v6946
  %v6963 = vpack.c.b16 %v6949, %v6948
  %v6964 = vpack.c.b16 %v6951, %v6950
  %v6965 = vpack.c.b16 %v6953, %v6952
  %v6966 = vpack.c.b16 %v6955, %v6954
  %v6967 = vpack.c.b16 %v6957, %v6956
  %v6968 = vpack.c.b16 %v6959, %v6958
  %v6969 = vpack.c.b16 %v6961, %v6960
  %v6971 = vsel %vm4441, %v6962, 0
  %v6974 = vsel %vm4441, %v6963, 0
  %v6977 = vsel %vm4441, %v6964, 0
  %v6980 = vsel %vm4441, %v6965, 0
  %v6983 = vsel %vm4441, %v6966, 0
  %v6986 = vsel %vm4441, %v6967, 0
  %v6989 = vsel %vm4441, %v6968, 0
  %v6992 = vsel %vm4441, %v6969, 0
  %6994 = vmatpush.bf16.msra.mxu0 0
  %6995 = vmatpush.bf16.msra.mxu0 0
  %6996 = vmatpush.bf16.msra.mxu0 0
  %6997 = vmatpush.bf16.msra.mxu0 %v6912
  %6998 = vmatpush.bf16.msra.mxu0 %v6911
  %6999 = vmatpush.bf16.msra.mxu0 %v6910
  %7000 = vmatpush.bf16.msra.mxu0 %v6909
  %7001 = vmatpush.bf16.msra.mxu0 %v6908
  %7002 = vmatmul.bf16.gmra.mxu0 %v6971
  %v7003 = vpop.f32.mrf.mxu0
  %v7004 = vadd.f32 0.0, %v7003
  %v7005 = vpop.f32.mrf.mxu0
  %v7006 = vadd.f32 0.0, %v7005
  %7007 = vmatmul.bf16.gmra.mxu0 %v6974
  %v7008 = vpop.f32.mrf.mxu0
  %v7009 = vadd.f32 0.0, %v7008
  %v7010 = vpop.f32.mrf.mxu0
  %v7011 = vadd.f32 0.0, %v7010
  %7012 = vmatmul.bf16.gmra.mxu0 %v6977
  %v7013 = vpop.f32.mrf.mxu0
  %v7014 = vadd.f32 0.0, %v7013
  %v7015 = vpop.f32.mrf.mxu0
  %v7016 = vadd.f32 0.0, %v7015
  %7017 = vmatmul.bf16.gmra.mxu0 %v6980
  %v7018 = vpop.f32.mrf.mxu0
  %v7019 = vadd.f32 0.0, %v7018
  %v7020 = vpop.f32.mrf.mxu0
  %v7021 = vadd.f32 0.0, %v7020
  %7022 = vmatmul.bf16.gmra.mxu0 %v6983
  %v7023 = vpop.f32.mrf.mxu0
  %v7024 = vadd.f32 0.0, %v7023
  %v7025 = vpop.f32.mrf.mxu0
  %v7026 = vadd.f32 0.0, %v7025
  %7027 = vmatmul.bf16.gmra.mxu0 %v6986
  %v7028 = vpop.f32.mrf.mxu0
  %v7029 = vadd.f32 0.0, %v7028
  %v7030 = vpop.f32.mrf.mxu0
  %v7031 = vadd.f32 0.0, %v7030
  %7032 = vmatmul.bf16.gmra.mxu0 %v6989
  %v7033 = vpop.f32.mrf.mxu0
  %v7034 = vadd.f32 0.0, %v7033
  %v7035 = vpop.f32.mrf.mxu0
  %v7036 = vadd.f32 0.0, %v7035
  %7037 = vmatmul.bf16.gmra.mxu0 %v6992
  %v7038 = vpop.f32.mrf.mxu0
  %v7039 = vadd.f32 0.0, %v7038
  %v7040 = vpop.f32.mrf.mxu0
  %v7041 = vadd.f32 0.0, %v7040
  %7042 = vdwg.mxu0
  %v7043 = vadd.f32 %v6822, %v7004
  %v7044 = vadd.f32 %v6823, %v7006
  %v7045 = vadd.f32 %v6824, %v7009
  %v7046 = vadd.f32 %v6825, %v7011
  %v7047 = vadd.f32 %v6826, %v7014
  %v7048 = vadd.f32 %v6827, %v7016
  %v7049 = vadd.f32 %v6828, %v7019
  %v7050 = vadd.f32 %v6829, %v7021
  %v7051 = vadd.f32 %v6830, %v7024
  %v7052 = vadd.f32 %v6831, %v7026
  %v7053 = vadd.f32 %v6832, %v7029
  %v7054 = vadd.f32 %v6833, %v7031
  %v7055 = vadd.f32 %v6834, %v7034
  %v7056 = vadd.f32 %v6835, %v7036
  %v7057 = vadd.f32 %v6836, %v7039
  %v7058 = vadd.f32 %v6837, %v7041
  %7059 = vrot.lane.b32.xlu0 %v4228, 109
  %v7060 = vpop.permute.xlu0 %7059
  %7061 = vrot.lane.b32.xlu0 %v4229, 109
  %v7062 = vpop.permute.xlu0 %7061
  %7063 = vrot.lane.b32.xlu0 %v4230, 109
  %v7064 = vpop.permute.xlu0 %7063
  %7065 = vrot.lane.b32.xlu0 %v4231, 109
  %v7066 = vpop.permute.xlu0 %7065
  %7067 = vrot.lane.b32.xlu0 %v4232, 109
  %v7068 = vpop.permute.xlu0 %7067
  %7069 = vrot.lane.b32.xlu0 %v4233, 109
  %v7070 = vpop.permute.xlu0 %7069
  %7071 = vrot.lane.b32.xlu0 %v4234, 109
  %v7072 = vpop.permute.xlu0 %7071
  %7073 = vrot.lane.b32.xlu0 %v4235, 109
  %v7074 = vpop.permute.xlu0 %7073
  %7075 = vrot.lane.b32.xlu0 %v4236, 109
  %v7076 = vpop.permute.xlu0 %7075
  %7077 = vrot.lane.b32.xlu0 %v4237, 109
  %v7078 = vpop.permute.xlu0 %7077
  %7089 = vrot.lane.b32.xlu0 %v4228, 74
  %v7090 = vpop.permute.xlu0 %7089
  %7091 = vrot.lane.b32.xlu0 %v4229, 74
  %v7092 = vpop.permute.xlu0 %7091
  %7093 = vrot.lane.b32.xlu0 %v4230, 74
  %v7094 = vpop.permute.xlu0 %7093
  %7095 = vrot.lane.b32.xlu0 %v4231, 74
  %v7096 = vpop.permute.xlu0 %7095
  %7097 = vrot.lane.b32.xlu0 %v4232, 74
  %v7098 = vpop.permute.xlu0 %7097
  %7099 = vrot.lane.b32.xlu0 %v4233, 74
  %v7100 = vpop.permute.xlu0 %7099
  %7101 = vrot.lane.b32.xlu0 %v4234, 74
  %v7102 = vpop.permute.xlu0 %7101
  %7103 = vrot.lane.b32.xlu0 %v4235, 74
  %v7104 = vpop.permute.xlu0 %7103
  %7105 = vrot.lane.b32.xlu0 %v4236, 74
  %v7106 = vpop.permute.xlu0 %7105
  %7107 = vrot.lane.b32.xlu0 %v4237, 74
  %v7108 = vpop.permute.xlu0 %7107
  %v7119 = vsel %vm1800, %v7060, %v7090
  %v7120 = vsel %vm1800, %v7062, %v7092
  %v7121 = vsel %vm1800, %v7064, %v7094
  %v7122 = vsel %vm1800, %v7066, %v7096
  %v7123 = vsel %vm1800, %v7068, %v7098
  %v7124 = vsel %vm1800, %v7070, %v7100
  %v7125 = vsel %vm1800, %v7072, %v7102
  %v7126 = vsel %vm1800, %v7074, %v7104
  %v7127 = vsel %vm1800, %v7076, %v7106
  %v7128 = vsel %vm1800, %v7078, %v7108
  %v7129 = vpack.c.bf16 %v7120, %v7119
  %v7130 = vpack.c.bf16 %v7122, %v7121
  %v7131 = vpack.c.bf16 %v7124, %v7123
  %v7132 = vpack.c.bf16 %v7126, %v7125
  %v7133 = vpack.c.bf16 %v7128, %v7127
  %s7134 = scalar_lea.vmem %s9, 832
  %v7135 = vld [vmem:[%s7134] sm:$0xf]
  %v7136 = vld [vmem:[%s7134 + $0x4] sm:$0xf]
  %v7137 = vld [vmem:[%s7134 + $0x8] sm:$0xf]
  %v7138 = vld [vmem:[%s7134 + $0xc] sm:$0xf]
  %v7139 = vld [vmem:[%s7134 + $0x10] sm:$0xf]
  %v7140 = vld [vmem:[%s7134 + $0x14] sm:$0xf]
  %v7141 = vld [vmem:[%s7134 + $0x18] sm:$0xf]
  %v7142 = vld [vmem:[%s7134 + $0x1c] sm:$0xf]
  %v7143 = vld [vmem:[%s7134 + $0x20] sm:$0xf]
  %v7144 = vld [vmem:[%s7134 + $0x24] sm:$0xf]
  %v7145 = vld [vmem:[%s7134 + $0x28] sm:$0xf]
  %v7146 = vld [vmem:[%s7134 + $0x2c] sm:$0xf]
  %v7147 = vld [vmem:[%s7134 + $0x30] sm:$0xf]
  %v7148 = vld [vmem:[%s7134 + $0x34] sm:$0xf]
  %v7149 = vld [vmem:[%s7134 + $0x38] sm:$0xf]
  %v7150 = vld [vmem:[%s7134 + $0x3c] sm:$0xf]
  %v7167 = vunpack.c.l.b16 %v7135
  %v7168 = vunpack.c.l.b16 %v7136
  %v7169 = vunpack.c.l.b16 %v7137
  %v7170 = vunpack.c.l.b16 %v7138
  %v7171 = vunpack.c.l.b16 %v7139
  %v7172 = vunpack.c.l.b16 %v7140
  %v7173 = vunpack.c.l.b16 %v7141
  %v7174 = vunpack.c.l.b16 %v7142
  %v7175 = vunpack.c.l.b16 %v7143
  %v7176 = vunpack.c.l.b16 %v7144
  %v7177 = vunpack.c.l.b16 %v7145
  %v7178 = vunpack.c.l.b16 %v7146
  %v7179 = vunpack.c.l.b16 %v7147
  %v7180 = vunpack.c.l.b16 %v7148
  %v7181 = vunpack.c.l.b16 %v7149
  %v7182 = vunpack.c.l.b16 %v7150
  %v7183 = vpack.c.b16 %v7168, %v7167
  %v7184 = vpack.c.b16 %v7170, %v7169
  %v7185 = vpack.c.b16 %v7172, %v7171
  %v7186 = vpack.c.b16 %v7174, %v7173
  %v7187 = vpack.c.b16 %v7176, %v7175
  %v7188 = vpack.c.b16 %v7178, %v7177
  %v7189 = vpack.c.b16 %v7180, %v7179
  %v7190 = vpack.c.b16 %v7182, %v7181
  %v7192 = vsel %vm4441, %v7183, 0
  %v7195 = vsel %vm4441, %v7184, 0
  %v7198 = vsel %vm4441, %v7185, 0
  %v7201 = vsel %vm4441, %v7186, 0
  %v7204 = vsel %vm4441, %v7187, 0
  %v7207 = vsel %vm4441, %v7188, 0
  %v7210 = vsel %vm4441, %v7189, 0
  %v7213 = vsel %vm4441, %v7190, 0
  %7215 = vmatpush.bf16.msra.mxu0 0
  %7216 = vmatpush.bf16.msra.mxu0 0
  %7217 = vmatpush.bf16.msra.mxu0 0
  %7218 = vmatpush.bf16.msra.mxu0 %v7133
  %7219 = vmatpush.bf16.msra.mxu0 %v7132
  %7220 = vmatpush.bf16.msra.mxu0 %v7131
  %7221 = vmatpush.bf16.msra.mxu0 %v7130
  %7222 = vmatpush.bf16.msra.mxu0 %v7129
  %7223 = vmatmul.bf16.gmra.mxu0 %v7192
  %v7224 = vpop.f32.mrf.mxu0
  %v7225 = vadd.f32 0.0, %v7224
  %v7226 = vpop.f32.mrf.mxu0
  %v7227 = vadd.f32 0.0, %v7226
  %7228 = vmatmul.bf16.gmra.mxu0 %v7195
  %v7229 = vpop.f32.mrf.mxu0
  %v7230 = vadd.f32 0.0, %v7229
  %v7231 = vpop.f32.mrf.mxu0
  %v7232 = vadd.f32 0.0, %v7231
  %7233 = vmatmul.bf16.gmra.mxu0 %v7198
  %v7234 = vpop.f32.mrf.mxu0
  %v7235 = vadd.f32 0.0, %v7234
  %v7236 = vpop.f32.mrf.mxu0
  %v7237 = vadd.f32 0.0, %v7236
  %7238 = vmatmul.bf16.gmra.mxu0 %v7201
  %v7239 = vpop.f32.mrf.mxu0
  %v7240 = vadd.f32 0.0, %v7239
  %v7241 = vpop.f32.mrf.mxu0
  %v7242 = vadd.f32 0.0, %v7241
  %7243 = vmatmul.bf16.gmra.mxu0 %v7204
  %v7244 = vpop.f32.mrf.mxu0
  %v7245 = vadd.f32 0.0, %v7244
  %v7246 = vpop.f32.mrf.mxu0
  %v7247 = vadd.f32 0.0, %v7246
  %7248 = vmatmul.bf16.gmra.mxu0 %v7207
  %v7249 = vpop.f32.mrf.mxu0
  %v7250 = vadd.f32 0.0, %v7249
  %v7251 = vpop.f32.mrf.mxu0
  %v7252 = vadd.f32 0.0, %v7251
  %7253 = vmatmul.bf16.gmra.mxu0 %v7210
  %v7254 = vpop.f32.mrf.mxu0
  %v7255 = vadd.f32 0.0, %v7254
  %v7256 = vpop.f32.mrf.mxu0
  %v7257 = vadd.f32 0.0, %v7256
  %7258 = vmatmul.bf16.gmra.mxu0 %v7213
  %v7259 = vpop.f32.mrf.mxu0
  %v7260 = vadd.f32 0.0, %v7259
  %v7261 = vpop.f32.mrf.mxu0
  %v7262 = vadd.f32 0.0, %v7261
  %7263 = vdwg.mxu0
  %v7264 = vadd.f32 %v7043, %v7225
  %v7265 = vadd.f32 %v7044, %v7227
  %v7266 = vadd.f32 %v7045, %v7230
  %v7267 = vadd.f32 %v7046, %v7232
  %v7268 = vadd.f32 %v7047, %v7235
  %v7269 = vadd.f32 %v7048, %v7237
  %v7270 = vadd.f32 %v7049, %v7240
  %v7271 = vadd.f32 %v7050, %v7242
  %v7272 = vadd.f32 %v7051, %v7245
  %v7273 = vadd.f32 %v7052, %v7247
  %v7274 = vadd.f32 %v7053, %v7250
  %v7275 = vadd.f32 %v7054, %v7252
  %v7276 = vadd.f32 %v7055, %v7255
  %v7277 = vadd.f32 %v7056, %v7257
  %v7278 = vadd.f32 %v7057, %v7260
  %v7279 = vadd.f32 %v7058, %v7262
  %7280 = vrot.lane.b32.xlu0 %v4228, 108
  %v7281 = vpop.permute.xlu0 %7280
  %7282 = vrot.lane.b32.xlu0 %v4229, 108
  %v7283 = vpop.permute.xlu0 %7282
  %7284 = vrot.lane.b32.xlu0 %v4230, 108
  %v7285 = vpop.permute.xlu0 %7284
  %7286 = vrot.lane.b32.xlu0 %v4231, 108
  %v7287 = vpop.permute.xlu0 %7286
  %7288 = vrot.lane.b32.xlu0 %v4232, 108
  %v7289 = vpop.permute.xlu0 %7288
  %7290 = vrot.lane.b32.xlu0 %v4233, 108
  %v7291 = vpop.permute.xlu0 %7290
  %7292 = vrot.lane.b32.xlu0 %v4234, 108
  %v7293 = vpop.permute.xlu0 %7292
  %7294 = vrot.lane.b32.xlu0 %v4235, 108
  %v7295 = vpop.permute.xlu0 %7294
  %7296 = vrot.lane.b32.xlu0 %v4236, 108
  %v7297 = vpop.permute.xlu0 %7296
  %7298 = vrot.lane.b32.xlu0 %v4237, 108
  %v7299 = vpop.permute.xlu0 %7298
  %7310 = vrot.lane.b32.xlu0 %v4228, 73
  %v7311 = vpop.permute.xlu0 %7310
  %7312 = vrot.lane.b32.xlu0 %v4229, 73
  %v7313 = vpop.permute.xlu0 %7312
  %7314 = vrot.lane.b32.xlu0 %v4230, 73
  %v7315 = vpop.permute.xlu0 %7314
  %7316 = vrot.lane.b32.xlu0 %v4231, 73
  %v7317 = vpop.permute.xlu0 %7316
  %7318 = vrot.lane.b32.xlu0 %v4232, 73
  %v7319 = vpop.permute.xlu0 %7318
  %7320 = vrot.lane.b32.xlu0 %v4233, 73
  %v7321 = vpop.permute.xlu0 %7320
  %7322 = vrot.lane.b32.xlu0 %v4234, 73
  %v7323 = vpop.permute.xlu0 %7322
  %7324 = vrot.lane.b32.xlu0 %v4235, 73
  %v7325 = vpop.permute.xlu0 %7324
  %7326 = vrot.lane.b32.xlu0 %v4236, 73
  %v7327 = vpop.permute.xlu0 %7326
  %7328 = vrot.lane.b32.xlu0 %v4237, 73
  %v7329 = vpop.permute.xlu0 %7328
  %v7340 = vsel %vm1800, %v7281, %v7311
  %v7341 = vsel %vm1800, %v7283, %v7313
  %v7342 = vsel %vm1800, %v7285, %v7315
  %v7343 = vsel %vm1800, %v7287, %v7317
  %v7344 = vsel %vm1800, %v7289, %v7319
  %v7345 = vsel %vm1800, %v7291, %v7321
  %v7346 = vsel %vm1800, %v7293, %v7323
  %v7347 = vsel %vm1800, %v7295, %v7325
  %v7348 = vsel %vm1800, %v7297, %v7327
  %v7349 = vsel %vm1800, %v7299, %v7329
  %v7350 = vpack.c.bf16 %v7341, %v7340
  %v7351 = vpack.c.bf16 %v7343, %v7342
  %v7352 = vpack.c.bf16 %v7345, %v7344
  %v7353 = vpack.c.bf16 %v7347, %v7346
  %v7354 = vpack.c.bf16 %v7349, %v7348
  %s7355 = scalar_lea.vmem %s9, 896
  %v7356 = vld [vmem:[%s7355] sm:$0xf]
  %v7357 = vld [vmem:[%s7355 + $0x4] sm:$0xf]
  %v7358 = vld [vmem:[%s7355 + $0x8] sm:$0xf]
  %v7359 = vld [vmem:[%s7355 + $0xc] sm:$0xf]
  %v7360 = vld [vmem:[%s7355 + $0x10] sm:$0xf]
  %v7361 = vld [vmem:[%s7355 + $0x14] sm:$0xf]
  %v7362 = vld [vmem:[%s7355 + $0x18] sm:$0xf]
  %v7363 = vld [vmem:[%s7355 + $0x1c] sm:$0xf]
  %v7364 = vld [vmem:[%s7355 + $0x20] sm:$0xf]
  %v7365 = vld [vmem:[%s7355 + $0x24] sm:$0xf]
  %v7366 = vld [vmem:[%s7355 + $0x28] sm:$0xf]
  %v7367 = vld [vmem:[%s7355 + $0x2c] sm:$0xf]
  %v7368 = vld [vmem:[%s7355 + $0x30] sm:$0xf]
  %v7369 = vld [vmem:[%s7355 + $0x34] sm:$0xf]
  %v7370 = vld [vmem:[%s7355 + $0x38] sm:$0xf]
  %v7371 = vld [vmem:[%s7355 + $0x3c] sm:$0xf]
  %v7388 = vunpack.c.l.b16 %v7356
  %v7389 = vunpack.c.l.b16 %v7357
  %v7390 = vunpack.c.l.b16 %v7358
  %v7391 = vunpack.c.l.b16 %v7359
  %v7392 = vunpack.c.l.b16 %v7360
  %v7393 = vunpack.c.l.b16 %v7361
  %v7394 = vunpack.c.l.b16 %v7362
  %v7395 = vunpack.c.l.b16 %v7363
  %v7396 = vunpack.c.l.b16 %v7364
  %v7397 = vunpack.c.l.b16 %v7365
  %v7398 = vunpack.c.l.b16 %v7366
  %v7399 = vunpack.c.l.b16 %v7367
  %v7400 = vunpack.c.l.b16 %v7368
  %v7401 = vunpack.c.l.b16 %v7369
  %v7402 = vunpack.c.l.b16 %v7370
  %v7403 = vunpack.c.l.b16 %v7371
  %v7404 = vpack.c.b16 %v7389, %v7388
  %v7405 = vpack.c.b16 %v7391, %v7390
  %v7406 = vpack.c.b16 %v7393, %v7392
  %v7407 = vpack.c.b16 %v7395, %v7394
  %v7408 = vpack.c.b16 %v7397, %v7396
  %v7409 = vpack.c.b16 %v7399, %v7398
  %v7410 = vpack.c.b16 %v7401, %v7400
  %v7411 = vpack.c.b16 %v7403, %v7402
  %v7413 = vsel %vm4441, %v7404, 0
  %v7416 = vsel %vm4441, %v7405, 0
  %v7419 = vsel %vm4441, %v7406, 0
  %v7422 = vsel %vm4441, %v7407, 0
  %v7425 = vsel %vm4441, %v7408, 0
  %v7428 = vsel %vm4441, %v7409, 0
  %v7431 = vsel %vm4441, %v7410, 0
  %v7434 = vsel %vm4441, %v7411, 0
  %7436 = vmatpush.bf16.msra.mxu0 0
  %7437 = vmatpush.bf16.msra.mxu0 0
  %7438 = vmatpush.bf16.msra.mxu0 0
  %7439 = vmatpush.bf16.msra.mxu0 %v7354
  %7440 = vmatpush.bf16.msra.mxu0 %v7353
  %7441 = vmatpush.bf16.msra.mxu0 %v7352
  %7442 = vmatpush.bf16.msra.mxu0 %v7351
  %7443 = vmatpush.bf16.msra.mxu0 %v7350
  %7444 = vmatmul.bf16.gmra.mxu0 %v7413
  %v7445 = vpop.f32.mrf.mxu0
  %v7446 = vadd.f32 0.0, %v7445
  %v7447 = vpop.f32.mrf.mxu0
  %v7448 = vadd.f32 0.0, %v7447
  %7449 = vmatmul.bf16.gmra.mxu0 %v7416
  %v7450 = vpop.f32.mrf.mxu0
  %v7451 = vadd.f32 0.0, %v7450
  %v7452 = vpop.f32.mrf.mxu0
  %v7453 = vadd.f32 0.0, %v7452
  %7454 = vmatmul.bf16.gmra.mxu0 %v7419
  %v7455 = vpop.f32.mrf.mxu0
  %v7456 = vadd.f32 0.0, %v7455
  %v7457 = vpop.f32.mrf.mxu0
  %v7458 = vadd.f32 0.0, %v7457
  %7459 = vmatmul.bf16.gmra.mxu0 %v7422
  %v7460 = vpop.f32.mrf.mxu0
  %v7461 = vadd.f32 0.0, %v7460
  %v7462 = vpop.f32.mrf.mxu0
  %v7463 = vadd.f32 0.0, %v7462
  %7464 = vmatmul.bf16.gmra.mxu0 %v7425
  %v7465 = vpop.f32.mrf.mxu0
  %v7466 = vadd.f32 0.0, %v7465
  %v7467 = vpop.f32.mrf.mxu0
  %v7468 = vadd.f32 0.0, %v7467
  %7469 = vmatmul.bf16.gmra.mxu0 %v7428
  %v7470 = vpop.f32.mrf.mxu0
  %v7471 = vadd.f32 0.0, %v7470
  %v7472 = vpop.f32.mrf.mxu0
  %v7473 = vadd.f32 0.0, %v7472
  %7474 = vmatmul.bf16.gmra.mxu0 %v7431
  %v7475 = vpop.f32.mrf.mxu0
  %v7476 = vadd.f32 0.0, %v7475
  %v7477 = vpop.f32.mrf.mxu0
  %v7478 = vadd.f32 0.0, %v7477
  %7479 = vmatmul.bf16.gmra.mxu0 %v7434
  %v7480 = vpop.f32.mrf.mxu0
  %v7481 = vadd.f32 0.0, %v7480
  %v7482 = vpop.f32.mrf.mxu0
  %v7483 = vadd.f32 0.0, %v7482
  %7484 = vdwg.mxu0
  %v7485 = vadd.f32 %v7264, %v7446
  %v7486 = vadd.f32 %v7265, %v7448
  %v7487 = vadd.f32 %v7266, %v7451
  %v7488 = vadd.f32 %v7267, %v7453
  %v7489 = vadd.f32 %v7268, %v7456
  %v7490 = vadd.f32 %v7269, %v7458
  %v7491 = vadd.f32 %v7270, %v7461
  %v7492 = vadd.f32 %v7271, %v7463
  %v7493 = vadd.f32 %v7272, %v7466
  %v7494 = vadd.f32 %v7273, %v7468
  %v7495 = vadd.f32 %v7274, %v7471
  %v7496 = vadd.f32 %v7275, %v7473
  %v7497 = vadd.f32 %v7276, %v7476
  %v7498 = vadd.f32 %v7277, %v7478
  %v7499 = vadd.f32 %v7278, %v7481
  %v7500 = vadd.f32 %v7279, %v7483
  %7501 = vrot.lane.b32.xlu0 %v4228, 107
  %v7502 = vpop.permute.xlu0 %7501
  %7503 = vrot.lane.b32.xlu0 %v4229, 107
  %v7504 = vpop.permute.xlu0 %7503
  %7505 = vrot.lane.b32.xlu0 %v4230, 107
  %v7506 = vpop.permute.xlu0 %7505
  %7507 = vrot.lane.b32.xlu0 %v4231, 107
  %v7508 = vpop.permute.xlu0 %7507
  %7509 = vrot.lane.b32.xlu0 %v4232, 107
  %v7510 = vpop.permute.xlu0 %7509
  %7511 = vrot.lane.b32.xlu0 %v4233, 107
  %v7512 = vpop.permute.xlu0 %7511
  %7513 = vrot.lane.b32.xlu0 %v4234, 107
  %v7514 = vpop.permute.xlu0 %7513
  %7515 = vrot.lane.b32.xlu0 %v4235, 107
  %v7516 = vpop.permute.xlu0 %7515
  %7517 = vrot.lane.b32.xlu0 %v4236, 107
  %v7518 = vpop.permute.xlu0 %7517
  %7519 = vrot.lane.b32.xlu0 %v4237, 107
  %v7520 = vpop.permute.xlu0 %7519
  %7531 = vrot.lane.b32.xlu0 %v4228, 72
  %v7532 = vpop.permute.xlu0 %7531
  %7533 = vrot.lane.b32.xlu0 %v4229, 72
  %v7534 = vpop.permute.xlu0 %7533
  %7535 = vrot.lane.b32.xlu0 %v4230, 72
  %v7536 = vpop.permute.xlu0 %7535
  %7537 = vrot.lane.b32.xlu0 %v4231, 72
  %v7538 = vpop.permute.xlu0 %7537
  %7539 = vrot.lane.b32.xlu0 %v4232, 72
  %v7540 = vpop.permute.xlu0 %7539
  %7541 = vrot.lane.b32.xlu0 %v4233, 72
  %v7542 = vpop.permute.xlu0 %7541
  %7543 = vrot.lane.b32.xlu0 %v4234, 72
  %v7544 = vpop.permute.xlu0 %7543
  %7545 = vrot.lane.b32.xlu0 %v4235, 72
  %v7546 = vpop.permute.xlu0 %7545
  %7547 = vrot.lane.b32.xlu0 %v4236, 72
  %v7548 = vpop.permute.xlu0 %7547
  %7549 = vrot.lane.b32.xlu0 %v4237, 72
  %v7550 = vpop.permute.xlu0 %7549
  %v7561 = vsel %vm1800, %v7502, %v7532
  %v7562 = vsel %vm1800, %v7504, %v7534
  %v7563 = vsel %vm1800, %v7506, %v7536
  %v7564 = vsel %vm1800, %v7508, %v7538
  %v7565 = vsel %vm1800, %v7510, %v7540
  %v7566 = vsel %vm1800, %v7512, %v7542
  %v7567 = vsel %vm1800, %v7514, %v7544
  %v7568 = vsel %vm1800, %v7516, %v7546
  %v7569 = vsel %vm1800, %v7518, %v7548
  %v7570 = vsel %vm1800, %v7520, %v7550
  %v7571 = vpack.c.bf16 %v7562, %v7561
  %v7572 = vpack.c.bf16 %v7564, %v7563
  %v7573 = vpack.c.bf16 %v7566, %v7565
  %v7574 = vpack.c.bf16 %v7568, %v7567
  %v7575 = vpack.c.bf16 %v7570, %v7569
  %s7576 = scalar_lea.vmem %s9, 960
  %v7577 = vld [vmem:[%s7576] sm:$0xf]
  %v7578 = vld [vmem:[%s7576 + $0x4] sm:$0xf]
  %v7579 = vld [vmem:[%s7576 + $0x8] sm:$0xf]
  %v7580 = vld [vmem:[%s7576 + $0xc] sm:$0xf]
  %v7581 = vld [vmem:[%s7576 + $0x10] sm:$0xf]
  %v7582 = vld [vmem:[%s7576 + $0x14] sm:$0xf]
  %v7583 = vld [vmem:[%s7576 + $0x18] sm:$0xf]
  %v7584 = vld [vmem:[%s7576 + $0x1c] sm:$0xf]
  %v7585 = vld [vmem:[%s7576 + $0x20] sm:$0xf]
  %v7586 = vld [vmem:[%s7576 + $0x24] sm:$0xf]
  %v7587 = vld [vmem:[%s7576 + $0x28] sm:$0xf]
  %v7588 = vld [vmem:[%s7576 + $0x2c] sm:$0xf]
  %v7589 = vld [vmem:[%s7576 + $0x30] sm:$0xf]
  %v7590 = vld [vmem:[%s7576 + $0x34] sm:$0xf]
  %v7591 = vld [vmem:[%s7576 + $0x38] sm:$0xf]
  %v7592 = vld [vmem:[%s7576 + $0x3c] sm:$0xf]
  %v7609 = vunpack.c.l.b16 %v7577
  %v7610 = vunpack.c.l.b16 %v7578
  %v7611 = vunpack.c.l.b16 %v7579
  %v7612 = vunpack.c.l.b16 %v7580
  %v7613 = vunpack.c.l.b16 %v7581
  %v7614 = vunpack.c.l.b16 %v7582
  %v7615 = vunpack.c.l.b16 %v7583
  %v7616 = vunpack.c.l.b16 %v7584
  %v7617 = vunpack.c.l.b16 %v7585
  %v7618 = vunpack.c.l.b16 %v7586
  %v7619 = vunpack.c.l.b16 %v7587
  %v7620 = vunpack.c.l.b16 %v7588
  %v7621 = vunpack.c.l.b16 %v7589
  %v7622 = vunpack.c.l.b16 %v7590
  %v7623 = vunpack.c.l.b16 %v7591
  %v7624 = vunpack.c.l.b16 %v7592
  %v7625 = vpack.c.b16 %v7610, %v7609
  %v7626 = vpack.c.b16 %v7612, %v7611
  %v7627 = vpack.c.b16 %v7614, %v7613
  %v7628 = vpack.c.b16 %v7616, %v7615
  %v7629 = vpack.c.b16 %v7618, %v7617
  %v7630 = vpack.c.b16 %v7620, %v7619
  %v7631 = vpack.c.b16 %v7622, %v7621
  %v7632 = vpack.c.b16 %v7624, %v7623
  %v7634 = vsel %vm4441, %v7625, 0
  %v7637 = vsel %vm4441, %v7626, 0
  %v7640 = vsel %vm4441, %v7627, 0
  %v7643 = vsel %vm4441, %v7628, 0
  %v7646 = vsel %vm4441, %v7629, 0
  %v7649 = vsel %vm4441, %v7630, 0
  %v7652 = vsel %vm4441, %v7631, 0
  %v7655 = vsel %vm4441, %v7632, 0
  %7657 = vmatpush.bf16.msra.mxu0 0
  %7658 = vmatpush.bf16.msra.mxu0 0
  %7659 = vmatpush.bf16.msra.mxu0 0
  %7660 = vmatpush.bf16.msra.mxu0 %v7575
  %7661 = vmatpush.bf16.msra.mxu0 %v7574
  %7662 = vmatpush.bf16.msra.mxu0 %v7573
  %7663 = vmatpush.bf16.msra.mxu0 %v7572
  %7664 = vmatpush.bf16.msra.mxu0 %v7571
  %7665 = vmatmul.bf16.gmra.mxu0 %v7634
  %v7666 = vpop.f32.mrf.mxu0
  %v7667 = vadd.f32 0.0, %v7666
  %v7668 = vpop.f32.mrf.mxu0
  %v7669 = vadd.f32 0.0, %v7668
  %7670 = vmatmul.bf16.gmra.mxu0 %v7637
  %v7671 = vpop.f32.mrf.mxu0
  %v7672 = vadd.f32 0.0, %v7671
  %v7673 = vpop.f32.mrf.mxu0
  %v7674 = vadd.f32 0.0, %v7673
  %7675 = vmatmul.bf16.gmra.mxu0 %v7640
  %v7676 = vpop.f32.mrf.mxu0
  %v7677 = vadd.f32 0.0, %v7676
  %v7678 = vpop.f32.mrf.mxu0
  %v7679 = vadd.f32 0.0, %v7678
  %7680 = vmatmul.bf16.gmra.mxu0 %v7643
  %v7681 = vpop.f32.mrf.mxu0
  %v7682 = vadd.f32 0.0, %v7681
  %v7683 = vpop.f32.mrf.mxu0
  %v7684 = vadd.f32 0.0, %v7683
  %7685 = vmatmul.bf16.gmra.mxu0 %v7646
  %v7686 = vpop.f32.mrf.mxu0
  %v7687 = vadd.f32 0.0, %v7686
  %v7688 = vpop.f32.mrf.mxu0
  %v7689 = vadd.f32 0.0, %v7688
  %7690 = vmatmul.bf16.gmra.mxu0 %v7649
  %v7691 = vpop.f32.mrf.mxu0
  %v7692 = vadd.f32 0.0, %v7691
  %v7693 = vpop.f32.mrf.mxu0
  %v7694 = vadd.f32 0.0, %v7693
  %7695 = vmatmul.bf16.gmra.mxu0 %v7652
  %v7696 = vpop.f32.mrf.mxu0
  %v7697 = vadd.f32 0.0, %v7696
  %v7698 = vpop.f32.mrf.mxu0
  %v7699 = vadd.f32 0.0, %v7698
  %7700 = vmatmul.bf16.gmra.mxu0 %v7655
  %v7701 = vpop.f32.mrf.mxu0
  %v7702 = vadd.f32 0.0, %v7701
  %v7703 = vpop.f32.mrf.mxu0
  %v7704 = vadd.f32 0.0, %v7703
  %7705 = vdwg.mxu0
  %v7706 = vadd.f32 %v7485, %v7667
  %v7707 = vadd.f32 %v7486, %v7669
  %v7708 = vadd.f32 %v7487, %v7672
  %v7709 = vadd.f32 %v7488, %v7674
  %v7710 = vadd.f32 %v7489, %v7677
  %v7711 = vadd.f32 %v7490, %v7679
  %v7712 = vadd.f32 %v7491, %v7682
  %v7713 = vadd.f32 %v7492, %v7684
  %v7714 = vadd.f32 %v7493, %v7687
  %v7715 = vadd.f32 %v7494, %v7689
  %v7716 = vadd.f32 %v7495, %v7692
  %v7717 = vadd.f32 %v7496, %v7694
  %v7718 = vadd.f32 %v7497, %v7697
  %v7719 = vadd.f32 %v7498, %v7699
  %v7720 = vadd.f32 %v7499, %v7702
  %v7721 = vadd.f32 %v7500, %v7704
  %v7722 = vld [vmem:[%s10] sm:$0xff]
  %v7723 = vld [vmem:[%s10 + $0x8] sm:$0xff]
  %v7724 = vld [vmem:[%s10 + $0x10] sm:$0xff]
  %v7725 = vld [vmem:[%s10 + $0x18] sm:$0xff]
  %v7726 = vld [vmem:[%s10 + $0x20] sm:$0xff]
  %v7727 = vld [vmem:[%s10 + $0x28] sm:$0xff]
  %v7728 = vld [vmem:[%s10 + $0x30] sm:$0xff]
  %v7729 = vld [vmem:[%s10 + $0x38] sm:$0xff]
  %v7730 = vld [vmem:[%s10 + $0x40] sm:$0xff]
  %v7731 = vld [vmem:[%s10 + $0x48] sm:$0xff]
  %v7732 = vld [vmem:[%s10 + $0x50] sm:$0xff]
  %v7733 = vld [vmem:[%s10 + $0x58] sm:$0xff]
  %v7734 = vld [vmem:[%s10 + $0x60] sm:$0xff]
  %v7735 = vld [vmem:[%s10 + $0x68] sm:$0xff]
  %v7736 = vld [vmem:[%s10 + $0x70] sm:$0xff]
  %v7737 = vld [vmem:[%s10 + $0x78] sm:$0xff]
  %7739 = vset.pattern.permute.xlu0 0
  %7740 = vperm.xlu0 %7739, %v7722
  %v7741 = vpop.permute.xlu0 %7740
  %7744 = vset.pattern.permute.xlu0 0
  %7745 = vperm.xlu0 %7744, %v7723
  %v7746 = vpop.permute.xlu0 %7745
  %7749 = vset.pattern.permute.xlu0 0
  %7750 = vperm.xlu0 %7749, %v7724
  %v7751 = vpop.permute.xlu0 %7750
  %7754 = vset.pattern.permute.xlu0 0
  %7755 = vperm.xlu0 %7754, %v7725
  %v7756 = vpop.permute.xlu0 %7755
  %7759 = vset.pattern.permute.xlu0 0
  %7760 = vperm.xlu0 %7759, %v7726
  %v7761 = vpop.permute.xlu0 %7760
  %7764 = vset.pattern.permute.xlu0 0
  %7765 = vperm.xlu0 %7764, %v7727
  %v7766 = vpop.permute.xlu0 %7765
  %7769 = vset.pattern.permute.xlu0 0
  %7770 = vperm.xlu0 %7769, %v7728
  %v7771 = vpop.permute.xlu0 %7770
  %7774 = vset.pattern.permute.xlu0 0
  %7775 = vperm.xlu0 %7774, %v7729
  %v7776 = vpop.permute.xlu0 %7775
  %7779 = vset.pattern.permute.xlu0 0
  %7780 = vperm.xlu0 %7779, %v7730
  %v7781 = vpop.permute.xlu0 %7780
  %7784 = vset.pattern.permute.xlu0 0
  %7785 = vperm.xlu0 %7784, %v7731
  %v7786 = vpop.permute.xlu0 %7785
  %7789 = vset.pattern.permute.xlu0 0
  %7790 = vperm.xlu0 %7789, %v7732
  %v7791 = vpop.permute.xlu0 %7790
  %7794 = vset.pattern.permute.xlu0 0
  %7795 = vperm.xlu0 %7794, %v7733
  %v7796 = vpop.permute.xlu0 %7795
  %7799 = vset.pattern.permute.xlu0 0
  %7800 = vperm.xlu0 %7799, %v7734
  %v7801 = vpop.permute.xlu0 %7800
  %7804 = vset.pattern.permute.xlu0 0
  %7805 = vperm.xlu0 %7804, %v7735
  %v7806 = vpop.permute.xlu0 %7805
  %7809 = vset.pattern.permute.xlu0 0
  %7810 = vperm.xlu0 %7809, %v7736
  %v7811 = vpop.permute.xlu0 %7810
  %7814 = vset.pattern.permute.xlu0 0
  %7815 = vperm.xlu0 %7814, %v7737
  %v7816 = vpop.permute.xlu0 %7815
  %v7818 = vadd.f32 %v7706, %v7741
  %v7819 = vadd.f32 %v7707, %v7746
  %v7820 = vadd.f32 %v7708, %v7751
  %v7821 = vadd.f32 %v7709, %v7756
  %v7822 = vadd.f32 %v7710, %v7761
  %v7823 = vadd.f32 %v7711, %v7766
  %v7824 = vadd.f32 %v7712, %v7771
  %v7825 = vadd.f32 %v7713, %v7776
  %v7826 = vadd.f32 %v7714, %v7781
  %v7827 = vadd.f32 %v7715, %v7786
  %v7828 = vadd.f32 %v7716, %v7791
  %v7829 = vadd.f32 %v7717, %v7796
  %v7830 = vadd.f32 %v7718, %v7801
  %v7831 = vadd.f32 %v7719, %v7806
  %v7832 = vadd.f32 %v7720, %v7811
  %v7833 = vadd.f32 %v7721, %v7816
  %vm7834 = vcmp.ge.f32.partialorder %v7818, 0.0
  %vm7835 = vcmp.ge.f32.partialorder %v7819, 0.0
  %vm7836 = vcmp.ge.f32.partialorder %v7820, 0.0
  %vm7837 = vcmp.ge.f32.partialorder %v7821, 0.0
  %vm7838 = vcmp.ge.f32.partialorder %v7822, 0.0
  %vm7839 = vcmp.ge.f32.partialorder %v7823, 0.0
  %vm7840 = vcmp.ge.f32.partialorder %v7824, 0.0
  %vm7841 = vcmp.ge.f32.partialorder %v7825, 0.0
  %vm7842 = vcmp.ge.f32.partialorder %v7826, 0.0
  %vm7843 = vcmp.ge.f32.partialorder %v7827, 0.0
  %vm7844 = vcmp.ge.f32.partialorder %v7828, 0.0
  %vm7845 = vcmp.ge.f32.partialorder %v7829, 0.0
  %vm7846 = vcmp.ge.f32.partialorder %v7830, 0.0
  %vm7847 = vcmp.ge.f32.partialorder %v7831, 0.0
  %vm7848 = vcmp.ge.f32.partialorder %v7832, 0.0
  %vm7849 = vcmp.ge.f32.partialorder %v7833, 0.0
  %v7850 = vmul.f32 %v919, %v7818
  %v7851 = vmul.f32 %v919, %v7819
  %v7852 = vmul.f32 %v919, %v7820
  %v7853 = vmul.f32 %v919, %v7821
  %v7854 = vmul.f32 %v919, %v7822
  %v7855 = vmul.f32 %v919, %v7823
  %v7856 = vmul.f32 %v919, %v7824
  %v7857 = vmul.f32 %v919, %v7825
  %v7858 = vmul.f32 %v919, %v7826
  %v7859 = vmul.f32 %v919, %v7827
  %v7860 = vmul.f32 %v919, %v7828
  %v7861 = vmul.f32 %v919, %v7829
  %v7862 = vmul.f32 %v919, %v7830
  %v7863 = vmul.f32 %v919, %v7831
  %v7864 = vmul.f32 %v919, %v7832
  %v7865 = vmul.f32 %v919, %v7833
  %v7866 = vsel %vm7834, %v7818, %v7850
  %v7867 = vsel %vm7835, %v7819, %v7851
  %v7868 = vsel %vm7836, %v7820, %v7852
  %v7869 = vsel %vm7837, %v7821, %v7853
  %v7870 = vsel %vm7838, %v7822, %v7854
  %v7871 = vsel %vm7839, %v7823, %v7855
  %v7872 = vsel %vm7840, %v7824, %v7856
  %v7873 = vsel %vm7841, %v7825, %v7857
  %v7874 = vsel %vm7842, %v7826, %v7858
  %v7875 = vsel %vm7843, %v7827, %v7859
  %v7876 = vsel %vm7844, %v7828, %v7860
  %v7877 = vsel %vm7845, %v7829, %v7861
  %v7878 = vsel %vm7846, %v7830, %v7862
  %v7879 = vsel %vm7847, %v7831, %v7863
  %v7880 = vsel %vm7848, %v7832, %v7864
  %v7881 = vsel %vm7849, %v7833, %v7865
  %v7882 = vld [vmem:[%s11] sm:$0xf]
  %v7883 = vld [vmem:[%s11 + $0x4] sm:$0xf]
  %v7884 = vld [vmem:[%s11 + $0x8] sm:$0xf]
  %v7885 = vld [vmem:[%s11 + $0xc] sm:$0xf]
  %v7886 = vld [vmem:[%s11 + $0x10] sm:$0xf]
  %v7887 = vld [vmem:[%s11 + $0x14] sm:$0xf]
  %v7888 = vld [vmem:[%s11 + $0x18] sm:$0xf]
  %v7889 = vld [vmem:[%s11 + $0x1c] sm:$0xf]
  %v7890 = vld [vmem:[%s11 + $0x20] sm:$0xf]
  %v7891 = vld [vmem:[%s11 + $0x24] sm:$0xf]
  %v7892 = vld [vmem:[%s11 + $0x28] sm:$0xf]
  %v7893 = vld [vmem:[%s11 + $0x2c] sm:$0xf]
  %v7894 = vld [vmem:[%s11 + $0x30] sm:$0xf]
  %v7895 = vld [vmem:[%s11 + $0x34] sm:$0xf]
  %v7896 = vld [vmem:[%s11 + $0x38] sm:$0xf]
  %v7897 = vld [vmem:[%s11 + $0x3c] sm:$0xf]
  %v7898 = vpack.c.bf16 %v7867, %v7866
  %v7899 = vpack.c.bf16 %v7869, %v7868
  %v7900 = vpack.c.bf16 %v7871, %v7870
  %v7901 = vpack.c.bf16 %v7873, %v7872
  %v7902 = vpack.c.bf16 %v7875, %v7874
  %v7903 = vpack.c.bf16 %v7877, %v7876
  %v7904 = vpack.c.bf16 %v7879, %v7878
  %v7905 = vpack.c.bf16 %v7881, %v7880
  %v7906 = vld [vmem:[%s12] sm:$0xff]
  %v7907 = vld [vmem:[%s12 + $0x8] sm:$0xff]
  %v7908 = vld [vmem:[%s12 + $0x10] sm:$0xff]
  %v7909 = vld [vmem:[%s12 + $0x18] sm:$0xff]
  %v7910 = vld [vmem:[%s12 + $0x20] sm:$0xff]
  %v7911 = vld [vmem:[%s12 + $0x28] sm:$0xff]
  %v7912 = vld [vmem:[%s12 + $0x30] sm:$0xff]
  %v7913 = vld [vmem:[%s12 + $0x38] sm:$0xff]
  %v7914 = vld [vmem:[%s12 + $0x40] sm:$0xff]
  %v7915 = vld [vmem:[%s12 + $0x48] sm:$0xff]
  %v7916 = vld [vmem:[%s12 + $0x50] sm:$0xff]
  %v7917 = vld [vmem:[%s12 + $0x58] sm:$0xff]
  %v7918 = vld [vmem:[%s12 + $0x60] sm:$0xff]
  %v7919 = vld [vmem:[%s12 + $0x68] sm:$0xff]
  %v7920 = vld [vmem:[%s12 + $0x70] sm:$0xff]
  %v7921 = vld [vmem:[%s12 + $0x78] sm:$0xff]
  %7923 = vset.pattern.permute.xlu0 0
  %7924 = vperm.xlu0 %7923, %v7906
  %v7925 = vpop.permute.xlu0 %7924
  %7928 = vset.pattern.permute.xlu0 0
  %7929 = vperm.xlu0 %7928, %v7907
  %v7930 = vpop.permute.xlu0 %7929
  %7933 = vset.pattern.permute.xlu0 0
  %7934 = vperm.xlu0 %7933, %v7908
  %v7935 = vpop.permute.xlu0 %7934
  %7938 = vset.pattern.permute.xlu0 0
  %7939 = vperm.xlu0 %7938, %v7909
  %v7940 = vpop.permute.xlu0 %7939
  %7943 = vset.pattern.permute.xlu0 0
  %7944 = vperm.xlu0 %7943, %v7910
  %v7945 = vpop.permute.xlu0 %7944
  %7948 = vset.pattern.permute.xlu0 0
  %7949 = vperm.xlu0 %7948, %v7911
  %v7950 = vpop.permute.xlu0 %7949
  %7953 = vset.pattern.permute.xlu0 0
  %7954 = vperm.xlu0 %7953, %v7912
  %v7955 = vpop.permute.xlu0 %7954
  %7958 = vset.pattern.permute.xlu0 0
  %7959 = vperm.xlu0 %7958, %v7913
  %v7960 = vpop.permute.xlu0 %7959
  %7963 = vset.pattern.permute.xlu0 0
  %7964 = vperm.xlu0 %7963, %v7914
  %v7965 = vpop.permute.xlu0 %7964
  %7968 = vset.pattern.permute.xlu0 0
  %7969 = vperm.xlu0 %7968, %v7915
  %v7970 = vpop.permute.xlu0 %7969
  %7973 = vset.pattern.permute.xlu0 0
  %7974 = vperm.xlu0 %7973, %v7916
  %v7975 = vpop.permute.xlu0 %7974
  %7978 = vset.pattern.permute.xlu0 0
  %7979 = vperm.xlu0 %7978, %v7917
  %v7980 = vpop.permute.xlu0 %7979
  %7983 = vset.pattern.permute.xlu0 0
  %7984 = vperm.xlu0 %7983, %v7918
  %v7985 = vpop.permute.xlu0 %7984
  %7988 = vset.pattern.permute.xlu0 0
  %7989 = vperm.xlu0 %7988, %v7919
  %v7990 = vpop.permute.xlu0 %7989
  %7993 = vset.pattern.permute.xlu0 0
  %7994 = vperm.xlu0 %7993, %v7920
  %v7995 = vpop.permute.xlu0 %7994
  %7998 = vset.pattern.permute.xlu0 0
  %7999 = vperm.xlu0 %7998, %v7921
  %v8000 = vpop.permute.xlu0 %7999
  %v8018 = vunpack.c.l.b16 %v7882
  %v8019 = vunpack.c.l.b16 %v7883
  %v8020 = vunpack.c.l.b16 %v7884
  %v8021 = vunpack.c.l.b16 %v7885
  %v8022 = vunpack.c.l.b16 %v7886
  %v8023 = vunpack.c.l.b16 %v7887
  %v8024 = vunpack.c.l.b16 %v7888
  %v8025 = vunpack.c.l.b16 %v7889
  %v8026 = vunpack.c.l.b16 %v7890
  %v8027 = vunpack.c.l.b16 %v7891
  %v8028 = vunpack.c.l.b16 %v7892
  %v8029 = vunpack.c.l.b16 %v7893
  %v8030 = vunpack.c.l.b16 %v7894
  %v8031 = vunpack.c.l.b16 %v7895
  %v8032 = vunpack.c.l.b16 %v7896
  %v8033 = vunpack.c.l.b16 %v7897
  %v8034 = vpack.c.b16 %v8019, %v8018
  %v8035 = vpack.c.b16 %v8021, %v8020
  %v8036 = vpack.c.b16 %v8023, %v8022
  %v8037 = vpack.c.b16 %v8025, %v8024
  %v8038 = vpack.c.b16 %v8027, %v8026
  %v8039 = vpack.c.b16 %v8029, %v8028
  %v8040 = vpack.c.b16 %v8031, %v8030
  %v8041 = vpack.c.b16 %v8033, %v8032
  %8050 = vmatpush.bf16.msra.mxu0 %v7905
  %8051 = vmatpush.bf16.msra.mxu0 %v7904
  %8052 = vmatpush.bf16.msra.mxu0 %v7903
  %8053 = vmatpush.bf16.msra.mxu0 %v7902
  %8054 = vmatpush.bf16.msra.mxu0 %v7901
  %8055 = vmatpush.bf16.msra.mxu0 %v7900
  %8056 = vmatpush.bf16.msra.mxu0 %v7899
  %8057 = vmatpush.bf16.msra.mxu0 %v7898
  %8058 = vmatmul.bf16.gmra.mxu0 %v8034
  %v8059 = vpop.f32.mrf.mxu0
  %v8060 = vadd.f32 %v7925, %v8059
  %v8061 = vpop.f32.mrf.mxu0
  %v8062 = vadd.f32 %v7930, %v8061
  %8063 = vmatmul.bf16.gmra.mxu0 %v8035
  %v8064 = vpop.f32.mrf.mxu0
  %v8065 = vadd.f32 %v7935, %v8064
  %v8066 = vpop.f32.mrf.mxu0
  %v8067 = vadd.f32 %v7940, %v8066
  %8068 = vmatmul.bf16.gmra.mxu0 %v8036
  %v8069 = vpop.f32.mrf.mxu0
  %v8070 = vadd.f32 %v7945, %v8069
  %v8071 = vpop.f32.mrf.mxu0
  %v8072 = vadd.f32 %v7950, %v8071
  %8073 = vmatmul.bf16.gmra.mxu0 %v8037
  %v8074 = vpop.f32.mrf.mxu0
  %v8075 = vadd.f32 %v7955, %v8074
  %v8076 = vpop.f32.mrf.mxu0
  %v8077 = vadd.f32 %v7960, %v8076
  %8078 = vmatmul.bf16.gmra.mxu0 %v8038
  %v8079 = vpop.f32.mrf.mxu0
  %v8080 = vadd.f32 %v7965, %v8079
  %v8081 = vpop.f32.mrf.mxu0
  %v8082 = vadd.f32 %v7970, %v8081
  %8083 = vmatmul.bf16.gmra.mxu0 %v8039
  %v8084 = vpop.f32.mrf.mxu0
  %v8085 = vadd.f32 %v7975, %v8084
  %v8086 = vpop.f32.mrf.mxu0
  %v8087 = vadd.f32 %v7980, %v8086
  %8088 = vmatmul.bf16.gmra.mxu0 %v8040
  %v8089 = vpop.f32.mrf.mxu0
  %v8090 = vadd.f32 %v7985, %v8089
  %v8091 = vpop.f32.mrf.mxu0
  %v8092 = vadd.f32 %v7990, %v8091
  %8093 = vmatmul.bf16.gmra.mxu0 %v8041
  %v8094 = vpop.f32.mrf.mxu0
  %v8095 = vadd.f32 %v7995, %v8094
  %v8096 = vpop.f32.mrf.mxu0
  %v8097 = vadd.f32 %v8000, %v8096
  %8098 = vdwg.mxu0
  %vm8099 = vcmp.ge.f32.partialorder %v8060, 0.0
  %vm8100 = vcmp.ge.f32.partialorder %v8062, 0.0
  %vm8101 = vcmp.ge.f32.partialorder %v8065, 0.0
  %vm8102 = vcmp.ge.f32.partialorder %v8067, 0.0
  %vm8103 = vcmp.ge.f32.partialorder %v8070, 0.0
  %vm8104 = vcmp.ge.f32.partialorder %v8072, 0.0
  %vm8105 = vcmp.ge.f32.partialorder %v8075, 0.0
  %vm8106 = vcmp.ge.f32.partialorder %v8077, 0.0
  %vm8107 = vcmp.ge.f32.partialorder %v8080, 0.0
  %vm8108 = vcmp.ge.f32.partialorder %v8082, 0.0
  %vm8109 = vcmp.ge.f32.partialorder %v8085, 0.0
  %vm8110 = vcmp.ge.f32.partialorder %v8087, 0.0
  %vm8111 = vcmp.ge.f32.partialorder %v8090, 0.0
  %vm8112 = vcmp.ge.f32.partialorder %v8092, 0.0
  %vm8113 = vcmp.ge.f32.partialorder %v8095, 0.0
  %vm8114 = vcmp.ge.f32.partialorder %v8097, 0.0
  %v8115 = vmul.f32 %v919, %v8060
  %v8116 = vmul.f32 %v919, %v8062
  %v8117 = vmul.f32 %v919, %v8065
  %v8118 = vmul.f32 %v919, %v8067
  %v8119 = vmul.f32 %v919, %v8070
  %v8120 = vmul.f32 %v919, %v8072
  %v8121 = vmul.f32 %v919, %v8075
  %v8122 = vmul.f32 %v919, %v8077
  %v8123 = vmul.f32 %v919, %v8080
  %v8124 = vmul.f32 %v919, %v8082
  %v8125 = vmul.f32 %v919, %v8085
  %v8126 = vmul.f32 %v919, %v8087
  %v8127 = vmul.f32 %v919, %v8090
  %v8128 = vmul.f32 %v919, %v8092
  %v8129 = vmul.f32 %v919, %v8095
  %v8130 = vmul.f32 %v919, %v8097
  %v8131 = vsel %vm8099, %v8060, %v8115
  %v8132 = vsel %vm8100, %v8062, %v8116
  %v8133 = vsel %vm8101, %v8065, %v8117
  %v8134 = vsel %vm8102, %v8067, %v8118
  %v8135 = vsel %vm8103, %v8070, %v8119
  %v8136 = vsel %vm8104, %v8072, %v8120
  %v8137 = vsel %vm8105, %v8075, %v8121
  %v8138 = vsel %vm8106, %v8077, %v8122
  %v8139 = vsel %vm8107, %v8080, %v8123
  %v8140 = vsel %vm8108, %v8082, %v8124
  %v8141 = vsel %vm8109, %v8085, %v8125
  %v8142 = vsel %vm8110, %v8087, %v8126
  %v8143 = vsel %vm8111, %v8090, %v8127
  %v8144 = vsel %vm8112, %v8092, %v8128
  %v8145 = vsel %vm8113, %v8095, %v8129
  %v8146 = vsel %vm8114, %v8097, %v8130
  %v8147 = vld [vmem:[%s13] sm:$0xf]
  %v8148 = vld [vmem:[%s13 + $0x4] sm:$0xf]
  %v8149 = vld [vmem:[%s13 + $0x8] sm:$0xf]
  %v8150 = vld [vmem:[%s13 + $0xc] sm:$0xf]
  %v8151 = vld [vmem:[%s13 + $0x10] sm:$0xf]
  %v8152 = vld [vmem:[%s13 + $0x14] sm:$0x1]
  %v8153 = vpack.c.bf16 %v8132, %v8131
  %v8154 = vpack.c.bf16 %v8134, %v8133
  %v8155 = vpack.c.bf16 %v8136, %v8135
  %v8156 = vpack.c.bf16 %v8138, %v8137
  %v8157 = vpack.c.bf16 %v8140, %v8139
  %v8158 = vpack.c.bf16 %v8142, %v8141
  %v8159 = vpack.c.bf16 %v8144, %v8143
  %v8160 = vpack.c.bf16 %v8146, %v8145
  %v8161 = vld [vmem:[%s14] sm:$0xff]
  %v8162 = vld [vmem:[%s14 + $0x8] sm:$0xff]
  %v8163 = vld [vmem:[%s14 + $0x10] sm:$0xff]
  %v8164 = vld [vmem:[%s14 + $0x18] sm:$0xff]
  %v8165 = vld [vmem:[%s14 + $0x20] sm:$0xff]
  %v8166 = vld [vmem:[%s14 + $0x28] sm:$0x3]
  %8168 = vset.pattern.permute.xlu0 0
  %8169 = vperm.xlu0 %8168, %v8161
  %v8170 = vpop.permute.xlu0 %8169
  %8173 = vset.pattern.permute.xlu0 0
  %8174 = vperm.xlu0 %8173, %v8162
  %v8175 = vpop.permute.xlu0 %8174
  %8178 = vset.pattern.permute.xlu0 0
  %8179 = vperm.xlu0 %8178, %v8163
  %v8180 = vpop.permute.xlu0 %8179
  %8183 = vset.pattern.permute.xlu0 0
  %8184 = vperm.xlu0 %8183, %v8164
  %v8185 = vpop.permute.xlu0 %8184
  %8188 = vset.pattern.permute.xlu0 0
  %8189 = vperm.xlu0 %8188, %v8165
  %v8190 = vpop.permute.xlu0 %8189
  %8193 = vset.pattern.permute.xlu0 0
  %8194 = vperm.xlu0 %8193, %v8166
  %v8195 = vpop.permute.xlu0 %8194
  %v8203 = vunpack.c.l.b16 %v8147
  %v8204 = vunpack.c.l.b16 %v8148
  %v8205 = vunpack.c.l.b16 %v8149
  %v8206 = vunpack.c.l.b16 %v8150
  %v8207 = vunpack.c.l.b16 %v8151
  %v8208 = vunpack.c.l.b16 %v8152
  %v8209 = vpack.c.b16 %v8204, %v8203
  %v8210 = vpack.c.b16 %v8206, %v8205
  %v8211 = vpack.c.b16 %v8208, %v8207
  %8215 = vmatpush.bf16.msra.mxu0 %v8160
  %8216 = vmatpush.bf16.msra.mxu0 %v8159
  %8217 = vmatpush.bf16.msra.mxu0 %v8158
  %8218 = vmatpush.bf16.msra.mxu0 %v8157
  %8219 = vmatpush.bf16.msra.mxu0 %v8156
  %8220 = vmatpush.bf16.msra.mxu0 %v8155
  %8221 = vmatpush.bf16.msra.mxu0 %v8154
  %8222 = vmatpush.bf16.msra.mxu0 %v8153
  %8223 = vmatmul.bf16.gmra.mxu0 %v8209
  %v8224 = vpop.f32.mrf.mxu0
  %v8225 = vadd.f32 %v8170, %v8224
  %v8226 = vpop.f32.mrf.mxu0
  %v8227 = vadd.f32 %v8175, %v8226
  %8228 = vmatmul.bf16.gmra.mxu0 %v8210
  %v8229 = vpop.f32.mrf.mxu0
  %v8230 = vadd.f32 %v8180, %v8229
  %v8231 = vpop.f32.mrf.mxu0
  %v8232 = vadd.f32 %v8185, %v8231
  %8233 = vmatmul.bf16.gmra.mxu0 %v8211
  %v8234 = vpop.f32.mrf.mxu0
  %v8235 = vadd.f32 %v8190, %v8234
  %v8236 = vpop.f32.mrf.mxu0
  %v8237 = vadd.f32 %v8195, %v8236
  %8238 = vdwg.mxu0
  %vm8239 = vcmp.ge.f32.partialorder %v8225, 0.0
  %vm8240 = vcmp.ge.f32.partialorder %v8227, 0.0
  %vm8241 = vcmp.ge.f32.partialorder %v8230, 0.0
  %vm8242 = vcmp.ge.f32.partialorder %v8232, 0.0
  %vm8243 = vcmp.ge.f32.partialorder %v8235, 0.0
  %vm8244 = vcmp.ge.f32.partialorder %v8237, 0.0
  %v8245 = vmul.f32 %v919, %v8225
  %v8246 = vmul.f32 %v919, %v8227
  %v8247 = vmul.f32 %v919, %v8230
  %v8248 = vmul.f32 %v919, %v8232
  %v8249 = vmul.f32 %v919, %v8235
  %v8250 = vmul.f32 %v919, %v8237
  %v8251 = vsel %vm8239, %v8225, %v8245
  %v8252 = vsel %vm8240, %v8227, %v8246
  %v8253 = vsel %vm8241, %v8230, %v8247
  %v8254 = vsel %vm8242, %v8232, %v8248
  %v8255 = vsel %vm8243, %v8235, %v8249
  %v8256 = vsel %vm8244, %v8237, %v8250
  %8257 = vst.msk [vmem:[%s16] sm:$0xff] %vm1804, %v8251
  %8258 = vst.msk [vmem:[%s16 + $0x8] sm:$0xff] %vm1804, %v8252
  %8259 = vst.msk [vmem:[%s16 + $0x10] sm:$0xff] %vm1804, %v8253
  %8260 = vst.msk [vmem:[%s16 + $0x18] sm:$0xff] %vm1804, %v8254
  %8261 = vst.msk [vmem:[%s16 + $0x20] sm:$0xff] %vm1804, %v8255
  %vm8262 = vcmask 9216
  %8263 = vst.msk [vmem:[%s16 + $0x28] sm:$0x3] %vm8262, %v8256
  // Predicated region
  $region66: #{net_forward.7} parent=0 // pred_check
    _
  $region67: #{net_forward.7} parent=0 // pred_check_branch
    %8265 = sbr.rel (0) target = $region69
  $region68: #{net_forward.7} parent=0 // pred_region
    _
  $region69: #{net_forward.7} parent=0 // pred_fallthru
    _
  // Predicated region
  $region70: #{net_forward.7} parent=0 // pred_check
    _
  $region71: #{net_forward.7} parent=0 // pred_check_branch
    %8267 = sbr.rel (0) target = $region73
  $region72: #{net_forward.7} parent=0 // pred_region
    _
  $region73: #{net_forward.7} parent=0 // pred_fallthru
    _

</llo_original>
